<compile_context>
chip_gen: v6e
topology: v6e:2x2x1
jax: 0.10.0
libtpu: 0.0.40
codegen_flags: <defaults>
</compile_context>

<pallas_src>
import jax
import jax.numpy as jnp
from jax.experimental import pallas as pl
from jax.experimental.pallas import tpu as pltpu

IN_DIM = 64 * 64
OUT_DIM = 10
LAYER_DIMS = [(IN_DIM, 512), (512, 256), (256, 256), (256, 100), (100, OUT_DIM)]
LANE = 128
OUT_PAD = ((OUT_DIM + LANE - 1) // LANE) * LANE  # 128


def _round_up(n, m):
    return ((n + m - 1) // m) * m


def mlp_kernel(x_ref,
               w1_ref, b1_ref,
               w2_ref, b2_ref,
               w3_ref, b3_ref,
               w4_ref, b4_ref,
               w5_ref, b5_ref,
               o_ref):
    # Layer 1 + ReLU (bf16 operands, f32 MXU accumulation).
    h = jnp.dot(x_ref[...], w1_ref[...], preferred_element_type=jnp.float32)
    h = jnp.maximum(h + b1_ref[...], 0.0).astype(jnp.bfloat16)
    # Layer 2 + ReLU
    h = jnp.dot(h, w2_ref[...], preferred_element_type=jnp.float32)
    h = jnp.maximum(h + b2_ref[...], 0.0).astype(jnp.bfloat16)
    # Layer 3 + ReLU
    h = jnp.dot(h, w3_ref[...], preferred_element_type=jnp.float32)
    h = jnp.maximum(h + b3_ref[...], 0.0).astype(jnp.bfloat16)
    # Layer 4 + ReLU (width 100 padded to 128; padded cols of W4/b4 are zero,
    # so the extra activations are exactly zero after ReLU).
    h = jnp.dot(h, w4_ref[...], preferred_element_type=jnp.float32)
    h = jnp.maximum(h + b4_ref[...], 0.0).astype(jnp.bfloat16)
    # Layer 5, no activation (output padded 10 -> 128 lanes; sliced in wrapper).
    h = jnp.dot(h, w5_ref[...], preferred_element_type=jnp.float32)
    o_ref[...] = (h + b5_ref[...]).astype(o_ref.dtype)


def net_forward(x, kernel_params, *, tb=None):
    """Fused 5-layer MLP forward.

    x: (B, 4096) float array.
    kernel_params: list of (W_bf16_padded, b_f32_padded) from prepare_kernel_params.
    Returns (B, 10) float32.
    """
    B = x.shape[0]
    if tb is None:
        # Large batches: 256-row tiles fill MXU rows; tiny batches: one tile.
        tb = 256 if B >= 256 else max(8, int(pl.next_power_of_2(B)))
    Bp = int(pl.cdiv(B, tb)) * tb

    x = x.astype(jnp.bfloat16)
    if Bp != B:
        x = jnp.pad(x, ((0, Bp - B), (0, 0)))

    flat_args = [x]
    in_specs = [pl.BlockSpec((tb, IN_DIM), lambda i: (i, 0))]
    for w, b in kernel_params:
        flat_args.append(w)
        flat_args.append(b)
        # Same block index for every grid step -> weights stay VMEM-resident.
        in_specs.append(pl.BlockSpec(w.shape, lambda i: (0, 0)))
        in_specs.append(pl.BlockSpec(b.shape, lambda i: (0, 0)))

    out = pl.pallas_call(
        mlp_kernel,
        out_shape=jax.ShapeDtypeStruct((Bp, OUT_PAD), jnp.float32),
        grid_spec=pltpu.PrefetchScalarGridSpec(
            num_scalar_prefetch=0,
            grid=(Bp // tb,),
            in_specs=in_specs,
            out_specs=pl.BlockSpec((tb, OUT_PAD), lambda i: (i, 0)),
        ),
        compiler_params=pltpu.CompilerParams(
            dimension_semantics=("parallel",),
            vmem_limit_bytes=32 << 20,
        ),
    )(*flat_args)
    return out[:B, :OUT_DIM]


def init_params(key):
    """Logical f32 params matching PyTorch Linear default init
    U(-1/sqrt(in), 1/sqrt(in)); weights stored as (in, out) = W_pytorch.T."""
    params = []
    for (fan_in, fan_out) in LAYER_DIMS:
        key, kw, kb = jax.random.split(key, 3)
        bound = 1.0 / (fan_in ** 0.5)
        w = jax.random.uniform(kw, (fan_in, fan_out), jnp.float32, -bound, bound)
        b = jax.random.uniform(kb, (1, fan_out), jnp.float32, -bound, bound)
        params.append((w, b))
    return params


def prepare_kernel_params(params):
    """Cast weights to bf16 and zero-pad every dim up to a multiple of 128
    (only the 100- and 10-wide dims actually change). Biases stay f32 (they are
    added to the f32 accumulator). Zero padding keeps the math exact."""
    kp = []
    for (w, b) in params:
        fan_in, fan_out = w.shape
        in_p = _round_up(fan_in, LANE)
        out_p = _round_up(fan_out, LANE)
        wp = jnp.zeros((in_p, out_p), jnp.bfloat16)
        wp = wp.at[:fan_in, :fan_out].set(w.astype(jnp.bfloat16))
        bp = jnp.zeros((1, out_p), jnp.float32)
        bp = bp.at[:, :fan_out].set(b.astype(jnp.float32))
        kp.append((wp, bp))
    return kp


def reference_forward(x, params):
    """Pure-JAX reference mirroring the kernel's bf16-operand / f32-accumulate
    datapath, using the unpadded weights."""
    h = x.astype(jnp.bfloat16)
    n = len(params)
    for i, (w, b) in enumerate(params):
        h = jnp.dot(h, w.astype(jnp.bfloat16),
                    preferred_element_type=jnp.float32) + b
        if i < n - 1:
            h = jnp.maximum(h, 0.0).astype(jnp.bfloat16)
    return h


if __name__ == "__main__":
    key = jax.random.PRNGKey(0)
    key, kx = jax.random.split(key)
    B = 8
    x = jax.random.normal(kx, (B, IN_DIM), jnp.float32)

    params = init_params(key)
    kernel_params = prepare_kernel_params(params)

    out = net_forward(x, kernel_params)
    out = jax.block_until_ready(out)

    ref = reference_forward(x, params)
    assert out.shape == (B, OUT_DIM), out.shape
    assert jnp.allclose(out, ref, atol=1e-3, rtol=1e-3), "mismatch vs reference"
    print("KERNEL_OK")
</pallas_src>

<mosaic_0001>
module attributes {stable_mosaic.version = 11 : i64} {
  func.func @mlp_kernel(%arg0: i32, %arg1: memref<8x4096xbf16, #tpu.memory_space<vmem>>, %arg2: memref<4096x512xbf16, #tpu.memory_space<vmem>>, %arg3: memref<1x512xf32, #tpu.memory_space<vmem>>, %arg4: memref<512x256xbf16, #tpu.memory_space<vmem>>, %arg5: memref<1x256xf32, #tpu.memory_space<vmem>>, %arg6: memref<256x256xbf16, #tpu.memory_space<vmem>>, %arg7: memref<1x256xf32, #tpu.memory_space<vmem>>, %arg8: memref<256x128xbf16, #tpu.memory_space<vmem>>, %arg9: memref<1x128xf32, #tpu.memory_space<vmem>>, %arg10: memref<128x128xbf16, #tpu.memory_space<vmem>>, %arg11: memref<1x128xf32, #tpu.memory_space<vmem>>, %arg12: memref<8x128xf32, #tpu.memory_space<vmem>>) attributes {dimension_semantics = [#tpu.dimension_semantics<parallel>], iteration_bounds = array<i64: 1>, scalar_prefetch = 0 : i64, scratch_operands = 0 : i64, tpu.core_type = #tpu.core_type<tc>, window_params = [{transform_indices = @transform_0, window_bounds = array<i64: 8, 4096>}, {pipeline_mode = #tpu.pipeline_mode<synchronous>, transform_indices = @transform_1, window_bounds = array<i64: 4096, 512>}, {pipeline_mode = #tpu.pipeline_mode<synchronous>, transform_indices = @transform_2, window_bounds = array<i64: 1, 512>}, {pipeline_mode = #tpu.pipeline_mode<synchronous>, transform_indices = @transform_3, window_bounds = array<i64: 512, 256>}, {pipeline_mode = #tpu.pipeline_mode<synchronous>, transform_indices = @transform_4, window_bounds = array<i64: 1, 256>}, {pipeline_mode = #tpu.pipeline_mode<synchronous>, transform_indices = @transform_5, window_bounds = array<i64: 256, 256>}, {pipeline_mode = #tpu.pipeline_mode<synchronous>, transform_indices = @transform_6, window_bounds = array<i64: 1, 256>}, {pipeline_mode = #tpu.pipeline_mode<synchronous>, transform_indices = @transform_7, window_bounds = array<i64: 256, 128>}, {pipeline_mode = #tpu.pipeline_mode<synchronous>, transform_indices = @transform_8, window_bounds = array<i64: 1, 128>}, {pipeline_mode = #tpu.pipeline_mode<synchronous>, transform_indices = @transform_9, window_bounds = array<i64: 128, 128>}, {pipeline_mode = #tpu.pipeline_mode<synchronous>, transform_indices = @transform_10, window_bounds = array<i64: 1, 128>}, {transform_indices = @transform_11, window_bounds = array<i64: 8, 128>}]} {
    %c0 = arith.constant 0 : index
    %c0_0 = arith.constant 0 : index
    %0 = vector.load %arg1[%c0, %c0_0] : memref<8x4096xbf16, #tpu.memory_space<vmem>>, vector<8x4096xbf16>
    %c0_1 = arith.constant 0 : index
    %c0_2 = arith.constant 0 : index
    %1 = vector.load %arg2[%c0_1, %c0_2] : memref<4096x512xbf16, #tpu.memory_space<vmem>>, vector<4096x512xbf16>
    %cst = arith.constant dense<0.000000e+00> : vector<8x512xf32>
    %2 = tpu.matmul %0, %1, %cst {dimension_numbers = #tpu.dot_dimension_numbers<[1], [0], [0], [1], [0, 0, 1, 1], [], []>} : vector<8x4096xbf16>, vector<4096x512xbf16>, vector<8x512xf32> -> vector<8x512xf32>
    %c0_3 = arith.constant 0 : index
    %c0_4 = arith.constant 0 : index
    %3 = vector.load %arg3[%c0_3, %c0_4] : memref<1x512xf32, #tpu.memory_space<vmem>>, vector<1x512xf32>
    %4 = vector.broadcast %3 : vector<1x512xf32> to vector<8x512xf32>
    %5 = arith.addf %2, %4 : vector<8x512xf32>
    %cst_5 = arith.constant 0.000000e+00 : f32
    %6 = vector.broadcast %cst_5 : f32 to vector<8x512xf32>
    %7 = arith.maximumf %5, %6 : vector<8x512xf32>
    %8 = arith.truncf %7 : vector<8x512xf32> to vector<8x512xbf16>
    %c0_6 = arith.constant 0 : index
    %c0_7 = arith.constant 0 : index
    %9 = vector.load %arg4[%c0_6, %c0_7] : memref<512x256xbf16, #tpu.memory_space<vmem>>, vector<512x256xbf16>
    %cst_8 = arith.constant dense<0.000000e+00> : vector<8x256xf32>
    %10 = tpu.matmul %8, %9, %cst_8 {dimension_numbers = #tpu.dot_dimension_numbers<[1], [0], [0], [1], [0, 0, 1, 1], [], []>} : vector<8x512xbf16>, vector<512x256xbf16>, vector<8x256xf32> -> vector<8x256xf32>
    %c0_9 = arith.constant 0 : index
    %c0_10 = arith.constant 0 : index
    %11 = vector.load %arg5[%c0_9, %c0_10] : memref<1x256xf32, #tpu.memory_space<vmem>>, vector<1x256xf32>
    %12 = vector.broadcast %11 : vector<1x256xf32> to vector<8x256xf32>
    %13 = arith.addf %10, %12 : vector<8x256xf32>
    %cst_11 = arith.constant 0.000000e+00 : f32
    %14 = vector.broadcast %cst_11 : f32 to vector<8x256xf32>
    %15 = arith.maximumf %13, %14 : vector<8x256xf32>
    %16 = arith.truncf %15 : vector<8x256xf32> to vector<8x256xbf16>
    %c0_12 = arith.constant 0 : index
    %c0_13 = arith.constant 0 : index
    %17 = vector.load %arg6[%c0_12, %c0_13] : memref<256x256xbf16, #tpu.memory_space<vmem>>, vector<256x256xbf16>
    %cst_14 = arith.constant dense<0.000000e+00> : vector<8x256xf32>
    %18 = tpu.matmul %16, %17, %cst_14 {dimension_numbers = #tpu.dot_dimension_numbers<[1], [0], [0], [1], [0, 0, 1, 1], [], []>} : vector<8x256xbf16>, vector<256x256xbf16>, vector<8x256xf32> -> vector<8x256xf32>
    %c0_15 = arith.constant 0 : index
    %c0_16 = arith.constant 0 : index
    %19 = vector.load %arg7[%c0_15, %c0_16] : memref<1x256xf32, #tpu.memory_space<vmem>>, vector<1x256xf32>
    %20 = vector.broadcast %19 : vector<1x256xf32> to vector<8x256xf32>
    %21 = arith.addf %18, %20 : vector<8x256xf32>
    %cst_17 = arith.constant 0.000000e+00 : f32
    %22 = vector.broadcast %cst_17 : f32 to vector<8x256xf32>
    %23 = arith.maximumf %21, %22 : vector<8x256xf32>
    %24 = arith.truncf %23 : vector<8x256xf32> to vector<8x256xbf16>
    %c0_18 = arith.constant 0 : index
    %c0_19 = arith.constant 0 : index
    %25 = vector.load %arg8[%c0_18, %c0_19] : memref<256x128xbf16, #tpu.memory_space<vmem>>, vector<256x128xbf16>
    %cst_20 = arith.constant dense<0.000000e+00> : vector<8x128xf32>
    %26 = tpu.matmul %24, %25, %cst_20 {dimension_numbers = #tpu.dot_dimension_numbers<[1], [0], [0], [1], [0, 0, 1, 1], [], []>} : vector<8x256xbf16>, vector<256x128xbf16>, vector<8x128xf32> -> vector<8x128xf32>
    %c0_21 = arith.constant 0 : index
    %c0_22 = arith.constant 0 : index
    %27 = vector.load %arg9[%c0_21, %c0_22] : memref<1x128xf32, #tpu.memory_space<vmem>>, vector<1x128xf32>
    %28 = vector.broadcast %27 : vector<1x128xf32> to vector<8x128xf32>
    %29 = arith.addf %26, %28 : vector<8x128xf32>
    %cst_23 = arith.constant 0.000000e+00 : f32
    %30 = vector.broadcast %cst_23 : f32 to vector<8x128xf32>
    %31 = arith.maximumf %29, %30 : vector<8x128xf32>
    %32 = arith.truncf %31 : vector<8x128xf32> to vector<8x128xbf16>
    %c0_24 = arith.constant 0 : index
    %c0_25 = arith.constant 0 : index
    %33 = vector.load %arg10[%c0_24, %c0_25] : memref<128x128xbf16, #tpu.memory_space<vmem>>, vector<128x128xbf16>
    %cst_26 = arith.constant dense<0.000000e+00> : vector<8x128xf32>
    %34 = tpu.matmul %32, %33, %cst_26 {dimension_numbers = #tpu.dot_dimension_numbers<[1], [0], [0], [1], [0, 0, 1, 1], [], []>} : vector<8x128xbf16>, vector<128x128xbf16>, vector<8x128xf32> -> vector<8x128xf32>
    %c0_27 = arith.constant 0 : index
    %c0_28 = arith.constant 0 : index
    %35 = vector.load %arg11[%c0_27, %c0_28] : memref<1x128xf32, #tpu.memory_space<vmem>>, vector<1x128xf32>
    %36 = vector.broadcast %35 : vector<1x128xf32> to vector<8x128xf32>
    %37 = arith.addf %34, %36 : vector<8x128xf32>
    %c0_29 = arith.constant 0 : index
    %c0_30 = arith.constant 0 : index
    %38 = vector.load %arg12[%c0_29, %c0_30] : memref<8x128xf32, #tpu.memory_space<vmem>>, vector<8x128xf32>
    tpu.vector_store %arg12[%c0_29, %c0_30], %37 {strides = array<i32>} : memref<8x128xf32, #tpu.memory_space<vmem>>, vector<8x128xf32>,
    return
  }
  func.func @transform_0(%arg0: i32) -> (i32, i32) {
    %c0_i32 = arith.constant 0 : i32
    %c0_i32_0 = arith.constant 0 : i32
    return %arg0, %c0_i32 : i32, i32
  }
  func.func @transform_1(%arg0: i32) -> (i32, i32) {
    %c0_i32 = arith.constant 0 : i32
    %c0_i32_0 = arith.constant 0 : i32
    %c0_i32_1 = arith.constant 0 : i32
    return %c0_i32, %c0_i32_0 : i32, i32
  }
  func.func @transform_2(%arg0: i32) -> (i32, i32) {
    %c0_i32 = arith.constant 0 : i32
    %c0_i32_0 = arith.constant 0 : i32
    %c0_i32_1 = arith.constant 0 : i32
    return %c0_i32, %c0_i32_0 : i32, i32
  }
  func.func @transform_3(%arg0: i32) -> (i32, i32) {
    %c0_i32 = arith.constant 0 : i32
    %c0_i32_0 = arith.constant 0 : i32
    %c0_i32_1 = arith.constant 0 : i32
    return %c0_i32, %c0_i32_0 : i32, i32
  }
  func.func @transform_4(%arg0: i32) -> (i32, i32) {
    %c0_i32 = arith.constant 0 : i32
    %c0_i32_0 = arith.constant 0 : i32
    %c0_i32_1 = arith.constant 0 : i32
    return %c0_i32, %c0_i32_0 : i32, i32
  }
  func.func @transform_5(%arg0: i32) -> (i32, i32) {
    %c0_i32 = arith.constant 0 : i32
    %c0_i32_0 = arith.constant 0 : i32
    %c0_i32_1 = arith.constant 0 : i32
    return %c0_i32, %c0_i32_0 : i32, i32
  }
  func.func @transform_6(%arg0: i32) -> (i32, i32) {
    %c0_i32 = arith.constant 0 : i32
    %c0_i32_0 = arith.constant 0 : i32
    %c0_i32_1 = arith.constant 0 : i32
    return %c0_i32, %c0_i32_0 : i32, i32
  }
  func.func @transform_7(%arg0: i32) -> (i32, i32) {
    %c0_i32 = arith.constant 0 : i32
    %c0_i32_0 = arith.constant 0 : i32
    %c0_i32_1 = arith.constant 0 : i32
    return %c0_i32, %c0_i32_0 : i32, i32
  }
  func.func @transform_8(%arg0: i32) -> (i32, i32) {
    %c0_i32 = arith.constant 0 : i32
    %c0_i32_0 = arith.constant 0 : i32
    %c0_i32_1 = arith.constant 0 : i32
    return %c0_i32, %c0_i32_0 : i32, i32
  }
  func.func @transform_9(%arg0: i32) -> (i32, i32) {
    %c0_i32 = arith.constant 0 : i32
    %c0_i32_0 = arith.constant 0 : i32
    %c0_i32_1 = arith.constant 0 : i32
    return %c0_i32, %c0_i32_0 : i32, i32
  }
  func.func @transform_10(%arg0: i32) -> (i32, i32) {
    %c0_i32 = arith.constant 0 : i32
    %c0_i32_0 = arith.constant 0 : i32
    %c0_i32_1 = arith.constant 0 : i32
    return %c0_i32, %c0_i32_0 : i32, i32
  }
  func.func @transform_11(%arg0: i32) -> (i32, i32) {
    %c0_i32 = arith.constant 0 : i32
    %c0_i32_0 = arith.constant 0 : i32
    return %arg0, %c0_i32 : i32, i32
  }
}

</mosaic_0001>

<llo_original>
// kernel: tpu_custom_call.1
$region0: #{tpu_custom_call.1}
  #allocation0 [shape = 'u32[]', space=smem, size = 0x4, offset = 0x4, fixed_abs, tag = 'smem constant byte address 0x4 - core index']
  #allocation1 [shape = 'u32[144,128]{1,0:T(1,128)}', space=vmem, size = 0x12000, scoped, tag = 'internal scratch']
  %s0 = inlined_call_operand.hbm [shape: bf16[8,4096], index: 0, kind: input, shape index: {}]
  %s1 = inlined_call_operand.hbm [shape: bf16[4096,512], index: 1, kind: input, shape index: {}]
  %s2 = inlined_call_operand.hbm [shape: f32[1,512], index: 2, kind: input, shape index: {}]
  %s3 = inlined_call_operand.hbm [shape: bf16[512,256], index: 3, kind: input, shape index: {}]
  %s4 = inlined_call_operand.hbm [shape: f32[1,256], index: 4, kind: input, shape index: {}]
  %s5 = inlined_call_operand.hbm [shape: bf16[256,256], index: 5, kind: input, shape index: {}]
  %s6 = inlined_call_operand.hbm [shape: f32[1,256], index: 6, kind: input, shape index: {}]
  %s7 = inlined_call_operand.hbm [shape: bf16[256,128], index: 7, kind: input, shape index: {}]
  %s8 = inlined_call_operand.hbm [shape: f32[1,128], index: 8, kind: input, shape index: {}]
  %s9 = inlined_call_operand.hbm [shape: bf16[128,128], index: 9, kind: input, shape index: {}]
  %s10 = inlined_call_operand.hbm [shape: f32[1,128], index: 10, kind: input, shape index: {}]
  %s11 = inlined_call_operand.hbm [shape: f32[8,128], index: 11, kind: output, shape index: {}]
  %s12 = sld [smem:[#allocation0]]
  $region98: #{tpu_custom_call.1} parent=0
    _
  %s14 = ssub.s32 1, %s12
  %s15 = scalar_select 0, %s14, %s12
  $region1: #{tpu_custom_call.1} parent=0
    #allocation2 [shape = 'u8[65536]{0}', space=vmem, size = 0x10000, scoped, tag = 'input window, operand 0, single buffered']
    #allocation3 [shape = 's32[1]{0}', space=sflag, size = 0x4, scoped, tag = 'scoped memory for tpu_custom_call.1']
    #allocation4 [shape = 's32[1]{0}', space=sflag, size = 0x4, scoped, tag = 'scoped memory for tpu_custom_call.1']
    #allocation5 [shape = 'u8[4194304]{0}', space=vmem, size = 0x400000, scoped, tag = 'input window, operand 1, single buffered']
    #allocation6 [shape = 's32[1]{0}', space=sflag, size = 0x4, scoped, tag = 'scoped memory for tpu_custom_call.1']
    #allocation7 [shape = 'u8[2048]{0}', space=vmem, size = 0x800, scoped, tag = 'input window, operand 2, single buffered']
    #allocation8 [shape = 'u8[262144]{0}', space=vmem, size = 0x40000, scoped, tag = 'input window, operand 3, single buffered']
    #allocation9 [shape = 's32[1]{0}', space=sflag, size = 0x4, scoped, tag = 'scoped memory for tpu_custom_call.1']
    #allocation10 [shape = 'u8[1024]{0}', space=vmem, size = 0x400, scoped, tag = 'input window, operand 4, single buffered']
    #allocation11 [shape = 'u8[131072]{0}', space=vmem, size = 0x20000, scoped, tag = 'input window, operand 5, single buffered']
    #allocation12 [shape = 's32[1]{0}', space=sflag, size = 0x4, scoped, tag = 'scoped memory for tpu_custom_call.1']
    #allocation13 [shape = 'u8[1024]{0}', space=vmem, size = 0x400, scoped, tag = 'input window, operand 6, single buffered']
    #allocation14 [shape = 'u8[65536]{0}', space=vmem, size = 0x10000, scoped, tag = 'input window, operand 7, single buffered']
    #allocation15 [shape = 's32[1]{0}', space=sflag, size = 0x4, scoped, tag = 'scoped memory for tpu_custom_call.1']
    #allocation16 [shape = 'u8[512]{0}', space=vmem, size = 0x400, scoped, tag = 'input window, operand 8, single buffered']
    #allocation17 [shape = 'u8[32768]{0}', space=vmem, size = 0x8000, scoped, tag = 'input window, operand 9, single buffered']
    #allocation18 [shape = 's32[1]{0}', space=sflag, size = 0x4, scoped, tag = 'scoped memory for tpu_custom_call.1']
    #allocation19 [shape = 'u8[512]{0}', space=vmem, size = 0x400, scoped, tag = 'input window, operand 10, single buffered']
    #allocation20 [shape = 'u8[4096]{0}', space=vmem, size = 0x1000, scoped, tag = 'output window, operand 0, single buffered']
    %16 = vsyncpa [#allocation3], 0
    %17 = vsyncpa [#allocation6], 0
    %18 = vsyncpa [#allocation9], 0
    %19 = vsyncpa [#allocation12], 0
    %20 = vsyncpa [#allocation15], 0
    %21 = vsyncpa [#allocation18], 0
    %22 = vsyncpa [#allocation4], 0
    // Predicated region
    $region2: #{tpu_custom_call.1} parent=1 // pred_check
      _
    $region3: #{tpu_custom_call.1} parent=1 // pred_check_branch
      %24 = sbr.rel (0) target = $region5
    $region4: #{tpu_custom_call.1} parent=1 // pred_region
      %s26 = ssub.s32 2048, 2048
      %27 = vsyncadd [#allocation3], %s26
      %s29 = sshll.u32 [#allocation2], 4
      %s30 = int_to_ptr.vmem [resolvable:$true] %s29
      %32 = dma.hbm_to_vmem [thread:$0]  %s0, 2048, %s30, [#allocation3]
    $region5: #{tpu_custom_call.1} parent=1 // pred_fallthru
      _
    // Predicated region
    $region6: #{tpu_custom_call.1} parent=1 // pred_check
      _
    $region7: #{tpu_custom_call.1} parent=1 // pred_check_branch
      %34 = sbr.rel (0) target = $region9
    $region8: #{tpu_custom_call.1} parent=1 // pred_region
      %s36 = ssub.s32 131072, 131072
      %37 = vsyncadd [#allocation6], %s36
      %s38 = sshll.u32 [#allocation5], 4
      %s39 = int_to_ptr.vmem [resolvable:$true] %s38
      %44 = dma.hbm_to_vmem [thread:$0]  %s1, 131072, %s39, [#allocation6], 256, 256, 16
    $region9: #{tpu_custom_call.1} parent=1 // pred_fallthru
      _
    // Predicated region
    $region10: #{tpu_custom_call.1} parent=1 // pred_check
      _
    $region11: #{tpu_custom_call.1} parent=1 // pred_check_branch
      %46 = sbr.rel (0) target = $region13
    $region12: #{tpu_custom_call.1} parent=1 // pred_region
      %s48 = ssub.s32 64, 64
      %49 = vsyncadd [#allocation6], %s48
      %s51 = sshll.u32 [#allocation7], 4
      %s52 = int_to_ptr.vmem [resolvable:$true] %s51
      %54 = dma.hbm_to_vmem [thread:$0]  %s2, 64, %s52, [#allocation6]
    $region13: #{tpu_custom_call.1} parent=1 // pred_fallthru
      _
    // Predicated region
    $region14: #{tpu_custom_call.1} parent=1 // pred_check
      _
    $region15: #{tpu_custom_call.1} parent=1 // pred_check_branch
      %56 = sbr.rel (0) target = $region17
    $region16: #{tpu_custom_call.1} parent=1 // pred_region
      %s58 = ssub.s32 8192, 8192
      %59 = vsyncadd [#allocation9], %s58
      %s60 = sshll.u32 [#allocation8], 4
      %s61 = int_to_ptr.vmem [resolvable:$true] %s60
      %66 = dma.hbm_to_vmem [thread:$0]  %s3, 8192, %s61, [#allocation9], 128, 128, 8
    $region17: #{tpu_custom_call.1} parent=1 // pred_fallthru
      _
    // Predicated region
    $region18: #{tpu_custom_call.1} parent=1 // pred_check
      _
    $region19: #{tpu_custom_call.1} parent=1 // pred_check_branch
      %68 = sbr.rel (0) target = $region21
    $region20: #{tpu_custom_call.1} parent=1 // pred_region
      %s70 = ssub.s32 32, 32
      %71 = vsyncadd [#allocation9], %s70
      %s73 = sshll.u32 [#allocation10], 4
      %s74 = int_to_ptr.vmem [resolvable:$true] %s73
      %76 = dma.hbm_to_vmem [thread:$0]  %s4, 32, %s74, [#allocation9]
    $region21: #{tpu_custom_call.1} parent=1 // pred_fallthru
      _
    // Predicated region
    $region22: #{tpu_custom_call.1} parent=1 // pred_check
      _
    $region23: #{tpu_custom_call.1} parent=1 // pred_check_branch
      %78 = sbr.rel (0) target = $region25
    $region24: #{tpu_custom_call.1} parent=1 // pred_region
      %s80 = ssub.s32 4096, 4096
      %81 = vsyncadd [#allocation12], %s80
      %s82 = sshll.u32 [#allocation11], 4
      %s83 = int_to_ptr.vmem [resolvable:$true] %s82
      %88 = dma.hbm_to_vmem [thread:$0]  %s5, 4096, %s83, [#allocation12], 128, 128, 8
    $region25: #{tpu_custom_call.1} parent=1 // pred_fallthru
      _
    // Predicated region
    $region26: #{tpu_custom_call.1} parent=1 // pred_check
      _
    $region27: #{tpu_custom_call.1} parent=1 // pred_check_branch
      %90 = sbr.rel (0) target = $region29
    $region28: #{tpu_custom_call.1} parent=1 // pred_region
      %s92 = ssub.s32 32, 32
      %93 = vsyncadd [#allocation12], %s92
      %s95 = sshll.u32 [#allocation13], 4
      %s96 = int_to_ptr.vmem [resolvable:$true] %s95
      %98 = dma.hbm_to_vmem [thread:$0]  %s6, 32, %s96, [#allocation12]
    $region29: #{tpu_custom_call.1} parent=1 // pred_fallthru
      _
    // Predicated region
    $region30: #{tpu_custom_call.1} parent=1 // pred_check
      _
    $region31: #{tpu_custom_call.1} parent=1 // pred_check_branch
      %100 = sbr.rel (0) target = $region33
    $region32: #{tpu_custom_call.1} parent=1 // pred_region
      %s102 = ssub.s32 2048, 2048
      %103 = vsyncadd [#allocation15], %s102
      %s104 = sshll.u32 [#allocation14], 4
      %s105 = int_to_ptr.vmem [resolvable:$true] %s104
      %110 = dma.hbm_to_vmem [thread:$0]  %s7, 2048, %s105, [#allocation15], 64, 64, 4
    $region33: #{tpu_custom_call.1} parent=1 // pred_fallthru
      _
    // Predicated region
    $region34: #{tpu_custom_call.1} parent=1 // pred_check
      _
    $region35: #{tpu_custom_call.1} parent=1 // pred_check_branch
      %112 = sbr.rel (0) target = $region37
    $region36: #{tpu_custom_call.1} parent=1 // pred_region
      %s114 = ssub.s32 16, 16
      %115 = vsyncadd [#allocation15], %s114
      %s117 = sshll.u32 [#allocation16], 4
      %s118 = int_to_ptr.vmem [resolvable:$true] %s117
      %120 = dma.hbm_to_vmem [thread:$0]  %s8, 16, %s118, [#allocation15]
    $region37: #{tpu_custom_call.1} parent=1 // pred_fallthru
      _
    // Predicated region
    $region38: #{tpu_custom_call.1} parent=1 // pred_check
      _
    $region39: #{tpu_custom_call.1} parent=1 // pred_check_branch
      %122 = sbr.rel (0) target = $region41
    $region40: #{tpu_custom_call.1} parent=1 // pred_region
      %s124 = ssub.s32 1024, 1024
      %125 = vsyncadd [#allocation18], %s124
      %s126 = sshll.u32 [#allocation17], 4
      %s127 = int_to_ptr.vmem [resolvable:$true] %s126
      %132 = dma.hbm_to_vmem [thread:$0]  %s9, 1024, %s127, [#allocation18], 64, 64, 4
    $region41: #{tpu_custom_call.1} parent=1 // pred_fallthru
      _
    // Predicated region
    $region42: #{tpu_custom_call.1} parent=1 // pred_check
      _
    $region43: #{tpu_custom_call.1} parent=1 // pred_check_branch
      %134 = sbr.rel (0) target = $region45
    $region44: #{tpu_custom_call.1} parent=1 // pred_region
      %s136 = ssub.s32 16, 16
      %137 = vsyncadd [#allocation18], %s136
      %s139 = sshll.u32 [#allocation19], 4
      %s140 = int_to_ptr.vmem [resolvable:$true] %s139
      %142 = dma.hbm_to_vmem [thread:$0]  %s10, 16, %s140, [#allocation18]
    $region45: #{tpu_custom_call.1} parent=1 // pred_fallthru
      _
    // Predicated region
    $region46: #{tpu_custom_call.1} parent=1 // pred_check
      _
    $region47: #{tpu_custom_call.1} parent=1 // pred_check_branch
      %144 = sbr.rel (0) target = $region49
    $region48: #{tpu_custom_call.1} parent=1 // pred_region
      %145 = dma.done [#allocation3], 2048
    $region49: #{tpu_custom_call.1} parent=1 // pred_fallthru
      _
    // Predicated region
    $region50: #{tpu_custom_call.1} parent=1 // pred_check
      _
    $region51: #{tpu_custom_call.1} parent=1 // pred_check_branch
      %147 = sbr.rel (0) target = $region53
    $region52: #{tpu_custom_call.1} parent=1 // pred_region
      %148 = dma.done [#allocation6], 131072
    $region53: #{tpu_custom_call.1} parent=1 // pred_fallthru
      _
    // Predicated region
    $region54: #{tpu_custom_call.1} parent=1 // pred_check
      _
    $region55: #{tpu_custom_call.1} parent=1 // pred_check_branch
      %150 = sbr.rel (0) target = $region57
    $region56: #{tpu_custom_call.1} parent=1 // pred_region
      %151 = dma.done [#allocation6], 64
    $region57: #{tpu_custom_call.1} parent=1 // pred_fallthru
      _
    // Predicated region
    $region58: #{tpu_custom_call.1} parent=1 // pred_check
      _
    $region59: #{tpu_custom_call.1} parent=1 // pred_check_branch
      %153 = sbr.rel (0) target = $region61
    $region60: #{tpu_custom_call.1} parent=1 // pred_region
      %154 = dma.done [#allocation9], 8192
    $region61: #{tpu_custom_call.1} parent=1 // pred_fallthru
      _
    // Predicated region
    $region62: #{tpu_custom_call.1} parent=1 // pred_check
      _
    $region63: #{tpu_custom_call.1} parent=1 // pred_check_branch
      %156 = sbr.rel (0) target = $region65
    $region64: #{tpu_custom_call.1} parent=1 // pred_region
      %157 = dma.done [#allocation9], 32
    $region65: #{tpu_custom_call.1} parent=1 // pred_fallthru
      _
    // Predicated region
    $region66: #{tpu_custom_call.1} parent=1 // pred_check
      _
    $region67: #{tpu_custom_call.1} parent=1 // pred_check_branch
      %159 = sbr.rel (0) target = $region69
    $region68: #{tpu_custom_call.1} parent=1 // pred_region
      %160 = dma.done [#allocation12], 4096
    $region69: #{tpu_custom_call.1} parent=1 // pred_fallthru
      _
    // Predicated region
    $region70: #{tpu_custom_call.1} parent=1 // pred_check
      _
    $region71: #{tpu_custom_call.1} parent=1 // pred_check_branch
      %162 = sbr.rel (0) target = $region73
    $region72: #{tpu_custom_call.1} parent=1 // pred_region
      %163 = dma.done [#allocation12], 32
    $region73: #{tpu_custom_call.1} parent=1 // pred_fallthru
      _
    // Predicated region
    $region74: #{tpu_custom_call.1} parent=1 // pred_check
      _
    $region75: #{tpu_custom_call.1} parent=1 // pred_check_branch
      %165 = sbr.rel (0) target = $region77
    $region76: #{tpu_custom_call.1} parent=1 // pred_region
      %166 = dma.done [#allocation15], 2048
    $region77: #{tpu_custom_call.1} parent=1 // pred_fallthru
      _
    // Predicated region
    $region78: #{tpu_custom_call.1} parent=1 // pred_check
      _
    $region79: #{tpu_custom_call.1} parent=1 // pred_check_branch
      %168 = sbr.rel (0) target = $region81
    $region80: #{tpu_custom_call.1} parent=1 // pred_region
      %169 = dma.done [#allocation15], 16
    $region81: #{tpu_custom_call.1} parent=1 // pred_fallthru
      _
    // Predicated region
    $region82: #{tpu_custom_call.1} parent=1 // pred_check
      _
    $region83: #{tpu_custom_call.1} parent=1 // pred_check_branch
      %171 = sbr.rel (0) target = $region85
    $region84: #{tpu_custom_call.1} parent=1 // pred_region
      %172 = dma.done [#allocation18], 1024
    $region85: #{tpu_custom_call.1} parent=1 // pred_fallthru
      _
    // Predicated region
    $region86: #{tpu_custom_call.1} parent=1 // pred_check
      _
    $region87: #{tpu_custom_call.1} parent=1 // pred_check_branch
      %174 = sbr.rel (0) target = $region89
    $region88: #{tpu_custom_call.1} parent=1 // pred_region
      %175 = dma.done [#allocation18], 16
    $region89: #{tpu_custom_call.1} parent=1 // pred_fallthru
      _
    %v177 = vld [vmem:[#allocation2] sm:$0xff]
    %v178 = vld [vmem:[#allocation2 + $0x8] sm:$0xff]
    %v179 = vld [vmem:[#allocation2 + $0x10] sm:$0xff]
    %v180 = vld [vmem:[#allocation2 + $0x18] sm:$0xff]
    %v181 = vld [vmem:[#allocation2 + $0x20] sm:$0xff]
    %v182 = vld [vmem:[#allocation2 + $0x28] sm:$0xff]
    %v183 = vld [vmem:[#allocation2 + $0x30] sm:$0xff]
    %v184 = vld [vmem:[#allocation2 + $0x38] sm:$0xff]
    %v185 = vld [vmem:[#allocation2 + $0x40] sm:$0xff]
    %v186 = vld [vmem:[#allocation2 + $0x48] sm:$0xff]
    %v187 = vld [vmem:[#allocation2 + $0x50] sm:$0xff]
    %v188 = vld [vmem:[#allocation2 + $0x58] sm:$0xff]
    %v189 = vld [vmem:[#allocation2 + $0x60] sm:$0xff]
    %v190 = vld [vmem:[#allocation2 + $0x68] sm:$0xff]
    %v191 = vld [vmem:[#allocation2 + $0x70] sm:$0xff]
    %v192 = vld [vmem:[#allocation2 + $0x78] sm:$0xff]
    %v193 = vld [vmem:[#allocation5] sm:$0xff]
    %v194 = vld [vmem:[#allocation5 + $0x8] sm:$0xff]
    %v195 = vld [vmem:[#allocation5 + $0x10] sm:$0xff]
    %v196 = vld [vmem:[#allocation5 + $0x18] sm:$0xff]
    %v197 = vld [vmem:[#allocation5 + $0x20] sm:$0xff]
    %v198 = vld [vmem:[#allocation5 + $0x28] sm:$0xff]
    %v199 = vld [vmem:[#allocation5 + $0x30] sm:$0xff]
    %v200 = vld [vmem:[#allocation5 + $0x38] sm:$0xff]
    %v201 = vld [vmem:[#allocation5 + $0x40] sm:$0xff]
    %v202 = vld [vmem:[#allocation5 + $0x48] sm:$0xff]
    %v203 = vld [vmem:[#allocation5 + $0x50] sm:$0xff]
    %v204 = vld [vmem:[#allocation5 + $0x58] sm:$0xff]
    %v205 = vld [vmem:[#allocation5 + $0x60] sm:$0xff]
    %v206 = vld [vmem:[#allocation5 + $0x68] sm:$0xff]
    %v207 = vld [vmem:[#allocation5 + $0x70] sm:$0xff]
    %v208 = vld [vmem:[#allocation5 + $0x78] sm:$0xff]
    %v209 = vld [vmem:[#allocation5 + $0x80] sm:$0xff]
    %v210 = vld [vmem:[#allocation5 + $0x88] sm:$0xff]
    %v211 = vld [vmem:[#allocation5 + $0x90] sm:$0xff]
    %v212 = vld [vmem:[#allocation5 + $0x98] sm:$0xff]
    %v213 = vld [vmem:[#allocation5 + $0xa0] sm:$0xff]
    %v214 = vld [vmem:[#allocation5 + $0xa8] sm:$0xff]
    %v215 = vld [vmem:[#allocation5 + $0xb0] sm:$0xff]
    %v216 = vld [vmem:[#allocation5 + $0xb8] sm:$0xff]
    %v217 = vld [vmem:[#allocation5 + $0xc0] sm:$0xff]
    %v218 = vld [vmem:[#allocation5 + $0xc8] sm:$0xff]
    %v219 = vld [vmem:[#allocation5 + $0xd0] sm:$0xff]
    %v220 = vld [vmem:[#allocation5 + $0xd8] sm:$0xff]
    %v221 = vld [vmem:[#allocation5 + $0xe0] sm:$0xff]
    %v222 = vld [vmem:[#allocation5 + $0xe8] sm:$0xff]
    %v223 = vld [vmem:[#allocation5 + $0xf0] sm:$0xff]
    %v224 = vld [vmem:[#allocation5 + $0xf8] sm:$0xff]
    %v225 = vld [vmem:[#allocation5 + $0x100] sm:$0xff]
    %v226 = vld [vmem:[#allocation5 + $0x108] sm:$0xff]
    %v227 = vld [vmem:[#allocation5 + $0x110] sm:$0xff]
    %v228 = vld [vmem:[#allocation5 + $0x118] sm:$0xff]
    %v229 = vld [vmem:[#allocation5 + $0x120] sm:$0xff]
    %v230 = vld [vmem:[#allocation5 + $0x128] sm:$0xff]
    %v231 = vld [vmem:[#allocation5 + $0x130] sm:$0xff]
    %v232 = vld [vmem:[#allocation5 + $0x138] sm:$0xff]
    %v233 = vld [vmem:[#allocation5 + $0x140] sm:$0xff]
    %v234 = vld [vmem:[#allocation5 + $0x148] sm:$0xff]
    %v235 = vld [vmem:[#allocation5 + $0x150] sm:$0xff]
    %v236 = vld [vmem:[#allocation5 + $0x158] sm:$0xff]
    %v237 = vld [vmem:[#allocation5 + $0x160] sm:$0xff]
    %v238 = vld [vmem:[#allocation5 + $0x168] sm:$0xff]
    %v239 = vld [vmem:[#allocation5 + $0x170] sm:$0xff]
    %v240 = vld [vmem:[#allocation5 + $0x178] sm:$0xff]
    %v241 = vld [vmem:[#allocation5 + $0x180] sm:$0xff]
    %v242 = vld [vmem:[#allocation5 + $0x188] sm:$0xff]
    %v243 = vld [vmem:[#allocation5 + $0x190] sm:$0xff]
    %v244 = vld [vmem:[#allocation5 + $0x198] sm:$0xff]
    %v245 = vld [vmem:[#allocation5 + $0x1a0] sm:$0xff]
    %v246 = vld [vmem:[#allocation5 + $0x1a8] sm:$0xff]
    %v247 = vld [vmem:[#allocation5 + $0x1b0] sm:$0xff]
    %v248 = vld [vmem:[#allocation5 + $0x1b8] sm:$0xff]
    %v249 = vld [vmem:[#allocation5 + $0x1c0] sm:$0xff]
    %v250 = vld [vmem:[#allocation5 + $0x1c8] sm:$0xff]
    %v251 = vld [vmem:[#allocation5 + $0x1d0] sm:$0xff]
    %v252 = vld [vmem:[#allocation5 + $0x1d8] sm:$0xff]
    %v253 = vld [vmem:[#allocation5 + $0x1e0] sm:$0xff]
    %v254 = vld [vmem:[#allocation5 + $0x1e8] sm:$0xff]
    %v255 = vld [vmem:[#allocation5 + $0x1f0] sm:$0xff]
    %v256 = vld [vmem:[#allocation5 + $0x1f8] sm:$0xff]
    %v257 = vld [vmem:[#allocation5 + $0x200] sm:$0xff]
    %v258 = vld [vmem:[#allocation5 + $0x208] sm:$0xff]
    %v259 = vld [vmem:[#allocation5 + $0x210] sm:$0xff]
    %v260 = vld [vmem:[#allocation5 + $0x218] sm:$0xff]
    %v261 = vld [vmem:[#allocation5 + $0x220] sm:$0xff]
    %v262 = vld [vmem:[#allocation5 + $0x228] sm:$0xff]
    %v263 = vld [vmem:[#allocation5 + $0x230] sm:$0xff]
    %v264 = vld [vmem:[#allocation5 + $0x238] sm:$0xff]
    %v265 = vld [vmem:[#allocation5 + $0x240] sm:$0xff]
    %v266 = vld [vmem:[#allocation5 + $0x248] sm:$0xff]
    %v267 = vld [vmem:[#allocation5 + $0x250] sm:$0xff]
    %v268 = vld [vmem:[#allocation5 + $0x258] sm:$0xff]
    %v269 = vld [vmem:[#allocation5 + $0x260] sm:$0xff]
    %v270 = vld [vmem:[#allocation5 + $0x268] sm:$0xff]
    %v271 = vld [vmem:[#allocation5 + $0x270] sm:$0xff]
    %v272 = vld [vmem:[#allocation5 + $0x278] sm:$0xff]
    %v273 = vld [vmem:[#allocation5 + $0x280] sm:$0xff]
    %v274 = vld [vmem:[#allocation5 + $0x288] sm:$0xff]
    %v275 = vld [vmem:[#allocation5 + $0x290] sm:$0xff]
    %v276 = vld [vmem:[#allocation5 + $0x298] sm:$0xff]
    %v277 = vld [vmem:[#allocation5 + $0x2a0] sm:$0xff]
    %v278 = vld [vmem:[#allocation5 + $0x2a8] sm:$0xff]
    %v279 = vld [vmem:[#allocation5 + $0x2b0] sm:$0xff]
    %v280 = vld [vmem:[#allocation5 + $0x2b8] sm:$0xff]
    %v281 = vld [vmem:[#allocation5 + $0x2c0] sm:$0xff]
    %v282 = vld [vmem:[#allocation5 + $0x2c8] sm:$0xff]
    %v283 = vld [vmem:[#allocation5 + $0x2d0] sm:$0xff]
    %v284 = vld [vmem:[#allocation5 + $0x2d8] sm:$0xff]
    %v285 = vld [vmem:[#allocation5 + $0x2e0] sm:$0xff]
    %v286 = vld [vmem:[#allocation5 + $0x2e8] sm:$0xff]
    %v287 = vld [vmem:[#allocation5 + $0x2f0] sm:$0xff]
    %v288 = vld [vmem:[#allocation5 + $0x2f8] sm:$0xff]
    %v289 = vld [vmem:[#allocation5 + $0x300] sm:$0xff]
    %v290 = vld [vmem:[#allocation5 + $0x308] sm:$0xff]
    %v291 = vld [vmem:[#allocation5 + $0x310] sm:$0xff]
    %v292 = vld [vmem:[#allocation5 + $0x318] sm:$0xff]
    %v293 = vld [vmem:[#allocation5 + $0x320] sm:$0xff]
    %v294 = vld [vmem:[#allocation5 + $0x328] sm:$0xff]
    %v295 = vld [vmem:[#allocation5 + $0x330] sm:$0xff]
    %v296 = vld [vmem:[#allocation5 + $0x338] sm:$0xff]
    %v297 = vld [vmem:[#allocation5 + $0x340] sm:$0xff]
    %v298 = vld [vmem:[#allocation5 + $0x348] sm:$0xff]
    %v299 = vld [vmem:[#allocation5 + $0x350] sm:$0xff]
    %v300 = vld [vmem:[#allocation5 + $0x358] sm:$0xff]
    %v301 = vld [vmem:[#allocation5 + $0x360] sm:$0xff]
    %v302 = vld [vmem:[#allocation5 + $0x368] sm:$0xff]
    %v303 = vld [vmem:[#allocation5 + $0x370] sm:$0xff]
    %v304 = vld [vmem:[#allocation5 + $0x378] sm:$0xff]
    %v305 = vld [vmem:[#allocation5 + $0x380] sm:$0xff]
    %v306 = vld [vmem:[#allocation5 + $0x388] sm:$0xff]
    %v307 = vld [vmem:[#allocation5 + $0x390] sm:$0xff]
    %v308 = vld [vmem:[#allocation5 + $0x398] sm:$0xff]
    %v309 = vld [vmem:[#allocation5 + $0x3a0] sm:$0xff]
    %v310 = vld [vmem:[#allocation5 + $0x3a8] sm:$0xff]
    %v311 = vld [vmem:[#allocation5 + $0x3b0] sm:$0xff]
    %v312 = vld [vmem:[#allocation5 + $0x3b8] sm:$0xff]
    %v313 = vld [vmem:[#allocation5 + $0x3c0] sm:$0xff]
    %v314 = vld [vmem:[#allocation5 + $0x3c8] sm:$0xff]
    %v315 = vld [vmem:[#allocation5 + $0x3d0] sm:$0xff]
    %v316 = vld [vmem:[#allocation5 + $0x3d8] sm:$0xff]
    %v317 = vld [vmem:[#allocation5 + $0x3e0] sm:$0xff]
    %v318 = vld [vmem:[#allocation5 + $0x3e8] sm:$0xff]
    %v319 = vld [vmem:[#allocation5 + $0x3f0] sm:$0xff]
    %v320 = vld [vmem:[#allocation5 + $0x3f8] sm:$0xff]
    %v321 = vld [vmem:[#allocation5 + $0x400] sm:$0xff]
    %v322 = vld [vmem:[#allocation5 + $0x408] sm:$0xff]
    %v323 = vld [vmem:[#allocation5 + $0x410] sm:$0xff]
    %v324 = vld [vmem:[#allocation5 + $0x418] sm:$0xff]
    %v325 = vld [vmem:[#allocation5 + $0x420] sm:$0xff]
    %v326 = vld [vmem:[#allocation5 + $0x428] sm:$0xff]
    %v327 = vld [vmem:[#allocation5 + $0x430] sm:$0xff]
    %v328 = vld [vmem:[#allocation5 + $0x438] sm:$0xff]
    %v329 = vld [vmem:[#allocation5 + $0x440] sm:$0xff]
    %v330 = vld [vmem:[#allocation5 + $0x448] sm:$0xff]
    %v331 = vld [vmem:[#allocation5 + $0x450] sm:$0xff]
    %v332 = vld [vmem:[#allocation5 + $0x458] sm:$0xff]
    %v333 = vld [vmem:[#allocation5 + $0x460] sm:$0xff]
    %v334 = vld [vmem:[#allocation5 + $0x468] sm:$0xff]
    %v335 = vld [vmem:[#allocation5 + $0x470] sm:$0xff]
    %v336 = vld [vmem:[#allocation5 + $0x478] sm:$0xff]
    %v337 = vld [vmem:[#allocation5 + $0x480] sm:$0xff]
    %v338 = vld [vmem:[#allocation5 + $0x488] sm:$0xff]
    %v339 = vld [vmem:[#allocation5 + $0x490] sm:$0xff]
    %v340 = vld [vmem:[#allocation5 + $0x498] sm:$0xff]
    %v341 = vld [vmem:[#allocation5 + $0x4a0] sm:$0xff]
    %v342 = vld [vmem:[#allocation5 + $0x4a8] sm:$0xff]
    %v343 = vld [vmem:[#allocation5 + $0x4b0] sm:$0xff]
    %v344 = vld [vmem:[#allocation5 + $0x4b8] sm:$0xff]
    %v345 = vld [vmem:[#allocation5 + $0x4c0] sm:$0xff]
    %v346 = vld [vmem:[#allocation5 + $0x4c8] sm:$0xff]
    %v347 = vld [vmem:[#allocation5 + $0x4d0] sm:$0xff]
    %v348 = vld [vmem:[#allocation5 + $0x4d8] sm:$0xff]
    %v349 = vld [vmem:[#allocation5 + $0x4e0] sm:$0xff]
    %v350 = vld [vmem:[#allocation5 + $0x4e8] sm:$0xff]
    %v351 = vld [vmem:[#allocation5 + $0x4f0] sm:$0xff]
    %v352 = vld [vmem:[#allocation5 + $0x4f8] sm:$0xff]
    %v353 = vld [vmem:[#allocation5 + $0x500] sm:$0xff]
    %v354 = vld [vmem:[#allocation5 + $0x508] sm:$0xff]
    %v355 = vld [vmem:[#allocation5 + $0x510] sm:$0xff]
    %v356 = vld [vmem:[#allocation5 + $0x518] sm:$0xff]
    %v357 = vld [vmem:[#allocation5 + $0x520] sm:$0xff]
    %v358 = vld [vmem:[#allocation5 + $0x528] sm:$0xff]
    %v359 = vld [vmem:[#allocation5 + $0x530] sm:$0xff]
    %v360 = vld [vmem:[#allocation5 + $0x538] sm:$0xff]
    %v361 = vld [vmem:[#allocation5 + $0x540] sm:$0xff]
    %v362 = vld [vmem:[#allocation5 + $0x548] sm:$0xff]
    %v363 = vld [vmem:[#allocation5 + $0x550] sm:$0xff]
    %v364 = vld [vmem:[#allocation5 + $0x558] sm:$0xff]
    %v365 = vld [vmem:[#allocation5 + $0x560] sm:$0xff]
    %v366 = vld [vmem:[#allocation5 + $0x568] sm:$0xff]
    %v367 = vld [vmem:[#allocation5 + $0x570] sm:$0xff]
    %v368 = vld [vmem:[#allocation5 + $0x578] sm:$0xff]
    %v369 = vld [vmem:[#allocation5 + $0x580] sm:$0xff]
    %v370 = vld [vmem:[#allocation5 + $0x588] sm:$0xff]
    %v371 = vld [vmem:[#allocation5 + $0x590] sm:$0xff]
    %v372 = vld [vmem:[#allocation5 + $0x598] sm:$0xff]
    %v373 = vld [vmem:[#allocation5 + $0x5a0] sm:$0xff]
    %v374 = vld [vmem:[#allocation5 + $0x5a8] sm:$0xff]
    %v375 = vld [vmem:[#allocation5 + $0x5b0] sm:$0xff]
    %v376 = vld [vmem:[#allocation5 + $0x5b8] sm:$0xff]
    %v377 = vld [vmem:[#allocation5 + $0x5c0] sm:$0xff]
    %v378 = vld [vmem:[#allocation5 + $0x5c8] sm:$0xff]
    %v379 = vld [vmem:[#allocation5 + $0x5d0] sm:$0xff]
    %v380 = vld [vmem:[#allocation5 + $0x5d8] sm:$0xff]
    %v381 = vld [vmem:[#allocation5 + $0x5e0] sm:$0xff]
    %v382 = vld [vmem:[#allocation5 + $0x5e8] sm:$0xff]
    %v383 = vld [vmem:[#allocation5 + $0x5f0] sm:$0xff]
    %v384 = vld [vmem:[#allocation5 + $0x5f8] sm:$0xff]
    %v385 = vld [vmem:[#allocation5 + $0x600] sm:$0xff]
    %v386 = vld [vmem:[#allocation5 + $0x608] sm:$0xff]
    %v387 = vld [vmem:[#allocation5 + $0x610] sm:$0xff]
    %v388 = vld [vmem:[#allocation5 + $0x618] sm:$0xff]
    %v389 = vld [vmem:[#allocation5 + $0x620] sm:$0xff]
    %v390 = vld [vmem:[#allocation5 + $0x628] sm:$0xff]
    %v391 = vld [vmem:[#allocation5 + $0x630] sm:$0xff]
    %v392 = vld [vmem:[#allocation5 + $0x638] sm:$0xff]
    %v393 = vld [vmem:[#allocation5 + $0x640] sm:$0xff]
    %v394 = vld [vmem:[#allocation5 + $0x648] sm:$0xff]
    %v395 = vld [vmem:[#allocation5 + $0x650] sm:$0xff]
    %v396 = vld [vmem:[#allocation5 + $0x658] sm:$0xff]
    %v397 = vld [vmem:[#allocation5 + $0x660] sm:$0xff]
    %v398 = vld [vmem:[#allocation5 + $0x668] sm:$0xff]
    %v399 = vld [vmem:[#allocation5 + $0x670] sm:$0xff]
    %v400 = vld [vmem:[#allocation5 + $0x678] sm:$0xff]
    %v401 = vld [vmem:[#allocation5 + $0x680] sm:$0xff]
    %v402 = vld [vmem:[#allocation5 + $0x688] sm:$0xff]
    %v403 = vld [vmem:[#allocation5 + $0x690] sm:$0xff]
    %v404 = vld [vmem:[#allocation5 + $0x698] sm:$0xff]
    %v405 = vld [vmem:[#allocation5 + $0x6a0] sm:$0xff]
    %v406 = vld [vmem:[#allocation5 + $0x6a8] sm:$0xff]
    %v407 = vld [vmem:[#allocation5 + $0x6b0] sm:$0xff]
    %v408 = vld [vmem:[#allocation5 + $0x6b8] sm:$0xff]
    %v409 = vld [vmem:[#allocation5 + $0x6c0] sm:$0xff]
    %v410 = vld [vmem:[#allocation5 + $0x6c8] sm:$0xff]
    %v411 = vld [vmem:[#allocation5 + $0x6d0] sm:$0xff]
    %v412 = vld [vmem:[#allocation5 + $0x6d8] sm:$0xff]
    %v413 = vld [vmem:[#allocation5 + $0x6e0] sm:$0xff]
    %v414 = vld [vmem:[#allocation5 + $0x6e8] sm:$0xff]
    %v415 = vld [vmem:[#allocation5 + $0x6f0] sm:$0xff]
    %v416 = vld [vmem:[#allocation5 + $0x6f8] sm:$0xff]
    %v417 = vld [vmem:[#allocation5 + $0x700] sm:$0xff]
    %v418 = vld [vmem:[#allocation5 + $0x708] sm:$0xff]
    %v419 = vld [vmem:[#allocation5 + $0x710] sm:$0xff]
    %v420 = vld [vmem:[#allocation5 + $0x718] sm:$0xff]
    %v421 = vld [vmem:[#allocation5 + $0x720] sm:$0xff]
    %v422 = vld [vmem:[#allocation5 + $0x728] sm:$0xff]
    %v423 = vld [vmem:[#allocation5 + $0x730] sm:$0xff]
    %v424 = vld [vmem:[#allocation5 + $0x738] sm:$0xff]
    %v425 = vld [vmem:[#allocation5 + $0x740] sm:$0xff]
    %v426 = vld [vmem:[#allocation5 + $0x748] sm:$0xff]
    %v427 = vld [vmem:[#allocation5 + $0x750] sm:$0xff]
    %v428 = vld [vmem:[#allocation5 + $0x758] sm:$0xff]
    %v429 = vld [vmem:[#allocation5 + $0x760] sm:$0xff]
    %v430 = vld [vmem:[#allocation5 + $0x768] sm:$0xff]
    %v431 = vld [vmem:[#allocation5 + $0x770] sm:$0xff]
    %v432 = vld [vmem:[#allocation5 + $0x778] sm:$0xff]
    %v433 = vld [vmem:[#allocation5 + $0x780] sm:$0xff]
    %v434 = vld [vmem:[#allocation5 + $0x788] sm:$0xff]
    %v435 = vld [vmem:[#allocation5 + $0x790] sm:$0xff]
    %v436 = vld [vmem:[#allocation5 + $0x798] sm:$0xff]
    %v437 = vld [vmem:[#allocation5 + $0x7a0] sm:$0xff]
    %v438 = vld [vmem:[#allocation5 + $0x7a8] sm:$0xff]
    %v439 = vld [vmem:[#allocation5 + $0x7b0] sm:$0xff]
    %v440 = vld [vmem:[#allocation5 + $0x7b8] sm:$0xff]
    %v441 = vld [vmem:[#allocation5 + $0x7c0] sm:$0xff]
    %v442 = vld [vmem:[#allocation5 + $0x7c8] sm:$0xff]
    %v443 = vld [vmem:[#allocation5 + $0x7d0] sm:$0xff]
    %v444 = vld [vmem:[#allocation5 + $0x7d8] sm:$0xff]
    %v445 = vld [vmem:[#allocation5 + $0x7e0] sm:$0xff]
    %v446 = vld [vmem:[#allocation5 + $0x7e8] sm:$0xff]
    %v447 = vld [vmem:[#allocation5 + $0x7f0] sm:$0xff]
    %v448 = vld [vmem:[#allocation5 + $0x7f8] sm:$0xff]
    %v449 = vld [vmem:[#allocation5 + $0x800] sm:$0xff]
    %v450 = vld [vmem:[#allocation5 + $0x808] sm:$0xff]
    %v451 = vld [vmem:[#allocation5 + $0x810] sm:$0xff]
    %v452 = vld [vmem:[#allocation5 + $0x818] sm:$0xff]
    %v453 = vld [vmem:[#allocation5 + $0x820] sm:$0xff]
    %v454 = vld [vmem:[#allocation5 + $0x828] sm:$0xff]
    %v455 = vld [vmem:[#allocation5 + $0x830] sm:$0xff]
    %v456 = vld [vmem:[#allocation5 + $0x838] sm:$0xff]
    %v457 = vld [vmem:[#allocation5 + $0x840] sm:$0xff]
    %v458 = vld [vmem:[#allocation5 + $0x848] sm:$0xff]
    %v459 = vld [vmem:[#allocation5 + $0x850] sm:$0xff]
    %v460 = vld [vmem:[#allocation5 + $0x858] sm:$0xff]
    %v461 = vld [vmem:[#allocation5 + $0x860] sm:$0xff]
    %v462 = vld [vmem:[#allocation5 + $0x868] sm:$0xff]
    %v463 = vld [vmem:[#allocation5 + $0x870] sm:$0xff]
    %v464 = vld [vmem:[#allocation5 + $0x878] sm:$0xff]
    %v465 = vld [vmem:[#allocation5 + $0x880] sm:$0xff]
    %v466 = vld [vmem:[#allocation5 + $0x888] sm:$0xff]
    %v467 = vld [vmem:[#allocation5 + $0x890] sm:$0xff]
    %v468 = vld [vmem:[#allocation5 + $0x898] sm:$0xff]
    %v469 = vld [vmem:[#allocation5 + $0x8a0] sm:$0xff]
    %v470 = vld [vmem:[#allocation5 + $0x8a8] sm:$0xff]
    %v471 = vld [vmem:[#allocation5 + $0x8b0] sm:$0xff]
    %v472 = vld [vmem:[#allocation5 + $0x8b8] sm:$0xff]
    %v473 = vld [vmem:[#allocation5 + $0x8c0] sm:$0xff]
    %v474 = vld [vmem:[#allocation5 + $0x8c8] sm:$0xff]
    %v475 = vld [vmem:[#allocation5 + $0x8d0] sm:$0xff]
    %v476 = vld [vmem:[#allocation5 + $0x8d8] sm:$0xff]
    %v477 = vld [vmem:[#allocation5 + $0x8e0] sm:$0xff]
    %v478 = vld [vmem:[#allocation5 + $0x8e8] sm:$0xff]
    %v479 = vld [vmem:[#allocation5 + $0x8f0] sm:$0xff]
    %v480 = vld [vmem:[#allocation5 + $0x8f8] sm:$0xff]
    %v481 = vld [vmem:[#allocation5 + $0x900] sm:$0xff]
    %v482 = vld [vmem:[#allocation5 + $0x908] sm:$0xff]
    %v483 = vld [vmem:[#allocation5 + $0x910] sm:$0xff]
    %v484 = vld [vmem:[#allocation5 + $0x918] sm:$0xff]
    %v485 = vld [vmem:[#allocation5 + $0x920] sm:$0xff]
    %v486 = vld [vmem:[#allocation5 + $0x928] sm:$0xff]
    %v487 = vld [vmem:[#allocation5 + $0x930] sm:$0xff]
    %v488 = vld [vmem:[#allocation5 + $0x938] sm:$0xff]
    %v489 = vld [vmem:[#allocation5 + $0x940] sm:$0xff]
    %v490 = vld [vmem:[#allocation5 + $0x948] sm:$0xff]
    %v491 = vld [vmem:[#allocation5 + $0x950] sm:$0xff]
    %v492 = vld [vmem:[#allocation5 + $0x958] sm:$0xff]
    %v493 = vld [vmem:[#allocation5 + $0x960] sm:$0xff]
    %v494 = vld [vmem:[#allocation5 + $0x968] sm:$0xff]
    %v495 = vld [vmem:[#allocation5 + $0x970] sm:$0xff]
    %v496 = vld [vmem:[#allocation5 + $0x978] sm:$0xff]
    %v497 = vld [vmem:[#allocation5 + $0x980] sm:$0xff]
    %v498 = vld [vmem:[#allocation5 + $0x988] sm:$0xff]
    %v499 = vld [vmem:[#allocation5 + $0x990] sm:$0xff]
    %v500 = vld [vmem:[#allocation5 + $0x998] sm:$0xff]
    %v501 = vld [vmem:[#allocation5 + $0x9a0] sm:$0xff]
    %v502 = vld [vmem:[#allocation5 + $0x9a8] sm:$0xff]
    %v503 = vld [vmem:[#allocation5 + $0x9b0] sm:$0xff]
    %v504 = vld [vmem:[#allocation5 + $0x9b8] sm:$0xff]
    %v505 = vld [vmem:[#allocation5 + $0x9c0] sm:$0xff]
    %v506 = vld [vmem:[#allocation5 + $0x9c8] sm:$0xff]
    %v507 = vld [vmem:[#allocation5 + $0x9d0] sm:$0xff]
    %v508 = vld [vmem:[#allocation5 + $0x9d8] sm:$0xff]
    %v509 = vld [vmem:[#allocation5 + $0x9e0] sm:$0xff]
    %v510 = vld [vmem:[#allocation5 + $0x9e8] sm:$0xff]
    %v511 = vld [vmem:[#allocation5 + $0x9f0] sm:$0xff]
    %v512 = vld [vmem:[#allocation5 + $0x9f8] sm:$0xff]
    %v513 = vld [vmem:[#allocation5 + $0xa00] sm:$0xff]
    %v514 = vld [vmem:[#allocation5 + $0xa08] sm:$0xff]
    %v515 = vld [vmem:[#allocation5 + $0xa10] sm:$0xff]
    %v516 = vld [vmem:[#allocation5 + $0xa18] sm:$0xff]
    %v517 = vld [vmem:[#allocation5 + $0xa20] sm:$0xff]
    %v518 = vld [vmem:[#allocation5 + $0xa28] sm:$0xff]
    %v519 = vld [vmem:[#allocation5 + $0xa30] sm:$0xff]
    %v520 = vld [vmem:[#allocation5 + $0xa38] sm:$0xff]
    %v521 = vld [vmem:[#allocation5 + $0xa40] sm:$0xff]
    %v522 = vld [vmem:[#allocation5 + $0xa48] sm:$0xff]
    %v523 = vld [vmem:[#allocation5 + $0xa50] sm:$0xff]
    %v524 = vld [vmem:[#allocation5 + $0xa58] sm:$0xff]
    %v525 = vld [vmem:[#allocation5 + $0xa60] sm:$0xff]
    %v526 = vld [vmem:[#allocation5 + $0xa68] sm:$0xff]
    %v527 = vld [vmem:[#allocation5 + $0xa70] sm:$0xff]
    %v528 = vld [vmem:[#allocation5 + $0xa78] sm:$0xff]
    %v529 = vld [vmem:[#allocation5 + $0xa80] sm:$0xff]
    %v530 = vld [vmem:[#allocation5 + $0xa88] sm:$0xff]
    %v531 = vld [vmem:[#allocation5 + $0xa90] sm:$0xff]
    %v532 = vld [vmem:[#allocation5 + $0xa98] sm:$0xff]
    %v533 = vld [vmem:[#allocation5 + $0xaa0] sm:$0xff]
    %v534 = vld [vmem:[#allocation5 + $0xaa8] sm:$0xff]
    %v535 = vld [vmem:[#allocation5 + $0xab0] sm:$0xff]
    %v536 = vld [vmem:[#allocation5 + $0xab8] sm:$0xff]
    %v537 = vld [vmem:[#allocation5 + $0xac0] sm:$0xff]
    %v538 = vld [vmem:[#allocation5 + $0xac8] sm:$0xff]
    %v539 = vld [vmem:[#allocation5 + $0xad0] sm:$0xff]
    %v540 = vld [vmem:[#allocation5 + $0xad8] sm:$0xff]
    %v541 = vld [vmem:[#allocation5 + $0xae0] sm:$0xff]
    %v542 = vld [vmem:[#allocation5 + $0xae8] sm:$0xff]
    %v543 = vld [vmem:[#allocation5 + $0xaf0] sm:$0xff]
    %v544 = vld [vmem:[#allocation5 + $0xaf8] sm:$0xff]
    %v545 = vld [vmem:[#allocation5 + $0xb00] sm:$0xff]
    %v546 = vld [vmem:[#allocation5 + $0xb08] sm:$0xff]
    %v547 = vld [vmem:[#allocation5 + $0xb10] sm:$0xff]
    %v548 = vld [vmem:[#allocation5 + $0xb18] sm:$0xff]
    %v549 = vld [vmem:[#allocation5 + $0xb20] sm:$0xff]
    %v550 = vld [vmem:[#allocation5 + $0xb28] sm:$0xff]
    %v551 = vld [vmem:[#allocation5 + $0xb30] sm:$0xff]
    %v552 = vld [vmem:[#allocation5 + $0xb38] sm:$0xff]
    %v553 = vld [vmem:[#allocation5 + $0xb40] sm:$0xff]
    %v554 = vld [vmem:[#allocation5 + $0xb48] sm:$0xff]
    %v555 = vld [vmem:[#allocation5 + $0xb50] sm:$0xff]
    %v556 = vld [vmem:[#allocation5 + $0xb58] sm:$0xff]
    %v557 = vld [vmem:[#allocation5 + $0xb60] sm:$0xff]
    %v558 = vld [vmem:[#allocation5 + $0xb68] sm:$0xff]
    %v559 = vld [vmem:[#allocation5 + $0xb70] sm:$0xff]
    %v560 = vld [vmem:[#allocation5 + $0xb78] sm:$0xff]
    %v561 = vld [vmem:[#allocation5 + $0xb80] sm:$0xff]
    %v562 = vld [vmem:[#allocation5 + $0xb88] sm:$0xff]
    %v563 = vld [vmem:[#allocation5 + $0xb90] sm:$0xff]
    %v564 = vld [vmem:[#allocation5 + $0xb98] sm:$0xff]
    %v565 = vld [vmem:[#allocation5 + $0xba0] sm:$0xff]
    %v566 = vld [vmem:[#allocation5 + $0xba8] sm:$0xff]
    %v567 = vld [vmem:[#allocation5 + $0xbb0] sm:$0xff]
    %v568 = vld [vmem:[#allocation5 + $0xbb8] sm:$0xff]
    %v569 = vld [vmem:[#allocation5 + $0xbc0] sm:$0xff]
    %v570 = vld [vmem:[#allocation5 + $0xbc8] sm:$0xff]
    %v571 = vld [vmem:[#allocation5 + $0xbd0] sm:$0xff]
    %v572 = vld [vmem:[#allocation5 + $0xbd8] sm:$0xff]
    %v573 = vld [vmem:[#allocation5 + $0xbe0] sm:$0xff]
    %v574 = vld [vmem:[#allocation5 + $0xbe8] sm:$0xff]
    %v575 = vld [vmem:[#allocation5 + $0xbf0] sm:$0xff]
    %v576 = vld [vmem:[#allocation5 + $0xbf8] sm:$0xff]
    %v577 = vld [vmem:[#allocation5 + $0xc00] sm:$0xff]
    %v578 = vld [vmem:[#allocation5 + $0xc08] sm:$0xff]
    %v579 = vld [vmem:[#allocation5 + $0xc10] sm:$0xff]
    %v580 = vld [vmem:[#allocation5 + $0xc18] sm:$0xff]
    %v581 = vld [vmem:[#allocation5 + $0xc20] sm:$0xff]
    %v582 = vld [vmem:[#allocation5 + $0xc28] sm:$0xff]
    %v583 = vld [vmem:[#allocation5 + $0xc30] sm:$0xff]
    %v584 = vld [vmem:[#allocation5 + $0xc38] sm:$0xff]
    %v585 = vld [vmem:[#allocation5 + $0xc40] sm:$0xff]
    %v586 = vld [vmem:[#allocation5 + $0xc48] sm:$0xff]
    %v587 = vld [vmem:[#allocation5 + $0xc50] sm:$0xff]
    %v588 = vld [vmem:[#allocation5 + $0xc58] sm:$0xff]
    %v589 = vld [vmem:[#allocation5 + $0xc60] sm:$0xff]
    %v590 = vld [vmem:[#allocation5 + $0xc68] sm:$0xff]
    %v591 = vld [vmem:[#allocation5 + $0xc70] sm:$0xff]
    %v592 = vld [vmem:[#allocation5 + $0xc78] sm:$0xff]
    %v593 = vld [vmem:[#allocation5 + $0xc80] sm:$0xff]
    %v594 = vld [vmem:[#allocation5 + $0xc88] sm:$0xff]
    %v595 = vld [vmem:[#allocation5 + $0xc90] sm:$0xff]
    %v596 = vld [vmem:[#allocation5 + $0xc98] sm:$0xff]
    %v597 = vld [vmem:[#allocation5 + $0xca0] sm:$0xff]
    %v598 = vld [vmem:[#allocation5 + $0xca8] sm:$0xff]
    %v599 = vld [vmem:[#allocation5 + $0xcb0] sm:$0xff]
    %v600 = vld [vmem:[#allocation5 + $0xcb8] sm:$0xff]
    %v601 = vld [vmem:[#allocation5 + $0xcc0] sm:$0xff]
    %v602 = vld [vmem:[#allocation5 + $0xcc8] sm:$0xff]
    %v603 = vld [vmem:[#allocation5 + $0xcd0] sm:$0xff]
    %v604 = vld [vmem:[#allocation5 + $0xcd8] sm:$0xff]
    %v605 = vld [vmem:[#allocation5 + $0xce0] sm:$0xff]
    %v606 = vld [vmem:[#allocation5 + $0xce8] sm:$0xff]
    %v607 = vld [vmem:[#allocation5 + $0xcf0] sm:$0xff]
    %v608 = vld [vmem:[#allocation5 + $0xcf8] sm:$0xff]
    %v609 = vld [vmem:[#allocation5 + $0xd00] sm:$0xff]
    %v610 = vld [vmem:[#allocation5 + $0xd08] sm:$0xff]
    %v611 = vld [vmem:[#allocation5 + $0xd10] sm:$0xff]
    %v612 = vld [vmem:[#allocation5 + $0xd18] sm:$0xff]
    %v613 = vld [vmem:[#allocation5 + $0xd20] sm:$0xff]
    %v614 = vld [vmem:[#allocation5 + $0xd28] sm:$0xff]
    %v615 = vld [vmem:[#allocation5 + $0xd30] sm:$0xff]
    %v616 = vld [vmem:[#allocation5 + $0xd38] sm:$0xff]
    %v617 = vld [vmem:[#allocation5 + $0xd40] sm:$0xff]
    %v618 = vld [vmem:[#allocation5 + $0xd48] sm:$0xff]
    %v619 = vld [vmem:[#allocation5 + $0xd50] sm:$0xff]
    %v620 = vld [vmem:[#allocation5 + $0xd58] sm:$0xff]
    %v621 = vld [vmem:[#allocation5 + $0xd60] sm:$0xff]
    %v622 = vld [vmem:[#allocation5 + $0xd68] sm:$0xff]
    %v623 = vld [vmem:[#allocation5 + $0xd70] sm:$0xff]
    %v624 = vld [vmem:[#allocation5 + $0xd78] sm:$0xff]
    %v625 = vld [vmem:[#allocation5 + $0xd80] sm:$0xff]
    %v626 = vld [vmem:[#allocation5 + $0xd88] sm:$0xff]
    %v627 = vld [vmem:[#allocation5 + $0xd90] sm:$0xff]
    %v628 = vld [vmem:[#allocation5 + $0xd98] sm:$0xff]
    %v629 = vld [vmem:[#allocation5 + $0xda0] sm:$0xff]
    %v630 = vld [vmem:[#allocation5 + $0xda8] sm:$0xff]
    %v631 = vld [vmem:[#allocation5 + $0xdb0] sm:$0xff]
    %v632 = vld [vmem:[#allocation5 + $0xdb8] sm:$0xff]
    %v633 = vld [vmem:[#allocation5 + $0xdc0] sm:$0xff]
    %v634 = vld [vmem:[#allocation5 + $0xdc8] sm:$0xff]
    %v635 = vld [vmem:[#allocation5 + $0xdd0] sm:$0xff]
    %v636 = vld [vmem:[#allocation5 + $0xdd8] sm:$0xff]
    %v637 = vld [vmem:[#allocation5 + $0xde0] sm:$0xff]
    %v638 = vld [vmem:[#allocation5 + $0xde8] sm:$0xff]
    %v639 = vld [vmem:[#allocation5 + $0xdf0] sm:$0xff]
    %v640 = vld [vmem:[#allocation5 + $0xdf8] sm:$0xff]
    %v641 = vld [vmem:[#allocation5 + $0xe00] sm:$0xff]
    %v642 = vld [vmem:[#allocation5 + $0xe08] sm:$0xff]
    %v643 = vld [vmem:[#allocation5 + $0xe10] sm:$0xff]
    %v644 = vld [vmem:[#allocation5 + $0xe18] sm:$0xff]
    %v645 = vld [vmem:[#allocation5 + $0xe20] sm:$0xff]
    %v646 = vld [vmem:[#allocation5 + $0xe28] sm:$0xff]
    %v647 = vld [vmem:[#allocation5 + $0xe30] sm:$0xff]
    %v648 = vld [vmem:[#allocation5 + $0xe38] sm:$0xff]
    %v649 = vld [vmem:[#allocation5 + $0xe40] sm:$0xff]
    %v650 = vld [vmem:[#allocation5 + $0xe48] sm:$0xff]
    %v651 = vld [vmem:[#allocation5 + $0xe50] sm:$0xff]
    %v652 = vld [vmem:[#allocation5 + $0xe58] sm:$0xff]
    %v653 = vld [vmem:[#allocation5 + $0xe60] sm:$0xff]
    %v654 = vld [vmem:[#allocation5 + $0xe68] sm:$0xff]
    %v655 = vld [vmem:[#allocation5 + $0xe70] sm:$0xff]
    %v656 = vld [vmem:[#allocation5 + $0xe78] sm:$0xff]
    %v657 = vld [vmem:[#allocation5 + $0xe80] sm:$0xff]
    %v658 = vld [vmem:[#allocation5 + $0xe88] sm:$0xff]
    %v659 = vld [vmem:[#allocation5 + $0xe90] sm:$0xff]
    %v660 = vld [vmem:[#allocation5 + $0xe98] sm:$0xff]
    %v661 = vld [vmem:[#allocation5 + $0xea0] sm:$0xff]
    %v662 = vld [vmem:[#allocation5 + $0xea8] sm:$0xff]
    %v663 = vld [vmem:[#allocation5 + $0xeb0] sm:$0xff]
    %v664 = vld [vmem:[#allocation5 + $0xeb8] sm:$0xff]
    %v665 = vld [vmem:[#allocation5 + $0xec0] sm:$0xff]
    %v666 = vld [vmem:[#allocation5 + $0xec8] sm:$0xff]
    %v667 = vld [vmem:[#allocation5 + $0xed0] sm:$0xff]
    %v668 = vld [vmem:[#allocation5 + $0xed8] sm:$0xff]
    %v669 = vld [vmem:[#allocation5 + $0xee0] sm:$0xff]
    %v670 = vld [vmem:[#allocation5 + $0xee8] sm:$0xff]
    %v671 = vld [vmem:[#allocation5 + $0xef0] sm:$0xff]
    %v672 = vld [vmem:[#allocation5 + $0xef8] sm:$0xff]
    %v673 = vld [vmem:[#allocation5 + $0xf00] sm:$0xff]
    %v674 = vld [vmem:[#allocation5 + $0xf08] sm:$0xff]
    %v675 = vld [vmem:[#allocation5 + $0xf10] sm:$0xff]
    %v676 = vld [vmem:[#allocation5 + $0xf18] sm:$0xff]
    %v677 = vld [vmem:[#allocation5 + $0xf20] sm:$0xff]
    %v678 = vld [vmem:[#allocation5 + $0xf28] sm:$0xff]
    %v679 = vld [vmem:[#allocation5 + $0xf30] sm:$0xff]
    %v680 = vld [vmem:[#allocation5 + $0xf38] sm:$0xff]
    %v681 = vld [vmem:[#allocation5 + $0xf40] sm:$0xff]
    %v682 = vld [vmem:[#allocation5 + $0xf48] sm:$0xff]
    %v683 = vld [vmem:[#allocation5 + $0xf50] sm:$0xff]
    %v684 = vld [vmem:[#allocation5 + $0xf58] sm:$0xff]
    %v685 = vld [vmem:[#allocation5 + $0xf60] sm:$0xff]
    %v686 = vld [vmem:[#allocation5 + $0xf68] sm:$0xff]
    %v687 = vld [vmem:[#allocation5 + $0xf70] sm:$0xff]
    %v688 = vld [vmem:[#allocation5 + $0xf78] sm:$0xff]
    %v689 = vld [vmem:[#allocation5 + $0xf80] sm:$0xff]
    %v690 = vld [vmem:[#allocation5 + $0xf88] sm:$0xff]
    %v691 = vld [vmem:[#allocation5 + $0xf90] sm:$0xff]
    %v692 = vld [vmem:[#allocation5 + $0xf98] sm:$0xff]
    %v693 = vld [vmem:[#allocation5 + $0xfa0] sm:$0xff]
    %v694 = vld [vmem:[#allocation5 + $0xfa8] sm:$0xff]
    %v695 = vld [vmem:[#allocation5 + $0xfb0] sm:$0xff]
    %v696 = vld [vmem:[#allocation5 + $0xfb8] sm:$0xff]
    %v697 = vld [vmem:[#allocation5 + $0xfc0] sm:$0xff]
    %v698 = vld [vmem:[#allocation5 + $0xfc8] sm:$0xff]
    %v699 = vld [vmem:[#allocation5 + $0xfd0] sm:$0xff]
    %v700 = vld [vmem:[#allocation5 + $0xfd8] sm:$0xff]
    %v701 = vld [vmem:[#allocation5 + $0xfe0] sm:$0xff]
    %v702 = vld [vmem:[#allocation5 + $0xfe8] sm:$0xff]
    %v703 = vld [vmem:[#allocation5 + $0xff0] sm:$0xff]
    %v704 = vld [vmem:[#allocation5 + $0xff8] sm:$0xff]
    %v705 = vld [vmem:[#allocation5 + $0x1000] sm:$0xff]
    %v706 = vld [vmem:[#allocation5 + $0x1008] sm:$0xff]
    %v707 = vld [vmem:[#allocation5 + $0x1010] sm:$0xff]
    %v708 = vld [vmem:[#allocation5 + $0x1018] sm:$0xff]
    %v709 = vld [vmem:[#allocation5 + $0x1020] sm:$0xff]
    %v710 = vld [vmem:[#allocation5 + $0x1028] sm:$0xff]
    %v711 = vld [vmem:[#allocation5 + $0x1030] sm:$0xff]
    %v712 = vld [vmem:[#allocation5 + $0x1038] sm:$0xff]
    %v713 = vld [vmem:[#allocation5 + $0x1040] sm:$0xff]
    %v714 = vld [vmem:[#allocation5 + $0x1048] sm:$0xff]
    %v715 = vld [vmem:[#allocation5 + $0x1050] sm:$0xff]
    %v716 = vld [vmem:[#allocation5 + $0x1058] sm:$0xff]
    %v717 = vld [vmem:[#allocation5 + $0x1060] sm:$0xff]
    %v718 = vld [vmem:[#allocation5 + $0x1068] sm:$0xff]
    %v719 = vld [vmem:[#allocation5 + $0x1070] sm:$0xff]
    %v720 = vld [vmem:[#allocation5 + $0x1078] sm:$0xff]
    %v721 = vld [vmem:[#allocation5 + $0x1080] sm:$0xff]
    %v722 = vld [vmem:[#allocation5 + $0x1088] sm:$0xff]
    %v723 = vld [vmem:[#allocation5 + $0x1090] sm:$0xff]
    %v724 = vld [vmem:[#allocation5 + $0x1098] sm:$0xff]
    %v725 = vld [vmem:[#allocation5 + $0x10a0] sm:$0xff]
    %v726 = vld [vmem:[#allocation5 + $0x10a8] sm:$0xff]
    %v727 = vld [vmem:[#allocation5 + $0x10b0] sm:$0xff]
    %v728 = vld [vmem:[#allocation5 + $0x10b8] sm:$0xff]
    %v729 = vld [vmem:[#allocation5 + $0x10c0] sm:$0xff]
    %v730 = vld [vmem:[#allocation5 + $0x10c8] sm:$0xff]
    %v731 = vld [vmem:[#allocation5 + $0x10d0] sm:$0xff]
    %v732 = vld [vmem:[#allocation5 + $0x10d8] sm:$0xff]
    %v733 = vld [vmem:[#allocation5 + $0x10e0] sm:$0xff]
    %v734 = vld [vmem:[#allocation5 + $0x10e8] sm:$0xff]
    %v735 = vld [vmem:[#allocation5 + $0x10f0] sm:$0xff]
    %v736 = vld [vmem:[#allocation5 + $0x10f8] sm:$0xff]
    %v737 = vld [vmem:[#allocation5 + $0x1100] sm:$0xff]
    %v738 = vld [vmem:[#allocation5 + $0x1108] sm:$0xff]
    %v739 = vld [vmem:[#allocation5 + $0x1110] sm:$0xff]
    %v740 = vld [vmem:[#allocation5 + $0x1118] sm:$0xff]
    %v741 = vld [vmem:[#allocation5 + $0x1120] sm:$0xff]
    %v742 = vld [vmem:[#allocation5 + $0x1128] sm:$0xff]
    %v743 = vld [vmem:[#allocation5 + $0x1130] sm:$0xff]
    %v744 = vld [vmem:[#allocation5 + $0x1138] sm:$0xff]
    %v745 = vld [vmem:[#allocation5 + $0x1140] sm:$0xff]
    %v746 = vld [vmem:[#allocation5 + $0x1148] sm:$0xff]
    %v747 = vld [vmem:[#allocation5 + $0x1150] sm:$0xff]
    %v748 = vld [vmem:[#allocation5 + $0x1158] sm:$0xff]
    %v749 = vld [vmem:[#allocation5 + $0x1160] sm:$0xff]
    %v750 = vld [vmem:[#allocation5 + $0x1168] sm:$0xff]
    %v751 = vld [vmem:[#allocation5 + $0x1170] sm:$0xff]
    %v752 = vld [vmem:[#allocation5 + $0x1178] sm:$0xff]
    %v753 = vld [vmem:[#allocation5 + $0x1180] sm:$0xff]
    %v754 = vld [vmem:[#allocation5 + $0x1188] sm:$0xff]
    %v755 = vld [vmem:[#allocation5 + $0x1190] sm:$0xff]
    %v756 = vld [vmem:[#allocation5 + $0x1198] sm:$0xff]
    %v757 = vld [vmem:[#allocation5 + $0x11a0] sm:$0xff]
    %v758 = vld [vmem:[#allocation5 + $0x11a8] sm:$0xff]
    %v759 = vld [vmem:[#allocation5 + $0x11b0] sm:$0xff]
    %v760 = vld [vmem:[#allocation5 + $0x11b8] sm:$0xff]
    %v761 = vld [vmem:[#allocation5 + $0x11c0] sm:$0xff]
    %v762 = vld [vmem:[#allocation5 + $0x11c8] sm:$0xff]
    %v763 = vld [vmem:[#allocation5 + $0x11d0] sm:$0xff]
    %v764 = vld [vmem:[#allocation5 + $0x11d8] sm:$0xff]
    %v765 = vld [vmem:[#allocation5 + $0x11e0] sm:$0xff]
    %v766 = vld [vmem:[#allocation5 + $0x11e8] sm:$0xff]
    %v767 = vld [vmem:[#allocation5 + $0x11f0] sm:$0xff]
    %v768 = vld [vmem:[#allocation5 + $0x11f8] sm:$0xff]
    %v769 = vld [vmem:[#allocation5 + $0x1200] sm:$0xff]
    %v770 = vld [vmem:[#allocation5 + $0x1208] sm:$0xff]
    %v771 = vld [vmem:[#allocation5 + $0x1210] sm:$0xff]
    %v772 = vld [vmem:[#allocation5 + $0x1218] sm:$0xff]
    %v773 = vld [vmem:[#allocation5 + $0x1220] sm:$0xff]
    %v774 = vld [vmem:[#allocation5 + $0x1228] sm:$0xff]
    %v775 = vld [vmem:[#allocation5 + $0x1230] sm:$0xff]
    %v776 = vld [vmem:[#allocation5 + $0x1238] sm:$0xff]
    %v777 = vld [vmem:[#allocation5 + $0x1240] sm:$0xff]
    %v778 = vld [vmem:[#allocation5 + $0x1248] sm:$0xff]
    %v779 = vld [vmem:[#allocation5 + $0x1250] sm:$0xff]
    %v780 = vld [vmem:[#allocation5 + $0x1258] sm:$0xff]
    %v781 = vld [vmem:[#allocation5 + $0x1260] sm:$0xff]
    %v782 = vld [vmem:[#allocation5 + $0x1268] sm:$0xff]
    %v783 = vld [vmem:[#allocation5 + $0x1270] sm:$0xff]
    %v784 = vld [vmem:[#allocation5 + $0x1278] sm:$0xff]
    %v785 = vld [vmem:[#allocation5 + $0x1280] sm:$0xff]
    %v786 = vld [vmem:[#allocation5 + $0x1288] sm:$0xff]
    %v787 = vld [vmem:[#allocation5 + $0x1290] sm:$0xff]
    %v788 = vld [vmem:[#allocation5 + $0x1298] sm:$0xff]
    %v789 = vld [vmem:[#allocation5 + $0x12a0] sm:$0xff]
    %v790 = vld [vmem:[#allocation5 + $0x12a8] sm:$0xff]
    %v791 = vld [vmem:[#allocation5 + $0x12b0] sm:$0xff]
    %v792 = vld [vmem:[#allocation5 + $0x12b8] sm:$0xff]
    %v793 = vld [vmem:[#allocation5 + $0x12c0] sm:$0xff]
    %v794 = vld [vmem:[#allocation5 + $0x12c8] sm:$0xff]
    %v795 = vld [vmem:[#allocation5 + $0x12d0] sm:$0xff]
    %v796 = vld [vmem:[#allocation5 + $0x12d8] sm:$0xff]
    %v797 = vld [vmem:[#allocation5 + $0x12e0] sm:$0xff]
    %v798 = vld [vmem:[#allocation5 + $0x12e8] sm:$0xff]
    %v799 = vld [vmem:[#allocation5 + $0x12f0] sm:$0xff]
    %v800 = vld [vmem:[#allocation5 + $0x12f8] sm:$0xff]
    %v801 = vld [vmem:[#allocation5 + $0x1300] sm:$0xff]
    %v802 = vld [vmem:[#allocation5 + $0x1308] sm:$0xff]
    %v803 = vld [vmem:[#allocation5 + $0x1310] sm:$0xff]
    %v804 = vld [vmem:[#allocation5 + $0x1318] sm:$0xff]
    %v805 = vld [vmem:[#allocation5 + $0x1320] sm:$0xff]
    %v806 = vld [vmem:[#allocation5 + $0x1328] sm:$0xff]
    %v807 = vld [vmem:[#allocation5 + $0x1330] sm:$0xff]
    %v808 = vld [vmem:[#allocation5 + $0x1338] sm:$0xff]
    %v809 = vld [vmem:[#allocation5 + $0x1340] sm:$0xff]
    %v810 = vld [vmem:[#allocation5 + $0x1348] sm:$0xff]
    %v811 = vld [vmem:[#allocation5 + $0x1350] sm:$0xff]
    %v812 = vld [vmem:[#allocation5 + $0x1358] sm:$0xff]
    %v813 = vld [vmem:[#allocation5 + $0x1360] sm:$0xff]
    %v814 = vld [vmem:[#allocation5 + $0x1368] sm:$0xff]
    %v815 = vld [vmem:[#allocation5 + $0x1370] sm:$0xff]
    %v816 = vld [vmem:[#allocation5 + $0x1378] sm:$0xff]
    %v817 = vld [vmem:[#allocation5 + $0x1380] sm:$0xff]
    %v818 = vld [vmem:[#allocation5 + $0x1388] sm:$0xff]
    %v819 = vld [vmem:[#allocation5 + $0x1390] sm:$0xff]
    %v820 = vld [vmem:[#allocation5 + $0x1398] sm:$0xff]
    %v821 = vld [vmem:[#allocation5 + $0x13a0] sm:$0xff]
    %v822 = vld [vmem:[#allocation5 + $0x13a8] sm:$0xff]
    %v823 = vld [vmem:[#allocation5 + $0x13b0] sm:$0xff]
    %v824 = vld [vmem:[#allocation5 + $0x13b8] sm:$0xff]
    %v825 = vld [vmem:[#allocation5 + $0x13c0] sm:$0xff]
    %v826 = vld [vmem:[#allocation5 + $0x13c8] sm:$0xff]
    %v827 = vld [vmem:[#allocation5 + $0x13d0] sm:$0xff]
    %v828 = vld [vmem:[#allocation5 + $0x13d8] sm:$0xff]
    %v829 = vld [vmem:[#allocation5 + $0x13e0] sm:$0xff]
    %v830 = vld [vmem:[#allocation5 + $0x13e8] sm:$0xff]
    %v831 = vld [vmem:[#allocation5 + $0x13f0] sm:$0xff]
    %v832 = vld [vmem:[#allocation5 + $0x13f8] sm:$0xff]
    %v833 = vld [vmem:[#allocation5 + $0x1400] sm:$0xff]
    %v834 = vld [vmem:[#allocation5 + $0x1408] sm:$0xff]
    %v835 = vld [vmem:[#allocation5 + $0x1410] sm:$0xff]
    %v836 = vld [vmem:[#allocation5 + $0x1418] sm:$0xff]
    %v837 = vld [vmem:[#allocation5 + $0x1420] sm:$0xff]
    %v838 = vld [vmem:[#allocation5 + $0x1428] sm:$0xff]
    %v839 = vld [vmem:[#allocation5 + $0x1430] sm:$0xff]
    %v840 = vld [vmem:[#allocation5 + $0x1438] sm:$0xff]
    %v841 = vld [vmem:[#allocation5 + $0x1440] sm:$0xff]
    %v842 = vld [vmem:[#allocation5 + $0x1448] sm:$0xff]
    %v843 = vld [vmem:[#allocation5 + $0x1450] sm:$0xff]
    %v844 = vld [vmem:[#allocation5 + $0x1458] sm:$0xff]
    %v845 = vld [vmem:[#allocation5 + $0x1460] sm:$0xff]
    %v846 = vld [vmem:[#allocation5 + $0x1468] sm:$0xff]
    %v847 = vld [vmem:[#allocation5 + $0x1470] sm:$0xff]
    %v848 = vld [vmem:[#allocation5 + $0x1478] sm:$0xff]
    %v849 = vld [vmem:[#allocation5 + $0x1480] sm:$0xff]
    %v850 = vld [vmem:[#allocation5 + $0x1488] sm:$0xff]
    %v851 = vld [vmem:[#allocation5 + $0x1490] sm:$0xff]
    %v852 = vld [vmem:[#allocation5 + $0x1498] sm:$0xff]
    %v853 = vld [vmem:[#allocation5 + $0x14a0] sm:$0xff]
    %v854 = vld [vmem:[#allocation5 + $0x14a8] sm:$0xff]
    %v855 = vld [vmem:[#allocation5 + $0x14b0] sm:$0xff]
    %v856 = vld [vmem:[#allocation5 + $0x14b8] sm:$0xff]
    %v857 = vld [vmem:[#allocation5 + $0x14c0] sm:$0xff]
    %v858 = vld [vmem:[#allocation5 + $0x14c8] sm:$0xff]
    %v859 = vld [vmem:[#allocation5 + $0x14d0] sm:$0xff]
    %v860 = vld [vmem:[#allocation5 + $0x14d8] sm:$0xff]
    %v861 = vld [vmem:[#allocation5 + $0x14e0] sm:$0xff]
    %v862 = vld [vmem:[#allocation5 + $0x14e8] sm:$0xff]
    %v863 = vld [vmem:[#allocation5 + $0x14f0] sm:$0xff]
    %v864 = vld [vmem:[#allocation5 + $0x14f8] sm:$0xff]
    %v865 = vld [vmem:[#allocation5 + $0x1500] sm:$0xff]
    %v866 = vld [vmem:[#allocation5 + $0x1508] sm:$0xff]
    %v867 = vld [vmem:[#allocation5 + $0x1510] sm:$0xff]
    %v868 = vld [vmem:[#allocation5 + $0x1518] sm:$0xff]
    %v869 = vld [vmem:[#allocation5 + $0x1520] sm:$0xff]
    %v870 = vld [vmem:[#allocation5 + $0x1528] sm:$0xff]
    %v871 = vld [vmem:[#allocation5 + $0x1530] sm:$0xff]
    %v872 = vld [vmem:[#allocation5 + $0x1538] sm:$0xff]
    %v873 = vld [vmem:[#allocation5 + $0x1540] sm:$0xff]
    %v874 = vld [vmem:[#allocation5 + $0x1548] sm:$0xff]
    %v875 = vld [vmem:[#allocation5 + $0x1550] sm:$0xff]
    %v876 = vld [vmem:[#allocation5 + $0x1558] sm:$0xff]
    %v877 = vld [vmem:[#allocation5 + $0x1560] sm:$0xff]
    %v878 = vld [vmem:[#allocation5 + $0x1568] sm:$0xff]
    %v879 = vld [vmem:[#allocation5 + $0x1570] sm:$0xff]
    %v880 = vld [vmem:[#allocation5 + $0x1578] sm:$0xff]
    %v881 = vld [vmem:[#allocation5 + $0x1580] sm:$0xff]
    %v882 = vld [vmem:[#allocation5 + $0x1588] sm:$0xff]
    %v883 = vld [vmem:[#allocation5 + $0x1590] sm:$0xff]
    %v884 = vld [vmem:[#allocation5 + $0x1598] sm:$0xff]
    %v885 = vld [vmem:[#allocation5 + $0x15a0] sm:$0xff]
    %v886 = vld [vmem:[#allocation5 + $0x15a8] sm:$0xff]
    %v887 = vld [vmem:[#allocation5 + $0x15b0] sm:$0xff]
    %v888 = vld [vmem:[#allocation5 + $0x15b8] sm:$0xff]
    %v889 = vld [vmem:[#allocation5 + $0x15c0] sm:$0xff]
    %v890 = vld [vmem:[#allocation5 + $0x15c8] sm:$0xff]
    %v891 = vld [vmem:[#allocation5 + $0x15d0] sm:$0xff]
    %v892 = vld [vmem:[#allocation5 + $0x15d8] sm:$0xff]
    %v893 = vld [vmem:[#allocation5 + $0x15e0] sm:$0xff]
    %v894 = vld [vmem:[#allocation5 + $0x15e8] sm:$0xff]
    %v895 = vld [vmem:[#allocation5 + $0x15f0] sm:$0xff]
    %v896 = vld [vmem:[#allocation5 + $0x15f8] sm:$0xff]
    %v897 = vld [vmem:[#allocation5 + $0x1600] sm:$0xff]
    %v898 = vld [vmem:[#allocation5 + $0x1608] sm:$0xff]
    %v899 = vld [vmem:[#allocation5 + $0x1610] sm:$0xff]
    %v900 = vld [vmem:[#allocation5 + $0x1618] sm:$0xff]
    %v901 = vld [vmem:[#allocation5 + $0x1620] sm:$0xff]
    %v902 = vld [vmem:[#allocation5 + $0x1628] sm:$0xff]
    %v903 = vld [vmem:[#allocation5 + $0x1630] sm:$0xff]
    %v904 = vld [vmem:[#allocation5 + $0x1638] sm:$0xff]
    %v905 = vld [vmem:[#allocation5 + $0x1640] sm:$0xff]
    %v906 = vld [vmem:[#allocation5 + $0x1648] sm:$0xff]
    %v907 = vld [vmem:[#allocation5 + $0x1650] sm:$0xff]
    %v908 = vld [vmem:[#allocation5 + $0x1658] sm:$0xff]
    %v909 = vld [vmem:[#allocation5 + $0x1660] sm:$0xff]
    %v910 = vld [vmem:[#allocation5 + $0x1668] sm:$0xff]
    %v911 = vld [vmem:[#allocation5 + $0x1670] sm:$0xff]
    %v912 = vld [vmem:[#allocation5 + $0x1678] sm:$0xff]
    %v913 = vld [vmem:[#allocation5 + $0x1680] sm:$0xff]
    %v914 = vld [vmem:[#allocation5 + $0x1688] sm:$0xff]
    %v915 = vld [vmem:[#allocation5 + $0x1690] sm:$0xff]
    %v916 = vld [vmem:[#allocation5 + $0x1698] sm:$0xff]
    %v917 = vld [vmem:[#allocation5 + $0x16a0] sm:$0xff]
    %v918 = vld [vmem:[#allocation5 + $0x16a8] sm:$0xff]
    %v919 = vld [vmem:[#allocation5 + $0x16b0] sm:$0xff]
    %v920 = vld [vmem:[#allocation5 + $0x16b8] sm:$0xff]
    %v921 = vld [vmem:[#allocation5 + $0x16c0] sm:$0xff]
    %v922 = vld [vmem:[#allocation5 + $0x16c8] sm:$0xff]
    %v923 = vld [vmem:[#allocation5 + $0x16d0] sm:$0xff]
    %v924 = vld [vmem:[#allocation5 + $0x16d8] sm:$0xff]
    %v925 = vld [vmem:[#allocation5 + $0x16e0] sm:$0xff]
    %v926 = vld [vmem:[#allocation5 + $0x16e8] sm:$0xff]
    %v927 = vld [vmem:[#allocation5 + $0x16f0] sm:$0xff]
    %v928 = vld [vmem:[#allocation5 + $0x16f8] sm:$0xff]
    %v929 = vld [vmem:[#allocation5 + $0x1700] sm:$0xff]
    %v930 = vld [vmem:[#allocation5 + $0x1708] sm:$0xff]
    %v931 = vld [vmem:[#allocation5 + $0x1710] sm:$0xff]
    %v932 = vld [vmem:[#allocation5 + $0x1718] sm:$0xff]
    %v933 = vld [vmem:[#allocation5 + $0x1720] sm:$0xff]
    %v934 = vld [vmem:[#allocation5 + $0x1728] sm:$0xff]
    %v935 = vld [vmem:[#allocation5 + $0x1730] sm:$0xff]
    %v936 = vld [vmem:[#allocation5 + $0x1738] sm:$0xff]
    %v937 = vld [vmem:[#allocation5 + $0x1740] sm:$0xff]
    %v938 = vld [vmem:[#allocation5 + $0x1748] sm:$0xff]
    %v939 = vld [vmem:[#allocation5 + $0x1750] sm:$0xff]
    %v940 = vld [vmem:[#allocation5 + $0x1758] sm:$0xff]
    %v941 = vld [vmem:[#allocation5 + $0x1760] sm:$0xff]
    %v942 = vld [vmem:[#allocation5 + $0x1768] sm:$0xff]
    %v943 = vld [vmem:[#allocation5 + $0x1770] sm:$0xff]
    %v944 = vld [vmem:[#allocation5 + $0x1778] sm:$0xff]
    %v945 = vld [vmem:[#allocation5 + $0x1780] sm:$0xff]
    %v946 = vld [vmem:[#allocation5 + $0x1788] sm:$0xff]
    %v947 = vld [vmem:[#allocation5 + $0x1790] sm:$0xff]
    %v948 = vld [vmem:[#allocation5 + $0x1798] sm:$0xff]
    %v949 = vld [vmem:[#allocation5 + $0x17a0] sm:$0xff]
    %v950 = vld [vmem:[#allocation5 + $0x17a8] sm:$0xff]
    %v951 = vld [vmem:[#allocation5 + $0x17b0] sm:$0xff]
    %v952 = vld [vmem:[#allocation5 + $0x17b8] sm:$0xff]
    %v953 = vld [vmem:[#allocation5 + $0x17c0] sm:$0xff]
    %v954 = vld [vmem:[#allocation5 + $0x17c8] sm:$0xff]
    %v955 = vld [vmem:[#allocation5 + $0x17d0] sm:$0xff]
    %v956 = vld [vmem:[#allocation5 + $0x17d8] sm:$0xff]
    %v957 = vld [vmem:[#allocation5 + $0x17e0] sm:$0xff]
    %v958 = vld [vmem:[#allocation5 + $0x17e8] sm:$0xff]
    %v959 = vld [vmem:[#allocation5 + $0x17f0] sm:$0xff]
    %v960 = vld [vmem:[#allocation5 + $0x17f8] sm:$0xff]
    %v961 = vld [vmem:[#allocation5 + $0x1800] sm:$0xff]
    %v962 = vld [vmem:[#allocation5 + $0x1808] sm:$0xff]
    %v963 = vld [vmem:[#allocation5 + $0x1810] sm:$0xff]
    %v964 = vld [vmem:[#allocation5 + $0x1818] sm:$0xff]
    %v965 = vld [vmem:[#allocation5 + $0x1820] sm:$0xff]
    %v966 = vld [vmem:[#allocation5 + $0x1828] sm:$0xff]
    %v967 = vld [vmem:[#allocation5 + $0x1830] sm:$0xff]
    %v968 = vld [vmem:[#allocation5 + $0x1838] sm:$0xff]
    %v969 = vld [vmem:[#allocation5 + $0x1840] sm:$0xff]
    %v970 = vld [vmem:[#allocation5 + $0x1848] sm:$0xff]
    %v971 = vld [vmem:[#allocation5 + $0x1850] sm:$0xff]
    %v972 = vld [vmem:[#allocation5 + $0x1858] sm:$0xff]
    %v973 = vld [vmem:[#allocation5 + $0x1860] sm:$0xff]
    %v974 = vld [vmem:[#allocation5 + $0x1868] sm:$0xff]
    %v975 = vld [vmem:[#allocation5 + $0x1870] sm:$0xff]
    %v976 = vld [vmem:[#allocation5 + $0x1878] sm:$0xff]
    %v977 = vld [vmem:[#allocation5 + $0x1880] sm:$0xff]
    %v978 = vld [vmem:[#allocation5 + $0x1888] sm:$0xff]
    %v979 = vld [vmem:[#allocation5 + $0x1890] sm:$0xff]
    %v980 = vld [vmem:[#allocation5 + $0x1898] sm:$0xff]
    %v981 = vld [vmem:[#allocation5 + $0x18a0] sm:$0xff]
    %v982 = vld [vmem:[#allocation5 + $0x18a8] sm:$0xff]
    %v983 = vld [vmem:[#allocation5 + $0x18b0] sm:$0xff]
    %v984 = vld [vmem:[#allocation5 + $0x18b8] sm:$0xff]
    %v985 = vld [vmem:[#allocation5 + $0x18c0] sm:$0xff]
    %v986 = vld [vmem:[#allocation5 + $0x18c8] sm:$0xff]
    %v987 = vld [vmem:[#allocation5 + $0x18d0] sm:$0xff]
    %v988 = vld [vmem:[#allocation5 + $0x18d8] sm:$0xff]
    %v989 = vld [vmem:[#allocation5 + $0x18e0] sm:$0xff]
    %v990 = vld [vmem:[#allocation5 + $0x18e8] sm:$0xff]
    %v991 = vld [vmem:[#allocation5 + $0x18f0] sm:$0xff]
    %v992 = vld [vmem:[#allocation5 + $0x18f8] sm:$0xff]
    %v993 = vld [vmem:[#allocation5 + $0x1900] sm:$0xff]
    %v994 = vld [vmem:[#allocation5 + $0x1908] sm:$0xff]
    %v995 = vld [vmem:[#allocation5 + $0x1910] sm:$0xff]
    %v996 = vld [vmem:[#allocation5 + $0x1918] sm:$0xff]
    %v997 = vld [vmem:[#allocation5 + $0x1920] sm:$0xff]
    %v998 = vld [vmem:[#allocation5 + $0x1928] sm:$0xff]
    %v999 = vld [vmem:[#allocation5 + $0x1930] sm:$0xff]
    %v1000 = vld [vmem:[#allocation5 + $0x1938] sm:$0xff]
    %v1001 = vld [vmem:[#allocation5 + $0x1940] sm:$0xff]
    %v1002 = vld [vmem:[#allocation5 + $0x1948] sm:$0xff]
    %v1003 = vld [vmem:[#allocation5 + $0x1950] sm:$0xff]
    %v1004 = vld [vmem:[#allocation5 + $0x1958] sm:$0xff]
    %v1005 = vld [vmem:[#allocation5 + $0x1960] sm:$0xff]
    %v1006 = vld [vmem:[#allocation5 + $0x1968] sm:$0xff]
    %v1007 = vld [vmem:[#allocation5 + $0x1970] sm:$0xff]
    %v1008 = vld [vmem:[#allocation5 + $0x1978] sm:$0xff]
    %v1009 = vld [vmem:[#allocation5 + $0x1980] sm:$0xff]
    %v1010 = vld [vmem:[#allocation5 + $0x1988] sm:$0xff]
    %v1011 = vld [vmem:[#allocation5 + $0x1990] sm:$0xff]
    %v1012 = vld [vmem:[#allocation5 + $0x1998] sm:$0xff]
    %v1013 = vld [vmem:[#allocation5 + $0x19a0] sm:$0xff]
    %v1014 = vld [vmem:[#allocation5 + $0x19a8] sm:$0xff]
    %v1015 = vld [vmem:[#allocation5 + $0x19b0] sm:$0xff]
    %v1016 = vld [vmem:[#allocation5 + $0x19b8] sm:$0xff]
    %v1017 = vld [vmem:[#allocation5 + $0x19c0] sm:$0xff]
    %v1018 = vld [vmem:[#allocation5 + $0x19c8] sm:$0xff]
    %v1019 = vld [vmem:[#allocation5 + $0x19d0] sm:$0xff]
    %v1020 = vld [vmem:[#allocation5 + $0x19d8] sm:$0xff]
    %v1021 = vld [vmem:[#allocation5 + $0x19e0] sm:$0xff]
    %v1022 = vld [vmem:[#allocation5 + $0x19e8] sm:$0xff]
    %v1023 = vld [vmem:[#allocation5 + $0x19f0] sm:$0xff]
    %v1024 = vld [vmem:[#allocation5 + $0x19f8] sm:$0xff]
    %v1025 = vld [vmem:[#allocation5 + $0x1a00] sm:$0xff]
    %v1026 = vld [vmem:[#allocation5 + $0x1a08] sm:$0xff]
    %v1027 = vld [vmem:[#allocation5 + $0x1a10] sm:$0xff]
    %v1028 = vld [vmem:[#allocation5 + $0x1a18] sm:$0xff]
    %v1029 = vld [vmem:[#allocation5 + $0x1a20] sm:$0xff]
    %v1030 = vld [vmem:[#allocation5 + $0x1a28] sm:$0xff]
    %v1031 = vld [vmem:[#allocation5 + $0x1a30] sm:$0xff]
    %v1032 = vld [vmem:[#allocation5 + $0x1a38] sm:$0xff]
    %v1033 = vld [vmem:[#allocation5 + $0x1a40] sm:$0xff]
    %v1034 = vld [vmem:[#allocation5 + $0x1a48] sm:$0xff]
    %v1035 = vld [vmem:[#allocation5 + $0x1a50] sm:$0xff]
    %v1036 = vld [vmem:[#allocation5 + $0x1a58] sm:$0xff]
    %v1037 = vld [vmem:[#allocation5 + $0x1a60] sm:$0xff]
    %v1038 = vld [vmem:[#allocation5 + $0x1a68] sm:$0xff]
    %v1039 = vld [vmem:[#allocation5 + $0x1a70] sm:$0xff]
    %v1040 = vld [vmem:[#allocation5 + $0x1a78] sm:$0xff]
    %v1041 = vld [vmem:[#allocation5 + $0x1a80] sm:$0xff]
    %v1042 = vld [vmem:[#allocation5 + $0x1a88] sm:$0xff]
    %v1043 = vld [vmem:[#allocation5 + $0x1a90] sm:$0xff]
    %v1044 = vld [vmem:[#allocation5 + $0x1a98] sm:$0xff]
    %v1045 = vld [vmem:[#allocation5 + $0x1aa0] sm:$0xff]
    %v1046 = vld [vmem:[#allocation5 + $0x1aa8] sm:$0xff]
    %v1047 = vld [vmem:[#allocation5 + $0x1ab0] sm:$0xff]
    %v1048 = vld [vmem:[#allocation5 + $0x1ab8] sm:$0xff]
    %v1049 = vld [vmem:[#allocation5 + $0x1ac0] sm:$0xff]
    %v1050 = vld [vmem:[#allocation5 + $0x1ac8] sm:$0xff]
    %v1051 = vld [vmem:[#allocation5 + $0x1ad0] sm:$0xff]
    %v1052 = vld [vmem:[#allocation5 + $0x1ad8] sm:$0xff]
    %v1053 = vld [vmem:[#allocation5 + $0x1ae0] sm:$0xff]
    %v1054 = vld [vmem:[#allocation5 + $0x1ae8] sm:$0xff]
    %v1055 = vld [vmem:[#allocation5 + $0x1af0] sm:$0xff]
    %v1056 = vld [vmem:[#allocation5 + $0x1af8] sm:$0xff]
    %v1057 = vld [vmem:[#allocation5 + $0x1b00] sm:$0xff]
    %v1058 = vld [vmem:[#allocation5 + $0x1b08] sm:$0xff]
    %v1059 = vld [vmem:[#allocation5 + $0x1b10] sm:$0xff]
    %v1060 = vld [vmem:[#allocation5 + $0x1b18] sm:$0xff]
    %v1061 = vld [vmem:[#allocation5 + $0x1b20] sm:$0xff]
    %v1062 = vld [vmem:[#allocation5 + $0x1b28] sm:$0xff]
    %v1063 = vld [vmem:[#allocation5 + $0x1b30] sm:$0xff]
    %v1064 = vld [vmem:[#allocation5 + $0x1b38] sm:$0xff]
    %v1065 = vld [vmem:[#allocation5 + $0x1b40] sm:$0xff]
    %v1066 = vld [vmem:[#allocation5 + $0x1b48] sm:$0xff]
    %v1067 = vld [vmem:[#allocation5 + $0x1b50] sm:$0xff]
    %v1068 = vld [vmem:[#allocation5 + $0x1b58] sm:$0xff]
    %v1069 = vld [vmem:[#allocation5 + $0x1b60] sm:$0xff]
    %v1070 = vld [vmem:[#allocation5 + $0x1b68] sm:$0xff]
    %v1071 = vld [vmem:[#allocation5 + $0x1b70] sm:$0xff]
    %v1072 = vld [vmem:[#allocation5 + $0x1b78] sm:$0xff]
    %v1073 = vld [vmem:[#allocation5 + $0x1b80] sm:$0xff]
    %v1074 = vld [vmem:[#allocation5 + $0x1b88] sm:$0xff]
    %v1075 = vld [vmem:[#allocation5 + $0x1b90] sm:$0xff]
    %v1076 = vld [vmem:[#allocation5 + $0x1b98] sm:$0xff]
    %v1077 = vld [vmem:[#allocation5 + $0x1ba0] sm:$0xff]
    %v1078 = vld [vmem:[#allocation5 + $0x1ba8] sm:$0xff]
    %v1079 = vld [vmem:[#allocation5 + $0x1bb0] sm:$0xff]
    %v1080 = vld [vmem:[#allocation5 + $0x1bb8] sm:$0xff]
    %v1081 = vld [vmem:[#allocation5 + $0x1bc0] sm:$0xff]
    %v1082 = vld [vmem:[#allocation5 + $0x1bc8] sm:$0xff]
    %v1083 = vld [vmem:[#allocation5 + $0x1bd0] sm:$0xff]
    %v1084 = vld [vmem:[#allocation5 + $0x1bd8] sm:$0xff]
    %v1085 = vld [vmem:[#allocation5 + $0x1be0] sm:$0xff]
    %v1086 = vld [vmem:[#allocation5 + $0x1be8] sm:$0xff]
    %v1087 = vld [vmem:[#allocation5 + $0x1bf0] sm:$0xff]
    %v1088 = vld [vmem:[#allocation5 + $0x1bf8] sm:$0xff]
    %v1089 = vld [vmem:[#allocation5 + $0x1c00] sm:$0xff]
    %v1090 = vld [vmem:[#allocation5 + $0x1c08] sm:$0xff]
    %v1091 = vld [vmem:[#allocation5 + $0x1c10] sm:$0xff]
    %v1092 = vld [vmem:[#allocation5 + $0x1c18] sm:$0xff]
    %v1093 = vld [vmem:[#allocation5 + $0x1c20] sm:$0xff]
    %v1094 = vld [vmem:[#allocation5 + $0x1c28] sm:$0xff]
    %v1095 = vld [vmem:[#allocation5 + $0x1c30] sm:$0xff]
    %v1096 = vld [vmem:[#allocation5 + $0x1c38] sm:$0xff]
    %v1097 = vld [vmem:[#allocation5 + $0x1c40] sm:$0xff]
    %v1098 = vld [vmem:[#allocation5 + $0x1c48] sm:$0xff]
    %v1099 = vld [vmem:[#allocation5 + $0x1c50] sm:$0xff]
    %v1100 = vld [vmem:[#allocation5 + $0x1c58] sm:$0xff]
    %v1101 = vld [vmem:[#allocation5 + $0x1c60] sm:$0xff]
    %v1102 = vld [vmem:[#allocation5 + $0x1c68] sm:$0xff]
    %v1103 = vld [vmem:[#allocation5 + $0x1c70] sm:$0xff]
    %v1104 = vld [vmem:[#allocation5 + $0x1c78] sm:$0xff]
    %v1105 = vld [vmem:[#allocation5 + $0x1c80] sm:$0xff]
    %v1106 = vld [vmem:[#allocation5 + $0x1c88] sm:$0xff]
    %v1107 = vld [vmem:[#allocation5 + $0x1c90] sm:$0xff]
    %v1108 = vld [vmem:[#allocation5 + $0x1c98] sm:$0xff]
    %v1109 = vld [vmem:[#allocation5 + $0x1ca0] sm:$0xff]
    %v1110 = vld [vmem:[#allocation5 + $0x1ca8] sm:$0xff]
    %v1111 = vld [vmem:[#allocation5 + $0x1cb0] sm:$0xff]
    %v1112 = vld [vmem:[#allocation5 + $0x1cb8] sm:$0xff]
    %v1113 = vld [vmem:[#allocation5 + $0x1cc0] sm:$0xff]
    %v1114 = vld [vmem:[#allocation5 + $0x1cc8] sm:$0xff]
    %v1115 = vld [vmem:[#allocation5 + $0x1cd0] sm:$0xff]
    %v1116 = vld [vmem:[#allocation5 + $0x1cd8] sm:$0xff]
    %v1117 = vld [vmem:[#allocation5 + $0x1ce0] sm:$0xff]
    %v1118 = vld [vmem:[#allocation5 + $0x1ce8] sm:$0xff]
    %v1119 = vld [vmem:[#allocation5 + $0x1cf0] sm:$0xff]
    %v1120 = vld [vmem:[#allocation5 + $0x1cf8] sm:$0xff]
    %v1121 = vld [vmem:[#allocation5 + $0x1d00] sm:$0xff]
    %v1122 = vld [vmem:[#allocation5 + $0x1d08] sm:$0xff]
    %v1123 = vld [vmem:[#allocation5 + $0x1d10] sm:$0xff]
    %v1124 = vld [vmem:[#allocation5 + $0x1d18] sm:$0xff]
    %v1125 = vld [vmem:[#allocation5 + $0x1d20] sm:$0xff]
    %v1126 = vld [vmem:[#allocation5 + $0x1d28] sm:$0xff]
    %v1127 = vld [vmem:[#allocation5 + $0x1d30] sm:$0xff]
    %v1128 = vld [vmem:[#allocation5 + $0x1d38] sm:$0xff]
    %v1129 = vld [vmem:[#allocation5 + $0x1d40] sm:$0xff]
    %v1130 = vld [vmem:[#allocation5 + $0x1d48] sm:$0xff]
    %v1131 = vld [vmem:[#allocation5 + $0x1d50] sm:$0xff]
    %v1132 = vld [vmem:[#allocation5 + $0x1d58] sm:$0xff]
    %v1133 = vld [vmem:[#allocation5 + $0x1d60] sm:$0xff]
    %v1134 = vld [vmem:[#allocation5 + $0x1d68] sm:$0xff]
    %v1135 = vld [vmem:[#allocation5 + $0x1d70] sm:$0xff]
    %v1136 = vld [vmem:[#allocation5 + $0x1d78] sm:$0xff]
    %v1137 = vld [vmem:[#allocation5 + $0x1d80] sm:$0xff]
    %v1138 = vld [vmem:[#allocation5 + $0x1d88] sm:$0xff]
    %v1139 = vld [vmem:[#allocation5 + $0x1d90] sm:$0xff]
    %v1140 = vld [vmem:[#allocation5 + $0x1d98] sm:$0xff]
    %v1141 = vld [vmem:[#allocation5 + $0x1da0] sm:$0xff]
    %v1142 = vld [vmem:[#allocation5 + $0x1da8] sm:$0xff]
    %v1143 = vld [vmem:[#allocation5 + $0x1db0] sm:$0xff]
    %v1144 = vld [vmem:[#allocation5 + $0x1db8] sm:$0xff]
    %v1145 = vld [vmem:[#allocation5 + $0x1dc0] sm:$0xff]
    %v1146 = vld [vmem:[#allocation5 + $0x1dc8] sm:$0xff]
    %v1147 = vld [vmem:[#allocation5 + $0x1dd0] sm:$0xff]
    %v1148 = vld [vmem:[#allocation5 + $0x1dd8] sm:$0xff]
    %v1149 = vld [vmem:[#allocation5 + $0x1de0] sm:$0xff]
    %v1150 = vld [vmem:[#allocation5 + $0x1de8] sm:$0xff]
    %v1151 = vld [vmem:[#allocation5 + $0x1df0] sm:$0xff]
    %v1152 = vld [vmem:[#allocation5 + $0x1df8] sm:$0xff]
    %v1153 = vld [vmem:[#allocation5 + $0x1e00] sm:$0xff]
    %v1154 = vld [vmem:[#allocation5 + $0x1e08] sm:$0xff]
    %v1155 = vld [vmem:[#allocation5 + $0x1e10] sm:$0xff]
    %v1156 = vld [vmem:[#allocation5 + $0x1e18] sm:$0xff]
    %v1157 = vld [vmem:[#allocation5 + $0x1e20] sm:$0xff]
    %v1158 = vld [vmem:[#allocation5 + $0x1e28] sm:$0xff]
    %v1159 = vld [vmem:[#allocation5 + $0x1e30] sm:$0xff]
    %v1160 = vld [vmem:[#allocation5 + $0x1e38] sm:$0xff]
    %v1161 = vld [vmem:[#allocation5 + $0x1e40] sm:$0xff]
    %v1162 = vld [vmem:[#allocation5 + $0x1e48] sm:$0xff]
    %v1163 = vld [vmem:[#allocation5 + $0x1e50] sm:$0xff]
    %v1164 = vld [vmem:[#allocation5 + $0x1e58] sm:$0xff]
    %v1165 = vld [vmem:[#allocation5 + $0x1e60] sm:$0xff]
    %v1166 = vld [vmem:[#allocation5 + $0x1e68] sm:$0xff]
    %v1167 = vld [vmem:[#allocation5 + $0x1e70] sm:$0xff]
    %v1168 = vld [vmem:[#allocation5 + $0x1e78] sm:$0xff]
    %v1169 = vld [vmem:[#allocation5 + $0x1e80] sm:$0xff]
    %v1170 = vld [vmem:[#allocation5 + $0x1e88] sm:$0xff]
    %v1171 = vld [vmem:[#allocation5 + $0x1e90] sm:$0xff]
    %v1172 = vld [vmem:[#allocation5 + $0x1e98] sm:$0xff]
    %v1173 = vld [vmem:[#allocation5 + $0x1ea0] sm:$0xff]
    %v1174 = vld [vmem:[#allocation5 + $0x1ea8] sm:$0xff]
    %v1175 = vld [vmem:[#allocation5 + $0x1eb0] sm:$0xff]
    %v1176 = vld [vmem:[#allocation5 + $0x1eb8] sm:$0xff]
    %v1177 = vld [vmem:[#allocation5 + $0x1ec0] sm:$0xff]
    %v1178 = vld [vmem:[#allocation5 + $0x1ec8] sm:$0xff]
    %v1179 = vld [vmem:[#allocation5 + $0x1ed0] sm:$0xff]
    %v1180 = vld [vmem:[#allocation5 + $0x1ed8] sm:$0xff]
    %v1181 = vld [vmem:[#allocation5 + $0x1ee0] sm:$0xff]
    %v1182 = vld [vmem:[#allocation5 + $0x1ee8] sm:$0xff]
    %v1183 = vld [vmem:[#allocation5 + $0x1ef0] sm:$0xff]
    %v1184 = vld [vmem:[#allocation5 + $0x1ef8] sm:$0xff]
    %v1185 = vld [vmem:[#allocation5 + $0x1f00] sm:$0xff]
    %v1186 = vld [vmem:[#allocation5 + $0x1f08] sm:$0xff]
    %v1187 = vld [vmem:[#allocation5 + $0x1f10] sm:$0xff]
    %v1188 = vld [vmem:[#allocation5 + $0x1f18] sm:$0xff]
    %v1189 = vld [vmem:[#allocation5 + $0x1f20] sm:$0xff]
    %v1190 = vld [vmem:[#allocation5 + $0x1f28] sm:$0xff]
    %v1191 = vld [vmem:[#allocation5 + $0x1f30] sm:$0xff]
    %v1192 = vld [vmem:[#allocation5 + $0x1f38] sm:$0xff]
    %v1193 = vld [vmem:[#allocation5 + $0x1f40] sm:$0xff]
    %v1194 = vld [vmem:[#allocation5 + $0x1f48] sm:$0xff]
    %v1195 = vld [vmem:[#allocation5 + $0x1f50] sm:$0xff]
    %v1196 = vld [vmem:[#allocation5 + $0x1f58] sm:$0xff]
    %v1197 = vld [vmem:[#allocation5 + $0x1f60] sm:$0xff]
    %v1198 = vld [vmem:[#allocation5 + $0x1f68] sm:$0xff]
    %v1199 = vld [vmem:[#allocation5 + $0x1f70] sm:$0xff]
    %v1200 = vld [vmem:[#allocation5 + $0x1f78] sm:$0xff]
    %v1201 = vld [vmem:[#allocation5 + $0x1f80] sm:$0xff]
    %v1202 = vld [vmem:[#allocation5 + $0x1f88] sm:$0xff]
    %v1203 = vld [vmem:[#allocation5 + $0x1f90] sm:$0xff]
    %v1204 = vld [vmem:[#allocation5 + $0x1f98] sm:$0xff]
    %v1205 = vld [vmem:[#allocation5 + $0x1fa0] sm:$0xff]
    %v1206 = vld [vmem:[#allocation5 + $0x1fa8] sm:$0xff]
    %v1207 = vld [vmem:[#allocation5 + $0x1fb0] sm:$0xff]
    %v1208 = vld [vmem:[#allocation5 + $0x1fb8] sm:$0xff]
    %v1209 = vld [vmem:[#allocation5 + $0x1fc0] sm:$0xff]
    %v1210 = vld [vmem:[#allocation5 + $0x1fc8] sm:$0xff]
    %v1211 = vld [vmem:[#allocation5 + $0x1fd0] sm:$0xff]
    %v1212 = vld [vmem:[#allocation5 + $0x1fd8] sm:$0xff]
    %v1213 = vld [vmem:[#allocation5 + $0x1fe0] sm:$0xff]
    %v1214 = vld [vmem:[#allocation5 + $0x1fe8] sm:$0xff]
    %v1215 = vld [vmem:[#allocation5 + $0x1ff0] sm:$0xff]
    %v1216 = vld [vmem:[#allocation5 + $0x1ff8] sm:$0xff]
    %v1217 = vld [vmem:[#allocation7] sm:$0xf]
    %v1219 = vlaneseq
    %v1220 = vshrl.u32 %v1219, 7
    %v1221 = vsub.s32 0, %v1220
    %v1222 = vrot.slane %v1217, %v1221
    %v1223 = vlaneseq
    %v1224 = vshrl.u32 %v1223, 7
    %v1225 = vsub.s32 1, %v1224
    %v1226 = vrot.slane %v1217, %v1225
    %v1227 = vlaneseq
    %v1228 = vshrl.u32 %v1227, 7
    %v1229 = vsub.s32 2, %v1228
    %v1230 = vrot.slane %v1217, %v1229
    %v1231 = vlaneseq
    %v1232 = vshrl.u32 %v1231, 7
    %v1233 = vsub.s32 3, %v1232
    %v1234 = vrot.slane %v1217, %v1233
    %v1255 = vunpack.c.l.b16 %v177
    %v1256 = vunpack.c.h.b16 %v177
    %v1257 = vunpack.c.l.b16 %v178
    %v1258 = vunpack.c.h.b16 %v178
    %v1259 = vunpack.c.l.b16 %v179
    %v1260 = vunpack.c.h.b16 %v179
    %v1261 = vunpack.c.l.b16 %v180
    %v1262 = vunpack.c.h.b16 %v180
    %v1263 = vunpack.c.l.b16 %v181
    %v1264 = vunpack.c.h.b16 %v181
    %v1265 = vunpack.c.l.b16 %v182
    %v1266 = vunpack.c.h.b16 %v182
    %v1267 = vunpack.c.l.b16 %v183
    %v1268 = vunpack.c.h.b16 %v183
    %v1269 = vunpack.c.l.b16 %v184
    %v1270 = vunpack.c.h.b16 %v184
    %v1271 = vunpack.c.l.b16 %v185
    %v1272 = vunpack.c.h.b16 %v185
    %v1273 = vunpack.c.l.b16 %v186
    %v1274 = vunpack.c.h.b16 %v186
    %v1275 = vunpack.c.l.b16 %v187
    %v1276 = vunpack.c.h.b16 %v187
    %v1277 = vunpack.c.l.b16 %v188
    %v1278 = vunpack.c.h.b16 %v188
    %v1279 = vunpack.c.l.b16 %v189
    %v1280 = vunpack.c.h.b16 %v189
    %v1281 = vunpack.c.l.b16 %v190
    %v1282 = vunpack.c.h.b16 %v190
    %v1283 = vunpack.c.l.b16 %v191
    %v1284 = vunpack.c.h.b16 %v191
    %v1285 = vunpack.c.l.b16 %v192
    %v1286 = vunpack.c.h.b16 %v192
    %v1287 = vpack.c.b16 %v1255, %v1255
    %v1288 = vpack.c.b16 %v1256, %v1256
    %v1289 = vpack.c.b16 %v1257, %v1257
    %v1290 = vpack.c.b16 %v1258, %v1258
    %v1291 = vpack.c.b16 %v1259, %v1259
    %v1292 = vpack.c.b16 %v1260, %v1260
    %v1293 = vpack.c.b16 %v1261, %v1261
    %v1294 = vpack.c.b16 %v1262, %v1262
    %v1295 = vpack.c.b16 %v1263, %v1263
    %v1296 = vpack.c.b16 %v1264, %v1264
    %v1297 = vpack.c.b16 %v1265, %v1265
    %v1298 = vpack.c.b16 %v1266, %v1266
    %v1299 = vpack.c.b16 %v1267, %v1267
    %v1300 = vpack.c.b16 %v1268, %v1268
    %v1301 = vpack.c.b16 %v1269, %v1269
    %v1302 = vpack.c.b16 %v1270, %v1270
    %v1303 = vpack.c.b16 %v1271, %v1271
    %v1304 = vpack.c.b16 %v1272, %v1272
    %v1305 = vpack.c.b16 %v1273, %v1273
    %v1306 = vpack.c.b16 %v1274, %v1274
    %v1307 = vpack.c.b16 %v1275, %v1275
    %v1308 = vpack.c.b16 %v1276, %v1276
    %v1309 = vpack.c.b16 %v1277, %v1277
    %v1310 = vpack.c.b16 %v1278, %v1278
    %v1311 = vpack.c.b16 %v1279, %v1279
    %v1312 = vpack.c.b16 %v1280, %v1280
    %v1313 = vpack.c.b16 %v1281, %v1281
    %v1314 = vpack.c.b16 %v1282, %v1282
    %v1315 = vpack.c.b16 %v1283, %v1283
    %v1316 = vpack.c.b16 %v1284, %v1284
    %v1317 = vpack.c.b16 %v1285, %v1285
    %v1318 = vpack.c.b16 %v1286, %v1286
    %v2375 = vunpack.c.l.b16 %v193
    %v2376 = vunpack.c.h.b16 %v193
    %v2377 = vunpack.c.l.b16 %v194
    %v2378 = vunpack.c.h.b16 %v194
    %v2379 = vunpack.c.l.b16 %v195
    %v2380 = vunpack.c.h.b16 %v195
    %v2381 = vunpack.c.l.b16 %v196
    %v2382 = vunpack.c.h.b16 %v196
    %v2383 = vunpack.c.l.b16 %v197
    %v2384 = vunpack.c.h.b16 %v197
    %v2385 = vunpack.c.l.b16 %v198
    %v2386 = vunpack.c.h.b16 %v198
    %v2387 = vunpack.c.l.b16 %v199
    %v2388 = vunpack.c.h.b16 %v199
    %v2389 = vunpack.c.l.b16 %v200
    %v2390 = vunpack.c.h.b16 %v200
    %v2391 = vunpack.c.l.b16 %v201
    %v2392 = vunpack.c.h.b16 %v201
    %v2393 = vunpack.c.l.b16 %v202
    %v2394 = vunpack.c.h.b16 %v202
    %v2395 = vunpack.c.l.b16 %v203
    %v2396 = vunpack.c.h.b16 %v203
    %v2397 = vunpack.c.l.b16 %v204
    %v2398 = vunpack.c.h.b16 %v204
    %v2399 = vunpack.c.l.b16 %v205
    %v2400 = vunpack.c.h.b16 %v205
    %v2401 = vunpack.c.l.b16 %v206
    %v2402 = vunpack.c.h.b16 %v206
    %v2403 = vunpack.c.l.b16 %v207
    %v2404 = vunpack.c.h.b16 %v207
    %v2405 = vunpack.c.l.b16 %v208
    %v2406 = vunpack.c.h.b16 %v208
    %v2407 = vunpack.c.l.b16 %v209
    %v2408 = vunpack.c.h.b16 %v209
    %v2409 = vunpack.c.l.b16 %v210
    %v2410 = vunpack.c.h.b16 %v210
    %v2411 = vunpack.c.l.b16 %v211
    %v2412 = vunpack.c.h.b16 %v211
    %v2413 = vunpack.c.l.b16 %v212
    %v2414 = vunpack.c.h.b16 %v212
    %v2415 = vunpack.c.l.b16 %v213
    %v2416 = vunpack.c.h.b16 %v213
    %v2417 = vunpack.c.l.b16 %v214
    %v2418 = vunpack.c.h.b16 %v214
    %v2419 = vunpack.c.l.b16 %v215
    %v2420 = vunpack.c.h.b16 %v215
    %v2421 = vunpack.c.l.b16 %v216
    %v2422 = vunpack.c.h.b16 %v216
    %v2423 = vunpack.c.l.b16 %v217
    %v2424 = vunpack.c.h.b16 %v217
    %v2425 = vunpack.c.l.b16 %v218
    %v2426 = vunpack.c.h.b16 %v218
    %v2427 = vunpack.c.l.b16 %v219
    %v2428 = vunpack.c.h.b16 %v219
    %v2429 = vunpack.c.l.b16 %v220
    %v2430 = vunpack.c.h.b16 %v220
    %v2431 = vunpack.c.l.b16 %v221
    %v2432 = vunpack.c.h.b16 %v221
    %v2433 = vunpack.c.l.b16 %v222
    %v2434 = vunpack.c.h.b16 %v222
    %v2435 = vunpack.c.l.b16 %v223
    %v2436 = vunpack.c.h.b16 %v223
    %v2437 = vunpack.c.l.b16 %v224
    %v2438 = vunpack.c.h.b16 %v224
    %v2439 = vunpack.c.l.b16 %v225
    %v2440 = vunpack.c.h.b16 %v225
    %v2441 = vunpack.c.l.b16 %v226
    %v2442 = vunpack.c.h.b16 %v226
    %v2443 = vunpack.c.l.b16 %v227
    %v2444 = vunpack.c.h.b16 %v227
    %v2445 = vunpack.c.l.b16 %v228
    %v2446 = vunpack.c.h.b16 %v228
    %v2447 = vunpack.c.l.b16 %v229
    %v2448 = vunpack.c.h.b16 %v229
    %v2449 = vunpack.c.l.b16 %v230
    %v2450 = vunpack.c.h.b16 %v230
    %v2451 = vunpack.c.l.b16 %v231
    %v2452 = vunpack.c.h.b16 %v231
    %v2453 = vunpack.c.l.b16 %v232
    %v2454 = vunpack.c.h.b16 %v232
    %v2455 = vunpack.c.l.b16 %v233
    %v2456 = vunpack.c.h.b16 %v233
    %v2457 = vunpack.c.l.b16 %v234
    %v2458 = vunpack.c.h.b16 %v234
    %v2459 = vunpack.c.l.b16 %v235
    %v2460 = vunpack.c.h.b16 %v235
    %v2461 = vunpack.c.l.b16 %v236
    %v2462 = vunpack.c.h.b16 %v236
    %v2463 = vunpack.c.l.b16 %v237
    %v2464 = vunpack.c.h.b16 %v237
    %v2465 = vunpack.c.l.b16 %v238
    %v2466 = vunpack.c.h.b16 %v238
    %v2467 = vunpack.c.l.b16 %v239
    %v2468 = vunpack.c.h.b16 %v239
    %v2469 = vunpack.c.l.b16 %v240
    %v2470 = vunpack.c.h.b16 %v240
    %v2471 = vunpack.c.l.b16 %v241
    %v2472 = vunpack.c.h.b16 %v241
    %v2473 = vunpack.c.l.b16 %v242
    %v2474 = vunpack.c.h.b16 %v242
    %v2475 = vunpack.c.l.b16 %v243
    %v2476 = vunpack.c.h.b16 %v243
    %v2477 = vunpack.c.l.b16 %v244
    %v2478 = vunpack.c.h.b16 %v244
    %v2479 = vunpack.c.l.b16 %v245
    %v2480 = vunpack.c.h.b16 %v245
    %v2481 = vunpack.c.l.b16 %v246
    %v2482 = vunpack.c.h.b16 %v246
    %v2483 = vunpack.c.l.b16 %v247
    %v2484 = vunpack.c.h.b16 %v247
    %v2485 = vunpack.c.l.b16 %v248
    %v2486 = vunpack.c.h.b16 %v248
    %v2487 = vunpack.c.l.b16 %v249
    %v2488 = vunpack.c.h.b16 %v249
    %v2489 = vunpack.c.l.b16 %v250
    %v2490 = vunpack.c.h.b16 %v250
    %v2491 = vunpack.c.l.b16 %v251
    %v2492 = vunpack.c.h.b16 %v251
    %v2493 = vunpack.c.l.b16 %v252
    %v2494 = vunpack.c.h.b16 %v252
    %v2495 = vunpack.c.l.b16 %v253
    %v2496 = vunpack.c.h.b16 %v253
    %v2497 = vunpack.c.l.b16 %v254
    %v2498 = vunpack.c.h.b16 %v254
    %v2499 = vunpack.c.l.b16 %v255
    %v2500 = vunpack.c.h.b16 %v255
    %v2501 = vunpack.c.l.b16 %v256
    %v2502 = vunpack.c.h.b16 %v256
    %v2503 = vunpack.c.l.b16 %v257
    %v2504 = vunpack.c.h.b16 %v257
    %v2505 = vunpack.c.l.b16 %v258
    %v2506 = vunpack.c.h.b16 %v258
    %v2507 = vunpack.c.l.b16 %v259
    %v2508 = vunpack.c.h.b16 %v259
    %v2509 = vunpack.c.l.b16 %v260
    %v2510 = vunpack.c.h.b16 %v260
    %v2511 = vunpack.c.l.b16 %v261
    %v2512 = vunpack.c.h.b16 %v261
    %v2513 = vunpack.c.l.b16 %v262
    %v2514 = vunpack.c.h.b16 %v262
    %v2515 = vunpack.c.l.b16 %v263
    %v2516 = vunpack.c.h.b16 %v263
    %v2517 = vunpack.c.l.b16 %v264
    %v2518 = vunpack.c.h.b16 %v264
    %v2519 = vunpack.c.l.b16 %v265
    %v2520 = vunpack.c.h.b16 %v265
    %v2521 = vunpack.c.l.b16 %v266
    %v2522 = vunpack.c.h.b16 %v266
    %v2523 = vunpack.c.l.b16 %v267
    %v2524 = vunpack.c.h.b16 %v267
    %v2525 = vunpack.c.l.b16 %v268
    %v2526 = vunpack.c.h.b16 %v268
    %v2527 = vunpack.c.l.b16 %v269
    %v2528 = vunpack.c.h.b16 %v269
    %v2529 = vunpack.c.l.b16 %v270
    %v2530 = vunpack.c.h.b16 %v270
    %v2531 = vunpack.c.l.b16 %v271
    %v2532 = vunpack.c.h.b16 %v271
    %v2533 = vunpack.c.l.b16 %v272
    %v2534 = vunpack.c.h.b16 %v272
    %v2535 = vunpack.c.l.b16 %v273
    %v2536 = vunpack.c.h.b16 %v273
    %v2537 = vunpack.c.l.b16 %v274
    %v2538 = vunpack.c.h.b16 %v274
    %v2539 = vunpack.c.l.b16 %v275
    %v2540 = vunpack.c.h.b16 %v275
    %v2541 = vunpack.c.l.b16 %v276
    %v2542 = vunpack.c.h.b16 %v276
    %v2543 = vunpack.c.l.b16 %v277
    %v2544 = vunpack.c.h.b16 %v277
    %v2545 = vunpack.c.l.b16 %v278
    %v2546 = vunpack.c.h.b16 %v278
    %v2547 = vunpack.c.l.b16 %v279
    %v2548 = vunpack.c.h.b16 %v279
    %v2549 = vunpack.c.l.b16 %v280
    %v2550 = vunpack.c.h.b16 %v280
    %v2551 = vunpack.c.l.b16 %v281
    %v2552 = vunpack.c.h.b16 %v281
    %v2553 = vunpack.c.l.b16 %v282
    %v2554 = vunpack.c.h.b16 %v282
    %v2555 = vunpack.c.l.b16 %v283
    %v2556 = vunpack.c.h.b16 %v283
    %v2557 = vunpack.c.l.b16 %v284
    %v2558 = vunpack.c.h.b16 %v284
    %v2559 = vunpack.c.l.b16 %v285
    %v2560 = vunpack.c.h.b16 %v285
    %v2561 = vunpack.c.l.b16 %v286
    %v2562 = vunpack.c.h.b16 %v286
    %v2563 = vunpack.c.l.b16 %v287
    %v2564 = vunpack.c.h.b16 %v287
    %v2565 = vunpack.c.l.b16 %v288
    %v2566 = vunpack.c.h.b16 %v288
    %v2567 = vunpack.c.l.b16 %v289
    %v2568 = vunpack.c.h.b16 %v289
    %v2569 = vunpack.c.l.b16 %v290
    %v2570 = vunpack.c.h.b16 %v290
    %v2571 = vunpack.c.l.b16 %v291
    %v2572 = vunpack.c.h.b16 %v291
    %v2573 = vunpack.c.l.b16 %v292
    %v2574 = vunpack.c.h.b16 %v292
    %v2575 = vunpack.c.l.b16 %v293
    %v2576 = vunpack.c.h.b16 %v293
    %v2577 = vunpack.c.l.b16 %v294
    %v2578 = vunpack.c.h.b16 %v294
    %v2579 = vunpack.c.l.b16 %v295
    %v2580 = vunpack.c.h.b16 %v295
    %v2581 = vunpack.c.l.b16 %v296
    %v2582 = vunpack.c.h.b16 %v296
    %v2583 = vunpack.c.l.b16 %v297
    %v2584 = vunpack.c.h.b16 %v297
    %v2585 = vunpack.c.l.b16 %v298
    %v2586 = vunpack.c.h.b16 %v298
    %v2587 = vunpack.c.l.b16 %v299
    %v2588 = vunpack.c.h.b16 %v299
    %v2589 = vunpack.c.l.b16 %v300
    %v2590 = vunpack.c.h.b16 %v300
    %v2591 = vunpack.c.l.b16 %v301
    %v2592 = vunpack.c.h.b16 %v301
    %v2593 = vunpack.c.l.b16 %v302
    %v2594 = vunpack.c.h.b16 %v302
    %v2595 = vunpack.c.l.b16 %v303
    %v2596 = vunpack.c.h.b16 %v303
    %v2597 = vunpack.c.l.b16 %v304
    %v2598 = vunpack.c.h.b16 %v304
    %v2599 = vunpack.c.l.b16 %v305
    %v2600 = vunpack.c.h.b16 %v305
    %v2601 = vunpack.c.l.b16 %v306
    %v2602 = vunpack.c.h.b16 %v306
    %v2603 = vunpack.c.l.b16 %v307
    %v2604 = vunpack.c.h.b16 %v307
    %v2605 = vunpack.c.l.b16 %v308
    %v2606 = vunpack.c.h.b16 %v308
    %v2607 = vunpack.c.l.b16 %v309
    %v2608 = vunpack.c.h.b16 %v309
    %v2609 = vunpack.c.l.b16 %v310
    %v2610 = vunpack.c.h.b16 %v310
    %v2611 = vunpack.c.l.b16 %v311
    %v2612 = vunpack.c.h.b16 %v311
    %v2613 = vunpack.c.l.b16 %v312
    %v2614 = vunpack.c.h.b16 %v312
    %v2615 = vunpack.c.l.b16 %v313
    %v2616 = vunpack.c.h.b16 %v313
    %v2617 = vunpack.c.l.b16 %v314
    %v2618 = vunpack.c.h.b16 %v314
    %v2619 = vunpack.c.l.b16 %v315
    %v2620 = vunpack.c.h.b16 %v315
    %v2621 = vunpack.c.l.b16 %v316
    %v2622 = vunpack.c.h.b16 %v316
    %v2623 = vunpack.c.l.b16 %v317
    %v2624 = vunpack.c.h.b16 %v317
    %v2625 = vunpack.c.l.b16 %v318
    %v2626 = vunpack.c.h.b16 %v318
    %v2627 = vunpack.c.l.b16 %v319
    %v2628 = vunpack.c.h.b16 %v319
    %v2629 = vunpack.c.l.b16 %v320
    %v2630 = vunpack.c.h.b16 %v320
    %v2631 = vunpack.c.l.b16 %v321
    %v2632 = vunpack.c.h.b16 %v321
    %v2633 = vunpack.c.l.b16 %v322
    %v2634 = vunpack.c.h.b16 %v322
    %v2635 = vunpack.c.l.b16 %v323
    %v2636 = vunpack.c.h.b16 %v323
    %v2637 = vunpack.c.l.b16 %v324
    %v2638 = vunpack.c.h.b16 %v324
    %v2639 = vunpack.c.l.b16 %v325
    %v2640 = vunpack.c.h.b16 %v325
    %v2641 = vunpack.c.l.b16 %v326
    %v2642 = vunpack.c.h.b16 %v326
    %v2643 = vunpack.c.l.b16 %v327
    %v2644 = vunpack.c.h.b16 %v327
    %v2645 = vunpack.c.l.b16 %v328
    %v2646 = vunpack.c.h.b16 %v328
    %v2647 = vunpack.c.l.b16 %v329
    %v2648 = vunpack.c.h.b16 %v329
    %v2649 = vunpack.c.l.b16 %v330
    %v2650 = vunpack.c.h.b16 %v330
    %v2651 = vunpack.c.l.b16 %v331
    %v2652 = vunpack.c.h.b16 %v331
    %v2653 = vunpack.c.l.b16 %v332
    %v2654 = vunpack.c.h.b16 %v332
    %v2655 = vunpack.c.l.b16 %v333
    %v2656 = vunpack.c.h.b16 %v333
    %v2657 = vunpack.c.l.b16 %v334
    %v2658 = vunpack.c.h.b16 %v334
    %v2659 = vunpack.c.l.b16 %v335
    %v2660 = vunpack.c.h.b16 %v335
    %v2661 = vunpack.c.l.b16 %v336
    %v2662 = vunpack.c.h.b16 %v336
    %v2663 = vunpack.c.l.b16 %v337
    %v2664 = vunpack.c.h.b16 %v337
    %v2665 = vunpack.c.l.b16 %v338
    %v2666 = vunpack.c.h.b16 %v338
    %v2667 = vunpack.c.l.b16 %v339
    %v2668 = vunpack.c.h.b16 %v339
    %v2669 = vunpack.c.l.b16 %v340
    %v2670 = vunpack.c.h.b16 %v340
    %v2671 = vunpack.c.l.b16 %v341
    %v2672 = vunpack.c.h.b16 %v341
    %v2673 = vunpack.c.l.b16 %v342
    %v2674 = vunpack.c.h.b16 %v342
    %v2675 = vunpack.c.l.b16 %v343
    %v2676 = vunpack.c.h.b16 %v343
    %v2677 = vunpack.c.l.b16 %v344
    %v2678 = vunpack.c.h.b16 %v344
    %v2679 = vunpack.c.l.b16 %v345
    %v2680 = vunpack.c.h.b16 %v345
    %v2681 = vunpack.c.l.b16 %v346
    %v2682 = vunpack.c.h.b16 %v346
    %v2683 = vunpack.c.l.b16 %v347
    %v2684 = vunpack.c.h.b16 %v347
    %v2685 = vunpack.c.l.b16 %v348
    %v2686 = vunpack.c.h.b16 %v348
    %v2687 = vunpack.c.l.b16 %v349
    %v2688 = vunpack.c.h.b16 %v349
    %v2689 = vunpack.c.l.b16 %v350
    %v2690 = vunpack.c.h.b16 %v350
    %v2691 = vunpack.c.l.b16 %v351
    %v2692 = vunpack.c.h.b16 %v351
    %v2693 = vunpack.c.l.b16 %v352
    %v2694 = vunpack.c.h.b16 %v352
    %v2695 = vunpack.c.l.b16 %v353
    %v2696 = vunpack.c.h.b16 %v353
    %v2697 = vunpack.c.l.b16 %v354
    %v2698 = vunpack.c.h.b16 %v354
    %v2699 = vunpack.c.l.b16 %v355
    %v2700 = vunpack.c.h.b16 %v355
    %v2701 = vunpack.c.l.b16 %v356
    %v2702 = vunpack.c.h.b16 %v356
    %v2703 = vunpack.c.l.b16 %v357
    %v2704 = vunpack.c.h.b16 %v357
    %v2705 = vunpack.c.l.b16 %v358
    %v2706 = vunpack.c.h.b16 %v358
    %v2707 = vunpack.c.l.b16 %v359
    %v2708 = vunpack.c.h.b16 %v359
    %v2709 = vunpack.c.l.b16 %v360
    %v2710 = vunpack.c.h.b16 %v360
    %v2711 = vunpack.c.l.b16 %v361
    %v2712 = vunpack.c.h.b16 %v361
    %v2713 = vunpack.c.l.b16 %v362
    %v2714 = vunpack.c.h.b16 %v362
    %v2715 = vunpack.c.l.b16 %v363
    %v2716 = vunpack.c.h.b16 %v363
    %v2717 = vunpack.c.l.b16 %v364
    %v2718 = vunpack.c.h.b16 %v364
    %v2719 = vunpack.c.l.b16 %v365
    %v2720 = vunpack.c.h.b16 %v365
    %v2721 = vunpack.c.l.b16 %v366
    %v2722 = vunpack.c.h.b16 %v366
    %v2723 = vunpack.c.l.b16 %v367
    %v2724 = vunpack.c.h.b16 %v367
    %v2725 = vunpack.c.l.b16 %v368
    %v2726 = vunpack.c.h.b16 %v368
    %v2727 = vunpack.c.l.b16 %v369
    %v2728 = vunpack.c.h.b16 %v369
    %v2729 = vunpack.c.l.b16 %v370
    %v2730 = vunpack.c.h.b16 %v370
    %v2731 = vunpack.c.l.b16 %v371
    %v2732 = vunpack.c.h.b16 %v371
    %v2733 = vunpack.c.l.b16 %v372
    %v2734 = vunpack.c.h.b16 %v372
    %v2735 = vunpack.c.l.b16 %v373
    %v2736 = vunpack.c.h.b16 %v373
    %v2737 = vunpack.c.l.b16 %v374
    %v2738 = vunpack.c.h.b16 %v374
    %v2739 = vunpack.c.l.b16 %v375
    %v2740 = vunpack.c.h.b16 %v375
    %v2741 = vunpack.c.l.b16 %v376
    %v2742 = vunpack.c.h.b16 %v376
    %v2743 = vunpack.c.l.b16 %v377
    %v2744 = vunpack.c.h.b16 %v377
    %v2745 = vunpack.c.l.b16 %v378
    %v2746 = vunpack.c.h.b16 %v378
    %v2747 = vunpack.c.l.b16 %v379
    %v2748 = vunpack.c.h.b16 %v379
    %v2749 = vunpack.c.l.b16 %v380
    %v2750 = vunpack.c.h.b16 %v380
    %v2751 = vunpack.c.l.b16 %v381
    %v2752 = vunpack.c.h.b16 %v381
    %v2753 = vunpack.c.l.b16 %v382
    %v2754 = vunpack.c.h.b16 %v382
    %v2755 = vunpack.c.l.b16 %v383
    %v2756 = vunpack.c.h.b16 %v383
    %v2757 = vunpack.c.l.b16 %v384
    %v2758 = vunpack.c.h.b16 %v384
    %v2759 = vunpack.c.l.b16 %v385
    %v2760 = vunpack.c.h.b16 %v385
    %v2761 = vunpack.c.l.b16 %v386
    %v2762 = vunpack.c.h.b16 %v386
    %v2763 = vunpack.c.l.b16 %v387
    %v2764 = vunpack.c.h.b16 %v387
    %v2765 = vunpack.c.l.b16 %v388
    %v2766 = vunpack.c.h.b16 %v388
    %v2767 = vunpack.c.l.b16 %v389
    %v2768 = vunpack.c.h.b16 %v389
    %v2769 = vunpack.c.l.b16 %v390
    %v2770 = vunpack.c.h.b16 %v390
    %v2771 = vunpack.c.l.b16 %v391
    %v2772 = vunpack.c.h.b16 %v391
    %v2773 = vunpack.c.l.b16 %v392
    %v2774 = vunpack.c.h.b16 %v392
    %v2775 = vunpack.c.l.b16 %v393
    %v2776 = vunpack.c.h.b16 %v393
    %v2777 = vunpack.c.l.b16 %v394
    %v2778 = vunpack.c.h.b16 %v394
    %v2779 = vunpack.c.l.b16 %v395
    %v2780 = vunpack.c.h.b16 %v395
    %v2781 = vunpack.c.l.b16 %v396
    %v2782 = vunpack.c.h.b16 %v396
    %v2783 = vunpack.c.l.b16 %v397
    %v2784 = vunpack.c.h.b16 %v397
    %v2785 = vunpack.c.l.b16 %v398
    %v2786 = vunpack.c.h.b16 %v398
    %v2787 = vunpack.c.l.b16 %v399
    %v2788 = vunpack.c.h.b16 %v399
    %v2789 = vunpack.c.l.b16 %v400
    %v2790 = vunpack.c.h.b16 %v400
    %v2791 = vunpack.c.l.b16 %v401
    %v2792 = vunpack.c.h.b16 %v401
    %v2793 = vunpack.c.l.b16 %v402
    %v2794 = vunpack.c.h.b16 %v402
    %v2795 = vunpack.c.l.b16 %v403
    %v2796 = vunpack.c.h.b16 %v403
    %v2797 = vunpack.c.l.b16 %v404
    %v2798 = vunpack.c.h.b16 %v404
    %v2799 = vunpack.c.l.b16 %v405
    %v2800 = vunpack.c.h.b16 %v405
    %v2801 = vunpack.c.l.b16 %v406
    %v2802 = vunpack.c.h.b16 %v406
    %v2803 = vunpack.c.l.b16 %v407
    %v2804 = vunpack.c.h.b16 %v407
    %v2805 = vunpack.c.l.b16 %v408
    %v2806 = vunpack.c.h.b16 %v408
    %v2807 = vunpack.c.l.b16 %v409
    %v2808 = vunpack.c.h.b16 %v409
    %v2809 = vunpack.c.l.b16 %v410
    %v2810 = vunpack.c.h.b16 %v410
    %v2811 = vunpack.c.l.b16 %v411
    %v2812 = vunpack.c.h.b16 %v411
    %v2813 = vunpack.c.l.b16 %v412
    %v2814 = vunpack.c.h.b16 %v412
    %v2815 = vunpack.c.l.b16 %v413
    %v2816 = vunpack.c.h.b16 %v413
    %v2817 = vunpack.c.l.b16 %v414
    %v2818 = vunpack.c.h.b16 %v414
    %v2819 = vunpack.c.l.b16 %v415
    %v2820 = vunpack.c.h.b16 %v415
    %v2821 = vunpack.c.l.b16 %v416
    %v2822 = vunpack.c.h.b16 %v416
    %v2823 = vunpack.c.l.b16 %v417
    %v2824 = vunpack.c.h.b16 %v417
    %v2825 = vunpack.c.l.b16 %v418
    %v2826 = vunpack.c.h.b16 %v418
    %v2827 = vunpack.c.l.b16 %v419
    %v2828 = vunpack.c.h.b16 %v419
    %v2829 = vunpack.c.l.b16 %v420
    %v2830 = vunpack.c.h.b16 %v420
    %v2831 = vunpack.c.l.b16 %v421
    %v2832 = vunpack.c.h.b16 %v421
    %v2833 = vunpack.c.l.b16 %v422
    %v2834 = vunpack.c.h.b16 %v422
    %v2835 = vunpack.c.l.b16 %v423
    %v2836 = vunpack.c.h.b16 %v423
    %v2837 = vunpack.c.l.b16 %v424
    %v2838 = vunpack.c.h.b16 %v424
    %v2839 = vunpack.c.l.b16 %v425
    %v2840 = vunpack.c.h.b16 %v425
    %v2841 = vunpack.c.l.b16 %v426
    %v2842 = vunpack.c.h.b16 %v426
    %v2843 = vunpack.c.l.b16 %v427
    %v2844 = vunpack.c.h.b16 %v427
    %v2845 = vunpack.c.l.b16 %v428
    %v2846 = vunpack.c.h.b16 %v428
    %v2847 = vunpack.c.l.b16 %v429
    %v2848 = vunpack.c.h.b16 %v429
    %v2849 = vunpack.c.l.b16 %v430
    %v2850 = vunpack.c.h.b16 %v430
    %v2851 = vunpack.c.l.b16 %v431
    %v2852 = vunpack.c.h.b16 %v431
    %v2853 = vunpack.c.l.b16 %v432
    %v2854 = vunpack.c.h.b16 %v432
    %v2855 = vunpack.c.l.b16 %v433
    %v2856 = vunpack.c.h.b16 %v433
    %v2857 = vunpack.c.l.b16 %v434
    %v2858 = vunpack.c.h.b16 %v434
    %v2859 = vunpack.c.l.b16 %v435
    %v2860 = vunpack.c.h.b16 %v435
    %v2861 = vunpack.c.l.b16 %v436
    %v2862 = vunpack.c.h.b16 %v436
    %v2863 = vunpack.c.l.b16 %v437
    %v2864 = vunpack.c.h.b16 %v437
    %v2865 = vunpack.c.l.b16 %v438
    %v2866 = vunpack.c.h.b16 %v438
    %v2867 = vunpack.c.l.b16 %v439
    %v2868 = vunpack.c.h.b16 %v439
    %v2869 = vunpack.c.l.b16 %v440
    %v2870 = vunpack.c.h.b16 %v440
    %v2871 = vunpack.c.l.b16 %v441
    %v2872 = vunpack.c.h.b16 %v441
    %v2873 = vunpack.c.l.b16 %v442
    %v2874 = vunpack.c.h.b16 %v442
    %v2875 = vunpack.c.l.b16 %v443
    %v2876 = vunpack.c.h.b16 %v443
    %v2877 = vunpack.c.l.b16 %v444
    %v2878 = vunpack.c.h.b16 %v444
    %v2879 = vunpack.c.l.b16 %v445
    %v2880 = vunpack.c.h.b16 %v445
    %v2881 = vunpack.c.l.b16 %v446
    %v2882 = vunpack.c.h.b16 %v446
    %v2883 = vunpack.c.l.b16 %v447
    %v2884 = vunpack.c.h.b16 %v447
    %v2885 = vunpack.c.l.b16 %v448
    %v2886 = vunpack.c.h.b16 %v448
    %v2887 = vunpack.c.l.b16 %v449
    %v2888 = vunpack.c.h.b16 %v449
    %v2889 = vunpack.c.l.b16 %v450
    %v2890 = vunpack.c.h.b16 %v450
    %v2891 = vunpack.c.l.b16 %v451
    %v2892 = vunpack.c.h.b16 %v451
    %v2893 = vunpack.c.l.b16 %v452
    %v2894 = vunpack.c.h.b16 %v452
    %v2895 = vunpack.c.l.b16 %v453
    %v2896 = vunpack.c.h.b16 %v453
    %v2897 = vunpack.c.l.b16 %v454
    %v2898 = vunpack.c.h.b16 %v454
    %v2899 = vunpack.c.l.b16 %v455
    %v2900 = vunpack.c.h.b16 %v455
    %v2901 = vunpack.c.l.b16 %v456
    %v2902 = vunpack.c.h.b16 %v456
    %v2903 = vunpack.c.l.b16 %v457
    %v2904 = vunpack.c.h.b16 %v457
    %v2905 = vunpack.c.l.b16 %v458
    %v2906 = vunpack.c.h.b16 %v458
    %v2907 = vunpack.c.l.b16 %v459
    %v2908 = vunpack.c.h.b16 %v459
    %v2909 = vunpack.c.l.b16 %v460
    %v2910 = vunpack.c.h.b16 %v460
    %v2911 = vunpack.c.l.b16 %v461
    %v2912 = vunpack.c.h.b16 %v461
    %v2913 = vunpack.c.l.b16 %v462
    %v2914 = vunpack.c.h.b16 %v462
    %v2915 = vunpack.c.l.b16 %v463
    %v2916 = vunpack.c.h.b16 %v463
    %v2917 = vunpack.c.l.b16 %v464
    %v2918 = vunpack.c.h.b16 %v464
    %v2919 = vunpack.c.l.b16 %v465
    %v2920 = vunpack.c.h.b16 %v465
    %v2921 = vunpack.c.l.b16 %v466
    %v2922 = vunpack.c.h.b16 %v466
    %v2923 = vunpack.c.l.b16 %v467
    %v2924 = vunpack.c.h.b16 %v467
    %v2925 = vunpack.c.l.b16 %v468
    %v2926 = vunpack.c.h.b16 %v468
    %v2927 = vunpack.c.l.b16 %v469
    %v2928 = vunpack.c.h.b16 %v469
    %v2929 = vunpack.c.l.b16 %v470
    %v2930 = vunpack.c.h.b16 %v470
    %v2931 = vunpack.c.l.b16 %v471
    %v2932 = vunpack.c.h.b16 %v471
    %v2933 = vunpack.c.l.b16 %v472
    %v2934 = vunpack.c.h.b16 %v472
    %v2935 = vunpack.c.l.b16 %v473
    %v2936 = vunpack.c.h.b16 %v473
    %v2937 = vunpack.c.l.b16 %v474
    %v2938 = vunpack.c.h.b16 %v474
    %v2939 = vunpack.c.l.b16 %v475
    %v2940 = vunpack.c.h.b16 %v475
    %v2941 = vunpack.c.l.b16 %v476
    %v2942 = vunpack.c.h.b16 %v476
    %v2943 = vunpack.c.l.b16 %v477
    %v2944 = vunpack.c.h.b16 %v477
    %v2945 = vunpack.c.l.b16 %v478
    %v2946 = vunpack.c.h.b16 %v478
    %v2947 = vunpack.c.l.b16 %v479
    %v2948 = vunpack.c.h.b16 %v479
    %v2949 = vunpack.c.l.b16 %v480
    %v2950 = vunpack.c.h.b16 %v480
    %v2951 = vunpack.c.l.b16 %v481
    %v2952 = vunpack.c.h.b16 %v481
    %v2953 = vunpack.c.l.b16 %v482
    %v2954 = vunpack.c.h.b16 %v482
    %v2955 = vunpack.c.l.b16 %v483
    %v2956 = vunpack.c.h.b16 %v483
    %v2957 = vunpack.c.l.b16 %v484
    %v2958 = vunpack.c.h.b16 %v484
    %v2959 = vunpack.c.l.b16 %v485
    %v2960 = vunpack.c.h.b16 %v485
    %v2961 = vunpack.c.l.b16 %v486
    %v2962 = vunpack.c.h.b16 %v486
    %v2963 = vunpack.c.l.b16 %v487
    %v2964 = vunpack.c.h.b16 %v487
    %v2965 = vunpack.c.l.b16 %v488
    %v2966 = vunpack.c.h.b16 %v488
    %v2967 = vunpack.c.l.b16 %v489
    %v2968 = vunpack.c.h.b16 %v489
    %v2969 = vunpack.c.l.b16 %v490
    %v2970 = vunpack.c.h.b16 %v490
    %v2971 = vunpack.c.l.b16 %v491
    %v2972 = vunpack.c.h.b16 %v491
    %v2973 = vunpack.c.l.b16 %v492
    %v2974 = vunpack.c.h.b16 %v492
    %v2975 = vunpack.c.l.b16 %v493
    %v2976 = vunpack.c.h.b16 %v493
    %v2977 = vunpack.c.l.b16 %v494
    %v2978 = vunpack.c.h.b16 %v494
    %v2979 = vunpack.c.l.b16 %v495
    %v2980 = vunpack.c.h.b16 %v495
    %v2981 = vunpack.c.l.b16 %v496
    %v2982 = vunpack.c.h.b16 %v496
    %v2983 = vunpack.c.l.b16 %v497
    %v2984 = vunpack.c.h.b16 %v497
    %v2985 = vunpack.c.l.b16 %v498
    %v2986 = vunpack.c.h.b16 %v498
    %v2987 = vunpack.c.l.b16 %v499
    %v2988 = vunpack.c.h.b16 %v499
    %v2989 = vunpack.c.l.b16 %v500
    %v2990 = vunpack.c.h.b16 %v500
    %v2991 = vunpack.c.l.b16 %v501
    %v2992 = vunpack.c.h.b16 %v501
    %v2993 = vunpack.c.l.b16 %v502
    %v2994 = vunpack.c.h.b16 %v502
    %v2995 = vunpack.c.l.b16 %v503
    %v2996 = vunpack.c.h.b16 %v503
    %v2997 = vunpack.c.l.b16 %v504
    %v2998 = vunpack.c.h.b16 %v504
    %v2999 = vunpack.c.l.b16 %v505
    %v3000 = vunpack.c.h.b16 %v505
    %v3001 = vunpack.c.l.b16 %v506
    %v3002 = vunpack.c.h.b16 %v506
    %v3003 = vunpack.c.l.b16 %v507
    %v3004 = vunpack.c.h.b16 %v507
    %v3005 = vunpack.c.l.b16 %v508
    %v3006 = vunpack.c.h.b16 %v508
    %v3007 = vunpack.c.l.b16 %v509
    %v3008 = vunpack.c.h.b16 %v509
    %v3009 = vunpack.c.l.b16 %v510
    %v3010 = vunpack.c.h.b16 %v510
    %v3011 = vunpack.c.l.b16 %v511
    %v3012 = vunpack.c.h.b16 %v511
    %v3013 = vunpack.c.l.b16 %v512
    %v3014 = vunpack.c.h.b16 %v512
    %v3015 = vunpack.c.l.b16 %v513
    %v3016 = vunpack.c.h.b16 %v513
    %v3017 = vunpack.c.l.b16 %v514
    %v3018 = vunpack.c.h.b16 %v514
    %v3019 = vunpack.c.l.b16 %v515
    %v3020 = vunpack.c.h.b16 %v515
    %v3021 = vunpack.c.l.b16 %v516
    %v3022 = vunpack.c.h.b16 %v516
    %v3023 = vunpack.c.l.b16 %v517
    %v3024 = vunpack.c.h.b16 %v517
    %v3025 = vunpack.c.l.b16 %v518
    %v3026 = vunpack.c.h.b16 %v518
    %v3027 = vunpack.c.l.b16 %v519
    %v3028 = vunpack.c.h.b16 %v519
    %v3029 = vunpack.c.l.b16 %v520
    %v3030 = vunpack.c.h.b16 %v520
    %v3031 = vunpack.c.l.b16 %v521
    %v3032 = vunpack.c.h.b16 %v521
    %v3033 = vunpack.c.l.b16 %v522
    %v3034 = vunpack.c.h.b16 %v522
    %v3035 = vunpack.c.l.b16 %v523
    %v3036 = vunpack.c.h.b16 %v523
    %v3037 = vunpack.c.l.b16 %v524
    %v3038 = vunpack.c.h.b16 %v524
    %v3039 = vunpack.c.l.b16 %v525
    %v3040 = vunpack.c.h.b16 %v525
    %v3041 = vunpack.c.l.b16 %v526
    %v3042 = vunpack.c.h.b16 %v526
    %v3043 = vunpack.c.l.b16 %v527
    %v3044 = vunpack.c.h.b16 %v527
    %v3045 = vunpack.c.l.b16 %v528
    %v3046 = vunpack.c.h.b16 %v528
    %v3047 = vunpack.c.l.b16 %v529
    %v3048 = vunpack.c.h.b16 %v529
    %v3049 = vunpack.c.l.b16 %v530
    %v3050 = vunpack.c.h.b16 %v530
    %v3051 = vunpack.c.l.b16 %v531
    %v3052 = vunpack.c.h.b16 %v531
    %v3053 = vunpack.c.l.b16 %v532
    %v3054 = vunpack.c.h.b16 %v532
    %v3055 = vunpack.c.l.b16 %v533
    %v3056 = vunpack.c.h.b16 %v533
    %v3057 = vunpack.c.l.b16 %v534
    %v3058 = vunpack.c.h.b16 %v534
    %v3059 = vunpack.c.l.b16 %v535
    %v3060 = vunpack.c.h.b16 %v535
    %v3061 = vunpack.c.l.b16 %v536
    %v3062 = vunpack.c.h.b16 %v536
    %v3063 = vunpack.c.l.b16 %v537
    %v3064 = vunpack.c.h.b16 %v537
    %v3065 = vunpack.c.l.b16 %v538
    %v3066 = vunpack.c.h.b16 %v538
    %v3067 = vunpack.c.l.b16 %v539
    %v3068 = vunpack.c.h.b16 %v539
    %v3069 = vunpack.c.l.b16 %v540
    %v3070 = vunpack.c.h.b16 %v540
    %v3071 = vunpack.c.l.b16 %v541
    %v3072 = vunpack.c.h.b16 %v541
    %v3073 = vunpack.c.l.b16 %v542
    %v3074 = vunpack.c.h.b16 %v542
    %v3075 = vunpack.c.l.b16 %v543
    %v3076 = vunpack.c.h.b16 %v543
    %v3077 = vunpack.c.l.b16 %v544
    %v3078 = vunpack.c.h.b16 %v544
    %v3079 = vunpack.c.l.b16 %v545
    %v3080 = vunpack.c.h.b16 %v545
    %v3081 = vunpack.c.l.b16 %v546
    %v3082 = vunpack.c.h.b16 %v546
    %v3083 = vunpack.c.l.b16 %v547
    %v3084 = vunpack.c.h.b16 %v547
    %v3085 = vunpack.c.l.b16 %v548
    %v3086 = vunpack.c.h.b16 %v548
    %v3087 = vunpack.c.l.b16 %v549
    %v3088 = vunpack.c.h.b16 %v549
    %v3089 = vunpack.c.l.b16 %v550
    %v3090 = vunpack.c.h.b16 %v550
    %v3091 = vunpack.c.l.b16 %v551
    %v3092 = vunpack.c.h.b16 %v551
    %v3093 = vunpack.c.l.b16 %v552
    %v3094 = vunpack.c.h.b16 %v552
    %v3095 = vunpack.c.l.b16 %v553
    %v3096 = vunpack.c.h.b16 %v553
    %v3097 = vunpack.c.l.b16 %v554
    %v3098 = vunpack.c.h.b16 %v554
    %v3099 = vunpack.c.l.b16 %v555
    %v3100 = vunpack.c.h.b16 %v555
    %v3101 = vunpack.c.l.b16 %v556
    %v3102 = vunpack.c.h.b16 %v556
    %v3103 = vunpack.c.l.b16 %v557
    %v3104 = vunpack.c.h.b16 %v557
    %v3105 = vunpack.c.l.b16 %v558
    %v3106 = vunpack.c.h.b16 %v558
    %v3107 = vunpack.c.l.b16 %v559
    %v3108 = vunpack.c.h.b16 %v559
    %v3109 = vunpack.c.l.b16 %v560
    %v3110 = vunpack.c.h.b16 %v560
    %v3111 = vunpack.c.l.b16 %v561
    %v3112 = vunpack.c.h.b16 %v561
    %v3113 = vunpack.c.l.b16 %v562
    %v3114 = vunpack.c.h.b16 %v562
    %v3115 = vunpack.c.l.b16 %v563
    %v3116 = vunpack.c.h.b16 %v563
    %v3117 = vunpack.c.l.b16 %v564
    %v3118 = vunpack.c.h.b16 %v564
    %v3119 = vunpack.c.l.b16 %v565
    %v3120 = vunpack.c.h.b16 %v565
    %v3121 = vunpack.c.l.b16 %v566
    %v3122 = vunpack.c.h.b16 %v566
    %v3123 = vunpack.c.l.b16 %v567
    %v3124 = vunpack.c.h.b16 %v567
    %v3125 = vunpack.c.l.b16 %v568
    %v3126 = vunpack.c.h.b16 %v568
    %v3127 = vunpack.c.l.b16 %v569
    %v3128 = vunpack.c.h.b16 %v569
    %v3129 = vunpack.c.l.b16 %v570
    %v3130 = vunpack.c.h.b16 %v570
    %v3131 = vunpack.c.l.b16 %v571
    %v3132 = vunpack.c.h.b16 %v571
    %v3133 = vunpack.c.l.b16 %v572
    %v3134 = vunpack.c.h.b16 %v572
    %v3135 = vunpack.c.l.b16 %v573
    %v3136 = vunpack.c.h.b16 %v573
    %v3137 = vunpack.c.l.b16 %v574
    %v3138 = vunpack.c.h.b16 %v574
    %v3139 = vunpack.c.l.b16 %v575
    %v3140 = vunpack.c.h.b16 %v575
    %v3141 = vunpack.c.l.b16 %v576
    %v3142 = vunpack.c.h.b16 %v576
    %v3143 = vunpack.c.l.b16 %v577
    %v3144 = vunpack.c.h.b16 %v577
    %v3145 = vunpack.c.l.b16 %v578
    %v3146 = vunpack.c.h.b16 %v578
    %v3147 = vunpack.c.l.b16 %v579
    %v3148 = vunpack.c.h.b16 %v579
    %v3149 = vunpack.c.l.b16 %v580
    %v3150 = vunpack.c.h.b16 %v580
    %v3151 = vunpack.c.l.b16 %v581
    %v3152 = vunpack.c.h.b16 %v581
    %v3153 = vunpack.c.l.b16 %v582
    %v3154 = vunpack.c.h.b16 %v582
    %v3155 = vunpack.c.l.b16 %v583
    %v3156 = vunpack.c.h.b16 %v583
    %v3157 = vunpack.c.l.b16 %v584
    %v3158 = vunpack.c.h.b16 %v584
    %v3159 = vunpack.c.l.b16 %v585
    %v3160 = vunpack.c.h.b16 %v585
    %v3161 = vunpack.c.l.b16 %v586
    %v3162 = vunpack.c.h.b16 %v586
    %v3163 = vunpack.c.l.b16 %v587
    %v3164 = vunpack.c.h.b16 %v587
    %v3165 = vunpack.c.l.b16 %v588
    %v3166 = vunpack.c.h.b16 %v588
    %v3167 = vunpack.c.l.b16 %v589
    %v3168 = vunpack.c.h.b16 %v589
    %v3169 = vunpack.c.l.b16 %v590
    %v3170 = vunpack.c.h.b16 %v590
    %v3171 = vunpack.c.l.b16 %v591
    %v3172 = vunpack.c.h.b16 %v591
    %v3173 = vunpack.c.l.b16 %v592
    %v3174 = vunpack.c.h.b16 %v592
    %v3175 = vunpack.c.l.b16 %v593
    %v3176 = vunpack.c.h.b16 %v593
    %v3177 = vunpack.c.l.b16 %v594
    %v3178 = vunpack.c.h.b16 %v594
    %v3179 = vunpack.c.l.b16 %v595
    %v3180 = vunpack.c.h.b16 %v595
    %v3181 = vunpack.c.l.b16 %v596
    %v3182 = vunpack.c.h.b16 %v596
    %v3183 = vunpack.c.l.b16 %v597
    %v3184 = vunpack.c.h.b16 %v597
    %v3185 = vunpack.c.l.b16 %v598
    %v3186 = vunpack.c.h.b16 %v598
    %v3187 = vunpack.c.l.b16 %v599
    %v3188 = vunpack.c.h.b16 %v599
    %v3189 = vunpack.c.l.b16 %v600
    %v3190 = vunpack.c.h.b16 %v600
    %v3191 = vunpack.c.l.b16 %v601
    %v3192 = vunpack.c.h.b16 %v601
    %v3193 = vunpack.c.l.b16 %v602
    %v3194 = vunpack.c.h.b16 %v602
    %v3195 = vunpack.c.l.b16 %v603
    %v3196 = vunpack.c.h.b16 %v603
    %v3197 = vunpack.c.l.b16 %v604
    %v3198 = vunpack.c.h.b16 %v604
    %v3199 = vunpack.c.l.b16 %v605
    %v3200 = vunpack.c.h.b16 %v605
    %v3201 = vunpack.c.l.b16 %v606
    %v3202 = vunpack.c.h.b16 %v606
    %v3203 = vunpack.c.l.b16 %v607
    %v3204 = vunpack.c.h.b16 %v607
    %v3205 = vunpack.c.l.b16 %v608
    %v3206 = vunpack.c.h.b16 %v608
    %v3207 = vunpack.c.l.b16 %v609
    %v3208 = vunpack.c.h.b16 %v609
    %v3209 = vunpack.c.l.b16 %v610
    %v3210 = vunpack.c.h.b16 %v610
    %v3211 = vunpack.c.l.b16 %v611
    %v3212 = vunpack.c.h.b16 %v611
    %v3213 = vunpack.c.l.b16 %v612
    %v3214 = vunpack.c.h.b16 %v612
    %v3215 = vunpack.c.l.b16 %v613
    %v3216 = vunpack.c.h.b16 %v613
    %v3217 = vunpack.c.l.b16 %v614
    %v3218 = vunpack.c.h.b16 %v614
    %v3219 = vunpack.c.l.b16 %v615
    %v3220 = vunpack.c.h.b16 %v615
    %v3221 = vunpack.c.l.b16 %v616
    %v3222 = vunpack.c.h.b16 %v616
    %v3223 = vunpack.c.l.b16 %v617
    %v3224 = vunpack.c.h.b16 %v617
    %v3225 = vunpack.c.l.b16 %v618
    %v3226 = vunpack.c.h.b16 %v618
    %v3227 = vunpack.c.l.b16 %v619
    %v3228 = vunpack.c.h.b16 %v619
    %v3229 = vunpack.c.l.b16 %v620
    %v3230 = vunpack.c.h.b16 %v620
    %v3231 = vunpack.c.l.b16 %v621
    %v3232 = vunpack.c.h.b16 %v621
    %v3233 = vunpack.c.l.b16 %v622
    %v3234 = vunpack.c.h.b16 %v622
    %v3235 = vunpack.c.l.b16 %v623
    %v3236 = vunpack.c.h.b16 %v623
    %v3237 = vunpack.c.l.b16 %v624
    %v3238 = vunpack.c.h.b16 %v624
    %v3239 = vunpack.c.l.b16 %v625
    %v3240 = vunpack.c.h.b16 %v625
    %v3241 = vunpack.c.l.b16 %v626
    %v3242 = vunpack.c.h.b16 %v626
    %v3243 = vunpack.c.l.b16 %v627
    %v3244 = vunpack.c.h.b16 %v627
    %v3245 = vunpack.c.l.b16 %v628
    %v3246 = vunpack.c.h.b16 %v628
    %v3247 = vunpack.c.l.b16 %v629
    %v3248 = vunpack.c.h.b16 %v629
    %v3249 = vunpack.c.l.b16 %v630
    %v3250 = vunpack.c.h.b16 %v630
    %v3251 = vunpack.c.l.b16 %v631
    %v3252 = vunpack.c.h.b16 %v631
    %v3253 = vunpack.c.l.b16 %v632
    %v3254 = vunpack.c.h.b16 %v632
    %v3255 = vunpack.c.l.b16 %v633
    %v3256 = vunpack.c.h.b16 %v633
    %v3257 = vunpack.c.l.b16 %v634
    %v3258 = vunpack.c.h.b16 %v634
    %v3259 = vunpack.c.l.b16 %v635
    %v3260 = vunpack.c.h.b16 %v635
    %v3261 = vunpack.c.l.b16 %v636
    %v3262 = vunpack.c.h.b16 %v636
    %v3263 = vunpack.c.l.b16 %v637
    %v3264 = vunpack.c.h.b16 %v637
    %v3265 = vunpack.c.l.b16 %v638
    %v3266 = vunpack.c.h.b16 %v638
    %v3267 = vunpack.c.l.b16 %v639
    %v3268 = vunpack.c.h.b16 %v639
    %v3269 = vunpack.c.l.b16 %v640
    %v3270 = vunpack.c.h.b16 %v640
    %v3271 = vunpack.c.l.b16 %v641
    %v3272 = vunpack.c.h.b16 %v641
    %v3273 = vunpack.c.l.b16 %v642
    %v3274 = vunpack.c.h.b16 %v642
    %v3275 = vunpack.c.l.b16 %v643
    %v3276 = vunpack.c.h.b16 %v643
    %v3277 = vunpack.c.l.b16 %v644
    %v3278 = vunpack.c.h.b16 %v644
    %v3279 = vunpack.c.l.b16 %v645
    %v3280 = vunpack.c.h.b16 %v645
    %v3281 = vunpack.c.l.b16 %v646
    %v3282 = vunpack.c.h.b16 %v646
    %v3283 = vunpack.c.l.b16 %v647
    %v3284 = vunpack.c.h.b16 %v647
    %v3285 = vunpack.c.l.b16 %v648
    %v3286 = vunpack.c.h.b16 %v648
    %v3287 = vunpack.c.l.b16 %v649
    %v3288 = vunpack.c.h.b16 %v649
    %v3289 = vunpack.c.l.b16 %v650
    %v3290 = vunpack.c.h.b16 %v650
    %v3291 = vunpack.c.l.b16 %v651
    %v3292 = vunpack.c.h.b16 %v651
    %v3293 = vunpack.c.l.b16 %v652
    %v3294 = vunpack.c.h.b16 %v652
    %v3295 = vunpack.c.l.b16 %v653
    %v3296 = vunpack.c.h.b16 %v653
    %v3297 = vunpack.c.l.b16 %v654
    %v3298 = vunpack.c.h.b16 %v654
    %v3299 = vunpack.c.l.b16 %v655
    %v3300 = vunpack.c.h.b16 %v655
    %v3301 = vunpack.c.l.b16 %v656
    %v3302 = vunpack.c.h.b16 %v656
    %v3303 = vunpack.c.l.b16 %v657
    %v3304 = vunpack.c.h.b16 %v657
    %v3305 = vunpack.c.l.b16 %v658
    %v3306 = vunpack.c.h.b16 %v658
    %v3307 = vunpack.c.l.b16 %v659
    %v3308 = vunpack.c.h.b16 %v659
    %v3309 = vunpack.c.l.b16 %v660
    %v3310 = vunpack.c.h.b16 %v660
    %v3311 = vunpack.c.l.b16 %v661
    %v3312 = vunpack.c.h.b16 %v661
    %v3313 = vunpack.c.l.b16 %v662
    %v3314 = vunpack.c.h.b16 %v662
    %v3315 = vunpack.c.l.b16 %v663
    %v3316 = vunpack.c.h.b16 %v663
    %v3317 = vunpack.c.l.b16 %v664
    %v3318 = vunpack.c.h.b16 %v664
    %v3319 = vunpack.c.l.b16 %v665
    %v3320 = vunpack.c.h.b16 %v665
    %v3321 = vunpack.c.l.b16 %v666
    %v3322 = vunpack.c.h.b16 %v666
    %v3323 = vunpack.c.l.b16 %v667
    %v3324 = vunpack.c.h.b16 %v667
    %v3325 = vunpack.c.l.b16 %v668
    %v3326 = vunpack.c.h.b16 %v668
    %v3327 = vunpack.c.l.b16 %v669
    %v3328 = vunpack.c.h.b16 %v669
    %v3329 = vunpack.c.l.b16 %v670
    %v3330 = vunpack.c.h.b16 %v670
    %v3331 = vunpack.c.l.b16 %v671
    %v3332 = vunpack.c.h.b16 %v671
    %v3333 = vunpack.c.l.b16 %v672
    %v3334 = vunpack.c.h.b16 %v672
    %v3335 = vunpack.c.l.b16 %v673
    %v3336 = vunpack.c.h.b16 %v673
    %v3337 = vunpack.c.l.b16 %v674
    %v3338 = vunpack.c.h.b16 %v674
    %v3339 = vunpack.c.l.b16 %v675
    %v3340 = vunpack.c.h.b16 %v675
    %v3341 = vunpack.c.l.b16 %v676
    %v3342 = vunpack.c.h.b16 %v676
    %v3343 = vunpack.c.l.b16 %v677
    %v3344 = vunpack.c.h.b16 %v677
    %v3345 = vunpack.c.l.b16 %v678
    %v3346 = vunpack.c.h.b16 %v678
    %v3347 = vunpack.c.l.b16 %v679
    %v3348 = vunpack.c.h.b16 %v679
    %v3349 = vunpack.c.l.b16 %v680
    %v3350 = vunpack.c.h.b16 %v680
    %v3351 = vunpack.c.l.b16 %v681
    %v3352 = vunpack.c.h.b16 %v681
    %v3353 = vunpack.c.l.b16 %v682
    %v3354 = vunpack.c.h.b16 %v682
    %v3355 = vunpack.c.l.b16 %v683
    %v3356 = vunpack.c.h.b16 %v683
    %v3357 = vunpack.c.l.b16 %v684
    %v3358 = vunpack.c.h.b16 %v684
    %v3359 = vunpack.c.l.b16 %v685
    %v3360 = vunpack.c.h.b16 %v685
    %v3361 = vunpack.c.l.b16 %v686
    %v3362 = vunpack.c.h.b16 %v686
    %v3363 = vunpack.c.l.b16 %v687
    %v3364 = vunpack.c.h.b16 %v687
    %v3365 = vunpack.c.l.b16 %v688
    %v3366 = vunpack.c.h.b16 %v688
    %v3367 = vunpack.c.l.b16 %v689
    %v3368 = vunpack.c.h.b16 %v689
    %v3369 = vunpack.c.l.b16 %v690
    %v3370 = vunpack.c.h.b16 %v690
    %v3371 = vunpack.c.l.b16 %v691
    %v3372 = vunpack.c.h.b16 %v691
    %v3373 = vunpack.c.l.b16 %v692
    %v3374 = vunpack.c.h.b16 %v692
    %v3375 = vunpack.c.l.b16 %v693
    %v3376 = vunpack.c.h.b16 %v693
    %v3377 = vunpack.c.l.b16 %v694
    %v3378 = vunpack.c.h.b16 %v694
    %v3379 = vunpack.c.l.b16 %v695
    %v3380 = vunpack.c.h.b16 %v695
    %v3381 = vunpack.c.l.b16 %v696
    %v3382 = vunpack.c.h.b16 %v696
    %v3383 = vunpack.c.l.b16 %v697
    %v3384 = vunpack.c.h.b16 %v697
    %v3385 = vunpack.c.l.b16 %v698
    %v3386 = vunpack.c.h.b16 %v698
    %v3387 = vunpack.c.l.b16 %v699
    %v3388 = vunpack.c.h.b16 %v699
    %v3389 = vunpack.c.l.b16 %v700
    %v3390 = vunpack.c.h.b16 %v700
    %v3391 = vunpack.c.l.b16 %v701
    %v3392 = vunpack.c.h.b16 %v701
    %v3393 = vunpack.c.l.b16 %v702
    %v3394 = vunpack.c.h.b16 %v702
    %v3395 = vunpack.c.l.b16 %v703
    %v3396 = vunpack.c.h.b16 %v703
    %v3397 = vunpack.c.l.b16 %v704
    %v3398 = vunpack.c.h.b16 %v704
    %v3399 = vunpack.c.l.b16 %v705
    %v3400 = vunpack.c.h.b16 %v705
    %v3401 = vunpack.c.l.b16 %v706
    %v3402 = vunpack.c.h.b16 %v706
    %v3403 = vunpack.c.l.b16 %v707
    %v3404 = vunpack.c.h.b16 %v707
    %v3405 = vunpack.c.l.b16 %v708
    %v3406 = vunpack.c.h.b16 %v708
    %v3407 = vunpack.c.l.b16 %v709
    %v3408 = vunpack.c.h.b16 %v709
    %v3409 = vunpack.c.l.b16 %v710
    %v3410 = vunpack.c.h.b16 %v710
    %v3411 = vunpack.c.l.b16 %v711
    %v3412 = vunpack.c.h.b16 %v711
    %v3413 = vunpack.c.l.b16 %v712
    %v3414 = vunpack.c.h.b16 %v712
    %v3415 = vunpack.c.l.b16 %v713
    %v3416 = vunpack.c.h.b16 %v713
    %v3417 = vunpack.c.l.b16 %v714
    %v3418 = vunpack.c.h.b16 %v714
    %v3419 = vunpack.c.l.b16 %v715
    %v3420 = vunpack.c.h.b16 %v715
    %v3421 = vunpack.c.l.b16 %v716
    %v3422 = vunpack.c.h.b16 %v716
    %v3423 = vunpack.c.l.b16 %v717
    %v3424 = vunpack.c.h.b16 %v717
    %v3425 = vunpack.c.l.b16 %v718
    %v3426 = vunpack.c.h.b16 %v718
    %v3427 = vunpack.c.l.b16 %v719
    %v3428 = vunpack.c.h.b16 %v719
    %v3429 = vunpack.c.l.b16 %v720
    %v3430 = vunpack.c.h.b16 %v720
    %v3431 = vunpack.c.l.b16 %v721
    %v3432 = vunpack.c.h.b16 %v721
    %v3433 = vunpack.c.l.b16 %v722
    %v3434 = vunpack.c.h.b16 %v722
    %v3435 = vunpack.c.l.b16 %v723
    %v3436 = vunpack.c.h.b16 %v723
    %v3437 = vunpack.c.l.b16 %v724
    %v3438 = vunpack.c.h.b16 %v724
    %v3439 = vunpack.c.l.b16 %v725
    %v3440 = vunpack.c.h.b16 %v725
    %v3441 = vunpack.c.l.b16 %v726
    %v3442 = vunpack.c.h.b16 %v726
    %v3443 = vunpack.c.l.b16 %v727
    %v3444 = vunpack.c.h.b16 %v727
    %v3445 = vunpack.c.l.b16 %v728
    %v3446 = vunpack.c.h.b16 %v728
    %v3447 = vunpack.c.l.b16 %v729
    %v3448 = vunpack.c.h.b16 %v729
    %v3449 = vunpack.c.l.b16 %v730
    %v3450 = vunpack.c.h.b16 %v730
    %v3451 = vunpack.c.l.b16 %v731
    %v3452 = vunpack.c.h.b16 %v731
    %v3453 = vunpack.c.l.b16 %v732
    %v3454 = vunpack.c.h.b16 %v732
    %v3455 = vunpack.c.l.b16 %v733
    %v3456 = vunpack.c.h.b16 %v733
    %v3457 = vunpack.c.l.b16 %v734
    %v3458 = vunpack.c.h.b16 %v734
    %v3459 = vunpack.c.l.b16 %v735
    %v3460 = vunpack.c.h.b16 %v735
    %v3461 = vunpack.c.l.b16 %v736
    %v3462 = vunpack.c.h.b16 %v736
    %v3463 = vunpack.c.l.b16 %v737
    %v3464 = vunpack.c.h.b16 %v737
    %v3465 = vunpack.c.l.b16 %v738
    %v3466 = vunpack.c.h.b16 %v738
    %v3467 = vunpack.c.l.b16 %v739
    %v3468 = vunpack.c.h.b16 %v739
    %v3469 = vunpack.c.l.b16 %v740
    %v3470 = vunpack.c.h.b16 %v740
    %v3471 = vunpack.c.l.b16 %v741
    %v3472 = vunpack.c.h.b16 %v741
    %v3473 = vunpack.c.l.b16 %v742
    %v3474 = vunpack.c.h.b16 %v742
    %v3475 = vunpack.c.l.b16 %v743
    %v3476 = vunpack.c.h.b16 %v743
    %v3477 = vunpack.c.l.b16 %v744
    %v3478 = vunpack.c.h.b16 %v744
    %v3479 = vunpack.c.l.b16 %v745
    %v3480 = vunpack.c.h.b16 %v745
    %v3481 = vunpack.c.l.b16 %v746
    %v3482 = vunpack.c.h.b16 %v746
    %v3483 = vunpack.c.l.b16 %v747
    %v3484 = vunpack.c.h.b16 %v747
    %v3485 = vunpack.c.l.b16 %v748
    %v3486 = vunpack.c.h.b16 %v748
    %v3487 = vunpack.c.l.b16 %v749
    %v3488 = vunpack.c.h.b16 %v749
    %v3489 = vunpack.c.l.b16 %v750
    %v3490 = vunpack.c.h.b16 %v750
    %v3491 = vunpack.c.l.b16 %v751
    %v3492 = vunpack.c.h.b16 %v751
    %v3493 = vunpack.c.l.b16 %v752
    %v3494 = vunpack.c.h.b16 %v752
    %v3495 = vunpack.c.l.b16 %v753
    %v3496 = vunpack.c.h.b16 %v753
    %v3497 = vunpack.c.l.b16 %v754
    %v3498 = vunpack.c.h.b16 %v754
    %v3499 = vunpack.c.l.b16 %v755
    %v3500 = vunpack.c.h.b16 %v755
    %v3501 = vunpack.c.l.b16 %v756
    %v3502 = vunpack.c.h.b16 %v756
    %v3503 = vunpack.c.l.b16 %v757
    %v3504 = vunpack.c.h.b16 %v757
    %v3505 = vunpack.c.l.b16 %v758
    %v3506 = vunpack.c.h.b16 %v758
    %v3507 = vunpack.c.l.b16 %v759
    %v3508 = vunpack.c.h.b16 %v759
    %v3509 = vunpack.c.l.b16 %v760
    %v3510 = vunpack.c.h.b16 %v760
    %v3511 = vunpack.c.l.b16 %v761
    %v3512 = vunpack.c.h.b16 %v761
    %v3513 = vunpack.c.l.b16 %v762
    %v3514 = vunpack.c.h.b16 %v762
    %v3515 = vunpack.c.l.b16 %v763
    %v3516 = vunpack.c.h.b16 %v763
    %v3517 = vunpack.c.l.b16 %v764
    %v3518 = vunpack.c.h.b16 %v764
    %v3519 = vunpack.c.l.b16 %v765
    %v3520 = vunpack.c.h.b16 %v765
    %v3521 = vunpack.c.l.b16 %v766
    %v3522 = vunpack.c.h.b16 %v766
    %v3523 = vunpack.c.l.b16 %v767
    %v3524 = vunpack.c.h.b16 %v767
    %v3525 = vunpack.c.l.b16 %v768
    %v3526 = vunpack.c.h.b16 %v768
    %v3527 = vunpack.c.l.b16 %v769
    %v3528 = vunpack.c.h.b16 %v769
    %v3529 = vunpack.c.l.b16 %v770
    %v3530 = vunpack.c.h.b16 %v770
    %v3531 = vunpack.c.l.b16 %v771
    %v3532 = vunpack.c.h.b16 %v771
    %v3533 = vunpack.c.l.b16 %v772
    %v3534 = vunpack.c.h.b16 %v772
    %v3535 = vunpack.c.l.b16 %v773
    %v3536 = vunpack.c.h.b16 %v773
    %v3537 = vunpack.c.l.b16 %v774
    %v3538 = vunpack.c.h.b16 %v774
    %v3539 = vunpack.c.l.b16 %v775
    %v3540 = vunpack.c.h.b16 %v775
    %v3541 = vunpack.c.l.b16 %v776
    %v3542 = vunpack.c.h.b16 %v776
    %v3543 = vunpack.c.l.b16 %v777
    %v3544 = vunpack.c.h.b16 %v777
    %v3545 = vunpack.c.l.b16 %v778
    %v3546 = vunpack.c.h.b16 %v778
    %v3547 = vunpack.c.l.b16 %v779
    %v3548 = vunpack.c.h.b16 %v779
    %v3549 = vunpack.c.l.b16 %v780
    %v3550 = vunpack.c.h.b16 %v780
    %v3551 = vunpack.c.l.b16 %v781
    %v3552 = vunpack.c.h.b16 %v781
    %v3553 = vunpack.c.l.b16 %v782
    %v3554 = vunpack.c.h.b16 %v782
    %v3555 = vunpack.c.l.b16 %v783
    %v3556 = vunpack.c.h.b16 %v783
    %v3557 = vunpack.c.l.b16 %v784
    %v3558 = vunpack.c.h.b16 %v784
    %v3559 = vunpack.c.l.b16 %v785
    %v3560 = vunpack.c.h.b16 %v785
    %v3561 = vunpack.c.l.b16 %v786
    %v3562 = vunpack.c.h.b16 %v786
    %v3563 = vunpack.c.l.b16 %v787
    %v3564 = vunpack.c.h.b16 %v787
    %v3565 = vunpack.c.l.b16 %v788
    %v3566 = vunpack.c.h.b16 %v788
    %v3567 = vunpack.c.l.b16 %v789
    %v3568 = vunpack.c.h.b16 %v789
    %v3569 = vunpack.c.l.b16 %v790
    %v3570 = vunpack.c.h.b16 %v790
    %v3571 = vunpack.c.l.b16 %v791
    %v3572 = vunpack.c.h.b16 %v791
    %v3573 = vunpack.c.l.b16 %v792
    %v3574 = vunpack.c.h.b16 %v792
    %v3575 = vunpack.c.l.b16 %v793
    %v3576 = vunpack.c.h.b16 %v793
    %v3577 = vunpack.c.l.b16 %v794
    %v3578 = vunpack.c.h.b16 %v794
    %v3579 = vunpack.c.l.b16 %v795
    %v3580 = vunpack.c.h.b16 %v795
    %v3581 = vunpack.c.l.b16 %v796
    %v3582 = vunpack.c.h.b16 %v796
    %v3583 = vunpack.c.l.b16 %v797
    %v3584 = vunpack.c.h.b16 %v797
    %v3585 = vunpack.c.l.b16 %v798
    %v3586 = vunpack.c.h.b16 %v798
    %v3587 = vunpack.c.l.b16 %v799
    %v3588 = vunpack.c.h.b16 %v799
    %v3589 = vunpack.c.l.b16 %v800
    %v3590 = vunpack.c.h.b16 %v800
    %v3591 = vunpack.c.l.b16 %v801
    %v3592 = vunpack.c.h.b16 %v801
    %v3593 = vunpack.c.l.b16 %v802
    %v3594 = vunpack.c.h.b16 %v802
    %v3595 = vunpack.c.l.b16 %v803
    %v3596 = vunpack.c.h.b16 %v803
    %v3597 = vunpack.c.l.b16 %v804
    %v3598 = vunpack.c.h.b16 %v804
    %v3599 = vunpack.c.l.b16 %v805
    %v3600 = vunpack.c.h.b16 %v805
    %v3601 = vunpack.c.l.b16 %v806
    %v3602 = vunpack.c.h.b16 %v806
    %v3603 = vunpack.c.l.b16 %v807
    %v3604 = vunpack.c.h.b16 %v807
    %v3605 = vunpack.c.l.b16 %v808
    %v3606 = vunpack.c.h.b16 %v808
    %v3607 = vunpack.c.l.b16 %v809
    %v3608 = vunpack.c.h.b16 %v809
    %v3609 = vunpack.c.l.b16 %v810
    %v3610 = vunpack.c.h.b16 %v810
    %v3611 = vunpack.c.l.b16 %v811
    %v3612 = vunpack.c.h.b16 %v811
    %v3613 = vunpack.c.l.b16 %v812
    %v3614 = vunpack.c.h.b16 %v812
    %v3615 = vunpack.c.l.b16 %v813
    %v3616 = vunpack.c.h.b16 %v813
    %v3617 = vunpack.c.l.b16 %v814
    %v3618 = vunpack.c.h.b16 %v814
    %v3619 = vunpack.c.l.b16 %v815
    %v3620 = vunpack.c.h.b16 %v815
    %v3621 = vunpack.c.l.b16 %v816
    %v3622 = vunpack.c.h.b16 %v816
    %v3623 = vunpack.c.l.b16 %v817
    %v3624 = vunpack.c.h.b16 %v817
    %v3625 = vunpack.c.l.b16 %v818
    %v3626 = vunpack.c.h.b16 %v818
    %v3627 = vunpack.c.l.b16 %v819
    %v3628 = vunpack.c.h.b16 %v819
    %v3629 = vunpack.c.l.b16 %v820
    %v3630 = vunpack.c.h.b16 %v820
    %v3631 = vunpack.c.l.b16 %v821
    %v3632 = vunpack.c.h.b16 %v821
    %v3633 = vunpack.c.l.b16 %v822
    %v3634 = vunpack.c.h.b16 %v822
    %v3635 = vunpack.c.l.b16 %v823
    %v3636 = vunpack.c.h.b16 %v823
    %v3637 = vunpack.c.l.b16 %v824
    %v3638 = vunpack.c.h.b16 %v824
    %v3639 = vunpack.c.l.b16 %v825
    %v3640 = vunpack.c.h.b16 %v825
    %v3641 = vunpack.c.l.b16 %v826
    %v3642 = vunpack.c.h.b16 %v826
    %v3643 = vunpack.c.l.b16 %v827
    %v3644 = vunpack.c.h.b16 %v827
    %v3645 = vunpack.c.l.b16 %v828
    %v3646 = vunpack.c.h.b16 %v828
    %v3647 = vunpack.c.l.b16 %v829
    %v3648 = vunpack.c.h.b16 %v829
    %v3649 = vunpack.c.l.b16 %v830
    %v3650 = vunpack.c.h.b16 %v830
    %v3651 = vunpack.c.l.b16 %v831
    %v3652 = vunpack.c.h.b16 %v831
    %v3653 = vunpack.c.l.b16 %v832
    %v3654 = vunpack.c.h.b16 %v832
    %v3655 = vunpack.c.l.b16 %v833
    %v3656 = vunpack.c.h.b16 %v833
    %v3657 = vunpack.c.l.b16 %v834
    %v3658 = vunpack.c.h.b16 %v834
    %v3659 = vunpack.c.l.b16 %v835
    %v3660 = vunpack.c.h.b16 %v835
    %v3661 = vunpack.c.l.b16 %v836
    %v3662 = vunpack.c.h.b16 %v836
    %v3663 = vunpack.c.l.b16 %v837
    %v3664 = vunpack.c.h.b16 %v837
    %v3665 = vunpack.c.l.b16 %v838
    %v3666 = vunpack.c.h.b16 %v838
    %v3667 = vunpack.c.l.b16 %v839
    %v3668 = vunpack.c.h.b16 %v839
    %v3669 = vunpack.c.l.b16 %v840
    %v3670 = vunpack.c.h.b16 %v840
    %v3671 = vunpack.c.l.b16 %v841
    %v3672 = vunpack.c.h.b16 %v841
    %v3673 = vunpack.c.l.b16 %v842
    %v3674 = vunpack.c.h.b16 %v842
    %v3675 = vunpack.c.l.b16 %v843
    %v3676 = vunpack.c.h.b16 %v843
    %v3677 = vunpack.c.l.b16 %v844
    %v3678 = vunpack.c.h.b16 %v844
    %v3679 = vunpack.c.l.b16 %v845
    %v3680 = vunpack.c.h.b16 %v845
    %v3681 = vunpack.c.l.b16 %v846
    %v3682 = vunpack.c.h.b16 %v846
    %v3683 = vunpack.c.l.b16 %v847
    %v3684 = vunpack.c.h.b16 %v847
    %v3685 = vunpack.c.l.b16 %v848
    %v3686 = vunpack.c.h.b16 %v848
    %v3687 = vunpack.c.l.b16 %v849
    %v3688 = vunpack.c.h.b16 %v849
    %v3689 = vunpack.c.l.b16 %v850
    %v3690 = vunpack.c.h.b16 %v850
    %v3691 = vunpack.c.l.b16 %v851
    %v3692 = vunpack.c.h.b16 %v851
    %v3693 = vunpack.c.l.b16 %v852
    %v3694 = vunpack.c.h.b16 %v852
    %v3695 = vunpack.c.l.b16 %v853
    %v3696 = vunpack.c.h.b16 %v853
    %v3697 = vunpack.c.l.b16 %v854
    %v3698 = vunpack.c.h.b16 %v854
    %v3699 = vunpack.c.l.b16 %v855
    %v3700 = vunpack.c.h.b16 %v855
    %v3701 = vunpack.c.l.b16 %v856
    %v3702 = vunpack.c.h.b16 %v856
    %v3703 = vunpack.c.l.b16 %v857
    %v3704 = vunpack.c.h.b16 %v857
    %v3705 = vunpack.c.l.b16 %v858
    %v3706 = vunpack.c.h.b16 %v858
    %v3707 = vunpack.c.l.b16 %v859
    %v3708 = vunpack.c.h.b16 %v859
    %v3709 = vunpack.c.l.b16 %v860
    %v3710 = vunpack.c.h.b16 %v860
    %v3711 = vunpack.c.l.b16 %v861
    %v3712 = vunpack.c.h.b16 %v861
    %v3713 = vunpack.c.l.b16 %v862
    %v3714 = vunpack.c.h.b16 %v862
    %v3715 = vunpack.c.l.b16 %v863
    %v3716 = vunpack.c.h.b16 %v863
    %v3717 = vunpack.c.l.b16 %v864
    %v3718 = vunpack.c.h.b16 %v864
    %v3719 = vunpack.c.l.b16 %v865
    %v3720 = vunpack.c.h.b16 %v865
    %v3721 = vunpack.c.l.b16 %v866
    %v3722 = vunpack.c.h.b16 %v866
    %v3723 = vunpack.c.l.b16 %v867
    %v3724 = vunpack.c.h.b16 %v867
    %v3725 = vunpack.c.l.b16 %v868
    %v3726 = vunpack.c.h.b16 %v868
    %v3727 = vunpack.c.l.b16 %v869
    %v3728 = vunpack.c.h.b16 %v869
    %v3729 = vunpack.c.l.b16 %v870
    %v3730 = vunpack.c.h.b16 %v870
    %v3731 = vunpack.c.l.b16 %v871
    %v3732 = vunpack.c.h.b16 %v871
    %v3733 = vunpack.c.l.b16 %v872
    %v3734 = vunpack.c.h.b16 %v872
    %v3735 = vunpack.c.l.b16 %v873
    %v3736 = vunpack.c.h.b16 %v873
    %v3737 = vunpack.c.l.b16 %v874
    %v3738 = vunpack.c.h.b16 %v874
    %v3739 = vunpack.c.l.b16 %v875
    %v3740 = vunpack.c.h.b16 %v875
    %v3741 = vunpack.c.l.b16 %v876
    %v3742 = vunpack.c.h.b16 %v876
    %v3743 = vunpack.c.l.b16 %v877
    %v3744 = vunpack.c.h.b16 %v877
    %v3745 = vunpack.c.l.b16 %v878
    %v3746 = vunpack.c.h.b16 %v878
    %v3747 = vunpack.c.l.b16 %v879
    %v3748 = vunpack.c.h.b16 %v879
    %v3749 = vunpack.c.l.b16 %v880
    %v3750 = vunpack.c.h.b16 %v880
    %v3751 = vunpack.c.l.b16 %v881
    %v3752 = vunpack.c.h.b16 %v881
    %v3753 = vunpack.c.l.b16 %v882
    %v3754 = vunpack.c.h.b16 %v882
    %v3755 = vunpack.c.l.b16 %v883
    %v3756 = vunpack.c.h.b16 %v883
    %v3757 = vunpack.c.l.b16 %v884
    %v3758 = vunpack.c.h.b16 %v884
    %v3759 = vunpack.c.l.b16 %v885
    %v3760 = vunpack.c.h.b16 %v885
    %v3761 = vunpack.c.l.b16 %v886
    %v3762 = vunpack.c.h.b16 %v886
    %v3763 = vunpack.c.l.b16 %v887
    %v3764 = vunpack.c.h.b16 %v887
    %v3765 = vunpack.c.l.b16 %v888
    %v3766 = vunpack.c.h.b16 %v888
    %v3767 = vunpack.c.l.b16 %v889
    %v3768 = vunpack.c.h.b16 %v889
    %v3769 = vunpack.c.l.b16 %v890
    %v3770 = vunpack.c.h.b16 %v890
    %v3771 = vunpack.c.l.b16 %v891
    %v3772 = vunpack.c.h.b16 %v891
    %v3773 = vunpack.c.l.b16 %v892
    %v3774 = vunpack.c.h.b16 %v892
    %v3775 = vunpack.c.l.b16 %v893
    %v3776 = vunpack.c.h.b16 %v893
    %v3777 = vunpack.c.l.b16 %v894
    %v3778 = vunpack.c.h.b16 %v894
    %v3779 = vunpack.c.l.b16 %v895
    %v3780 = vunpack.c.h.b16 %v895
    %v3781 = vunpack.c.l.b16 %v896
    %v3782 = vunpack.c.h.b16 %v896
    %v3783 = vunpack.c.l.b16 %v897
    %v3784 = vunpack.c.h.b16 %v897
    %v3785 = vunpack.c.l.b16 %v898
    %v3786 = vunpack.c.h.b16 %v898
    %v3787 = vunpack.c.l.b16 %v899
    %v3788 = vunpack.c.h.b16 %v899
    %v3789 = vunpack.c.l.b16 %v900
    %v3790 = vunpack.c.h.b16 %v900
    %v3791 = vunpack.c.l.b16 %v901
    %v3792 = vunpack.c.h.b16 %v901
    %v3793 = vunpack.c.l.b16 %v902
    %v3794 = vunpack.c.h.b16 %v902
    %v3795 = vunpack.c.l.b16 %v903
    %v3796 = vunpack.c.h.b16 %v903
    %v3797 = vunpack.c.l.b16 %v904
    %v3798 = vunpack.c.h.b16 %v904
    %v3799 = vunpack.c.l.b16 %v905
    %v3800 = vunpack.c.h.b16 %v905
    %v3801 = vunpack.c.l.b16 %v906
    %v3802 = vunpack.c.h.b16 %v906
    %v3803 = vunpack.c.l.b16 %v907
    %v3804 = vunpack.c.h.b16 %v907
    %v3805 = vunpack.c.l.b16 %v908
    %v3806 = vunpack.c.h.b16 %v908
    %v3807 = vunpack.c.l.b16 %v909
    %v3808 = vunpack.c.h.b16 %v909
    %v3809 = vunpack.c.l.b16 %v910
    %v3810 = vunpack.c.h.b16 %v910
    %v3811 = vunpack.c.l.b16 %v911
    %v3812 = vunpack.c.h.b16 %v911
    %v3813 = vunpack.c.l.b16 %v912
    %v3814 = vunpack.c.h.b16 %v912
    %v3815 = vunpack.c.l.b16 %v913
    %v3816 = vunpack.c.h.b16 %v913
    %v3817 = vunpack.c.l.b16 %v914
    %v3818 = vunpack.c.h.b16 %v914
    %v3819 = vunpack.c.l.b16 %v915
    %v3820 = vunpack.c.h.b16 %v915
    %v3821 = vunpack.c.l.b16 %v916
    %v3822 = vunpack.c.h.b16 %v916
    %v3823 = vunpack.c.l.b16 %v917
    %v3824 = vunpack.c.h.b16 %v917
    %v3825 = vunpack.c.l.b16 %v918
    %v3826 = vunpack.c.h.b16 %v918
    %v3827 = vunpack.c.l.b16 %v919
    %v3828 = vunpack.c.h.b16 %v919
    %v3829 = vunpack.c.l.b16 %v920
    %v3830 = vunpack.c.h.b16 %v920
    %v3831 = vunpack.c.l.b16 %v921
    %v3832 = vunpack.c.h.b16 %v921
    %v3833 = vunpack.c.l.b16 %v922
    %v3834 = vunpack.c.h.b16 %v922
    %v3835 = vunpack.c.l.b16 %v923
    %v3836 = vunpack.c.h.b16 %v923
    %v3837 = vunpack.c.l.b16 %v924
    %v3838 = vunpack.c.h.b16 %v924
    %v3839 = vunpack.c.l.b16 %v925
    %v3840 = vunpack.c.h.b16 %v925
    %v3841 = vunpack.c.l.b16 %v926
    %v3842 = vunpack.c.h.b16 %v926
    %v3843 = vunpack.c.l.b16 %v927
    %v3844 = vunpack.c.h.b16 %v927
    %v3845 = vunpack.c.l.b16 %v928
    %v3846 = vunpack.c.h.b16 %v928
    %v3847 = vunpack.c.l.b16 %v929
    %v3848 = vunpack.c.h.b16 %v929
    %v3849 = vunpack.c.l.b16 %v930
    %v3850 = vunpack.c.h.b16 %v930
    %v3851 = vunpack.c.l.b16 %v931
    %v3852 = vunpack.c.h.b16 %v931
    %v3853 = vunpack.c.l.b16 %v932
    %v3854 = vunpack.c.h.b16 %v932
    %v3855 = vunpack.c.l.b16 %v933
    %v3856 = vunpack.c.h.b16 %v933
    %v3857 = vunpack.c.l.b16 %v934
    %v3858 = vunpack.c.h.b16 %v934
    %v3859 = vunpack.c.l.b16 %v935
    %v3860 = vunpack.c.h.b16 %v935
    %v3861 = vunpack.c.l.b16 %v936
    %v3862 = vunpack.c.h.b16 %v936
    %v3863 = vunpack.c.l.b16 %v937
    %v3864 = vunpack.c.h.b16 %v937
    %v3865 = vunpack.c.l.b16 %v938
    %v3866 = vunpack.c.h.b16 %v938
    %v3867 = vunpack.c.l.b16 %v939
    %v3868 = vunpack.c.h.b16 %v939
    %v3869 = vunpack.c.l.b16 %v940
    %v3870 = vunpack.c.h.b16 %v940
    %v3871 = vunpack.c.l.b16 %v941
    %v3872 = vunpack.c.h.b16 %v941
    %v3873 = vunpack.c.l.b16 %v942
    %v3874 = vunpack.c.h.b16 %v942
    %v3875 = vunpack.c.l.b16 %v943
    %v3876 = vunpack.c.h.b16 %v943
    %v3877 = vunpack.c.l.b16 %v944
    %v3878 = vunpack.c.h.b16 %v944
    %v3879 = vunpack.c.l.b16 %v945
    %v3880 = vunpack.c.h.b16 %v945
    %v3881 = vunpack.c.l.b16 %v946
    %v3882 = vunpack.c.h.b16 %v946
    %v3883 = vunpack.c.l.b16 %v947
    %v3884 = vunpack.c.h.b16 %v947
    %v3885 = vunpack.c.l.b16 %v948
    %v3886 = vunpack.c.h.b16 %v948
    %v3887 = vunpack.c.l.b16 %v949
    %v3888 = vunpack.c.h.b16 %v949
    %v3889 = vunpack.c.l.b16 %v950
    %v3890 = vunpack.c.h.b16 %v950
    %v3891 = vunpack.c.l.b16 %v951
    %v3892 = vunpack.c.h.b16 %v951
    %v3893 = vunpack.c.l.b16 %v952
    %v3894 = vunpack.c.h.b16 %v952
    %v3895 = vunpack.c.l.b16 %v953
    %v3896 = vunpack.c.h.b16 %v953
    %v3897 = vunpack.c.l.b16 %v954
    %v3898 = vunpack.c.h.b16 %v954
    %v3899 = vunpack.c.l.b16 %v955
    %v3900 = vunpack.c.h.b16 %v955
    %v3901 = vunpack.c.l.b16 %v956
    %v3902 = vunpack.c.h.b16 %v956
    %v3903 = vunpack.c.l.b16 %v957
    %v3904 = vunpack.c.h.b16 %v957
    %v3905 = vunpack.c.l.b16 %v958
    %v3906 = vunpack.c.h.b16 %v958
    %v3907 = vunpack.c.l.b16 %v959
    %v3908 = vunpack.c.h.b16 %v959
    %v3909 = vunpack.c.l.b16 %v960
    %v3910 = vunpack.c.h.b16 %v960
    %v3911 = vunpack.c.l.b16 %v961
    %v3912 = vunpack.c.h.b16 %v961
    %v3913 = vunpack.c.l.b16 %v962
    %v3914 = vunpack.c.h.b16 %v962
    %v3915 = vunpack.c.l.b16 %v963
    %v3916 = vunpack.c.h.b16 %v963
    %v3917 = vunpack.c.l.b16 %v964
    %v3918 = vunpack.c.h.b16 %v964
    %v3919 = vunpack.c.l.b16 %v965
    %v3920 = vunpack.c.h.b16 %v965
    %v3921 = vunpack.c.l.b16 %v966
    %v3922 = vunpack.c.h.b16 %v966
    %v3923 = vunpack.c.l.b16 %v967
    %v3924 = vunpack.c.h.b16 %v967
    %v3925 = vunpack.c.l.b16 %v968
    %v3926 = vunpack.c.h.b16 %v968
    %v3927 = vunpack.c.l.b16 %v969
    %v3928 = vunpack.c.h.b16 %v969
    %v3929 = vunpack.c.l.b16 %v970
    %v3930 = vunpack.c.h.b16 %v970
    %v3931 = vunpack.c.l.b16 %v971
    %v3932 = vunpack.c.h.b16 %v971
    %v3933 = vunpack.c.l.b16 %v972
    %v3934 = vunpack.c.h.b16 %v972
    %v3935 = vunpack.c.l.b16 %v973
    %v3936 = vunpack.c.h.b16 %v973
    %v3937 = vunpack.c.l.b16 %v974
    %v3938 = vunpack.c.h.b16 %v974
    %v3939 = vunpack.c.l.b16 %v975
    %v3940 = vunpack.c.h.b16 %v975
    %v3941 = vunpack.c.l.b16 %v976
    %v3942 = vunpack.c.h.b16 %v976
    %v3943 = vunpack.c.l.b16 %v977
    %v3944 = vunpack.c.h.b16 %v977
    %v3945 = vunpack.c.l.b16 %v978
    %v3946 = vunpack.c.h.b16 %v978
    %v3947 = vunpack.c.l.b16 %v979
    %v3948 = vunpack.c.h.b16 %v979
    %v3949 = vunpack.c.l.b16 %v980
    %v3950 = vunpack.c.h.b16 %v980
    %v3951 = vunpack.c.l.b16 %v981
    %v3952 = vunpack.c.h.b16 %v981
    %v3953 = vunpack.c.l.b16 %v982
    %v3954 = vunpack.c.h.b16 %v982
    %v3955 = vunpack.c.l.b16 %v983
    %v3956 = vunpack.c.h.b16 %v983
    %v3957 = vunpack.c.l.b16 %v984
    %v3958 = vunpack.c.h.b16 %v984
    %v3959 = vunpack.c.l.b16 %v985
    %v3960 = vunpack.c.h.b16 %v985
    %v3961 = vunpack.c.l.b16 %v986
    %v3962 = vunpack.c.h.b16 %v986
    %v3963 = vunpack.c.l.b16 %v987
    %v3964 = vunpack.c.h.b16 %v987
    %v3965 = vunpack.c.l.b16 %v988
    %v3966 = vunpack.c.h.b16 %v988
    %v3967 = vunpack.c.l.b16 %v989
    %v3968 = vunpack.c.h.b16 %v989
    %v3969 = vunpack.c.l.b16 %v990
    %v3970 = vunpack.c.h.b16 %v990
    %v3971 = vunpack.c.l.b16 %v991
    %v3972 = vunpack.c.h.b16 %v991
    %v3973 = vunpack.c.l.b16 %v992
    %v3974 = vunpack.c.h.b16 %v992
    %v3975 = vunpack.c.l.b16 %v993
    %v3976 = vunpack.c.h.b16 %v993
    %v3977 = vunpack.c.l.b16 %v994
    %v3978 = vunpack.c.h.b16 %v994
    %v3979 = vunpack.c.l.b16 %v995
    %v3980 = vunpack.c.h.b16 %v995
    %v3981 = vunpack.c.l.b16 %v996
    %v3982 = vunpack.c.h.b16 %v996
    %v3983 = vunpack.c.l.b16 %v997
    %v3984 = vunpack.c.h.b16 %v997
    %v3985 = vunpack.c.l.b16 %v998
    %v3986 = vunpack.c.h.b16 %v998
    %v3987 = vunpack.c.l.b16 %v999
    %v3988 = vunpack.c.h.b16 %v999
    %v3989 = vunpack.c.l.b16 %v1000
    %v3990 = vunpack.c.h.b16 %v1000
    %v3991 = vunpack.c.l.b16 %v1001
    %v3992 = vunpack.c.h.b16 %v1001
    %v3993 = vunpack.c.l.b16 %v1002
    %v3994 = vunpack.c.h.b16 %v1002
    %v3995 = vunpack.c.l.b16 %v1003
    %v3996 = vunpack.c.h.b16 %v1003
    %v3997 = vunpack.c.l.b16 %v1004
    %v3998 = vunpack.c.h.b16 %v1004
    %v3999 = vunpack.c.l.b16 %v1005
    %v4000 = vunpack.c.h.b16 %v1005
    %v4001 = vunpack.c.l.b16 %v1006
    %v4002 = vunpack.c.h.b16 %v1006
    %v4003 = vunpack.c.l.b16 %v1007
    %v4004 = vunpack.c.h.b16 %v1007
    %v4005 = vunpack.c.l.b16 %v1008
    %v4006 = vunpack.c.h.b16 %v1008
    %v4007 = vunpack.c.l.b16 %v1009
    %v4008 = vunpack.c.h.b16 %v1009
    %v4009 = vunpack.c.l.b16 %v1010
    %v4010 = vunpack.c.h.b16 %v1010
    %v4011 = vunpack.c.l.b16 %v1011
    %v4012 = vunpack.c.h.b16 %v1011
    %v4013 = vunpack.c.l.b16 %v1012
    %v4014 = vunpack.c.h.b16 %v1012
    %v4015 = vunpack.c.l.b16 %v1013
    %v4016 = vunpack.c.h.b16 %v1013
    %v4017 = vunpack.c.l.b16 %v1014
    %v4018 = vunpack.c.h.b16 %v1014
    %v4019 = vunpack.c.l.b16 %v1015
    %v4020 = vunpack.c.h.b16 %v1015
    %v4021 = vunpack.c.l.b16 %v1016
    %v4022 = vunpack.c.h.b16 %v1016
    %v4023 = vunpack.c.l.b16 %v1017
    %v4024 = vunpack.c.h.b16 %v1017
    %v4025 = vunpack.c.l.b16 %v1018
    %v4026 = vunpack.c.h.b16 %v1018
    %v4027 = vunpack.c.l.b16 %v1019
    %v4028 = vunpack.c.h.b16 %v1019
    %v4029 = vunpack.c.l.b16 %v1020
    %v4030 = vunpack.c.h.b16 %v1020
    %v4031 = vunpack.c.l.b16 %v1021
    %v4032 = vunpack.c.h.b16 %v1021
    %v4033 = vunpack.c.l.b16 %v1022
    %v4034 = vunpack.c.h.b16 %v1022
    %v4035 = vunpack.c.l.b16 %v1023
    %v4036 = vunpack.c.h.b16 %v1023
    %v4037 = vunpack.c.l.b16 %v1024
    %v4038 = vunpack.c.h.b16 %v1024
    %v4039 = vunpack.c.l.b16 %v1025
    %v4040 = vunpack.c.h.b16 %v1025
    %v4041 = vunpack.c.l.b16 %v1026
    %v4042 = vunpack.c.h.b16 %v1026
    %v4043 = vunpack.c.l.b16 %v1027
    %v4044 = vunpack.c.h.b16 %v1027
    %v4045 = vunpack.c.l.b16 %v1028
    %v4046 = vunpack.c.h.b16 %v1028
    %v4047 = vunpack.c.l.b16 %v1029
    %v4048 = vunpack.c.h.b16 %v1029
    %v4049 = vunpack.c.l.b16 %v1030
    %v4050 = vunpack.c.h.b16 %v1030
    %v4051 = vunpack.c.l.b16 %v1031
    %v4052 = vunpack.c.h.b16 %v1031
    %v4053 = vunpack.c.l.b16 %v1032
    %v4054 = vunpack.c.h.b16 %v1032
    %v4055 = vunpack.c.l.b16 %v1033
    %v4056 = vunpack.c.h.b16 %v1033
    %v4057 = vunpack.c.l.b16 %v1034
    %v4058 = vunpack.c.h.b16 %v1034
    %v4059 = vunpack.c.l.b16 %v1035
    %v4060 = vunpack.c.h.b16 %v1035
    %v4061 = vunpack.c.l.b16 %v1036
    %v4062 = vunpack.c.h.b16 %v1036
    %v4063 = vunpack.c.l.b16 %v1037
    %v4064 = vunpack.c.h.b16 %v1037
    %v4065 = vunpack.c.l.b16 %v1038
    %v4066 = vunpack.c.h.b16 %v1038
    %v4067 = vunpack.c.l.b16 %v1039
    %v4068 = vunpack.c.h.b16 %v1039
    %v4069 = vunpack.c.l.b16 %v1040
    %v4070 = vunpack.c.h.b16 %v1040
    %v4071 = vunpack.c.l.b16 %v1041
    %v4072 = vunpack.c.h.b16 %v1041
    %v4073 = vunpack.c.l.b16 %v1042
    %v4074 = vunpack.c.h.b16 %v1042
    %v4075 = vunpack.c.l.b16 %v1043
    %v4076 = vunpack.c.h.b16 %v1043
    %v4077 = vunpack.c.l.b16 %v1044
    %v4078 = vunpack.c.h.b16 %v1044
    %v4079 = vunpack.c.l.b16 %v1045
    %v4080 = vunpack.c.h.b16 %v1045
    %v4081 = vunpack.c.l.b16 %v1046
    %v4082 = vunpack.c.h.b16 %v1046
    %v4083 = vunpack.c.l.b16 %v1047
    %v4084 = vunpack.c.h.b16 %v1047
    %v4085 = vunpack.c.l.b16 %v1048
    %v4086 = vunpack.c.h.b16 %v1048
    %v4087 = vunpack.c.l.b16 %v1049
    %v4088 = vunpack.c.h.b16 %v1049
    %v4089 = vunpack.c.l.b16 %v1050
    %v4090 = vunpack.c.h.b16 %v1050
    %v4091 = vunpack.c.l.b16 %v1051
    %v4092 = vunpack.c.h.b16 %v1051
    %v4093 = vunpack.c.l.b16 %v1052
    %v4094 = vunpack.c.h.b16 %v1052
    %v4095 = vunpack.c.l.b16 %v1053
    %v4096 = vunpack.c.h.b16 %v1053
    %v4097 = vunpack.c.l.b16 %v1054
    %v4098 = vunpack.c.h.b16 %v1054
    %v4099 = vunpack.c.l.b16 %v1055
    %v4100 = vunpack.c.h.b16 %v1055
    %v4101 = vunpack.c.l.b16 %v1056
    %v4102 = vunpack.c.h.b16 %v1056
    %v4103 = vunpack.c.l.b16 %v1057
    %v4104 = vunpack.c.h.b16 %v1057
    %v4105 = vunpack.c.l.b16 %v1058
    %v4106 = vunpack.c.h.b16 %v1058
    %v4107 = vunpack.c.l.b16 %v1059
    %v4108 = vunpack.c.h.b16 %v1059
    %v4109 = vunpack.c.l.b16 %v1060
    %v4110 = vunpack.c.h.b16 %v1060
    %v4111 = vunpack.c.l.b16 %v1061
    %v4112 = vunpack.c.h.b16 %v1061
    %v4113 = vunpack.c.l.b16 %v1062
    %v4114 = vunpack.c.h.b16 %v1062
    %v4115 = vunpack.c.l.b16 %v1063
    %v4116 = vunpack.c.h.b16 %v1063
    %v4117 = vunpack.c.l.b16 %v1064
    %v4118 = vunpack.c.h.b16 %v1064
    %v4119 = vunpack.c.l.b16 %v1065
    %v4120 = vunpack.c.h.b16 %v1065
    %v4121 = vunpack.c.l.b16 %v1066
    %v4122 = vunpack.c.h.b16 %v1066
    %v4123 = vunpack.c.l.b16 %v1067
    %v4124 = vunpack.c.h.b16 %v1067
    %v4125 = vunpack.c.l.b16 %v1068
    %v4126 = vunpack.c.h.b16 %v1068
    %v4127 = vunpack.c.l.b16 %v1069
    %v4128 = vunpack.c.h.b16 %v1069
    %v4129 = vunpack.c.l.b16 %v1070
    %v4130 = vunpack.c.h.b16 %v1070
    %v4131 = vunpack.c.l.b16 %v1071
    %v4132 = vunpack.c.h.b16 %v1071
    %v4133 = vunpack.c.l.b16 %v1072
    %v4134 = vunpack.c.h.b16 %v1072
    %v4135 = vunpack.c.l.b16 %v1073
    %v4136 = vunpack.c.h.b16 %v1073
    %v4137 = vunpack.c.l.b16 %v1074
    %v4138 = vunpack.c.h.b16 %v1074
    %v4139 = vunpack.c.l.b16 %v1075
    %v4140 = vunpack.c.h.b16 %v1075
    %v4141 = vunpack.c.l.b16 %v1076
    %v4142 = vunpack.c.h.b16 %v1076
    %v4143 = vunpack.c.l.b16 %v1077
    %v4144 = vunpack.c.h.b16 %v1077
    %v4145 = vunpack.c.l.b16 %v1078
    %v4146 = vunpack.c.h.b16 %v1078
    %v4147 = vunpack.c.l.b16 %v1079
    %v4148 = vunpack.c.h.b16 %v1079
    %v4149 = vunpack.c.l.b16 %v1080
    %v4150 = vunpack.c.h.b16 %v1080
    %v4151 = vunpack.c.l.b16 %v1081
    %v4152 = vunpack.c.h.b16 %v1081
    %v4153 = vunpack.c.l.b16 %v1082
    %v4154 = vunpack.c.h.b16 %v1082
    %v4155 = vunpack.c.l.b16 %v1083
    %v4156 = vunpack.c.h.b16 %v1083
    %v4157 = vunpack.c.l.b16 %v1084
    %v4158 = vunpack.c.h.b16 %v1084
    %v4159 = vunpack.c.l.b16 %v1085
    %v4160 = vunpack.c.h.b16 %v1085
    %v4161 = vunpack.c.l.b16 %v1086
    %v4162 = vunpack.c.h.b16 %v1086
    %v4163 = vunpack.c.l.b16 %v1087
    %v4164 = vunpack.c.h.b16 %v1087
    %v4165 = vunpack.c.l.b16 %v1088
    %v4166 = vunpack.c.h.b16 %v1088
    %v4167 = vunpack.c.l.b16 %v1089
    %v4168 = vunpack.c.h.b16 %v1089
    %v4169 = vunpack.c.l.b16 %v1090
    %v4170 = vunpack.c.h.b16 %v1090
    %v4171 = vunpack.c.l.b16 %v1091
    %v4172 = vunpack.c.h.b16 %v1091
    %v4173 = vunpack.c.l.b16 %v1092
    %v4174 = vunpack.c.h.b16 %v1092
    %v4175 = vunpack.c.l.b16 %v1093
    %v4176 = vunpack.c.h.b16 %v1093
    %v4177 = vunpack.c.l.b16 %v1094
    %v4178 = vunpack.c.h.b16 %v1094
    %v4179 = vunpack.c.l.b16 %v1095
    %v4180 = vunpack.c.h.b16 %v1095
    %v4181 = vunpack.c.l.b16 %v1096
    %v4182 = vunpack.c.h.b16 %v1096
    %v4183 = vunpack.c.l.b16 %v1097
    %v4184 = vunpack.c.h.b16 %v1097
    %v4185 = vunpack.c.l.b16 %v1098
    %v4186 = vunpack.c.h.b16 %v1098
    %v4187 = vunpack.c.l.b16 %v1099
    %v4188 = vunpack.c.h.b16 %v1099
    %v4189 = vunpack.c.l.b16 %v1100
    %v4190 = vunpack.c.h.b16 %v1100
    %v4191 = vunpack.c.l.b16 %v1101
    %v4192 = vunpack.c.h.b16 %v1101
    %v4193 = vunpack.c.l.b16 %v1102
    %v4194 = vunpack.c.h.b16 %v1102
    %v4195 = vunpack.c.l.b16 %v1103
    %v4196 = vunpack.c.h.b16 %v1103
    %v4197 = vunpack.c.l.b16 %v1104
    %v4198 = vunpack.c.h.b16 %v1104
    %v4199 = vunpack.c.l.b16 %v1105
    %v4200 = vunpack.c.h.b16 %v1105
    %v4201 = vunpack.c.l.b16 %v1106
    %v4202 = vunpack.c.h.b16 %v1106
    %v4203 = vunpack.c.l.b16 %v1107
    %v4204 = vunpack.c.h.b16 %v1107
    %v4205 = vunpack.c.l.b16 %v1108
    %v4206 = vunpack.c.h.b16 %v1108
    %v4207 = vunpack.c.l.b16 %v1109
    %v4208 = vunpack.c.h.b16 %v1109
    %v4209 = vunpack.c.l.b16 %v1110
    %v4210 = vunpack.c.h.b16 %v1110
    %v4211 = vunpack.c.l.b16 %v1111
    %v4212 = vunpack.c.h.b16 %v1111
    %v4213 = vunpack.c.l.b16 %v1112
    %v4214 = vunpack.c.h.b16 %v1112
    %v4215 = vunpack.c.l.b16 %v1113
    %v4216 = vunpack.c.h.b16 %v1113
    %v4217 = vunpack.c.l.b16 %v1114
    %v4218 = vunpack.c.h.b16 %v1114
    %v4219 = vunpack.c.l.b16 %v1115
    %v4220 = vunpack.c.h.b16 %v1115
    %v4221 = vunpack.c.l.b16 %v1116
    %v4222 = vunpack.c.h.b16 %v1116
    %v4223 = vunpack.c.l.b16 %v1117
    %v4224 = vunpack.c.h.b16 %v1117
    %v4225 = vunpack.c.l.b16 %v1118
    %v4226 = vunpack.c.h.b16 %v1118
    %v4227 = vunpack.c.l.b16 %v1119
    %v4228 = vunpack.c.h.b16 %v1119
    %v4229 = vunpack.c.l.b16 %v1120
    %v4230 = vunpack.c.h.b16 %v1120
    %v4231 = vunpack.c.l.b16 %v1121
    %v4232 = vunpack.c.h.b16 %v1121
    %v4233 = vunpack.c.l.b16 %v1122
    %v4234 = vunpack.c.h.b16 %v1122
    %v4235 = vunpack.c.l.b16 %v1123
    %v4236 = vunpack.c.h.b16 %v1123
    %v4237 = vunpack.c.l.b16 %v1124
    %v4238 = vunpack.c.h.b16 %v1124
    %v4239 = vunpack.c.l.b16 %v1125
    %v4240 = vunpack.c.h.b16 %v1125
    %v4241 = vunpack.c.l.b16 %v1126
    %v4242 = vunpack.c.h.b16 %v1126
    %v4243 = vunpack.c.l.b16 %v1127
    %v4244 = vunpack.c.h.b16 %v1127
    %v4245 = vunpack.c.l.b16 %v1128
    %v4246 = vunpack.c.h.b16 %v1128
    %v4247 = vunpack.c.l.b16 %v1129
    %v4248 = vunpack.c.h.b16 %v1129
    %v4249 = vunpack.c.l.b16 %v1130
    %v4250 = vunpack.c.h.b16 %v1130
    %v4251 = vunpack.c.l.b16 %v1131
    %v4252 = vunpack.c.h.b16 %v1131
    %v4253 = vunpack.c.l.b16 %v1132
    %v4254 = vunpack.c.h.b16 %v1132
    %v4255 = vunpack.c.l.b16 %v1133
    %v4256 = vunpack.c.h.b16 %v1133
    %v4257 = vunpack.c.l.b16 %v1134
    %v4258 = vunpack.c.h.b16 %v1134
    %v4259 = vunpack.c.l.b16 %v1135
    %v4260 = vunpack.c.h.b16 %v1135
    %v4261 = vunpack.c.l.b16 %v1136
    %v4262 = vunpack.c.h.b16 %v1136
    %v4263 = vunpack.c.l.b16 %v1137
    %v4264 = vunpack.c.h.b16 %v1137
    %v4265 = vunpack.c.l.b16 %v1138
    %v4266 = vunpack.c.h.b16 %v1138
    %v4267 = vunpack.c.l.b16 %v1139
    %v4268 = vunpack.c.h.b16 %v1139
    %v4269 = vunpack.c.l.b16 %v1140
    %v4270 = vunpack.c.h.b16 %v1140
    %v4271 = vunpack.c.l.b16 %v1141
    %v4272 = vunpack.c.h.b16 %v1141
    %v4273 = vunpack.c.l.b16 %v1142
    %v4274 = vunpack.c.h.b16 %v1142
    %v4275 = vunpack.c.l.b16 %v1143
    %v4276 = vunpack.c.h.b16 %v1143
    %v4277 = vunpack.c.l.b16 %v1144
    %v4278 = vunpack.c.h.b16 %v1144
    %v4279 = vunpack.c.l.b16 %v1145
    %v4280 = vunpack.c.h.b16 %v1145
    %v4281 = vunpack.c.l.b16 %v1146
    %v4282 = vunpack.c.h.b16 %v1146
    %v4283 = vunpack.c.l.b16 %v1147
    %v4284 = vunpack.c.h.b16 %v1147
    %v4285 = vunpack.c.l.b16 %v1148
    %v4286 = vunpack.c.h.b16 %v1148
    %v4287 = vunpack.c.l.b16 %v1149
    %v4288 = vunpack.c.h.b16 %v1149
    %v4289 = vunpack.c.l.b16 %v1150
    %v4290 = vunpack.c.h.b16 %v1150
    %v4291 = vunpack.c.l.b16 %v1151
    %v4292 = vunpack.c.h.b16 %v1151
    %v4293 = vunpack.c.l.b16 %v1152
    %v4294 = vunpack.c.h.b16 %v1152
    %v4295 = vunpack.c.l.b16 %v1153
    %v4296 = vunpack.c.h.b16 %v1153
    %v4297 = vunpack.c.l.b16 %v1154
    %v4298 = vunpack.c.h.b16 %v1154
    %v4299 = vunpack.c.l.b16 %v1155
    %v4300 = vunpack.c.h.b16 %v1155
    %v4301 = vunpack.c.l.b16 %v1156
    %v4302 = vunpack.c.h.b16 %v1156
    %v4303 = vunpack.c.l.b16 %v1157
    %v4304 = vunpack.c.h.b16 %v1157
    %v4305 = vunpack.c.l.b16 %v1158
    %v4306 = vunpack.c.h.b16 %v1158
    %v4307 = vunpack.c.l.b16 %v1159
    %v4308 = vunpack.c.h.b16 %v1159
    %v4309 = vunpack.c.l.b16 %v1160
    %v4310 = vunpack.c.h.b16 %v1160
    %v4311 = vunpack.c.l.b16 %v1161
    %v4312 = vunpack.c.h.b16 %v1161
    %v4313 = vunpack.c.l.b16 %v1162
    %v4314 = vunpack.c.h.b16 %v1162
    %v4315 = vunpack.c.l.b16 %v1163
    %v4316 = vunpack.c.h.b16 %v1163
    %v4317 = vunpack.c.l.b16 %v1164
    %v4318 = vunpack.c.h.b16 %v1164
    %v4319 = vunpack.c.l.b16 %v1165
    %v4320 = vunpack.c.h.b16 %v1165
    %v4321 = vunpack.c.l.b16 %v1166
    %v4322 = vunpack.c.h.b16 %v1166
    %v4323 = vunpack.c.l.b16 %v1167
    %v4324 = vunpack.c.h.b16 %v1167
    %v4325 = vunpack.c.l.b16 %v1168
    %v4326 = vunpack.c.h.b16 %v1168
    %v4327 = vunpack.c.l.b16 %v1169
    %v4328 = vunpack.c.h.b16 %v1169
    %v4329 = vunpack.c.l.b16 %v1170
    %v4330 = vunpack.c.h.b16 %v1170
    %v4331 = vunpack.c.l.b16 %v1171
    %v4332 = vunpack.c.h.b16 %v1171
    %v4333 = vunpack.c.l.b16 %v1172
    %v4334 = vunpack.c.h.b16 %v1172
    %v4335 = vunpack.c.l.b16 %v1173
    %v4336 = vunpack.c.h.b16 %v1173
    %v4337 = vunpack.c.l.b16 %v1174
    %v4338 = vunpack.c.h.b16 %v1174
    %v4339 = vunpack.c.l.b16 %v1175
    %v4340 = vunpack.c.h.b16 %v1175
    %v4341 = vunpack.c.l.b16 %v1176
    %v4342 = vunpack.c.h.b16 %v1176
    %v4343 = vunpack.c.l.b16 %v1177
    %v4344 = vunpack.c.h.b16 %v1177
    %v4345 = vunpack.c.l.b16 %v1178
    %v4346 = vunpack.c.h.b16 %v1178
    %v4347 = vunpack.c.l.b16 %v1179
    %v4348 = vunpack.c.h.b16 %v1179
    %v4349 = vunpack.c.l.b16 %v1180
    %v4350 = vunpack.c.h.b16 %v1180
    %v4351 = vunpack.c.l.b16 %v1181
    %v4352 = vunpack.c.h.b16 %v1181
    %v4353 = vunpack.c.l.b16 %v1182
    %v4354 = vunpack.c.h.b16 %v1182
    %v4355 = vunpack.c.l.b16 %v1183
    %v4356 = vunpack.c.h.b16 %v1183
    %v4357 = vunpack.c.l.b16 %v1184
    %v4358 = vunpack.c.h.b16 %v1184
    %v4359 = vunpack.c.l.b16 %v1185
    %v4360 = vunpack.c.h.b16 %v1185
    %v4361 = vunpack.c.l.b16 %v1186
    %v4362 = vunpack.c.h.b16 %v1186
    %v4363 = vunpack.c.l.b16 %v1187
    %v4364 = vunpack.c.h.b16 %v1187
    %v4365 = vunpack.c.l.b16 %v1188
    %v4366 = vunpack.c.h.b16 %v1188
    %v4367 = vunpack.c.l.b16 %v1189
    %v4368 = vunpack.c.h.b16 %v1189
    %v4369 = vunpack.c.l.b16 %v1190
    %v4370 = vunpack.c.h.b16 %v1190
    %v4371 = vunpack.c.l.b16 %v1191
    %v4372 = vunpack.c.h.b16 %v1191
    %v4373 = vunpack.c.l.b16 %v1192
    %v4374 = vunpack.c.h.b16 %v1192
    %v4375 = vunpack.c.l.b16 %v1193
    %v4376 = vunpack.c.h.b16 %v1193
    %v4377 = vunpack.c.l.b16 %v1194
    %v4378 = vunpack.c.h.b16 %v1194
    %v4379 = vunpack.c.l.b16 %v1195
    %v4380 = vunpack.c.h.b16 %v1195
    %v4381 = vunpack.c.l.b16 %v1196
    %v4382 = vunpack.c.h.b16 %v1196
    %v4383 = vunpack.c.l.b16 %v1197
    %v4384 = vunpack.c.h.b16 %v1197
    %v4385 = vunpack.c.l.b16 %v1198
    %v4386 = vunpack.c.h.b16 %v1198
    %v4387 = vunpack.c.l.b16 %v1199
    %v4388 = vunpack.c.h.b16 %v1199
    %v4389 = vunpack.c.l.b16 %v1200
    %v4390 = vunpack.c.h.b16 %v1200
    %v4391 = vunpack.c.l.b16 %v1201
    %v4392 = vunpack.c.h.b16 %v1201
    %v4393 = vunpack.c.l.b16 %v1202
    %v4394 = vunpack.c.h.b16 %v1202
    %v4395 = vunpack.c.l.b16 %v1203
    %v4396 = vunpack.c.h.b16 %v1203
    %v4397 = vunpack.c.l.b16 %v1204
    %v4398 = vunpack.c.h.b16 %v1204
    %v4399 = vunpack.c.l.b16 %v1205
    %v4400 = vunpack.c.h.b16 %v1205
    %v4401 = vunpack.c.l.b16 %v1206
    %v4402 = vunpack.c.h.b16 %v1206
    %v4403 = vunpack.c.l.b16 %v1207
    %v4404 = vunpack.c.h.b16 %v1207
    %v4405 = vunpack.c.l.b16 %v1208
    %v4406 = vunpack.c.h.b16 %v1208
    %v4407 = vunpack.c.l.b16 %v1209
    %v4408 = vunpack.c.h.b16 %v1209
    %v4409 = vunpack.c.l.b16 %v1210
    %v4410 = vunpack.c.h.b16 %v1210
    %v4411 = vunpack.c.l.b16 %v1211
    %v4412 = vunpack.c.h.b16 %v1211
    %v4413 = vunpack.c.l.b16 %v1212
    %v4414 = vunpack.c.h.b16 %v1212
    %v4415 = vunpack.c.l.b16 %v1213
    %v4416 = vunpack.c.h.b16 %v1213
    %v4417 = vunpack.c.l.b16 %v1214
    %v4418 = vunpack.c.h.b16 %v1214
    %v4419 = vunpack.c.l.b16 %v1215
    %v4420 = vunpack.c.h.b16 %v1215
    %v4421 = vunpack.c.l.b16 %v1216
    %v4422 = vunpack.c.h.b16 %v1216
    %v4423 = vpack.c.b16 %v2379, %v2375
    %v4424 = vpack.c.b16 %v2380, %v2376
    %v4425 = vpack.c.b16 %v2381, %v2377
    %v4426 = vpack.c.b16 %v2382, %v2378
    %v4427 = vpack.c.b16 %v2387, %v2383
    %v4428 = vpack.c.b16 %v2388, %v2384
    %v4429 = vpack.c.b16 %v2389, %v2385
    %v4430 = vpack.c.b16 %v2390, %v2386
    %v4431 = vpack.c.b16 %v2395, %v2391
    %v4432 = vpack.c.b16 %v2396, %v2392
    %v4433 = vpack.c.b16 %v2397, %v2393
    %v4434 = vpack.c.b16 %v2398, %v2394
    %v4435 = vpack.c.b16 %v2403, %v2399
    %v4436 = vpack.c.b16 %v2404, %v2400
    %v4437 = vpack.c.b16 %v2405, %v2401
    %v4438 = vpack.c.b16 %v2406, %v2402
    %v4439 = vpack.c.b16 %v2411, %v2407
    %v4440 = vpack.c.b16 %v2412, %v2408
    %v4441 = vpack.c.b16 %v2413, %v2409
    %v4442 = vpack.c.b16 %v2414, %v2410
    %v4443 = vpack.c.b16 %v2419, %v2415
    %v4444 = vpack.c.b16 %v2420, %v2416
    %v4445 = vpack.c.b16 %v2421, %v2417
    %v4446 = vpack.c.b16 %v2422, %v2418
    %v4447 = vpack.c.b16 %v2427, %v2423
    %v4448 = vpack.c.b16 %v2428, %v2424
    %v4449 = vpack.c.b16 %v2429, %v2425
    %v4450 = vpack.c.b16 %v2430, %v2426
    %v4451 = vpack.c.b16 %v2435, %v2431
    %v4452 = vpack.c.b16 %v2436, %v2432
    %v4453 = vpack.c.b16 %v2437, %v2433
    %v4454 = vpack.c.b16 %v2438, %v2434
    %v4455 = vpack.c.b16 %v2443, %v2439
    %v4456 = vpack.c.b16 %v2444, %v2440
    %v4457 = vpack.c.b16 %v2445, %v2441
    %v4458 = vpack.c.b16 %v2446, %v2442
    %v4459 = vpack.c.b16 %v2451, %v2447
    %v4460 = vpack.c.b16 %v2452, %v2448
    %v4461 = vpack.c.b16 %v2453, %v2449
    %v4462 = vpack.c.b16 %v2454, %v2450
    %v4463 = vpack.c.b16 %v2459, %v2455
    %v4464 = vpack.c.b16 %v2460, %v2456
    %v4465 = vpack.c.b16 %v2461, %v2457
    %v4466 = vpack.c.b16 %v2462, %v2458
    %v4467 = vpack.c.b16 %v2467, %v2463
    %v4468 = vpack.c.b16 %v2468, %v2464
    %v4469 = vpack.c.b16 %v2469, %v2465
    %v4470 = vpack.c.b16 %v2470, %v2466
    %v4471 = vpack.c.b16 %v2475, %v2471
    %v4472 = vpack.c.b16 %v2476, %v2472
    %v4473 = vpack.c.b16 %v2477, %v2473
    %v4474 = vpack.c.b16 %v2478, %v2474
    %v4475 = vpack.c.b16 %v2483, %v2479
    %v4476 = vpack.c.b16 %v2484, %v2480
    %v4477 = vpack.c.b16 %v2485, %v2481
    %v4478 = vpack.c.b16 %v2486, %v2482
    %v4479 = vpack.c.b16 %v2491, %v2487
    %v4480 = vpack.c.b16 %v2492, %v2488
    %v4481 = vpack.c.b16 %v2493, %v2489
    %v4482 = vpack.c.b16 %v2494, %v2490
    %v4483 = vpack.c.b16 %v2499, %v2495
    %v4484 = vpack.c.b16 %v2500, %v2496
    %v4485 = vpack.c.b16 %v2501, %v2497
    %v4486 = vpack.c.b16 %v2502, %v2498
    %v4487 = vpack.c.b16 %v2507, %v2503
    %v4488 = vpack.c.b16 %v2508, %v2504
    %v4489 = vpack.c.b16 %v2509, %v2505
    %v4490 = vpack.c.b16 %v2510, %v2506
    %v4491 = vpack.c.b16 %v2515, %v2511
    %v4492 = vpack.c.b16 %v2516, %v2512
    %v4493 = vpack.c.b16 %v2517, %v2513
    %v4494 = vpack.c.b16 %v2518, %v2514
    %v4495 = vpack.c.b16 %v2523, %v2519
    %v4496 = vpack.c.b16 %v2524, %v2520
    %v4497 = vpack.c.b16 %v2525, %v2521
    %v4498 = vpack.c.b16 %v2526, %v2522
    %v4499 = vpack.c.b16 %v2531, %v2527
    %v4500 = vpack.c.b16 %v2532, %v2528
    %v4501 = vpack.c.b16 %v2533, %v2529
    %v4502 = vpack.c.b16 %v2534, %v2530
    %v4503 = vpack.c.b16 %v2539, %v2535
    %v4504 = vpack.c.b16 %v2540, %v2536
    %v4505 = vpack.c.b16 %v2541, %v2537
    %v4506 = vpack.c.b16 %v2542, %v2538
    %v4507 = vpack.c.b16 %v2547, %v2543
    %v4508 = vpack.c.b16 %v2548, %v2544
    %v4509 = vpack.c.b16 %v2549, %v2545
    %v4510 = vpack.c.b16 %v2550, %v2546
    %v4511 = vpack.c.b16 %v2555, %v2551
    %v4512 = vpack.c.b16 %v2556, %v2552
    %v4513 = vpack.c.b16 %v2557, %v2553
    %v4514 = vpack.c.b16 %v2558, %v2554
    %v4515 = vpack.c.b16 %v2563, %v2559
    %v4516 = vpack.c.b16 %v2564, %v2560
    %v4517 = vpack.c.b16 %v2565, %v2561
    %v4518 = vpack.c.b16 %v2566, %v2562
    %v4519 = vpack.c.b16 %v2571, %v2567
    %v4520 = vpack.c.b16 %v2572, %v2568
    %v4521 = vpack.c.b16 %v2573, %v2569
    %v4522 = vpack.c.b16 %v2574, %v2570
    %v4523 = vpack.c.b16 %v2579, %v2575
    %v4524 = vpack.c.b16 %v2580, %v2576
    %v4525 = vpack.c.b16 %v2581, %v2577
    %v4526 = vpack.c.b16 %v2582, %v2578
    %v4527 = vpack.c.b16 %v2587, %v2583
    %v4528 = vpack.c.b16 %v2588, %v2584
    %v4529 = vpack.c.b16 %v2589, %v2585
    %v4530 = vpack.c.b16 %v2590, %v2586
    %v4531 = vpack.c.b16 %v2595, %v2591
    %v4532 = vpack.c.b16 %v2596, %v2592
    %v4533 = vpack.c.b16 %v2597, %v2593
    %v4534 = vpack.c.b16 %v2598, %v2594
    %v4535 = vpack.c.b16 %v2603, %v2599
    %v4536 = vpack.c.b16 %v2604, %v2600
    %v4537 = vpack.c.b16 %v2605, %v2601
    %v4538 = vpack.c.b16 %v2606, %v2602
    %v4539 = vpack.c.b16 %v2611, %v2607
    %v4540 = vpack.c.b16 %v2612, %v2608
    %v4541 = vpack.c.b16 %v2613, %v2609
    %v4542 = vpack.c.b16 %v2614, %v2610
    %v4543 = vpack.c.b16 %v2619, %v2615
    %v4544 = vpack.c.b16 %v2620, %v2616
    %v4545 = vpack.c.b16 %v2621, %v2617
    %v4546 = vpack.c.b16 %v2622, %v2618
    %v4547 = vpack.c.b16 %v2627, %v2623
    %v4548 = vpack.c.b16 %v2628, %v2624
    %v4549 = vpack.c.b16 %v2629, %v2625
    %v4550 = vpack.c.b16 %v2630, %v2626
    %v4551 = vpack.c.b16 %v2635, %v2631
    %v4552 = vpack.c.b16 %v2636, %v2632
    %v4553 = vpack.c.b16 %v2637, %v2633
    %v4554 = vpack.c.b16 %v2638, %v2634
    %v4555 = vpack.c.b16 %v2643, %v2639
    %v4556 = vpack.c.b16 %v2644, %v2640
    %v4557 = vpack.c.b16 %v2645, %v2641
    %v4558 = vpack.c.b16 %v2646, %v2642
    %v4559 = vpack.c.b16 %v2651, %v2647
    %v4560 = vpack.c.b16 %v2652, %v2648
    %v4561 = vpack.c.b16 %v2653, %v2649
    %v4562 = vpack.c.b16 %v2654, %v2650
    %v4563 = vpack.c.b16 %v2659, %v2655
    %v4564 = vpack.c.b16 %v2660, %v2656
    %v4565 = vpack.c.b16 %v2661, %v2657
    %v4566 = vpack.c.b16 %v2662, %v2658
    %v4567 = vpack.c.b16 %v2667, %v2663
    %v4568 = vpack.c.b16 %v2668, %v2664
    %v4569 = vpack.c.b16 %v2669, %v2665
    %v4570 = vpack.c.b16 %v2670, %v2666
    %v4571 = vpack.c.b16 %v2675, %v2671
    %v4572 = vpack.c.b16 %v2676, %v2672
    %v4573 = vpack.c.b16 %v2677, %v2673
    %v4574 = vpack.c.b16 %v2678, %v2674
    %v4575 = vpack.c.b16 %v2683, %v2679
    %v4576 = vpack.c.b16 %v2684, %v2680
    %v4577 = vpack.c.b16 %v2685, %v2681
    %v4578 = vpack.c.b16 %v2686, %v2682
    %v4579 = vpack.c.b16 %v2691, %v2687
    %v4580 = vpack.c.b16 %v2692, %v2688
    %v4581 = vpack.c.b16 %v2693, %v2689
    %v4582 = vpack.c.b16 %v2694, %v2690
    %v4583 = vpack.c.b16 %v2699, %v2695
    %v4584 = vpack.c.b16 %v2700, %v2696
    %v4585 = vpack.c.b16 %v2701, %v2697
    %v4586 = vpack.c.b16 %v2702, %v2698
    %v4587 = vpack.c.b16 %v2707, %v2703
    %v4588 = vpack.c.b16 %v2708, %v2704
    %v4589 = vpack.c.b16 %v2709, %v2705
    %v4590 = vpack.c.b16 %v2710, %v2706
    %v4591 = vpack.c.b16 %v2715, %v2711
    %v4592 = vpack.c.b16 %v2716, %v2712
    %v4593 = vpack.c.b16 %v2717, %v2713
    %v4594 = vpack.c.b16 %v2718, %v2714
    %v4595 = vpack.c.b16 %v2723, %v2719
    %v4596 = vpack.c.b16 %v2724, %v2720
    %v4597 = vpack.c.b16 %v2725, %v2721
    %v4598 = vpack.c.b16 %v2726, %v2722
    %v4599 = vpack.c.b16 %v2731, %v2727
    %v4600 = vpack.c.b16 %v2732, %v2728
    %v4601 = vpack.c.b16 %v2733, %v2729
    %v4602 = vpack.c.b16 %v2734, %v2730
    %v4603 = vpack.c.b16 %v2739, %v2735
    %v4604 = vpack.c.b16 %v2740, %v2736
    %v4605 = vpack.c.b16 %v2741, %v2737
    %v4606 = vpack.c.b16 %v2742, %v2738
    %v4607 = vpack.c.b16 %v2747, %v2743
    %v4608 = vpack.c.b16 %v2748, %v2744
    %v4609 = vpack.c.b16 %v2749, %v2745
    %v4610 = vpack.c.b16 %v2750, %v2746
    %v4611 = vpack.c.b16 %v2755, %v2751
    %v4612 = vpack.c.b16 %v2756, %v2752
    %v4613 = vpack.c.b16 %v2757, %v2753
    %v4614 = vpack.c.b16 %v2758, %v2754
    %v4615 = vpack.c.b16 %v2763, %v2759
    %v4616 = vpack.c.b16 %v2764, %v2760
    %v4617 = vpack.c.b16 %v2765, %v2761
    %v4618 = vpack.c.b16 %v2766, %v2762
    %v4619 = vpack.c.b16 %v2771, %v2767
    %v4620 = vpack.c.b16 %v2772, %v2768
    %v4621 = vpack.c.b16 %v2773, %v2769
    %v4622 = vpack.c.b16 %v2774, %v2770
    %v4623 = vpack.c.b16 %v2779, %v2775
    %v4624 = vpack.c.b16 %v2780, %v2776
    %v4625 = vpack.c.b16 %v2781, %v2777
    %v4626 = vpack.c.b16 %v2782, %v2778
    %v4627 = vpack.c.b16 %v2787, %v2783
    %v4628 = vpack.c.b16 %v2788, %v2784
    %v4629 = vpack.c.b16 %v2789, %v2785
    %v4630 = vpack.c.b16 %v2790, %v2786
    %v4631 = vpack.c.b16 %v2795, %v2791
    %v4632 = vpack.c.b16 %v2796, %v2792
    %v4633 = vpack.c.b16 %v2797, %v2793
    %v4634 = vpack.c.b16 %v2798, %v2794
    %v4635 = vpack.c.b16 %v2803, %v2799
    %v4636 = vpack.c.b16 %v2804, %v2800
    %v4637 = vpack.c.b16 %v2805, %v2801
    %v4638 = vpack.c.b16 %v2806, %v2802
    %v4639 = vpack.c.b16 %v2811, %v2807
    %v4640 = vpack.c.b16 %v2812, %v2808
    %v4641 = vpack.c.b16 %v2813, %v2809
    %v4642 = vpack.c.b16 %v2814, %v2810
    %v4643 = vpack.c.b16 %v2819, %v2815
    %v4644 = vpack.c.b16 %v2820, %v2816
    %v4645 = vpack.c.b16 %v2821, %v2817
    %v4646 = vpack.c.b16 %v2822, %v2818
    %v4647 = vpack.c.b16 %v2827, %v2823
    %v4648 = vpack.c.b16 %v2828, %v2824
    %v4649 = vpack.c.b16 %v2829, %v2825
    %v4650 = vpack.c.b16 %v2830, %v2826
    %v4651 = vpack.c.b16 %v2835, %v2831
    %v4652 = vpack.c.b16 %v2836, %v2832
    %v4653 = vpack.c.b16 %v2837, %v2833
    %v4654 = vpack.c.b16 %v2838, %v2834
    %v4655 = vpack.c.b16 %v2843, %v2839
    %v4656 = vpack.c.b16 %v2844, %v2840
    %v4657 = vpack.c.b16 %v2845, %v2841
    %v4658 = vpack.c.b16 %v2846, %v2842
    %v4659 = vpack.c.b16 %v2851, %v2847
    %v4660 = vpack.c.b16 %v2852, %v2848
    %v4661 = vpack.c.b16 %v2853, %v2849
    %v4662 = vpack.c.b16 %v2854, %v2850
    %v4663 = vpack.c.b16 %v2859, %v2855
    %v4664 = vpack.c.b16 %v2860, %v2856
    %v4665 = vpack.c.b16 %v2861, %v2857
    %v4666 = vpack.c.b16 %v2862, %v2858
    %v4667 = vpack.c.b16 %v2867, %v2863
    %v4668 = vpack.c.b16 %v2868, %v2864
    %v4669 = vpack.c.b16 %v2869, %v2865
    %v4670 = vpack.c.b16 %v2870, %v2866
    %v4671 = vpack.c.b16 %v2875, %v2871
    %v4672 = vpack.c.b16 %v2876, %v2872
    %v4673 = vpack.c.b16 %v2877, %v2873
    %v4674 = vpack.c.b16 %v2878, %v2874
    %v4675 = vpack.c.b16 %v2883, %v2879
    %v4676 = vpack.c.b16 %v2884, %v2880
    %v4677 = vpack.c.b16 %v2885, %v2881
    %v4678 = vpack.c.b16 %v2886, %v2882
    %v4679 = vpack.c.b16 %v2891, %v2887
    %v4680 = vpack.c.b16 %v2892, %v2888
    %v4681 = vpack.c.b16 %v2893, %v2889
    %v4682 = vpack.c.b16 %v2894, %v2890
    %v4683 = vpack.c.b16 %v2899, %v2895
    %v4684 = vpack.c.b16 %v2900, %v2896
    %v4685 = vpack.c.b16 %v2901, %v2897
    %v4686 = vpack.c.b16 %v2902, %v2898
    %v4687 = vpack.c.b16 %v2907, %v2903
    %v4688 = vpack.c.b16 %v2908, %v2904
    %v4689 = vpack.c.b16 %v2909, %v2905
    %v4690 = vpack.c.b16 %v2910, %v2906
    %v4691 = vpack.c.b16 %v2915, %v2911
    %v4692 = vpack.c.b16 %v2916, %v2912
    %v4693 = vpack.c.b16 %v2917, %v2913
    %v4694 = vpack.c.b16 %v2918, %v2914
    %v4695 = vpack.c.b16 %v2923, %v2919
    %v4696 = vpack.c.b16 %v2924, %v2920
    %v4697 = vpack.c.b16 %v2925, %v2921
    %v4698 = vpack.c.b16 %v2926, %v2922
    %v4699 = vpack.c.b16 %v2931, %v2927
    %v4700 = vpack.c.b16 %v2932, %v2928
    %v4701 = vpack.c.b16 %v2933, %v2929
    %v4702 = vpack.c.b16 %v2934, %v2930
    %v4703 = vpack.c.b16 %v2939, %v2935
    %v4704 = vpack.c.b16 %v2940, %v2936
    %v4705 = vpack.c.b16 %v2941, %v2937
    %v4706 = vpack.c.b16 %v2942, %v2938
    %v4707 = vpack.c.b16 %v2947, %v2943
    %v4708 = vpack.c.b16 %v2948, %v2944
    %v4709 = vpack.c.b16 %v2949, %v2945
    %v4710 = vpack.c.b16 %v2950, %v2946
    %v4711 = vpack.c.b16 %v2955, %v2951
    %v4712 = vpack.c.b16 %v2956, %v2952
    %v4713 = vpack.c.b16 %v2957, %v2953
    %v4714 = vpack.c.b16 %v2958, %v2954
    %v4715 = vpack.c.b16 %v2963, %v2959
    %v4716 = vpack.c.b16 %v2964, %v2960
    %v4717 = vpack.c.b16 %v2965, %v2961
    %v4718 = vpack.c.b16 %v2966, %v2962
    %v4719 = vpack.c.b16 %v2971, %v2967
    %v4720 = vpack.c.b16 %v2972, %v2968
    %v4721 = vpack.c.b16 %v2973, %v2969
    %v4722 = vpack.c.b16 %v2974, %v2970
    %v4723 = vpack.c.b16 %v2979, %v2975
    %v4724 = vpack.c.b16 %v2980, %v2976
    %v4725 = vpack.c.b16 %v2981, %v2977
    %v4726 = vpack.c.b16 %v2982, %v2978
    %v4727 = vpack.c.b16 %v2987, %v2983
    %v4728 = vpack.c.b16 %v2988, %v2984
    %v4729 = vpack.c.b16 %v2989, %v2985
    %v4730 = vpack.c.b16 %v2990, %v2986
    %v4731 = vpack.c.b16 %v2995, %v2991
    %v4732 = vpack.c.b16 %v2996, %v2992
    %v4733 = vpack.c.b16 %v2997, %v2993
    %v4734 = vpack.c.b16 %v2998, %v2994
    %v4735 = vpack.c.b16 %v3003, %v2999
    %v4736 = vpack.c.b16 %v3004, %v3000
    %v4737 = vpack.c.b16 %v3005, %v3001
    %v4738 = vpack.c.b16 %v3006, %v3002
    %v4739 = vpack.c.b16 %v3011, %v3007
    %v4740 = vpack.c.b16 %v3012, %v3008
    %v4741 = vpack.c.b16 %v3013, %v3009
    %v4742 = vpack.c.b16 %v3014, %v3010
    %v4743 = vpack.c.b16 %v3019, %v3015
    %v4744 = vpack.c.b16 %v3020, %v3016
    %v4745 = vpack.c.b16 %v3021, %v3017
    %v4746 = vpack.c.b16 %v3022, %v3018
    %v4747 = vpack.c.b16 %v3027, %v3023
    %v4748 = vpack.c.b16 %v3028, %v3024
    %v4749 = vpack.c.b16 %v3029, %v3025
    %v4750 = vpack.c.b16 %v3030, %v3026
    %v4751 = vpack.c.b16 %v3035, %v3031
    %v4752 = vpack.c.b16 %v3036, %v3032
    %v4753 = vpack.c.b16 %v3037, %v3033
    %v4754 = vpack.c.b16 %v3038, %v3034
    %v4755 = vpack.c.b16 %v3043, %v3039
    %v4756 = vpack.c.b16 %v3044, %v3040
    %v4757 = vpack.c.b16 %v3045, %v3041
    %v4758 = vpack.c.b16 %v3046, %v3042
    %v4759 = vpack.c.b16 %v3051, %v3047
    %v4760 = vpack.c.b16 %v3052, %v3048
    %v4761 = vpack.c.b16 %v3053, %v3049
    %v4762 = vpack.c.b16 %v3054, %v3050
    %v4763 = vpack.c.b16 %v3059, %v3055
    %v4764 = vpack.c.b16 %v3060, %v3056
    %v4765 = vpack.c.b16 %v3061, %v3057
    %v4766 = vpack.c.b16 %v3062, %v3058
    %v4767 = vpack.c.b16 %v3067, %v3063
    %v4768 = vpack.c.b16 %v3068, %v3064
    %v4769 = vpack.c.b16 %v3069, %v3065
    %v4770 = vpack.c.b16 %v3070, %v3066
    %v4771 = vpack.c.b16 %v3075, %v3071
    %v4772 = vpack.c.b16 %v3076, %v3072
    %v4773 = vpack.c.b16 %v3077, %v3073
    %v4774 = vpack.c.b16 %v3078, %v3074
    %v4775 = vpack.c.b16 %v3083, %v3079
    %v4776 = vpack.c.b16 %v3084, %v3080
    %v4777 = vpack.c.b16 %v3085, %v3081
    %v4778 = vpack.c.b16 %v3086, %v3082
    %v4779 = vpack.c.b16 %v3091, %v3087
    %v4780 = vpack.c.b16 %v3092, %v3088
    %v4781 = vpack.c.b16 %v3093, %v3089
    %v4782 = vpack.c.b16 %v3094, %v3090
    %v4783 = vpack.c.b16 %v3099, %v3095
    %v4784 = vpack.c.b16 %v3100, %v3096
    %v4785 = vpack.c.b16 %v3101, %v3097
    %v4786 = vpack.c.b16 %v3102, %v3098
    %v4787 = vpack.c.b16 %v3107, %v3103
    %v4788 = vpack.c.b16 %v3108, %v3104
    %v4789 = vpack.c.b16 %v3109, %v3105
    %v4790 = vpack.c.b16 %v3110, %v3106
    %v4791 = vpack.c.b16 %v3115, %v3111
    %v4792 = vpack.c.b16 %v3116, %v3112
    %v4793 = vpack.c.b16 %v3117, %v3113
    %v4794 = vpack.c.b16 %v3118, %v3114
    %v4795 = vpack.c.b16 %v3123, %v3119
    %v4796 = vpack.c.b16 %v3124, %v3120
    %v4797 = vpack.c.b16 %v3125, %v3121
    %v4798 = vpack.c.b16 %v3126, %v3122
    %v4799 = vpack.c.b16 %v3131, %v3127
    %v4800 = vpack.c.b16 %v3132, %v3128
    %v4801 = vpack.c.b16 %v3133, %v3129
    %v4802 = vpack.c.b16 %v3134, %v3130
    %v4803 = vpack.c.b16 %v3139, %v3135
    %v4804 = vpack.c.b16 %v3140, %v3136
    %v4805 = vpack.c.b16 %v3141, %v3137
    %v4806 = vpack.c.b16 %v3142, %v3138
    %v4807 = vpack.c.b16 %v3147, %v3143
    %v4808 = vpack.c.b16 %v3148, %v3144
    %v4809 = vpack.c.b16 %v3149, %v3145
    %v4810 = vpack.c.b16 %v3150, %v3146
    %v4811 = vpack.c.b16 %v3155, %v3151
    %v4812 = vpack.c.b16 %v3156, %v3152
    %v4813 = vpack.c.b16 %v3157, %v3153
    %v4814 = vpack.c.b16 %v3158, %v3154
    %v4815 = vpack.c.b16 %v3163, %v3159
    %v4816 = vpack.c.b16 %v3164, %v3160
    %v4817 = vpack.c.b16 %v3165, %v3161
    %v4818 = vpack.c.b16 %v3166, %v3162
    %v4819 = vpack.c.b16 %v3171, %v3167
    %v4820 = vpack.c.b16 %v3172, %v3168
    %v4821 = vpack.c.b16 %v3173, %v3169
    %v4822 = vpack.c.b16 %v3174, %v3170
    %v4823 = vpack.c.b16 %v3179, %v3175
    %v4824 = vpack.c.b16 %v3180, %v3176
    %v4825 = vpack.c.b16 %v3181, %v3177
    %v4826 = vpack.c.b16 %v3182, %v3178
    %v4827 = vpack.c.b16 %v3187, %v3183
    %v4828 = vpack.c.b16 %v3188, %v3184
    %v4829 = vpack.c.b16 %v3189, %v3185
    %v4830 = vpack.c.b16 %v3190, %v3186
    %v4831 = vpack.c.b16 %v3195, %v3191
    %v4832 = vpack.c.b16 %v3196, %v3192
    %v4833 = vpack.c.b16 %v3197, %v3193
    %v4834 = vpack.c.b16 %v3198, %v3194
    %v4835 = vpack.c.b16 %v3203, %v3199
    %v4836 = vpack.c.b16 %v3204, %v3200
    %v4837 = vpack.c.b16 %v3205, %v3201
    %v4838 = vpack.c.b16 %v3206, %v3202
    %v4839 = vpack.c.b16 %v3211, %v3207
    %v4840 = vpack.c.b16 %v3212, %v3208
    %v4841 = vpack.c.b16 %v3213, %v3209
    %v4842 = vpack.c.b16 %v3214, %v3210
    %v4843 = vpack.c.b16 %v3219, %v3215
    %v4844 = vpack.c.b16 %v3220, %v3216
    %v4845 = vpack.c.b16 %v3221, %v3217
    %v4846 = vpack.c.b16 %v3222, %v3218
    %v4847 = vpack.c.b16 %v3227, %v3223
    %v4848 = vpack.c.b16 %v3228, %v3224
    %v4849 = vpack.c.b16 %v3229, %v3225
    %v4850 = vpack.c.b16 %v3230, %v3226
    %v4851 = vpack.c.b16 %v3235, %v3231
    %v4852 = vpack.c.b16 %v3236, %v3232
    %v4853 = vpack.c.b16 %v3237, %v3233
    %v4854 = vpack.c.b16 %v3238, %v3234
    %v4855 = vpack.c.b16 %v3243, %v3239
    %v4856 = vpack.c.b16 %v3244, %v3240
    %v4857 = vpack.c.b16 %v3245, %v3241
    %v4858 = vpack.c.b16 %v3246, %v3242
    %v4859 = vpack.c.b16 %v3251, %v3247
    %v4860 = vpack.c.b16 %v3252, %v3248
    %v4861 = vpack.c.b16 %v3253, %v3249
    %v4862 = vpack.c.b16 %v3254, %v3250
    %v4863 = vpack.c.b16 %v3259, %v3255
    %v4864 = vpack.c.b16 %v3260, %v3256
    %v4865 = vpack.c.b16 %v3261, %v3257
    %v4866 = vpack.c.b16 %v3262, %v3258
    %v4867 = vpack.c.b16 %v3267, %v3263
    %v4868 = vpack.c.b16 %v3268, %v3264
    %v4869 = vpack.c.b16 %v3269, %v3265
    %v4870 = vpack.c.b16 %v3270, %v3266
    %v4871 = vpack.c.b16 %v3275, %v3271
    %v4872 = vpack.c.b16 %v3276, %v3272
    %v4873 = vpack.c.b16 %v3277, %v3273
    %v4874 = vpack.c.b16 %v3278, %v3274
    %v4875 = vpack.c.b16 %v3283, %v3279
    %v4876 = vpack.c.b16 %v3284, %v3280
    %v4877 = vpack.c.b16 %v3285, %v3281
    %v4878 = vpack.c.b16 %v3286, %v3282
    %v4879 = vpack.c.b16 %v3291, %v3287
    %v4880 = vpack.c.b16 %v3292, %v3288
    %v4881 = vpack.c.b16 %v3293, %v3289
    %v4882 = vpack.c.b16 %v3294, %v3290
    %v4883 = vpack.c.b16 %v3299, %v3295
    %v4884 = vpack.c.b16 %v3300, %v3296
    %v4885 = vpack.c.b16 %v3301, %v3297
    %v4886 = vpack.c.b16 %v3302, %v3298
    %v4887 = vpack.c.b16 %v3307, %v3303
    %v4888 = vpack.c.b16 %v3308, %v3304
    %v4889 = vpack.c.b16 %v3309, %v3305
    %v4890 = vpack.c.b16 %v3310, %v3306
    %v4891 = vpack.c.b16 %v3315, %v3311
    %v4892 = vpack.c.b16 %v3316, %v3312
    %v4893 = vpack.c.b16 %v3317, %v3313
    %v4894 = vpack.c.b16 %v3318, %v3314
    %v4895 = vpack.c.b16 %v3323, %v3319
    %v4896 = vpack.c.b16 %v3324, %v3320
    %v4897 = vpack.c.b16 %v3325, %v3321
    %v4898 = vpack.c.b16 %v3326, %v3322
    %v4899 = vpack.c.b16 %v3331, %v3327
    %v4900 = vpack.c.b16 %v3332, %v3328
    %v4901 = vpack.c.b16 %v3333, %v3329
    %v4902 = vpack.c.b16 %v3334, %v3330
    %v4903 = vpack.c.b16 %v3339, %v3335
    %v4904 = vpack.c.b16 %v3340, %v3336
    %v4905 = vpack.c.b16 %v3341, %v3337
    %v4906 = vpack.c.b16 %v3342, %v3338
    %v4907 = vpack.c.b16 %v3347, %v3343
    %v4908 = vpack.c.b16 %v3348, %v3344
    %v4909 = vpack.c.b16 %v3349, %v3345
    %v4910 = vpack.c.b16 %v3350, %v3346
    %v4911 = vpack.c.b16 %v3355, %v3351
    %v4912 = vpack.c.b16 %v3356, %v3352
    %v4913 = vpack.c.b16 %v3357, %v3353
    %v4914 = vpack.c.b16 %v3358, %v3354
    %v4915 = vpack.c.b16 %v3363, %v3359
    %v4916 = vpack.c.b16 %v3364, %v3360
    %v4917 = vpack.c.b16 %v3365, %v3361
    %v4918 = vpack.c.b16 %v3366, %v3362
    %v4919 = vpack.c.b16 %v3371, %v3367
    %v4920 = vpack.c.b16 %v3372, %v3368
    %v4921 = vpack.c.b16 %v3373, %v3369
    %v4922 = vpack.c.b16 %v3374, %v3370
    %v4923 = vpack.c.b16 %v3379, %v3375
    %v4924 = vpack.c.b16 %v3380, %v3376
    %v4925 = vpack.c.b16 %v3381, %v3377
    %v4926 = vpack.c.b16 %v3382, %v3378
    %v4927 = vpack.c.b16 %v3387, %v3383
    %v4928 = vpack.c.b16 %v3388, %v3384
    %v4929 = vpack.c.b16 %v3389, %v3385
    %v4930 = vpack.c.b16 %v3390, %v3386
    %v4931 = vpack.c.b16 %v3395, %v3391
    %v4932 = vpack.c.b16 %v3396, %v3392
    %v4933 = vpack.c.b16 %v3397, %v3393
    %v4934 = vpack.c.b16 %v3398, %v3394
    %v4935 = vpack.c.b16 %v3403, %v3399
    %v4936 = vpack.c.b16 %v3404, %v3400
    %v4937 = vpack.c.b16 %v3405, %v3401
    %v4938 = vpack.c.b16 %v3406, %v3402
    %v4939 = vpack.c.b16 %v3411, %v3407
    %v4940 = vpack.c.b16 %v3412, %v3408
    %v4941 = vpack.c.b16 %v3413, %v3409
    %v4942 = vpack.c.b16 %v3414, %v3410
    %v4943 = vpack.c.b16 %v3419, %v3415
    %v4944 = vpack.c.b16 %v3420, %v3416
    %v4945 = vpack.c.b16 %v3421, %v3417
    %v4946 = vpack.c.b16 %v3422, %v3418
    %v4947 = vpack.c.b16 %v3427, %v3423
    %v4948 = vpack.c.b16 %v3428, %v3424
    %v4949 = vpack.c.b16 %v3429, %v3425
    %v4950 = vpack.c.b16 %v3430, %v3426
    %v4951 = vpack.c.b16 %v3435, %v3431
    %v4952 = vpack.c.b16 %v3436, %v3432
    %v4953 = vpack.c.b16 %v3437, %v3433
    %v4954 = vpack.c.b16 %v3438, %v3434
    %v4955 = vpack.c.b16 %v3443, %v3439
    %v4956 = vpack.c.b16 %v3444, %v3440
    %v4957 = vpack.c.b16 %v3445, %v3441
    %v4958 = vpack.c.b16 %v3446, %v3442
    %v4959 = vpack.c.b16 %v3451, %v3447
    %v4960 = vpack.c.b16 %v3452, %v3448
    %v4961 = vpack.c.b16 %v3453, %v3449
    %v4962 = vpack.c.b16 %v3454, %v3450
    %v4963 = vpack.c.b16 %v3459, %v3455
    %v4964 = vpack.c.b16 %v3460, %v3456
    %v4965 = vpack.c.b16 %v3461, %v3457
    %v4966 = vpack.c.b16 %v3462, %v3458
    %v4967 = vpack.c.b16 %v3467, %v3463
    %v4968 = vpack.c.b16 %v3468, %v3464
    %v4969 = vpack.c.b16 %v3469, %v3465
    %v4970 = vpack.c.b16 %v3470, %v3466
    %v4971 = vpack.c.b16 %v3475, %v3471
    %v4972 = vpack.c.b16 %v3476, %v3472
    %v4973 = vpack.c.b16 %v3477, %v3473
    %v4974 = vpack.c.b16 %v3478, %v3474
    %v4975 = vpack.c.b16 %v3483, %v3479
    %v4976 = vpack.c.b16 %v3484, %v3480
    %v4977 = vpack.c.b16 %v3485, %v3481
    %v4978 = vpack.c.b16 %v3486, %v3482
    %v4979 = vpack.c.b16 %v3491, %v3487
    %v4980 = vpack.c.b16 %v3492, %v3488
    %v4981 = vpack.c.b16 %v3493, %v3489
    %v4982 = vpack.c.b16 %v3494, %v3490
    %v4983 = vpack.c.b16 %v3499, %v3495
    %v4984 = vpack.c.b16 %v3500, %v3496
    %v4985 = vpack.c.b16 %v3501, %v3497
    %v4986 = vpack.c.b16 %v3502, %v3498
    %v4987 = vpack.c.b16 %v3507, %v3503
    %v4988 = vpack.c.b16 %v3508, %v3504
    %v4989 = vpack.c.b16 %v3509, %v3505
    %v4990 = vpack.c.b16 %v3510, %v3506
    %v4991 = vpack.c.b16 %v3515, %v3511
    %v4992 = vpack.c.b16 %v3516, %v3512
    %v4993 = vpack.c.b16 %v3517, %v3513
    %v4994 = vpack.c.b16 %v3518, %v3514
    %v4995 = vpack.c.b16 %v3523, %v3519
    %v4996 = vpack.c.b16 %v3524, %v3520
    %v4997 = vpack.c.b16 %v3525, %v3521
    %v4998 = vpack.c.b16 %v3526, %v3522
    %v4999 = vpack.c.b16 %v3531, %v3527
    %v5000 = vpack.c.b16 %v3532, %v3528
    %v5001 = vpack.c.b16 %v3533, %v3529
    %v5002 = vpack.c.b16 %v3534, %v3530
    %v5003 = vpack.c.b16 %v3539, %v3535
    %v5004 = vpack.c.b16 %v3540, %v3536
    %v5005 = vpack.c.b16 %v3541, %v3537
    %v5006 = vpack.c.b16 %v3542, %v3538
    %v5007 = vpack.c.b16 %v3547, %v3543
    %v5008 = vpack.c.b16 %v3548, %v3544
    %v5009 = vpack.c.b16 %v3549, %v3545
    %v5010 = vpack.c.b16 %v3550, %v3546
    %v5011 = vpack.c.b16 %v3555, %v3551
    %v5012 = vpack.c.b16 %v3556, %v3552
    %v5013 = vpack.c.b16 %v3557, %v3553
    %v5014 = vpack.c.b16 %v3558, %v3554
    %v5015 = vpack.c.b16 %v3563, %v3559
    %v5016 = vpack.c.b16 %v3564, %v3560
    %v5017 = vpack.c.b16 %v3565, %v3561
    %v5018 = vpack.c.b16 %v3566, %v3562
    %v5019 = vpack.c.b16 %v3571, %v3567
    %v5020 = vpack.c.b16 %v3572, %v3568
    %v5021 = vpack.c.b16 %v3573, %v3569
    %v5022 = vpack.c.b16 %v3574, %v3570
    %v5023 = vpack.c.b16 %v3579, %v3575
    %v5024 = vpack.c.b16 %v3580, %v3576
    %v5025 = vpack.c.b16 %v3581, %v3577
    %v5026 = vpack.c.b16 %v3582, %v3578
    %v5027 = vpack.c.b16 %v3587, %v3583
    %v5028 = vpack.c.b16 %v3588, %v3584
    %v5029 = vpack.c.b16 %v3589, %v3585
    %v5030 = vpack.c.b16 %v3590, %v3586
    %v5031 = vpack.c.b16 %v3595, %v3591
    %v5032 = vpack.c.b16 %v3596, %v3592
    %v5033 = vpack.c.b16 %v3597, %v3593
    %v5034 = vpack.c.b16 %v3598, %v3594
    %v5035 = vpack.c.b16 %v3603, %v3599
    %v5036 = vpack.c.b16 %v3604, %v3600
    %v5037 = vpack.c.b16 %v3605, %v3601
    %v5038 = vpack.c.b16 %v3606, %v3602
    %v5039 = vpack.c.b16 %v3611, %v3607
    %v5040 = vpack.c.b16 %v3612, %v3608
    %v5041 = vpack.c.b16 %v3613, %v3609
    %v5042 = vpack.c.b16 %v3614, %v3610
    %v5043 = vpack.c.b16 %v3619, %v3615
    %v5044 = vpack.c.b16 %v3620, %v3616
    %v5045 = vpack.c.b16 %v3621, %v3617
    %v5046 = vpack.c.b16 %v3622, %v3618
    %v5047 = vpack.c.b16 %v3627, %v3623
    %v5048 = vpack.c.b16 %v3628, %v3624
    %v5049 = vpack.c.b16 %v3629, %v3625
    %v5050 = vpack.c.b16 %v3630, %v3626
    %v5051 = vpack.c.b16 %v3635, %v3631
    %v5052 = vpack.c.b16 %v3636, %v3632
    %v5053 = vpack.c.b16 %v3637, %v3633
    %v5054 = vpack.c.b16 %v3638, %v3634
    %v5055 = vpack.c.b16 %v3643, %v3639
    %v5056 = vpack.c.b16 %v3644, %v3640
    %v5057 = vpack.c.b16 %v3645, %v3641
    %v5058 = vpack.c.b16 %v3646, %v3642
    %v5059 = vpack.c.b16 %v3651, %v3647
    %v5060 = vpack.c.b16 %v3652, %v3648
    %v5061 = vpack.c.b16 %v3653, %v3649
    %v5062 = vpack.c.b16 %v3654, %v3650
    %v5063 = vpack.c.b16 %v3659, %v3655
    %v5064 = vpack.c.b16 %v3660, %v3656
    %v5065 = vpack.c.b16 %v3661, %v3657
    %v5066 = vpack.c.b16 %v3662, %v3658
    %v5067 = vpack.c.b16 %v3667, %v3663
    %v5068 = vpack.c.b16 %v3668, %v3664
    %v5069 = vpack.c.b16 %v3669, %v3665
    %v5070 = vpack.c.b16 %v3670, %v3666
    %v5071 = vpack.c.b16 %v3675, %v3671
    %v5072 = vpack.c.b16 %v3676, %v3672
    %v5073 = vpack.c.b16 %v3677, %v3673
    %v5074 = vpack.c.b16 %v3678, %v3674
    %v5075 = vpack.c.b16 %v3683, %v3679
    %v5076 = vpack.c.b16 %v3684, %v3680
    %v5077 = vpack.c.b16 %v3685, %v3681
    %v5078 = vpack.c.b16 %v3686, %v3682
    %v5079 = vpack.c.b16 %v3691, %v3687
    %v5080 = vpack.c.b16 %v3692, %v3688
    %v5081 = vpack.c.b16 %v3693, %v3689
    %v5082 = vpack.c.b16 %v3694, %v3690
    %v5083 = vpack.c.b16 %v3699, %v3695
    %v5084 = vpack.c.b16 %v3700, %v3696
    %v5085 = vpack.c.b16 %v3701, %v3697
    %v5086 = vpack.c.b16 %v3702, %v3698
    %v5087 = vpack.c.b16 %v3707, %v3703
    %v5088 = vpack.c.b16 %v3708, %v3704
    %v5089 = vpack.c.b16 %v3709, %v3705
    %v5090 = vpack.c.b16 %v3710, %v3706
    %v5091 = vpack.c.b16 %v3715, %v3711
    %v5092 = vpack.c.b16 %v3716, %v3712
    %v5093 = vpack.c.b16 %v3717, %v3713
    %v5094 = vpack.c.b16 %v3718, %v3714
    %v5095 = vpack.c.b16 %v3723, %v3719
    %v5096 = vpack.c.b16 %v3724, %v3720
    %v5097 = vpack.c.b16 %v3725, %v3721
    %v5098 = vpack.c.b16 %v3726, %v3722
    %v5099 = vpack.c.b16 %v3731, %v3727
    %v5100 = vpack.c.b16 %v3732, %v3728
    %v5101 = vpack.c.b16 %v3733, %v3729
    %v5102 = vpack.c.b16 %v3734, %v3730
    %v5103 = vpack.c.b16 %v3739, %v3735
    %v5104 = vpack.c.b16 %v3740, %v3736
    %v5105 = vpack.c.b16 %v3741, %v3737
    %v5106 = vpack.c.b16 %v3742, %v3738
    %v5107 = vpack.c.b16 %v3747, %v3743
    %v5108 = vpack.c.b16 %v3748, %v3744
    %v5109 = vpack.c.b16 %v3749, %v3745
    %v5110 = vpack.c.b16 %v3750, %v3746
    %v5111 = vpack.c.b16 %v3755, %v3751
    %v5112 = vpack.c.b16 %v3756, %v3752
    %v5113 = vpack.c.b16 %v3757, %v3753
    %v5114 = vpack.c.b16 %v3758, %v3754
    %v5115 = vpack.c.b16 %v3763, %v3759
    %v5116 = vpack.c.b16 %v3764, %v3760
    %v5117 = vpack.c.b16 %v3765, %v3761
    %v5118 = vpack.c.b16 %v3766, %v3762
    %v5119 = vpack.c.b16 %v3771, %v3767
    %v5120 = vpack.c.b16 %v3772, %v3768
    %v5121 = vpack.c.b16 %v3773, %v3769
    %v5122 = vpack.c.b16 %v3774, %v3770
    %v5123 = vpack.c.b16 %v3779, %v3775
    %v5124 = vpack.c.b16 %v3780, %v3776
    %v5125 = vpack.c.b16 %v3781, %v3777
    %v5126 = vpack.c.b16 %v3782, %v3778
    %v5127 = vpack.c.b16 %v3787, %v3783
    %v5128 = vpack.c.b16 %v3788, %v3784
    %v5129 = vpack.c.b16 %v3789, %v3785
    %v5130 = vpack.c.b16 %v3790, %v3786
    %v5131 = vpack.c.b16 %v3795, %v3791
    %v5132 = vpack.c.b16 %v3796, %v3792
    %v5133 = vpack.c.b16 %v3797, %v3793
    %v5134 = vpack.c.b16 %v3798, %v3794
    %v5135 = vpack.c.b16 %v3803, %v3799
    %v5136 = vpack.c.b16 %v3804, %v3800
    %v5137 = vpack.c.b16 %v3805, %v3801
    %v5138 = vpack.c.b16 %v3806, %v3802
    %v5139 = vpack.c.b16 %v3811, %v3807
    %v5140 = vpack.c.b16 %v3812, %v3808
    %v5141 = vpack.c.b16 %v3813, %v3809
    %v5142 = vpack.c.b16 %v3814, %v3810
    %v5143 = vpack.c.b16 %v3819, %v3815
    %v5144 = vpack.c.b16 %v3820, %v3816
    %v5145 = vpack.c.b16 %v3821, %v3817
    %v5146 = vpack.c.b16 %v3822, %v3818
    %v5147 = vpack.c.b16 %v3827, %v3823
    %v5148 = vpack.c.b16 %v3828, %v3824
    %v5149 = vpack.c.b16 %v3829, %v3825
    %v5150 = vpack.c.b16 %v3830, %v3826
    %v5151 = vpack.c.b16 %v3835, %v3831
    %v5152 = vpack.c.b16 %v3836, %v3832
    %v5153 = vpack.c.b16 %v3837, %v3833
    %v5154 = vpack.c.b16 %v3838, %v3834
    %v5155 = vpack.c.b16 %v3843, %v3839
    %v5156 = vpack.c.b16 %v3844, %v3840
    %v5157 = vpack.c.b16 %v3845, %v3841
    %v5158 = vpack.c.b16 %v3846, %v3842
    %v5159 = vpack.c.b16 %v3851, %v3847
    %v5160 = vpack.c.b16 %v3852, %v3848
    %v5161 = vpack.c.b16 %v3853, %v3849
    %v5162 = vpack.c.b16 %v3854, %v3850
    %v5163 = vpack.c.b16 %v3859, %v3855
    %v5164 = vpack.c.b16 %v3860, %v3856
    %v5165 = vpack.c.b16 %v3861, %v3857
    %v5166 = vpack.c.b16 %v3862, %v3858
    %v5167 = vpack.c.b16 %v3867, %v3863
    %v5168 = vpack.c.b16 %v3868, %v3864
    %v5169 = vpack.c.b16 %v3869, %v3865
    %v5170 = vpack.c.b16 %v3870, %v3866
    %v5171 = vpack.c.b16 %v3875, %v3871
    %v5172 = vpack.c.b16 %v3876, %v3872
    %v5173 = vpack.c.b16 %v3877, %v3873
    %v5174 = vpack.c.b16 %v3878, %v3874
    %v5175 = vpack.c.b16 %v3883, %v3879
    %v5176 = vpack.c.b16 %v3884, %v3880
    %v5177 = vpack.c.b16 %v3885, %v3881
    %v5178 = vpack.c.b16 %v3886, %v3882
    %v5179 = vpack.c.b16 %v3891, %v3887
    %v5180 = vpack.c.b16 %v3892, %v3888
    %v5181 = vpack.c.b16 %v3893, %v3889
    %v5182 = vpack.c.b16 %v3894, %v3890
    %v5183 = vpack.c.b16 %v3899, %v3895
    %v5184 = vpack.c.b16 %v3900, %v3896
    %v5185 = vpack.c.b16 %v3901, %v3897
    %v5186 = vpack.c.b16 %v3902, %v3898
    %v5187 = vpack.c.b16 %v3907, %v3903
    %v5188 = vpack.c.b16 %v3908, %v3904
    %v5189 = vpack.c.b16 %v3909, %v3905
    %v5190 = vpack.c.b16 %v3910, %v3906
    %v5191 = vpack.c.b16 %v3915, %v3911
    %v5192 = vpack.c.b16 %v3916, %v3912
    %v5193 = vpack.c.b16 %v3917, %v3913
    %v5194 = vpack.c.b16 %v3918, %v3914
    %v5195 = vpack.c.b16 %v3923, %v3919
    %v5196 = vpack.c.b16 %v3924, %v3920
    %v5197 = vpack.c.b16 %v3925, %v3921
    %v5198 = vpack.c.b16 %v3926, %v3922
    %v5199 = vpack.c.b16 %v3931, %v3927
    %v5200 = vpack.c.b16 %v3932, %v3928
    %v5201 = vpack.c.b16 %v3933, %v3929
    %v5202 = vpack.c.b16 %v3934, %v3930
    %v5203 = vpack.c.b16 %v3939, %v3935
    %v5204 = vpack.c.b16 %v3940, %v3936
    %v5205 = vpack.c.b16 %v3941, %v3937
    %v5206 = vpack.c.b16 %v3942, %v3938
    %v5207 = vpack.c.b16 %v3947, %v3943
    %v5208 = vpack.c.b16 %v3948, %v3944
    %v5209 = vpack.c.b16 %v3949, %v3945
    %v5210 = vpack.c.b16 %v3950, %v3946
    %v5211 = vpack.c.b16 %v3955, %v3951
    %v5212 = vpack.c.b16 %v3956, %v3952
    %v5213 = vpack.c.b16 %v3957, %v3953
    %v5214 = vpack.c.b16 %v3958, %v3954
    %v5215 = vpack.c.b16 %v3963, %v3959
    %v5216 = vpack.c.b16 %v3964, %v3960
    %v5217 = vpack.c.b16 %v3965, %v3961
    %v5218 = vpack.c.b16 %v3966, %v3962
    %v5219 = vpack.c.b16 %v3971, %v3967
    %v5220 = vpack.c.b16 %v3972, %v3968
    %v5221 = vpack.c.b16 %v3973, %v3969
    %v5222 = vpack.c.b16 %v3974, %v3970
    %v5223 = vpack.c.b16 %v3979, %v3975
    %v5224 = vpack.c.b16 %v3980, %v3976
    %v5225 = vpack.c.b16 %v3981, %v3977
    %v5226 = vpack.c.b16 %v3982, %v3978
    %v5227 = vpack.c.b16 %v3987, %v3983
    %v5228 = vpack.c.b16 %v3988, %v3984
    %v5229 = vpack.c.b16 %v3989, %v3985
    %v5230 = vpack.c.b16 %v3990, %v3986
    %v5231 = vpack.c.b16 %v3995, %v3991
    %v5232 = vpack.c.b16 %v3996, %v3992
    %v5233 = vpack.c.b16 %v3997, %v3993
    %v5234 = vpack.c.b16 %v3998, %v3994
    %v5235 = vpack.c.b16 %v4003, %v3999
    %v5236 = vpack.c.b16 %v4004, %v4000
    %v5237 = vpack.c.b16 %v4005, %v4001
    %v5238 = vpack.c.b16 %v4006, %v4002
    %v5239 = vpack.c.b16 %v4011, %v4007
    %v5240 = vpack.c.b16 %v4012, %v4008
    %v5241 = vpack.c.b16 %v4013, %v4009
    %v5242 = vpack.c.b16 %v4014, %v4010
    %v5243 = vpack.c.b16 %v4019, %v4015
    %v5244 = vpack.c.b16 %v4020, %v4016
    %v5245 = vpack.c.b16 %v4021, %v4017
    %v5246 = vpack.c.b16 %v4022, %v4018
    %v5247 = vpack.c.b16 %v4027, %v4023
    %v5248 = vpack.c.b16 %v4028, %v4024
    %v5249 = vpack.c.b16 %v4029, %v4025
    %v5250 = vpack.c.b16 %v4030, %v4026
    %v5251 = vpack.c.b16 %v4035, %v4031
    %v5252 = vpack.c.b16 %v4036, %v4032
    %v5253 = vpack.c.b16 %v4037, %v4033
    %v5254 = vpack.c.b16 %v4038, %v4034
    %v5255 = vpack.c.b16 %v4043, %v4039
    %v5256 = vpack.c.b16 %v4044, %v4040
    %v5257 = vpack.c.b16 %v4045, %v4041
    %v5258 = vpack.c.b16 %v4046, %v4042
    %v5259 = vpack.c.b16 %v4051, %v4047
    %v5260 = vpack.c.b16 %v4052, %v4048
    %v5261 = vpack.c.b16 %v4053, %v4049
    %v5262 = vpack.c.b16 %v4054, %v4050
    %v5263 = vpack.c.b16 %v4059, %v4055
    %v5264 = vpack.c.b16 %v4060, %v4056
    %v5265 = vpack.c.b16 %v4061, %v4057
    %v5266 = vpack.c.b16 %v4062, %v4058
    %v5267 = vpack.c.b16 %v4067, %v4063
    %v5268 = vpack.c.b16 %v4068, %v4064
    %v5269 = vpack.c.b16 %v4069, %v4065
    %v5270 = vpack.c.b16 %v4070, %v4066
    %v5271 = vpack.c.b16 %v4075, %v4071
    %v5272 = vpack.c.b16 %v4076, %v4072
    %v5273 = vpack.c.b16 %v4077, %v4073
    %v5274 = vpack.c.b16 %v4078, %v4074
    %v5275 = vpack.c.b16 %v4083, %v4079
    %v5276 = vpack.c.b16 %v4084, %v4080
    %v5277 = vpack.c.b16 %v4085, %v4081
    %v5278 = vpack.c.b16 %v4086, %v4082
    %v5279 = vpack.c.b16 %v4091, %v4087
    %v5280 = vpack.c.b16 %v4092, %v4088
    %v5281 = vpack.c.b16 %v4093, %v4089
    %v5282 = vpack.c.b16 %v4094, %v4090
    %v5283 = vpack.c.b16 %v4099, %v4095
    %v5284 = vpack.c.b16 %v4100, %v4096
    %v5285 = vpack.c.b16 %v4101, %v4097
    %v5286 = vpack.c.b16 %v4102, %v4098
    %v5287 = vpack.c.b16 %v4107, %v4103
    %v5288 = vpack.c.b16 %v4108, %v4104
    %v5289 = vpack.c.b16 %v4109, %v4105
    %v5290 = vpack.c.b16 %v4110, %v4106
    %v5291 = vpack.c.b16 %v4115, %v4111
    %v5292 = vpack.c.b16 %v4116, %v4112
    %v5293 = vpack.c.b16 %v4117, %v4113
    %v5294 = vpack.c.b16 %v4118, %v4114
    %v5295 = vpack.c.b16 %v4123, %v4119
    %v5296 = vpack.c.b16 %v4124, %v4120
    %v5297 = vpack.c.b16 %v4125, %v4121
    %v5298 = vpack.c.b16 %v4126, %v4122
    %v5299 = vpack.c.b16 %v4131, %v4127
    %v5300 = vpack.c.b16 %v4132, %v4128
    %v5301 = vpack.c.b16 %v4133, %v4129
    %v5302 = vpack.c.b16 %v4134, %v4130
    %v5303 = vpack.c.b16 %v4139, %v4135
    %v5304 = vpack.c.b16 %v4140, %v4136
    %v5305 = vpack.c.b16 %v4141, %v4137
    %v5306 = vpack.c.b16 %v4142, %v4138
    %v5307 = vpack.c.b16 %v4147, %v4143
    %v5308 = vpack.c.b16 %v4148, %v4144
    %v5309 = vpack.c.b16 %v4149, %v4145
    %v5310 = vpack.c.b16 %v4150, %v4146
    %v5311 = vpack.c.b16 %v4155, %v4151
    %v5312 = vpack.c.b16 %v4156, %v4152
    %v5313 = vpack.c.b16 %v4157, %v4153
    %v5314 = vpack.c.b16 %v4158, %v4154
    %v5315 = vpack.c.b16 %v4163, %v4159
    %v5316 = vpack.c.b16 %v4164, %v4160
    %v5317 = vpack.c.b16 %v4165, %v4161
    %v5318 = vpack.c.b16 %v4166, %v4162
    %v5319 = vpack.c.b16 %v4171, %v4167
    %v5320 = vpack.c.b16 %v4172, %v4168
    %v5321 = vpack.c.b16 %v4173, %v4169
    %v5322 = vpack.c.b16 %v4174, %v4170
    %v5323 = vpack.c.b16 %v4179, %v4175
    %v5324 = vpack.c.b16 %v4180, %v4176
    %v5325 = vpack.c.b16 %v4181, %v4177
    %v5326 = vpack.c.b16 %v4182, %v4178
    %v5327 = vpack.c.b16 %v4187, %v4183
    %v5328 = vpack.c.b16 %v4188, %v4184
    %v5329 = vpack.c.b16 %v4189, %v4185
    %v5330 = vpack.c.b16 %v4190, %v4186
    %v5331 = vpack.c.b16 %v4195, %v4191
    %v5332 = vpack.c.b16 %v4196, %v4192
    %v5333 = vpack.c.b16 %v4197, %v4193
    %v5334 = vpack.c.b16 %v4198, %v4194
    %v5335 = vpack.c.b16 %v4203, %v4199
    %v5336 = vpack.c.b16 %v4204, %v4200
    %v5337 = vpack.c.b16 %v4205, %v4201
    %v5338 = vpack.c.b16 %v4206, %v4202
    %v5339 = vpack.c.b16 %v4211, %v4207
    %v5340 = vpack.c.b16 %v4212, %v4208
    %v5341 = vpack.c.b16 %v4213, %v4209
    %v5342 = vpack.c.b16 %v4214, %v4210
    %v5343 = vpack.c.b16 %v4219, %v4215
    %v5344 = vpack.c.b16 %v4220, %v4216
    %v5345 = vpack.c.b16 %v4221, %v4217
    %v5346 = vpack.c.b16 %v4222, %v4218
    %v5347 = vpack.c.b16 %v4227, %v4223
    %v5348 = vpack.c.b16 %v4228, %v4224
    %v5349 = vpack.c.b16 %v4229, %v4225
    %v5350 = vpack.c.b16 %v4230, %v4226
    %v5351 = vpack.c.b16 %v4235, %v4231
    %v5352 = vpack.c.b16 %v4236, %v4232
    %v5353 = vpack.c.b16 %v4237, %v4233
    %v5354 = vpack.c.b16 %v4238, %v4234
    %v5355 = vpack.c.b16 %v4243, %v4239
    %v5356 = vpack.c.b16 %v4244, %v4240
    %v5357 = vpack.c.b16 %v4245, %v4241
    %v5358 = vpack.c.b16 %v4246, %v4242
    %v5359 = vpack.c.b16 %v4251, %v4247
    %v5360 = vpack.c.b16 %v4252, %v4248
    %v5361 = vpack.c.b16 %v4253, %v4249
    %v5362 = vpack.c.b16 %v4254, %v4250
    %v5363 = vpack.c.b16 %v4259, %v4255
    %v5364 = vpack.c.b16 %v4260, %v4256
    %v5365 = vpack.c.b16 %v4261, %v4257
    %v5366 = vpack.c.b16 %v4262, %v4258
    %v5367 = vpack.c.b16 %v4267, %v4263
    %v5368 = vpack.c.b16 %v4268, %v4264
    %v5369 = vpack.c.b16 %v4269, %v4265
    %v5370 = vpack.c.b16 %v4270, %v4266
    %v5371 = vpack.c.b16 %v4275, %v4271
    %v5372 = vpack.c.b16 %v4276, %v4272
    %v5373 = vpack.c.b16 %v4277, %v4273
    %v5374 = vpack.c.b16 %v4278, %v4274
    %v5375 = vpack.c.b16 %v4283, %v4279
    %v5376 = vpack.c.b16 %v4284, %v4280
    %v5377 = vpack.c.b16 %v4285, %v4281
    %v5378 = vpack.c.b16 %v4286, %v4282
    %v5379 = vpack.c.b16 %v4291, %v4287
    %v5380 = vpack.c.b16 %v4292, %v4288
    %v5381 = vpack.c.b16 %v4293, %v4289
    %v5382 = vpack.c.b16 %v4294, %v4290
    %v5383 = vpack.c.b16 %v4299, %v4295
    %v5384 = vpack.c.b16 %v4300, %v4296
    %v5385 = vpack.c.b16 %v4301, %v4297
    %v5386 = vpack.c.b16 %v4302, %v4298
    %v5387 = vpack.c.b16 %v4307, %v4303
    %v5388 = vpack.c.b16 %v4308, %v4304
    %v5389 = vpack.c.b16 %v4309, %v4305
    %v5390 = vpack.c.b16 %v4310, %v4306
    %v5391 = vpack.c.b16 %v4315, %v4311
    %v5392 = vpack.c.b16 %v4316, %v4312
    %v5393 = vpack.c.b16 %v4317, %v4313
    %v5394 = vpack.c.b16 %v4318, %v4314
    %v5395 = vpack.c.b16 %v4323, %v4319
    %v5396 = vpack.c.b16 %v4324, %v4320
    %v5397 = vpack.c.b16 %v4325, %v4321
    %v5398 = vpack.c.b16 %v4326, %v4322
    %v5399 = vpack.c.b16 %v4331, %v4327
    %v5400 = vpack.c.b16 %v4332, %v4328
    %v5401 = vpack.c.b16 %v4333, %v4329
    %v5402 = vpack.c.b16 %v4334, %v4330
    %v5403 = vpack.c.b16 %v4339, %v4335
    %v5404 = vpack.c.b16 %v4340, %v4336
    %v5405 = vpack.c.b16 %v4341, %v4337
    %v5406 = vpack.c.b16 %v4342, %v4338
    %v5407 = vpack.c.b16 %v4347, %v4343
    %v5408 = vpack.c.b16 %v4348, %v4344
    %v5409 = vpack.c.b16 %v4349, %v4345
    %v5410 = vpack.c.b16 %v4350, %v4346
    %v5411 = vpack.c.b16 %v4355, %v4351
    %v5412 = vpack.c.b16 %v4356, %v4352
    %v5413 = vpack.c.b16 %v4357, %v4353
    %v5414 = vpack.c.b16 %v4358, %v4354
    %v5415 = vpack.c.b16 %v4363, %v4359
    %v5416 = vpack.c.b16 %v4364, %v4360
    %v5417 = vpack.c.b16 %v4365, %v4361
    %v5418 = vpack.c.b16 %v4366, %v4362
    %v5419 = vpack.c.b16 %v4371, %v4367
    %v5420 = vpack.c.b16 %v4372, %v4368
    %v5421 = vpack.c.b16 %v4373, %v4369
    %v5422 = vpack.c.b16 %v4374, %v4370
    %v5423 = vpack.c.b16 %v4379, %v4375
    %v5424 = vpack.c.b16 %v4380, %v4376
    %v5425 = vpack.c.b16 %v4381, %v4377
    %v5426 = vpack.c.b16 %v4382, %v4378
    %v5427 = vpack.c.b16 %v4387, %v4383
    %v5428 = vpack.c.b16 %v4388, %v4384
    %v5429 = vpack.c.b16 %v4389, %v4385
    %v5430 = vpack.c.b16 %v4390, %v4386
    %v5431 = vpack.c.b16 %v4395, %v4391
    %v5432 = vpack.c.b16 %v4396, %v4392
    %v5433 = vpack.c.b16 %v4397, %v4393
    %v5434 = vpack.c.b16 %v4398, %v4394
    %v5435 = vpack.c.b16 %v4403, %v4399
    %v5436 = vpack.c.b16 %v4404, %v4400
    %v5437 = vpack.c.b16 %v4405, %v4401
    %v5438 = vpack.c.b16 %v4406, %v4402
    %v5439 = vpack.c.b16 %v4411, %v4407
    %v5440 = vpack.c.b16 %v4412, %v4408
    %v5441 = vpack.c.b16 %v4413, %v4409
    %v5442 = vpack.c.b16 %v4414, %v4410
    %v5443 = vpack.c.b16 %v4419, %v4415
    %v5444 = vpack.c.b16 %v4420, %v4416
    %v5445 = vpack.c.b16 %v4421, %v4417
    %v5446 = vpack.c.b16 %v4422, %v4418
    %6471 = vmatprep.subr.bf16.mxu0 %v4452
    %6472 = vmatpush1.bf16.msra.mxu0 %v4451
    %6473 = vmatprep.subr.bf16.mxu0 %v4448
    %6474 = vmatpush1.bf16.msra.mxu0 %v4447
    %6475 = vmatprep.subr.bf16.mxu0 %v4444
    %6476 = vmatpush1.bf16.msra.mxu0 %v4443
    %6477 = vmatprep.subr.bf16.mxu0 %v4440
    %6478 = vmatpush1.bf16.msra.mxu0 %v4439
    %6479 = vmatprep.subr.bf16.mxu0 %v4436
    %6480 = vmatpush1.bf16.msra.mxu0 %v4435
    %6481 = vmatprep.subr.bf16.mxu0 %v4432
    %6482 = vmatpush1.bf16.msra.mxu0 %v4431
    %6483 = vmatprep.subr.bf16.mxu0 %v4428
    %6484 = vmatpush1.bf16.msra.mxu0 %v4427
    %6485 = vmatprep.subr.bf16.mxu0 %v4424
    %6486 = vmatpush1.bf16.msra.mxu0 %v4423
    %6487 = vmatprep.subr.bf16.mxu0 %v4484
    %6488 = vmatpush2.bf16.msra.mxu0 %v4483
    %6489 = vmatprep.subr.bf16.mxu0 %v4480
    %6490 = vmatpush2.bf16.msra.mxu0 %v4479
    %6491 = vmatprep.subr.bf16.mxu0 %v4476
    %6492 = vmatpush2.bf16.msra.mxu0 %v4475
    %6493 = vmatprep.subr.bf16.mxu0 %v4472
    %6494 = vmatpush2.bf16.msra.mxu0 %v4471
    %6495 = vmatprep.subr.bf16.mxu0 %v4468
    %6496 = vmatpush2.bf16.msra.mxu0 %v4467
    %6497 = vmatprep.subr.bf16.mxu0 %v4464
    %6498 = vmatpush2.bf16.msra.mxu0 %v4463
    %6499 = vmatprep.subr.bf16.mxu0 %v4460
    %6500 = vmatpush2.bf16.msra.mxu0 %v4459
    %6501 = vmatprep.subr.bf16.mxu0 %v4456
    %6502 = vmatpush2.bf16.msra.mxu0 %v4455
    %6503 = vmatprep.mubr.bf16.mxu0 %v1288
    %6504 = vmatmul.mubr.bf16.gmra.mxu0 %v1287
    %v6505 = vpop.f32.mrf.mxu0
    %v6506 = vadd.f32 %v1222, %v6505
    %v6507 = vpop.f32.mrf.mxu0
    %v6508 = vadd.f32 %v1226, %v6507
    %v6509 = vpop.f32.mrf.mxu0
    %v6510 = vpop.f32.mrf.mxu0
    %6511 = vdwg.mxu0
    %6512 = vmatprep.subr.bf16.mxu0 %v4516
    %6513 = vmatpush1.bf16.msra.mxu0 %v4515
    %6514 = vmatprep.subr.bf16.mxu0 %v4512
    %6515 = vmatpush1.bf16.msra.mxu0 %v4511
    %6516 = vmatprep.subr.bf16.mxu0 %v4508
    %6517 = vmatpush1.bf16.msra.mxu0 %v4507
    %6518 = vmatprep.subr.bf16.mxu0 %v4504
    %6519 = vmatpush1.bf16.msra.mxu0 %v4503
    %6520 = vmatprep.subr.bf16.mxu0 %v4500
    %6521 = vmatpush1.bf16.msra.mxu0 %v4499
    %6522 = vmatprep.subr.bf16.mxu0 %v4496
    %6523 = vmatpush1.bf16.msra.mxu0 %v4495
    %6524 = vmatprep.subr.bf16.mxu0 %v4492
    %6525 = vmatpush1.bf16.msra.mxu0 %v4491
    %6526 = vmatprep.subr.bf16.mxu0 %v4488
    %6527 = vmatpush1.bf16.msra.mxu0 %v4487
    %6528 = vmatprep.subr.bf16.mxu0 %v4548
    %6529 = vmatpush2.bf16.msra.mxu0 %v4547
    %6530 = vmatprep.subr.bf16.mxu0 %v4544
    %6531 = vmatpush2.bf16.msra.mxu0 %v4543
    %6532 = vmatprep.subr.bf16.mxu0 %v4540
    %6533 = vmatpush2.bf16.msra.mxu0 %v4539
    %6534 = vmatprep.subr.bf16.mxu0 %v4536
    %6535 = vmatpush2.bf16.msra.mxu0 %v4535
    %6536 = vmatprep.subr.bf16.mxu0 %v4532
    %6537 = vmatpush2.bf16.msra.mxu0 %v4531
    %6538 = vmatprep.subr.bf16.mxu0 %v4528
    %6539 = vmatpush2.bf16.msra.mxu0 %v4527
    %6540 = vmatprep.subr.bf16.mxu0 %v4524
    %6541 = vmatpush2.bf16.msra.mxu0 %v4523
    %6542 = vmatprep.subr.bf16.mxu0 %v4520
    %6543 = vmatpush2.bf16.msra.mxu0 %v4519
    %6544 = vmatprep.mubr.bf16.mxu0 %v1290
    %6545 = vmatmul.mubr.bf16.gmra.mxu0 %v1289
    %v6546 = vpop.f32.mrf.mxu0
    %v6547 = vadd.f32 %v6506, %v6546
    %v6548 = vpop.f32.mrf.mxu0
    %v6549 = vadd.f32 %v6508, %v6548
    %v6550 = vpop.f32.mrf.mxu0
    %v6551 = vpop.f32.mrf.mxu0
    %6552 = vdwg.mxu0
    %6553 = vmatprep.subr.bf16.mxu0 %v4580
    %6554 = vmatpush1.bf16.msra.mxu0 %v4579
    %6555 = vmatprep.subr.bf16.mxu0 %v4576
    %6556 = vmatpush1.bf16.msra.mxu0 %v4575
    %6557 = vmatprep.subr.bf16.mxu0 %v4572
    %6558 = vmatpush1.bf16.msra.mxu0 %v4571
    %6559 = vmatprep.subr.bf16.mxu0 %v4568
    %6560 = vmatpush1.bf16.msra.mxu0 %v4567
    %6561 = vmatprep.subr.bf16.mxu0 %v4564
    %6562 = vmatpush1.bf16.msra.mxu0 %v4563
    %6563 = vmatprep.subr.bf16.mxu0 %v4560
    %6564 = vmatpush1.bf16.msra.mxu0 %v4559
    %6565 = vmatprep.subr.bf16.mxu0 %v4556
    %6566 = vmatpush1.bf16.msra.mxu0 %v4555
    %6567 = vmatprep.subr.bf16.mxu0 %v4552
    %6568 = vmatpush1.bf16.msra.mxu0 %v4551
    %6569 = vmatprep.subr.bf16.mxu0 %v4612
    %6570 = vmatpush2.bf16.msra.mxu0 %v4611
    %6571 = vmatprep.subr.bf16.mxu0 %v4608
    %6572 = vmatpush2.bf16.msra.mxu0 %v4607
    %6573 = vmatprep.subr.bf16.mxu0 %v4604
    %6574 = vmatpush2.bf16.msra.mxu0 %v4603
    %6575 = vmatprep.subr.bf16.mxu0 %v4600
    %6576 = vmatpush2.bf16.msra.mxu0 %v4599
    %6577 = vmatprep.subr.bf16.mxu0 %v4596
    %6578 = vmatpush2.bf16.msra.mxu0 %v4595
    %6579 = vmatprep.subr.bf16.mxu0 %v4592
    %6580 = vmatpush2.bf16.msra.mxu0 %v4591
    %6581 = vmatprep.subr.bf16.mxu0 %v4588
    %6582 = vmatpush2.bf16.msra.mxu0 %v4587
    %6583 = vmatprep.subr.bf16.mxu0 %v4584
    %6584 = vmatpush2.bf16.msra.mxu0 %v4583
    %6585 = vmatprep.mubr.bf16.mxu0 %v1292
    %6586 = vmatmul.mubr.bf16.gmra.mxu0 %v1291
    %v6587 = vpop.f32.mrf.mxu0
    %v6588 = vadd.f32 %v6547, %v6587
    %v6589 = vpop.f32.mrf.mxu0
    %v6590 = vadd.f32 %v6549, %v6589
    %v6591 = vpop.f32.mrf.mxu0
    %v6592 = vpop.f32.mrf.mxu0
    %6593 = vdwg.mxu0
    %6594 = vmatprep.subr.bf16.mxu0 %v4644
    %6595 = vmatpush1.bf16.msra.mxu0 %v4643
    %6596 = vmatprep.subr.bf16.mxu0 %v4640
    %6597 = vmatpush1.bf16.msra.mxu0 %v4639
    %6598 = vmatprep.subr.bf16.mxu0 %v4636
    %6599 = vmatpush1.bf16.msra.mxu0 %v4635
    %6600 = vmatprep.subr.bf16.mxu0 %v4632
    %6601 = vmatpush1.bf16.msra.mxu0 %v4631
    %6602 = vmatprep.subr.bf16.mxu0 %v4628
    %6603 = vmatpush1.bf16.msra.mxu0 %v4627
    %6604 = vmatprep.subr.bf16.mxu0 %v4624
    %6605 = vmatpush1.bf16.msra.mxu0 %v4623
    %6606 = vmatprep.subr.bf16.mxu0 %v4620
    %6607 = vmatpush1.bf16.msra.mxu0 %v4619
    %6608 = vmatprep.subr.bf16.mxu0 %v4616
    %6609 = vmatpush1.bf16.msra.mxu0 %v4615
    %6610 = vmatprep.subr.bf16.mxu0 %v4676
    %6611 = vmatpush2.bf16.msra.mxu0 %v4675
    %6612 = vmatprep.subr.bf16.mxu0 %v4672
    %6613 = vmatpush2.bf16.msra.mxu0 %v4671
    %6614 = vmatprep.subr.bf16.mxu0 %v4668
    %6615 = vmatpush2.bf16.msra.mxu0 %v4667
    %6616 = vmatprep.subr.bf16.mxu0 %v4664
    %6617 = vmatpush2.bf16.msra.mxu0 %v4663
    %6618 = vmatprep.subr.bf16.mxu0 %v4660
    %6619 = vmatpush2.bf16.msra.mxu0 %v4659
    %6620 = vmatprep.subr.bf16.mxu0 %v4656
    %6621 = vmatpush2.bf16.msra.mxu0 %v4655
    %6622 = vmatprep.subr.bf16.mxu0 %v4652
    %6623 = vmatpush2.bf16.msra.mxu0 %v4651
    %6624 = vmatprep.subr.bf16.mxu0 %v4648
    %6625 = vmatpush2.bf16.msra.mxu0 %v4647
    %6626 = vmatprep.mubr.bf16.mxu0 %v1294
    %6627 = vmatmul.mubr.bf16.gmra.mxu0 %v1293
    %v6628 = vpop.f32.mrf.mxu0
    %v6629 = vadd.f32 %v6588, %v6628
    %v6630 = vpop.f32.mrf.mxu0
    %v6631 = vadd.f32 %v6590, %v6630
    %v6632 = vpop.f32.mrf.mxu0
    %v6633 = vpop.f32.mrf.mxu0
    %6634 = vdwg.mxu0
    %6635 = vmatprep.subr.bf16.mxu0 %v4708
    %6636 = vmatpush1.bf16.msra.mxu0 %v4707
    %6637 = vmatprep.subr.bf16.mxu0 %v4704
    %6638 = vmatpush1.bf16.msra.mxu0 %v4703
    %6639 = vmatprep.subr.bf16.mxu0 %v4700
    %6640 = vmatpush1.bf16.msra.mxu0 %v4699
    %6641 = vmatprep.subr.bf16.mxu0 %v4696
    %6642 = vmatpush1.bf16.msra.mxu0 %v4695
    %6643 = vmatprep.subr.bf16.mxu0 %v4692
    %6644 = vmatpush1.bf16.msra.mxu0 %v4691
    %6645 = vmatprep.subr.bf16.mxu0 %v4688
    %6646 = vmatpush1.bf16.msra.mxu0 %v4687
    %6647 = vmatprep.subr.bf16.mxu0 %v4684
    %6648 = vmatpush1.bf16.msra.mxu0 %v4683
    %6649 = vmatprep.subr.bf16.mxu0 %v4680
    %6650 = vmatpush1.bf16.msra.mxu0 %v4679
    %6651 = vmatprep.subr.bf16.mxu0 %v4740
    %6652 = vmatpush2.bf16.msra.mxu0 %v4739
    %6653 = vmatprep.subr.bf16.mxu0 %v4736
    %6654 = vmatpush2.bf16.msra.mxu0 %v4735
    %6655 = vmatprep.subr.bf16.mxu0 %v4732
    %6656 = vmatpush2.bf16.msra.mxu0 %v4731
    %6657 = vmatprep.subr.bf16.mxu0 %v4728
    %6658 = vmatpush2.bf16.msra.mxu0 %v4727
    %6659 = vmatprep.subr.bf16.mxu0 %v4724
    %6660 = vmatpush2.bf16.msra.mxu0 %v4723
    %6661 = vmatprep.subr.bf16.mxu0 %v4720
    %6662 = vmatpush2.bf16.msra.mxu0 %v4719
    %6663 = vmatprep.subr.bf16.mxu0 %v4716
    %6664 = vmatpush2.bf16.msra.mxu0 %v4715
    %6665 = vmatprep.subr.bf16.mxu0 %v4712
    %6666 = vmatpush2.bf16.msra.mxu0 %v4711
    %6667 = vmatprep.mubr.bf16.mxu0 %v1296
    %6668 = vmatmul.mubr.bf16.gmra.mxu0 %v1295
    %v6669 = vpop.f32.mrf.mxu0
    %v6670 = vadd.f32 %v6629, %v6669
    %v6671 = vpop.f32.mrf.mxu0
    %v6672 = vadd.f32 %v6631, %v6671
    %v6673 = vpop.f32.mrf.mxu0
    %v6674 = vpop.f32.mrf.mxu0
    %6675 = vdwg.mxu0
    %6676 = vmatprep.subr.bf16.mxu0 %v4772
    %6677 = vmatpush1.bf16.msra.mxu0 %v4771
    %6678 = vmatprep.subr.bf16.mxu0 %v4768
    %6679 = vmatpush1.bf16.msra.mxu0 %v4767
    %6680 = vmatprep.subr.bf16.mxu0 %v4764
    %6681 = vmatpush1.bf16.msra.mxu0 %v4763
    %6682 = vmatprep.subr.bf16.mxu0 %v4760
    %6683 = vmatpush1.bf16.msra.mxu0 %v4759
    %6684 = vmatprep.subr.bf16.mxu0 %v4756
    %6685 = vmatpush1.bf16.msra.mxu0 %v4755
    %6686 = vmatprep.subr.bf16.mxu0 %v4752
    %6687 = vmatpush1.bf16.msra.mxu0 %v4751
    %6688 = vmatprep.subr.bf16.mxu0 %v4748
    %6689 = vmatpush1.bf16.msra.mxu0 %v4747
    %6690 = vmatprep.subr.bf16.mxu0 %v4744
    %6691 = vmatpush1.bf16.msra.mxu0 %v4743
    %6692 = vmatprep.subr.bf16.mxu0 %v4804
    %6693 = vmatpush2.bf16.msra.mxu0 %v4803
    %6694 = vmatprep.subr.bf16.mxu0 %v4800
    %6695 = vmatpush2.bf16.msra.mxu0 %v4799
    %6696 = vmatprep.subr.bf16.mxu0 %v4796
    %6697 = vmatpush2.bf16.msra.mxu0 %v4795
    %6698 = vmatprep.subr.bf16.mxu0 %v4792
    %6699 = vmatpush2.bf16.msra.mxu0 %v4791
    %6700 = vmatprep.subr.bf16.mxu0 %v4788
    %6701 = vmatpush2.bf16.msra.mxu0 %v4787
    %6702 = vmatprep.subr.bf16.mxu0 %v4784
    %6703 = vmatpush2.bf16.msra.mxu0 %v4783
    %6704 = vmatprep.subr.bf16.mxu0 %v4780
    %6705 = vmatpush2.bf16.msra.mxu0 %v4779
    %6706 = vmatprep.subr.bf16.mxu0 %v4776
    %6707 = vmatpush2.bf16.msra.mxu0 %v4775
    %6708 = vmatprep.mubr.bf16.mxu0 %v1298
    %6709 = vmatmul.mubr.bf16.gmra.mxu0 %v1297
    %v6710 = vpop.f32.mrf.mxu0
    %v6711 = vadd.f32 %v6670, %v6710
    %v6712 = vpop.f32.mrf.mxu0
    %v6713 = vadd.f32 %v6672, %v6712
    %v6714 = vpop.f32.mrf.mxu0
    %v6715 = vpop.f32.mrf.mxu0
    %6716 = vdwg.mxu0
    %6717 = vmatprep.subr.bf16.mxu0 %v4836
    %6718 = vmatpush1.bf16.msra.mxu0 %v4835
    %6719 = vmatprep.subr.bf16.mxu0 %v4832
    %6720 = vmatpush1.bf16.msra.mxu0 %v4831
    %6721 = vmatprep.subr.bf16.mxu0 %v4828
    %6722 = vmatpush1.bf16.msra.mxu0 %v4827
    %6723 = vmatprep.subr.bf16.mxu0 %v4824
    %6724 = vmatpush1.bf16.msra.mxu0 %v4823
    %6725 = vmatprep.subr.bf16.mxu0 %v4820
    %6726 = vmatpush1.bf16.msra.mxu0 %v4819
    %6727 = vmatprep.subr.bf16.mxu0 %v4816
    %6728 = vmatpush1.bf16.msra.mxu0 %v4815
    %6729 = vmatprep.subr.bf16.mxu0 %v4812
    %6730 = vmatpush1.bf16.msra.mxu0 %v4811
    %6731 = vmatprep.subr.bf16.mxu0 %v4808
    %6732 = vmatpush1.bf16.msra.mxu0 %v4807
    %6733 = vmatprep.subr.bf16.mxu0 %v4868
    %6734 = vmatpush2.bf16.msra.mxu0 %v4867
    %6735 = vmatprep.subr.bf16.mxu0 %v4864
    %6736 = vmatpush2.bf16.msra.mxu0 %v4863
    %6737 = vmatprep.subr.bf16.mxu0 %v4860
    %6738 = vmatpush2.bf16.msra.mxu0 %v4859
    %6739 = vmatprep.subr.bf16.mxu0 %v4856
    %6740 = vmatpush2.bf16.msra.mxu0 %v4855
    %6741 = vmatprep.subr.bf16.mxu0 %v4852
    %6742 = vmatpush2.bf16.msra.mxu0 %v4851
    %6743 = vmatprep.subr.bf16.mxu0 %v4848
    %6744 = vmatpush2.bf16.msra.mxu0 %v4847
    %6745 = vmatprep.subr.bf16.mxu0 %v4844
    %6746 = vmatpush2.bf16.msra.mxu0 %v4843
    %6747 = vmatprep.subr.bf16.mxu0 %v4840
    %6748 = vmatpush2.bf16.msra.mxu0 %v4839
    %6749 = vmatprep.mubr.bf16.mxu0 %v1300
    %6750 = vmatmul.mubr.bf16.gmra.mxu0 %v1299
    %v6751 = vpop.f32.mrf.mxu0
    %v6752 = vadd.f32 %v6711, %v6751
    %v6753 = vpop.f32.mrf.mxu0
    %v6754 = vadd.f32 %v6713, %v6753
    %v6755 = vpop.f32.mrf.mxu0
    %v6756 = vpop.f32.mrf.mxu0
    %6757 = vdwg.mxu0
    %6758 = vmatprep.subr.bf16.mxu0 %v4900
    %6759 = vmatpush1.bf16.msra.mxu0 %v4899
    %6760 = vmatprep.subr.bf16.mxu0 %v4896
    %6761 = vmatpush1.bf16.msra.mxu0 %v4895
    %6762 = vmatprep.subr.bf16.mxu0 %v4892
    %6763 = vmatpush1.bf16.msra.mxu0 %v4891
    %6764 = vmatprep.subr.bf16.mxu0 %v4888
    %6765 = vmatpush1.bf16.msra.mxu0 %v4887
    %6766 = vmatprep.subr.bf16.mxu0 %v4884
    %6767 = vmatpush1.bf16.msra.mxu0 %v4883
    %6768 = vmatprep.subr.bf16.mxu0 %v4880
    %6769 = vmatpush1.bf16.msra.mxu0 %v4879
    %6770 = vmatprep.subr.bf16.mxu0 %v4876
    %6771 = vmatpush1.bf16.msra.mxu0 %v4875
    %6772 = vmatprep.subr.bf16.mxu0 %v4872
    %6773 = vmatpush1.bf16.msra.mxu0 %v4871
    %6774 = vmatprep.subr.bf16.mxu0 %v4932
    %6775 = vmatpush2.bf16.msra.mxu0 %v4931
    %6776 = vmatprep.subr.bf16.mxu0 %v4928
    %6777 = vmatpush2.bf16.msra.mxu0 %v4927
    %6778 = vmatprep.subr.bf16.mxu0 %v4924
    %6779 = vmatpush2.bf16.msra.mxu0 %v4923
    %6780 = vmatprep.subr.bf16.mxu0 %v4920
    %6781 = vmatpush2.bf16.msra.mxu0 %v4919
    %6782 = vmatprep.subr.bf16.mxu0 %v4916
    %6783 = vmatpush2.bf16.msra.mxu0 %v4915
    %6784 = vmatprep.subr.bf16.mxu0 %v4912
    %6785 = vmatpush2.bf16.msra.mxu0 %v4911
    %6786 = vmatprep.subr.bf16.mxu0 %v4908
    %6787 = vmatpush2.bf16.msra.mxu0 %v4907
    %6788 = vmatprep.subr.bf16.mxu0 %v4904
    %6789 = vmatpush2.bf16.msra.mxu0 %v4903
    %6790 = vmatprep.mubr.bf16.mxu0 %v1302
    %6791 = vmatmul.mubr.bf16.gmra.mxu0 %v1301
    %v6792 = vpop.f32.mrf.mxu0
    %v6793 = vadd.f32 %v6752, %v6792
    %v6794 = vpop.f32.mrf.mxu0
    %v6795 = vadd.f32 %v6754, %v6794
    %v6796 = vpop.f32.mrf.mxu0
    %v6797 = vpop.f32.mrf.mxu0
    %6798 = vdwg.mxu0
    %6799 = vmatprep.subr.bf16.mxu0 %v4964
    %6800 = vmatpush1.bf16.msra.mxu0 %v4963
    %6801 = vmatprep.subr.bf16.mxu0 %v4960
    %6802 = vmatpush1.bf16.msra.mxu0 %v4959
    %6803 = vmatprep.subr.bf16.mxu0 %v4956
    %6804 = vmatpush1.bf16.msra.mxu0 %v4955
    %6805 = vmatprep.subr.bf16.mxu0 %v4952
    %6806 = vmatpush1.bf16.msra.mxu0 %v4951
    %6807 = vmatprep.subr.bf16.mxu0 %v4948
    %6808 = vmatpush1.bf16.msra.mxu0 %v4947
    %6809 = vmatprep.subr.bf16.mxu0 %v4944
    %6810 = vmatpush1.bf16.msra.mxu0 %v4943
    %6811 = vmatprep.subr.bf16.mxu0 %v4940
    %6812 = vmatpush1.bf16.msra.mxu0 %v4939
    %6813 = vmatprep.subr.bf16.mxu0 %v4936
    %6814 = vmatpush1.bf16.msra.mxu0 %v4935
    %6815 = vmatprep.subr.bf16.mxu0 %v4996
    %6816 = vmatpush2.bf16.msra.mxu0 %v4995
    %6817 = vmatprep.subr.bf16.mxu0 %v4992
    %6818 = vmatpush2.bf16.msra.mxu0 %v4991
    %6819 = vmatprep.subr.bf16.mxu0 %v4988
    %6820 = vmatpush2.bf16.msra.mxu0 %v4987
    %6821 = vmatprep.subr.bf16.mxu0 %v4984
    %6822 = vmatpush2.bf16.msra.mxu0 %v4983
    %6823 = vmatprep.subr.bf16.mxu0 %v4980
    %6824 = vmatpush2.bf16.msra.mxu0 %v4979
    %6825 = vmatprep.subr.bf16.mxu0 %v4976
    %6826 = vmatpush2.bf16.msra.mxu0 %v4975
    %6827 = vmatprep.subr.bf16.mxu0 %v4972
    %6828 = vmatpush2.bf16.msra.mxu0 %v4971
    %6829 = vmatprep.subr.bf16.mxu0 %v4968
    %6830 = vmatpush2.bf16.msra.mxu0 %v4967
    %6831 = vmatprep.mubr.bf16.mxu0 %v1304
    %6832 = vmatmul.mubr.bf16.gmra.mxu0 %v1303
    %v6833 = vpop.f32.mrf.mxu0
    %v6834 = vadd.f32 %v6793, %v6833
    %v6835 = vpop.f32.mrf.mxu0
    %v6836 = vadd.f32 %v6795, %v6835
    %v6837 = vpop.f32.mrf.mxu0
    %v6838 = vpop.f32.mrf.mxu0
    %6839 = vdwg.mxu0
    %6840 = vmatprep.subr.bf16.mxu0 %v5028
    %6841 = vmatpush1.bf16.msra.mxu0 %v5027
    %6842 = vmatprep.subr.bf16.mxu0 %v5024
    %6843 = vmatpush1.bf16.msra.mxu0 %v5023
    %6844 = vmatprep.subr.bf16.mxu0 %v5020
    %6845 = vmatpush1.bf16.msra.mxu0 %v5019
    %6846 = vmatprep.subr.bf16.mxu0 %v5016
    %6847 = vmatpush1.bf16.msra.mxu0 %v5015
    %6848 = vmatprep.subr.bf16.mxu0 %v5012
    %6849 = vmatpush1.bf16.msra.mxu0 %v5011
    %6850 = vmatprep.subr.bf16.mxu0 %v5008
    %6851 = vmatpush1.bf16.msra.mxu0 %v5007
    %6852 = vmatprep.subr.bf16.mxu0 %v5004
    %6853 = vmatpush1.bf16.msra.mxu0 %v5003
    %6854 = vmatprep.subr.bf16.mxu0 %v5000
    %6855 = vmatpush1.bf16.msra.mxu0 %v4999
    %6856 = vmatprep.subr.bf16.mxu0 %v5060
    %6857 = vmatpush2.bf16.msra.mxu0 %v5059
    %6858 = vmatprep.subr.bf16.mxu0 %v5056
    %6859 = vmatpush2.bf16.msra.mxu0 %v5055
    %6860 = vmatprep.subr.bf16.mxu0 %v5052
    %6861 = vmatpush2.bf16.msra.mxu0 %v5051
    %6862 = vmatprep.subr.bf16.mxu0 %v5048
    %6863 = vmatpush2.bf16.msra.mxu0 %v5047
    %6864 = vmatprep.subr.bf16.mxu0 %v5044
    %6865 = vmatpush2.bf16.msra.mxu0 %v5043
    %6866 = vmatprep.subr.bf16.mxu0 %v5040
    %6867 = vmatpush2.bf16.msra.mxu0 %v5039
    %6868 = vmatprep.subr.bf16.mxu0 %v5036
    %6869 = vmatpush2.bf16.msra.mxu0 %v5035
    %6870 = vmatprep.subr.bf16.mxu0 %v5032
    %6871 = vmatpush2.bf16.msra.mxu0 %v5031
    %6872 = vmatprep.mubr.bf16.mxu0 %v1306
    %6873 = vmatmul.mubr.bf16.gmra.mxu0 %v1305
    %v6874 = vpop.f32.mrf.mxu0
    %v6875 = vadd.f32 %v6834, %v6874
    %v6876 = vpop.f32.mrf.mxu0
    %v6877 = vadd.f32 %v6836, %v6876
    %v6878 = vpop.f32.mrf.mxu0
    %v6879 = vpop.f32.mrf.mxu0
    %6880 = vdwg.mxu0
    %6881 = vmatprep.subr.bf16.mxu0 %v5092
    %6882 = vmatpush1.bf16.msra.mxu0 %v5091
    %6883 = vmatprep.subr.bf16.mxu0 %v5088
    %6884 = vmatpush1.bf16.msra.mxu0 %v5087
    %6885 = vmatprep.subr.bf16.mxu0 %v5084
    %6886 = vmatpush1.bf16.msra.mxu0 %v5083
    %6887 = vmatprep.subr.bf16.mxu0 %v5080
    %6888 = vmatpush1.bf16.msra.mxu0 %v5079
    %6889 = vmatprep.subr.bf16.mxu0 %v5076
    %6890 = vmatpush1.bf16.msra.mxu0 %v5075
    %6891 = vmatprep.subr.bf16.mxu0 %v5072
    %6892 = vmatpush1.bf16.msra.mxu0 %v5071
    %6893 = vmatprep.subr.bf16.mxu0 %v5068
    %6894 = vmatpush1.bf16.msra.mxu0 %v5067
    %6895 = vmatprep.subr.bf16.mxu0 %v5064
    %6896 = vmatpush1.bf16.msra.mxu0 %v5063
    %6897 = vmatprep.subr.bf16.mxu0 %v5124
    %6898 = vmatpush2.bf16.msra.mxu0 %v5123
    %6899 = vmatprep.subr.bf16.mxu0 %v5120
    %6900 = vmatpush2.bf16.msra.mxu0 %v5119
    %6901 = vmatprep.subr.bf16.mxu0 %v5116
    %6902 = vmatpush2.bf16.msra.mxu0 %v5115
    %6903 = vmatprep.subr.bf16.mxu0 %v5112
    %6904 = vmatpush2.bf16.msra.mxu0 %v5111
    %6905 = vmatprep.subr.bf16.mxu0 %v5108
    %6906 = vmatpush2.bf16.msra.mxu0 %v5107
    %6907 = vmatprep.subr.bf16.mxu0 %v5104
    %6908 = vmatpush2.bf16.msra.mxu0 %v5103
    %6909 = vmatprep.subr.bf16.mxu0 %v5100
    %6910 = vmatpush2.bf16.msra.mxu0 %v5099
    %6911 = vmatprep.subr.bf16.mxu0 %v5096
    %6912 = vmatpush2.bf16.msra.mxu0 %v5095
    %6913 = vmatprep.mubr.bf16.mxu0 %v1308
    %6914 = vmatmul.mubr.bf16.gmra.mxu0 %v1307
    %v6915 = vpop.f32.mrf.mxu0
    %v6916 = vadd.f32 %v6875, %v6915
    %v6917 = vpop.f32.mrf.mxu0
    %v6918 = vadd.f32 %v6877, %v6917
    %v6919 = vpop.f32.mrf.mxu0
    %v6920 = vpop.f32.mrf.mxu0
    %6921 = vdwg.mxu0
    %6922 = vmatprep.subr.bf16.mxu0 %v5156
    %6923 = vmatpush1.bf16.msra.mxu0 %v5155
    %6924 = vmatprep.subr.bf16.mxu0 %v5152
    %6925 = vmatpush1.bf16.msra.mxu0 %v5151
    %6926 = vmatprep.subr.bf16.mxu0 %v5148
    %6927 = vmatpush1.bf16.msra.mxu0 %v5147
    %6928 = vmatprep.subr.bf16.mxu0 %v5144
    %6929 = vmatpush1.bf16.msra.mxu0 %v5143
    %6930 = vmatprep.subr.bf16.mxu0 %v5140
    %6931 = vmatpush1.bf16.msra.mxu0 %v5139
    %6932 = vmatprep.subr.bf16.mxu0 %v5136
    %6933 = vmatpush1.bf16.msra.mxu0 %v5135
    %6934 = vmatprep.subr.bf16.mxu0 %v5132
    %6935 = vmatpush1.bf16.msra.mxu0 %v5131
    %6936 = vmatprep.subr.bf16.mxu0 %v5128
    %6937 = vmatpush1.bf16.msra.mxu0 %v5127
    %6938 = vmatprep.subr.bf16.mxu0 %v5188
    %6939 = vmatpush2.bf16.msra.mxu0 %v5187
    %6940 = vmatprep.subr.bf16.mxu0 %v5184
    %6941 = vmatpush2.bf16.msra.mxu0 %v5183
    %6942 = vmatprep.subr.bf16.mxu0 %v5180
    %6943 = vmatpush2.bf16.msra.mxu0 %v5179
    %6944 = vmatprep.subr.bf16.mxu0 %v5176
    %6945 = vmatpush2.bf16.msra.mxu0 %v5175
    %6946 = vmatprep.subr.bf16.mxu0 %v5172
    %6947 = vmatpush2.bf16.msra.mxu0 %v5171
    %6948 = vmatprep.subr.bf16.mxu0 %v5168
    %6949 = vmatpush2.bf16.msra.mxu0 %v5167
    %6950 = vmatprep.subr.bf16.mxu0 %v5164
    %6951 = vmatpush2.bf16.msra.mxu0 %v5163
    %6952 = vmatprep.subr.bf16.mxu0 %v5160
    %6953 = vmatpush2.bf16.msra.mxu0 %v5159
    %6954 = vmatprep.mubr.bf16.mxu0 %v1310
    %6955 = vmatmul.mubr.bf16.gmra.mxu0 %v1309
    %v6956 = vpop.f32.mrf.mxu0
    %v6957 = vadd.f32 %v6916, %v6956
    %v6958 = vpop.f32.mrf.mxu0
    %v6959 = vadd.f32 %v6918, %v6958
    %v6960 = vpop.f32.mrf.mxu0
    %v6961 = vpop.f32.mrf.mxu0
    %6962 = vdwg.mxu0
    %6963 = vmatprep.subr.bf16.mxu0 %v5220
    %6964 = vmatpush1.bf16.msra.mxu0 %v5219
    %6965 = vmatprep.subr.bf16.mxu0 %v5216
    %6966 = vmatpush1.bf16.msra.mxu0 %v5215
    %6967 = vmatprep.subr.bf16.mxu0 %v5212
    %6968 = vmatpush1.bf16.msra.mxu0 %v5211
    %6969 = vmatprep.subr.bf16.mxu0 %v5208
    %6970 = vmatpush1.bf16.msra.mxu0 %v5207
    %6971 = vmatprep.subr.bf16.mxu0 %v5204
    %6972 = vmatpush1.bf16.msra.mxu0 %v5203
    %6973 = vmatprep.subr.bf16.mxu0 %v5200
    %6974 = vmatpush1.bf16.msra.mxu0 %v5199
    %6975 = vmatprep.subr.bf16.mxu0 %v5196
    %6976 = vmatpush1.bf16.msra.mxu0 %v5195
    %6977 = vmatprep.subr.bf16.mxu0 %v5192
    %6978 = vmatpush1.bf16.msra.mxu0 %v5191
    %6979 = vmatprep.subr.bf16.mxu0 %v5252
    %6980 = vmatpush2.bf16.msra.mxu0 %v5251
    %6981 = vmatprep.subr.bf16.mxu0 %v5248
    %6982 = vmatpush2.bf16.msra.mxu0 %v5247
    %6983 = vmatprep.subr.bf16.mxu0 %v5244
    %6984 = vmatpush2.bf16.msra.mxu0 %v5243
    %6985 = vmatprep.subr.bf16.mxu0 %v5240
    %6986 = vmatpush2.bf16.msra.mxu0 %v5239
    %6987 = vmatprep.subr.bf16.mxu0 %v5236
    %6988 = vmatpush2.bf16.msra.mxu0 %v5235
    %6989 = vmatprep.subr.bf16.mxu0 %v5232
    %6990 = vmatpush2.bf16.msra.mxu0 %v5231
    %6991 = vmatprep.subr.bf16.mxu0 %v5228
    %6992 = vmatpush2.bf16.msra.mxu0 %v5227
    %6993 = vmatprep.subr.bf16.mxu0 %v5224
    %6994 = vmatpush2.bf16.msra.mxu0 %v5223
    %6995 = vmatprep.mubr.bf16.mxu0 %v1312
    %6996 = vmatmul.mubr.bf16.gmra.mxu0 %v1311
    %v6997 = vpop.f32.mrf.mxu0
    %v6998 = vadd.f32 %v6957, %v6997
    %v6999 = vpop.f32.mrf.mxu0
    %v7000 = vadd.f32 %v6959, %v6999
    %v7001 = vpop.f32.mrf.mxu0
    %v7002 = vpop.f32.mrf.mxu0
    %7003 = vdwg.mxu0
    %7004 = vmatprep.subr.bf16.mxu0 %v5284
    %7005 = vmatpush1.bf16.msra.mxu0 %v5283
    %7006 = vmatprep.subr.bf16.mxu0 %v5280
    %7007 = vmatpush1.bf16.msra.mxu0 %v5279
    %7008 = vmatprep.subr.bf16.mxu0 %v5276
    %7009 = vmatpush1.bf16.msra.mxu0 %v5275
    %7010 = vmatprep.subr.bf16.mxu0 %v5272
    %7011 = vmatpush1.bf16.msra.mxu0 %v5271
    %7012 = vmatprep.subr.bf16.mxu0 %v5268
    %7013 = vmatpush1.bf16.msra.mxu0 %v5267
    %7014 = vmatprep.subr.bf16.mxu0 %v5264
    %7015 = vmatpush1.bf16.msra.mxu0 %v5263
    %7016 = vmatprep.subr.bf16.mxu0 %v5260
    %7017 = vmatpush1.bf16.msra.mxu0 %v5259
    %7018 = vmatprep.subr.bf16.mxu0 %v5256
    %7019 = vmatpush1.bf16.msra.mxu0 %v5255
    %7020 = vmatprep.subr.bf16.mxu0 %v5316
    %7021 = vmatpush2.bf16.msra.mxu0 %v5315
    %7022 = vmatprep.subr.bf16.mxu0 %v5312
    %7023 = vmatpush2.bf16.msra.mxu0 %v5311
    %7024 = vmatprep.subr.bf16.mxu0 %v5308
    %7025 = vmatpush2.bf16.msra.mxu0 %v5307
    %7026 = vmatprep.subr.bf16.mxu0 %v5304
    %7027 = vmatpush2.bf16.msra.mxu0 %v5303
    %7028 = vmatprep.subr.bf16.mxu0 %v5300
    %7029 = vmatpush2.bf16.msra.mxu0 %v5299
    %7030 = vmatprep.subr.bf16.mxu0 %v5296
    %7031 = vmatpush2.bf16.msra.mxu0 %v5295
    %7032 = vmatprep.subr.bf16.mxu0 %v5292
    %7033 = vmatpush2.bf16.msra.mxu0 %v5291
    %7034 = vmatprep.subr.bf16.mxu0 %v5288
    %7035 = vmatpush2.bf16.msra.mxu0 %v5287
    %7036 = vmatprep.mubr.bf16.mxu0 %v1314
    %7037 = vmatmul.mubr.bf16.gmra.mxu0 %v1313
    %v7038 = vpop.f32.mrf.mxu0
    %v7039 = vadd.f32 %v6998, %v7038
    %v7040 = vpop.f32.mrf.mxu0
    %v7041 = vadd.f32 %v7000, %v7040
    %v7042 = vpop.f32.mrf.mxu0
    %v7043 = vpop.f32.mrf.mxu0
    %7044 = vdwg.mxu0
    %7045 = vmatprep.subr.bf16.mxu0 %v5348
    %7046 = vmatpush1.bf16.msra.mxu0 %v5347
    %7047 = vmatprep.subr.bf16.mxu0 %v5344
    %7048 = vmatpush1.bf16.msra.mxu0 %v5343
    %7049 = vmatprep.subr.bf16.mxu0 %v5340
    %7050 = vmatpush1.bf16.msra.mxu0 %v5339
    %7051 = vmatprep.subr.bf16.mxu0 %v5336
    %7052 = vmatpush1.bf16.msra.mxu0 %v5335
    %7053 = vmatprep.subr.bf16.mxu0 %v5332
    %7054 = vmatpush1.bf16.msra.mxu0 %v5331
    %7055 = vmatprep.subr.bf16.mxu0 %v5328
    %7056 = vmatpush1.bf16.msra.mxu0 %v5327
    %7057 = vmatprep.subr.bf16.mxu0 %v5324
    %7058 = vmatpush1.bf16.msra.mxu0 %v5323
    %7059 = vmatprep.subr.bf16.mxu0 %v5320
    %7060 = vmatpush1.bf16.msra.mxu0 %v5319
    %7061 = vmatprep.subr.bf16.mxu0 %v5380
    %7062 = vmatpush2.bf16.msra.mxu0 %v5379
    %7063 = vmatprep.subr.bf16.mxu0 %v5376
    %7064 = vmatpush2.bf16.msra.mxu0 %v5375
    %7065 = vmatprep.subr.bf16.mxu0 %v5372
    %7066 = vmatpush2.bf16.msra.mxu0 %v5371
    %7067 = vmatprep.subr.bf16.mxu0 %v5368
    %7068 = vmatpush2.bf16.msra.mxu0 %v5367
    %7069 = vmatprep.subr.bf16.mxu0 %v5364
    %7070 = vmatpush2.bf16.msra.mxu0 %v5363
    %7071 = vmatprep.subr.bf16.mxu0 %v5360
    %7072 = vmatpush2.bf16.msra.mxu0 %v5359
    %7073 = vmatprep.subr.bf16.mxu0 %v5356
    %7074 = vmatpush2.bf16.msra.mxu0 %v5355
    %7075 = vmatprep.subr.bf16.mxu0 %v5352
    %7076 = vmatpush2.bf16.msra.mxu0 %v5351
    %7077 = vmatprep.mubr.bf16.mxu0 %v1316
    %7078 = vmatmul.mubr.bf16.gmra.mxu0 %v1315
    %v7079 = vpop.f32.mrf.mxu0
    %v7080 = vadd.f32 %v7039, %v7079
    %v7081 = vpop.f32.mrf.mxu0
    %v7082 = vadd.f32 %v7041, %v7081
    %v7083 = vpop.f32.mrf.mxu0
    %v7084 = vpop.f32.mrf.mxu0
    %7085 = vdwg.mxu0
    %7086 = vmatprep.subr.bf16.mxu0 %v5412
    %7087 = vmatpush1.bf16.msra.mxu0 %v5411
    %7088 = vmatprep.subr.bf16.mxu0 %v5408
    %7089 = vmatpush1.bf16.msra.mxu0 %v5407
    %7090 = vmatprep.subr.bf16.mxu0 %v5404
    %7091 = vmatpush1.bf16.msra.mxu0 %v5403
    %7092 = vmatprep.subr.bf16.mxu0 %v5400
    %7093 = vmatpush1.bf16.msra.mxu0 %v5399
    %7094 = vmatprep.subr.bf16.mxu0 %v5396
    %7095 = vmatpush1.bf16.msra.mxu0 %v5395
    %7096 = vmatprep.subr.bf16.mxu0 %v5392
    %7097 = vmatpush1.bf16.msra.mxu0 %v5391
    %7098 = vmatprep.subr.bf16.mxu0 %v5388
    %7099 = vmatpush1.bf16.msra.mxu0 %v5387
    %7100 = vmatprep.subr.bf16.mxu0 %v5384
    %7101 = vmatpush1.bf16.msra.mxu0 %v5383
    %7102 = vmatprep.subr.bf16.mxu0 %v5444
    %7103 = vmatpush2.bf16.msra.mxu0 %v5443
    %7104 = vmatprep.subr.bf16.mxu0 %v5440
    %7105 = vmatpush2.bf16.msra.mxu0 %v5439
    %7106 = vmatprep.subr.bf16.mxu0 %v5436
    %7107 = vmatpush2.bf16.msra.mxu0 %v5435
    %7108 = vmatprep.subr.bf16.mxu0 %v5432
    %7109 = vmatpush2.bf16.msra.mxu0 %v5431
    %7110 = vmatprep.subr.bf16.mxu0 %v5428
    %7111 = vmatpush2.bf16.msra.mxu0 %v5427
    %7112 = vmatprep.subr.bf16.mxu0 %v5424
    %7113 = vmatpush2.bf16.msra.mxu0 %v5423
    %7114 = vmatprep.subr.bf16.mxu0 %v5420
    %7115 = vmatpush2.bf16.msra.mxu0 %v5419
    %7116 = vmatprep.subr.bf16.mxu0 %v5416
    %7117 = vmatpush2.bf16.msra.mxu0 %v5415
    %7118 = vmatprep.mubr.bf16.mxu0 %v1318
    %7119 = vmatmul.mubr.bf16.gmra.mxu0 %v1317
    %v7120 = vpop.f32.mrf.mxu0
    %v7121 = vadd.f32 %v7080, %v7120
    %v7122 = vpop.f32.mrf.mxu0
    %v7123 = vadd.f32 %v7082, %v7122
    %v7124 = vpop.f32.mrf.mxu0
    %v7125 = vpop.f32.mrf.mxu0
    %7126 = vdwg.mxu0
    %7127 = vmatprep.subr.bf16.mxu0 %v4454
    %7128 = vmatpush1.bf16.msra.mxu0 %v4453
    %7129 = vmatprep.subr.bf16.mxu0 %v4450
    %7130 = vmatpush1.bf16.msra.mxu0 %v4449
    %7131 = vmatprep.subr.bf16.mxu0 %v4446
    %7132 = vmatpush1.bf16.msra.mxu0 %v4445
    %7133 = vmatprep.subr.bf16.mxu0 %v4442
    %7134 = vmatpush1.bf16.msra.mxu0 %v4441
    %7135 = vmatprep.subr.bf16.mxu0 %v4438
    %7136 = vmatpush1.bf16.msra.mxu0 %v4437
    %7137 = vmatprep.subr.bf16.mxu0 %v4434
    %7138 = vmatpush1.bf16.msra.mxu0 %v4433
    %7139 = vmatprep.subr.bf16.mxu0 %v4430
    %7140 = vmatpush1.bf16.msra.mxu0 %v4429
    %7141 = vmatprep.subr.bf16.mxu0 %v4426
    %7142 = vmatpush1.bf16.msra.mxu0 %v4425
    %7143 = vmatprep.subr.bf16.mxu0 %v4486
    %7144 = vmatpush2.bf16.msra.mxu0 %v4485
    %7145 = vmatprep.subr.bf16.mxu0 %v4482
    %7146 = vmatpush2.bf16.msra.mxu0 %v4481
    %7147 = vmatprep.subr.bf16.mxu0 %v4478
    %7148 = vmatpush2.bf16.msra.mxu0 %v4477
    %7149 = vmatprep.subr.bf16.mxu0 %v4474
    %7150 = vmatpush2.bf16.msra.mxu0 %v4473
    %7151 = vmatprep.subr.bf16.mxu0 %v4470
    %7152 = vmatpush2.bf16.msra.mxu0 %v4469
    %7153 = vmatprep.subr.bf16.mxu0 %v4466
    %7154 = vmatpush2.bf16.msra.mxu0 %v4465
    %7155 = vmatprep.subr.bf16.mxu0 %v4462
    %7156 = vmatpush2.bf16.msra.mxu0 %v4461
    %7157 = vmatprep.subr.bf16.mxu0 %v4458
    %7158 = vmatpush2.bf16.msra.mxu0 %v4457
    %7159 = vmatprep.mubr.bf16.mxu0 %v1288
    %7160 = vmatmul.mubr.bf16.gmra.mxu0 %v1287
    %v7161 = vpop.f32.mrf.mxu0
    %v7162 = vadd.f32 %v1230, %v7161
    %v7163 = vpop.f32.mrf.mxu0
    %v7164 = vadd.f32 %v1234, %v7163
    %v7165 = vpop.f32.mrf.mxu0
    %v7166 = vpop.f32.mrf.mxu0
    %7167 = vdwg.mxu0
    %7168 = vmatprep.subr.bf16.mxu0 %v4518
    %7169 = vmatpush1.bf16.msra.mxu0 %v4517
    %7170 = vmatprep.subr.bf16.mxu0 %v4514
    %7171 = vmatpush1.bf16.msra.mxu0 %v4513
    %7172 = vmatprep.subr.bf16.mxu0 %v4510
    %7173 = vmatpush1.bf16.msra.mxu0 %v4509
    %7174 = vmatprep.subr.bf16.mxu0 %v4506
    %7175 = vmatpush1.bf16.msra.mxu0 %v4505
    %7176 = vmatprep.subr.bf16.mxu0 %v4502
    %7177 = vmatpush1.bf16.msra.mxu0 %v4501
    %7178 = vmatprep.subr.bf16.mxu0 %v4498
    %7179 = vmatpush1.bf16.msra.mxu0 %v4497
    %7180 = vmatprep.subr.bf16.mxu0 %v4494
    %7181 = vmatpush1.bf16.msra.mxu0 %v4493
    %7182 = vmatprep.subr.bf16.mxu0 %v4490
    %7183 = vmatpush1.bf16.msra.mxu0 %v4489
    %7184 = vmatprep.subr.bf16.mxu0 %v4550
    %7185 = vmatpush2.bf16.msra.mxu0 %v4549
    %7186 = vmatprep.subr.bf16.mxu0 %v4546
    %7187 = vmatpush2.bf16.msra.mxu0 %v4545
    %7188 = vmatprep.subr.bf16.mxu0 %v4542
    %7189 = vmatpush2.bf16.msra.mxu0 %v4541
    %7190 = vmatprep.subr.bf16.mxu0 %v4538
    %7191 = vmatpush2.bf16.msra.mxu0 %v4537
    %7192 = vmatprep.subr.bf16.mxu0 %v4534
    %7193 = vmatpush2.bf16.msra.mxu0 %v4533
    %7194 = vmatprep.subr.bf16.mxu0 %v4530
    %7195 = vmatpush2.bf16.msra.mxu0 %v4529
    %7196 = vmatprep.subr.bf16.mxu0 %v4526
    %7197 = vmatpush2.bf16.msra.mxu0 %v4525
    %7198 = vmatprep.subr.bf16.mxu0 %v4522
    %7199 = vmatpush2.bf16.msra.mxu0 %v4521
    %7200 = vmatprep.mubr.bf16.mxu0 %v1290
    %7201 = vmatmul.mubr.bf16.gmra.mxu0 %v1289
    %v7202 = vpop.f32.mrf.mxu0
    %v7203 = vadd.f32 %v7162, %v7202
    %v7204 = vpop.f32.mrf.mxu0
    %v7205 = vadd.f32 %v7164, %v7204
    %v7206 = vpop.f32.mrf.mxu0
    %v7207 = vpop.f32.mrf.mxu0
    %7208 = vdwg.mxu0
    %7209 = vmatprep.subr.bf16.mxu0 %v4582
    %7210 = vmatpush1.bf16.msra.mxu0 %v4581
    %7211 = vmatprep.subr.bf16.mxu0 %v4578
    %7212 = vmatpush1.bf16.msra.mxu0 %v4577
    %7213 = vmatprep.subr.bf16.mxu0 %v4574
    %7214 = vmatpush1.bf16.msra.mxu0 %v4573
    %7215 = vmatprep.subr.bf16.mxu0 %v4570
    %7216 = vmatpush1.bf16.msra.mxu0 %v4569
    %7217 = vmatprep.subr.bf16.mxu0 %v4566
    %7218 = vmatpush1.bf16.msra.mxu0 %v4565
    %7219 = vmatprep.subr.bf16.mxu0 %v4562
    %7220 = vmatpush1.bf16.msra.mxu0 %v4561
    %7221 = vmatprep.subr.bf16.mxu0 %v4558
    %7222 = vmatpush1.bf16.msra.mxu0 %v4557
    %7223 = vmatprep.subr.bf16.mxu0 %v4554
    %7224 = vmatpush1.bf16.msra.mxu0 %v4553
    %7225 = vmatprep.subr.bf16.mxu0 %v4614
    %7226 = vmatpush2.bf16.msra.mxu0 %v4613
    %7227 = vmatprep.subr.bf16.mxu0 %v4610
    %7228 = vmatpush2.bf16.msra.mxu0 %v4609
    %7229 = vmatprep.subr.bf16.mxu0 %v4606
    %7230 = vmatpush2.bf16.msra.mxu0 %v4605
    %7231 = vmatprep.subr.bf16.mxu0 %v4602
    %7232 = vmatpush2.bf16.msra.mxu0 %v4601
    %7233 = vmatprep.subr.bf16.mxu0 %v4598
    %7234 = vmatpush2.bf16.msra.mxu0 %v4597
    %7235 = vmatprep.subr.bf16.mxu0 %v4594
    %7236 = vmatpush2.bf16.msra.mxu0 %v4593
    %7237 = vmatprep.subr.bf16.mxu0 %v4590
    %7238 = vmatpush2.bf16.msra.mxu0 %v4589
    %7239 = vmatprep.subr.bf16.mxu0 %v4586
    %7240 = vmatpush2.bf16.msra.mxu0 %v4585
    %7241 = vmatprep.mubr.bf16.mxu0 %v1292
    %7242 = vmatmul.mubr.bf16.gmra.mxu0 %v1291
    %v7243 = vpop.f32.mrf.mxu0
    %v7244 = vadd.f32 %v7203, %v7243
    %v7245 = vpop.f32.mrf.mxu0
    %v7246 = vadd.f32 %v7205, %v7245
    %v7247 = vpop.f32.mrf.mxu0
    %v7248 = vpop.f32.mrf.mxu0
    %7249 = vdwg.mxu0
    %7250 = vmatprep.subr.bf16.mxu0 %v4646
    %7251 = vmatpush1.bf16.msra.mxu0 %v4645
    %7252 = vmatprep.subr.bf16.mxu0 %v4642
    %7253 = vmatpush1.bf16.msra.mxu0 %v4641
    %7254 = vmatprep.subr.bf16.mxu0 %v4638
    %7255 = vmatpush1.bf16.msra.mxu0 %v4637
    %7256 = vmatprep.subr.bf16.mxu0 %v4634
    %7257 = vmatpush1.bf16.msra.mxu0 %v4633
    %7258 = vmatprep.subr.bf16.mxu0 %v4630
    %7259 = vmatpush1.bf16.msra.mxu0 %v4629
    %7260 = vmatprep.subr.bf16.mxu0 %v4626
    %7261 = vmatpush1.bf16.msra.mxu0 %v4625
    %7262 = vmatprep.subr.bf16.mxu0 %v4622
    %7263 = vmatpush1.bf16.msra.mxu0 %v4621
    %7264 = vmatprep.subr.bf16.mxu0 %v4618
    %7265 = vmatpush1.bf16.msra.mxu0 %v4617
    %7266 = vmatprep.subr.bf16.mxu0 %v4678
    %7267 = vmatpush2.bf16.msra.mxu0 %v4677
    %7268 = vmatprep.subr.bf16.mxu0 %v4674
    %7269 = vmatpush2.bf16.msra.mxu0 %v4673
    %7270 = vmatprep.subr.bf16.mxu0 %v4670
    %7271 = vmatpush2.bf16.msra.mxu0 %v4669
    %7272 = vmatprep.subr.bf16.mxu0 %v4666
    %7273 = vmatpush2.bf16.msra.mxu0 %v4665
    %7274 = vmatprep.subr.bf16.mxu0 %v4662
    %7275 = vmatpush2.bf16.msra.mxu0 %v4661
    %7276 = vmatprep.subr.bf16.mxu0 %v4658
    %7277 = vmatpush2.bf16.msra.mxu0 %v4657
    %7278 = vmatprep.subr.bf16.mxu0 %v4654
    %7279 = vmatpush2.bf16.msra.mxu0 %v4653
    %7280 = vmatprep.subr.bf16.mxu0 %v4650
    %7281 = vmatpush2.bf16.msra.mxu0 %v4649
    %7282 = vmatprep.mubr.bf16.mxu0 %v1294
    %7283 = vmatmul.mubr.bf16.gmra.mxu0 %v1293
    %v7284 = vpop.f32.mrf.mxu0
    %v7285 = vadd.f32 %v7244, %v7284
    %v7286 = vpop.f32.mrf.mxu0
    %v7287 = vadd.f32 %v7246, %v7286
    %v7288 = vpop.f32.mrf.mxu0
    %v7289 = vpop.f32.mrf.mxu0
    %7290 = vdwg.mxu0
    %7291 = vmatprep.subr.bf16.mxu0 %v4710
    %7292 = vmatpush1.bf16.msra.mxu0 %v4709
    %7293 = vmatprep.subr.bf16.mxu0 %v4706
    %7294 = vmatpush1.bf16.msra.mxu0 %v4705
    %7295 = vmatprep.subr.bf16.mxu0 %v4702
    %7296 = vmatpush1.bf16.msra.mxu0 %v4701
    %7297 = vmatprep.subr.bf16.mxu0 %v4698
    %7298 = vmatpush1.bf16.msra.mxu0 %v4697
    %7299 = vmatprep.subr.bf16.mxu0 %v4694
    %7300 = vmatpush1.bf16.msra.mxu0 %v4693
    %7301 = vmatprep.subr.bf16.mxu0 %v4690
    %7302 = vmatpush1.bf16.msra.mxu0 %v4689
    %7303 = vmatprep.subr.bf16.mxu0 %v4686
    %7304 = vmatpush1.bf16.msra.mxu0 %v4685
    %7305 = vmatprep.subr.bf16.mxu0 %v4682
    %7306 = vmatpush1.bf16.msra.mxu0 %v4681
    %7307 = vmatprep.subr.bf16.mxu0 %v4742
    %7308 = vmatpush2.bf16.msra.mxu0 %v4741
    %7309 = vmatprep.subr.bf16.mxu0 %v4738
    %7310 = vmatpush2.bf16.msra.mxu0 %v4737
    %7311 = vmatprep.subr.bf16.mxu0 %v4734
    %7312 = vmatpush2.bf16.msra.mxu0 %v4733
    %7313 = vmatprep.subr.bf16.mxu0 %v4730
    %7314 = vmatpush2.bf16.msra.mxu0 %v4729
    %7315 = vmatprep.subr.bf16.mxu0 %v4726
    %7316 = vmatpush2.bf16.msra.mxu0 %v4725
    %7317 = vmatprep.subr.bf16.mxu0 %v4722
    %7318 = vmatpush2.bf16.msra.mxu0 %v4721
    %7319 = vmatprep.subr.bf16.mxu0 %v4718
    %7320 = vmatpush2.bf16.msra.mxu0 %v4717
    %7321 = vmatprep.subr.bf16.mxu0 %v4714
    %7322 = vmatpush2.bf16.msra.mxu0 %v4713
    %7323 = vmatprep.mubr.bf16.mxu0 %v1296
    %7324 = vmatmul.mubr.bf16.gmra.mxu0 %v1295
    %v7325 = vpop.f32.mrf.mxu0
    %v7326 = vadd.f32 %v7285, %v7325
    %v7327 = vpop.f32.mrf.mxu0
    %v7328 = vadd.f32 %v7287, %v7327
    %v7329 = vpop.f32.mrf.mxu0
    %v7330 = vpop.f32.mrf.mxu0
    %7331 = vdwg.mxu0
    %7332 = vmatprep.subr.bf16.mxu0 %v4774
    %7333 = vmatpush1.bf16.msra.mxu0 %v4773
    %7334 = vmatprep.subr.bf16.mxu0 %v4770
    %7335 = vmatpush1.bf16.msra.mxu0 %v4769
    %7336 = vmatprep.subr.bf16.mxu0 %v4766
    %7337 = vmatpush1.bf16.msra.mxu0 %v4765
    %7338 = vmatprep.subr.bf16.mxu0 %v4762
    %7339 = vmatpush1.bf16.msra.mxu0 %v4761
    %7340 = vmatprep.subr.bf16.mxu0 %v4758
    %7341 = vmatpush1.bf16.msra.mxu0 %v4757
    %7342 = vmatprep.subr.bf16.mxu0 %v4754
    %7343 = vmatpush1.bf16.msra.mxu0 %v4753
    %7344 = vmatprep.subr.bf16.mxu0 %v4750
    %7345 = vmatpush1.bf16.msra.mxu0 %v4749
    %7346 = vmatprep.subr.bf16.mxu0 %v4746
    %7347 = vmatpush1.bf16.msra.mxu0 %v4745
    %7348 = vmatprep.subr.bf16.mxu0 %v4806
    %7349 = vmatpush2.bf16.msra.mxu0 %v4805
    %7350 = vmatprep.subr.bf16.mxu0 %v4802
    %7351 = vmatpush2.bf16.msra.mxu0 %v4801
    %7352 = vmatprep.subr.bf16.mxu0 %v4798
    %7353 = vmatpush2.bf16.msra.mxu0 %v4797
    %7354 = vmatprep.subr.bf16.mxu0 %v4794
    %7355 = vmatpush2.bf16.msra.mxu0 %v4793
    %7356 = vmatprep.subr.bf16.mxu0 %v4790
    %7357 = vmatpush2.bf16.msra.mxu0 %v4789
    %7358 = vmatprep.subr.bf16.mxu0 %v4786
    %7359 = vmatpush2.bf16.msra.mxu0 %v4785
    %7360 = vmatprep.subr.bf16.mxu0 %v4782
    %7361 = vmatpush2.bf16.msra.mxu0 %v4781
    %7362 = vmatprep.subr.bf16.mxu0 %v4778
    %7363 = vmatpush2.bf16.msra.mxu0 %v4777
    %7364 = vmatprep.mubr.bf16.mxu0 %v1298
    %7365 = vmatmul.mubr.bf16.gmra.mxu0 %v1297
    %v7366 = vpop.f32.mrf.mxu0
    %v7367 = vadd.f32 %v7326, %v7366
    %v7368 = vpop.f32.mrf.mxu0
    %v7369 = vadd.f32 %v7328, %v7368
    %v7370 = vpop.f32.mrf.mxu0
    %v7371 = vpop.f32.mrf.mxu0
    %7372 = vdwg.mxu0
    %7373 = vmatprep.subr.bf16.mxu0 %v4838
    %7374 = vmatpush1.bf16.msra.mxu0 %v4837
    %7375 = vmatprep.subr.bf16.mxu0 %v4834
    %7376 = vmatpush1.bf16.msra.mxu0 %v4833
    %7377 = vmatprep.subr.bf16.mxu0 %v4830
    %7378 = vmatpush1.bf16.msra.mxu0 %v4829
    %7379 = vmatprep.subr.bf16.mxu0 %v4826
    %7380 = vmatpush1.bf16.msra.mxu0 %v4825
    %7381 = vmatprep.subr.bf16.mxu0 %v4822
    %7382 = vmatpush1.bf16.msra.mxu0 %v4821
    %7383 = vmatprep.subr.bf16.mxu0 %v4818
    %7384 = vmatpush1.bf16.msra.mxu0 %v4817
    %7385 = vmatprep.subr.bf16.mxu0 %v4814
    %7386 = vmatpush1.bf16.msra.mxu0 %v4813
    %7387 = vmatprep.subr.bf16.mxu0 %v4810
    %7388 = vmatpush1.bf16.msra.mxu0 %v4809
    %7389 = vmatprep.subr.bf16.mxu0 %v4870
    %7390 = vmatpush2.bf16.msra.mxu0 %v4869
    %7391 = vmatprep.subr.bf16.mxu0 %v4866
    %7392 = vmatpush2.bf16.msra.mxu0 %v4865
    %7393 = vmatprep.subr.bf16.mxu0 %v4862
    %7394 = vmatpush2.bf16.msra.mxu0 %v4861
    %7395 = vmatprep.subr.bf16.mxu0 %v4858
    %7396 = vmatpush2.bf16.msra.mxu0 %v4857
    %7397 = vmatprep.subr.bf16.mxu0 %v4854
    %7398 = vmatpush2.bf16.msra.mxu0 %v4853
    %7399 = vmatprep.subr.bf16.mxu0 %v4850
    %7400 = vmatpush2.bf16.msra.mxu0 %v4849
    %7401 = vmatprep.subr.bf16.mxu0 %v4846
    %7402 = vmatpush2.bf16.msra.mxu0 %v4845
    %7403 = vmatprep.subr.bf16.mxu0 %v4842
    %7404 = vmatpush2.bf16.msra.mxu0 %v4841
    %7405 = vmatprep.mubr.bf16.mxu0 %v1300
    %7406 = vmatmul.mubr.bf16.gmra.mxu0 %v1299
    %v7407 = vpop.f32.mrf.mxu0
    %v7408 = vadd.f32 %v7367, %v7407
    %v7409 = vpop.f32.mrf.mxu0
    %v7410 = vadd.f32 %v7369, %v7409
    %v7411 = vpop.f32.mrf.mxu0
    %v7412 = vpop.f32.mrf.mxu0
    %7413 = vdwg.mxu0
    %7414 = vmatprep.subr.bf16.mxu0 %v4902
    %7415 = vmatpush1.bf16.msra.mxu0 %v4901
    %7416 = vmatprep.subr.bf16.mxu0 %v4898
    %7417 = vmatpush1.bf16.msra.mxu0 %v4897
    %7418 = vmatprep.subr.bf16.mxu0 %v4894
    %7419 = vmatpush1.bf16.msra.mxu0 %v4893
    %7420 = vmatprep.subr.bf16.mxu0 %v4890
    %7421 = vmatpush1.bf16.msra.mxu0 %v4889
    %7422 = vmatprep.subr.bf16.mxu0 %v4886
    %7423 = vmatpush1.bf16.msra.mxu0 %v4885
    %7424 = vmatprep.subr.bf16.mxu0 %v4882
    %7425 = vmatpush1.bf16.msra.mxu0 %v4881
    %7426 = vmatprep.subr.bf16.mxu0 %v4878
    %7427 = vmatpush1.bf16.msra.mxu0 %v4877
    %7428 = vmatprep.subr.bf16.mxu0 %v4874
    %7429 = vmatpush1.bf16.msra.mxu0 %v4873
    %7430 = vmatprep.subr.bf16.mxu0 %v4934
    %7431 = vmatpush2.bf16.msra.mxu0 %v4933
    %7432 = vmatprep.subr.bf16.mxu0 %v4930
    %7433 = vmatpush2.bf16.msra.mxu0 %v4929
    %7434 = vmatprep.subr.bf16.mxu0 %v4926
    %7435 = vmatpush2.bf16.msra.mxu0 %v4925
    %7436 = vmatprep.subr.bf16.mxu0 %v4922
    %7437 = vmatpush2.bf16.msra.mxu0 %v4921
    %7438 = vmatprep.subr.bf16.mxu0 %v4918
    %7439 = vmatpush2.bf16.msra.mxu0 %v4917
    %7440 = vmatprep.subr.bf16.mxu0 %v4914
    %7441 = vmatpush2.bf16.msra.mxu0 %v4913
    %7442 = vmatprep.subr.bf16.mxu0 %v4910
    %7443 = vmatpush2.bf16.msra.mxu0 %v4909
    %7444 = vmatprep.subr.bf16.mxu0 %v4906
    %7445 = vmatpush2.bf16.msra.mxu0 %v4905
    %7446 = vmatprep.mubr.bf16.mxu0 %v1302
    %7447 = vmatmul.mubr.bf16.gmra.mxu0 %v1301
    %v7448 = vpop.f32.mrf.mxu0
    %v7449 = vadd.f32 %v7408, %v7448
    %v7450 = vpop.f32.mrf.mxu0
    %v7451 = vadd.f32 %v7410, %v7450
    %v7452 = vpop.f32.mrf.mxu0
    %v7453 = vpop.f32.mrf.mxu0
    %7454 = vdwg.mxu0
    %7455 = vmatprep.subr.bf16.mxu0 %v4966
    %7456 = vmatpush1.bf16.msra.mxu0 %v4965
    %7457 = vmatprep.subr.bf16.mxu0 %v4962
    %7458 = vmatpush1.bf16.msra.mxu0 %v4961
    %7459 = vmatprep.subr.bf16.mxu0 %v4958
    %7460 = vmatpush1.bf16.msra.mxu0 %v4957
    %7461 = vmatprep.subr.bf16.mxu0 %v4954
    %7462 = vmatpush1.bf16.msra.mxu0 %v4953
    %7463 = vmatprep.subr.bf16.mxu0 %v4950
    %7464 = vmatpush1.bf16.msra.mxu0 %v4949
    %7465 = vmatprep.subr.bf16.mxu0 %v4946
    %7466 = vmatpush1.bf16.msra.mxu0 %v4945
    %7467 = vmatprep.subr.bf16.mxu0 %v4942
    %7468 = vmatpush1.bf16.msra.mxu0 %v4941
    %7469 = vmatprep.subr.bf16.mxu0 %v4938
    %7470 = vmatpush1.bf16.msra.mxu0 %v4937
    %7471 = vmatprep.subr.bf16.mxu0 %v4998
    %7472 = vmatpush2.bf16.msra.mxu0 %v4997
    %7473 = vmatprep.subr.bf16.mxu0 %v4994
    %7474 = vmatpush2.bf16.msra.mxu0 %v4993
    %7475 = vmatprep.subr.bf16.mxu0 %v4990
    %7476 = vmatpush2.bf16.msra.mxu0 %v4989
    %7477 = vmatprep.subr.bf16.mxu0 %v4986
    %7478 = vmatpush2.bf16.msra.mxu0 %v4985
    %7479 = vmatprep.subr.bf16.mxu0 %v4982
    %7480 = vmatpush2.bf16.msra.mxu0 %v4981
    %7481 = vmatprep.subr.bf16.mxu0 %v4978
    %7482 = vmatpush2.bf16.msra.mxu0 %v4977
    %7483 = vmatprep.subr.bf16.mxu0 %v4974
    %7484 = vmatpush2.bf16.msra.mxu0 %v4973
    %7485 = vmatprep.subr.bf16.mxu0 %v4970
    %7486 = vmatpush2.bf16.msra.mxu0 %v4969
    %7487 = vmatprep.mubr.bf16.mxu0 %v1304
    %7488 = vmatmul.mubr.bf16.gmra.mxu0 %v1303
    %v7489 = vpop.f32.mrf.mxu0
    %v7490 = vadd.f32 %v7449, %v7489
    %v7491 = vpop.f32.mrf.mxu0
    %v7492 = vadd.f32 %v7451, %v7491
    %v7493 = vpop.f32.mrf.mxu0
    %v7494 = vpop.f32.mrf.mxu0
    %7495 = vdwg.mxu0
    %7496 = vmatprep.subr.bf16.mxu0 %v5030
    %7497 = vmatpush1.bf16.msra.mxu0 %v5029
    %7498 = vmatprep.subr.bf16.mxu0 %v5026
    %7499 = vmatpush1.bf16.msra.mxu0 %v5025
    %7500 = vmatprep.subr.bf16.mxu0 %v5022
    %7501 = vmatpush1.bf16.msra.mxu0 %v5021
    %7502 = vmatprep.subr.bf16.mxu0 %v5018
    %7503 = vmatpush1.bf16.msra.mxu0 %v5017
    %7504 = vmatprep.subr.bf16.mxu0 %v5014
    %7505 = vmatpush1.bf16.msra.mxu0 %v5013
    %7506 = vmatprep.subr.bf16.mxu0 %v5010
    %7507 = vmatpush1.bf16.msra.mxu0 %v5009
    %7508 = vmatprep.subr.bf16.mxu0 %v5006
    %7509 = vmatpush1.bf16.msra.mxu0 %v5005
    %7510 = vmatprep.subr.bf16.mxu0 %v5002
    %7511 = vmatpush1.bf16.msra.mxu0 %v5001
    %7512 = vmatprep.subr.bf16.mxu0 %v5062
    %7513 = vmatpush2.bf16.msra.mxu0 %v5061
    %7514 = vmatprep.subr.bf16.mxu0 %v5058
    %7515 = vmatpush2.bf16.msra.mxu0 %v5057
    %7516 = vmatprep.subr.bf16.mxu0 %v5054
    %7517 = vmatpush2.bf16.msra.mxu0 %v5053
    %7518 = vmatprep.subr.bf16.mxu0 %v5050
    %7519 = vmatpush2.bf16.msra.mxu0 %v5049
    %7520 = vmatprep.subr.bf16.mxu0 %v5046
    %7521 = vmatpush2.bf16.msra.mxu0 %v5045
    %7522 = vmatprep.subr.bf16.mxu0 %v5042
    %7523 = vmatpush2.bf16.msra.mxu0 %v5041
    %7524 = vmatprep.subr.bf16.mxu0 %v5038
    %7525 = vmatpush2.bf16.msra.mxu0 %v5037
    %7526 = vmatprep.subr.bf16.mxu0 %v5034
    %7527 = vmatpush2.bf16.msra.mxu0 %v5033
    %7528 = vmatprep.mubr.bf16.mxu0 %v1306
    %7529 = vmatmul.mubr.bf16.gmra.mxu0 %v1305
    %v7530 = vpop.f32.mrf.mxu0
    %v7531 = vadd.f32 %v7490, %v7530
    %v7532 = vpop.f32.mrf.mxu0
    %v7533 = vadd.f32 %v7492, %v7532
    %v7534 = vpop.f32.mrf.mxu0
    %v7535 = vpop.f32.mrf.mxu0
    %7536 = vdwg.mxu0
    %7537 = vmatprep.subr.bf16.mxu0 %v5094
    %7538 = vmatpush1.bf16.msra.mxu0 %v5093
    %7539 = vmatprep.subr.bf16.mxu0 %v5090
    %7540 = vmatpush1.bf16.msra.mxu0 %v5089
    %7541 = vmatprep.subr.bf16.mxu0 %v5086
    %7542 = vmatpush1.bf16.msra.mxu0 %v5085
    %7543 = vmatprep.subr.bf16.mxu0 %v5082
    %7544 = vmatpush1.bf16.msra.mxu0 %v5081
    %7545 = vmatprep.subr.bf16.mxu0 %v5078
    %7546 = vmatpush1.bf16.msra.mxu0 %v5077
    %7547 = vmatprep.subr.bf16.mxu0 %v5074
    %7548 = vmatpush1.bf16.msra.mxu0 %v5073
    %7549 = vmatprep.subr.bf16.mxu0 %v5070
    %7550 = vmatpush1.bf16.msra.mxu0 %v5069
    %7551 = vmatprep.subr.bf16.mxu0 %v5066
    %7552 = vmatpush1.bf16.msra.mxu0 %v5065
    %7553 = vmatprep.subr.bf16.mxu0 %v5126
    %7554 = vmatpush2.bf16.msra.mxu0 %v5125
    %7555 = vmatprep.subr.bf16.mxu0 %v5122
    %7556 = vmatpush2.bf16.msra.mxu0 %v5121
    %7557 = vmatprep.subr.bf16.mxu0 %v5118
    %7558 = vmatpush2.bf16.msra.mxu0 %v5117
    %7559 = vmatprep.subr.bf16.mxu0 %v5114
    %7560 = vmatpush2.bf16.msra.mxu0 %v5113
    %7561 = vmatprep.subr.bf16.mxu0 %v5110
    %7562 = vmatpush2.bf16.msra.mxu0 %v5109
    %7563 = vmatprep.subr.bf16.mxu0 %v5106
    %7564 = vmatpush2.bf16.msra.mxu0 %v5105
    %7565 = vmatprep.subr.bf16.mxu0 %v5102
    %7566 = vmatpush2.bf16.msra.mxu0 %v5101
    %7567 = vmatprep.subr.bf16.mxu0 %v5098
    %7568 = vmatpush2.bf16.msra.mxu0 %v5097
    %7569 = vmatprep.mubr.bf16.mxu0 %v1308
    %7570 = vmatmul.mubr.bf16.gmra.mxu0 %v1307
    %v7571 = vpop.f32.mrf.mxu0
    %v7572 = vadd.f32 %v7531, %v7571
    %v7573 = vpop.f32.mrf.mxu0
    %v7574 = vadd.f32 %v7533, %v7573
    %v7575 = vpop.f32.mrf.mxu0
    %v7576 = vpop.f32.mrf.mxu0
    %7577 = vdwg.mxu0
    %7578 = vmatprep.subr.bf16.mxu0 %v5158
    %7579 = vmatpush1.bf16.msra.mxu0 %v5157
    %7580 = vmatprep.subr.bf16.mxu0 %v5154
    %7581 = vmatpush1.bf16.msra.mxu0 %v5153
    %7582 = vmatprep.subr.bf16.mxu0 %v5150
    %7583 = vmatpush1.bf16.msra.mxu0 %v5149
    %7584 = vmatprep.subr.bf16.mxu0 %v5146
    %7585 = vmatpush1.bf16.msra.mxu0 %v5145
    %7586 = vmatprep.subr.bf16.mxu0 %v5142
    %7587 = vmatpush1.bf16.msra.mxu0 %v5141
    %7588 = vmatprep.subr.bf16.mxu0 %v5138
    %7589 = vmatpush1.bf16.msra.mxu0 %v5137
    %7590 = vmatprep.subr.bf16.mxu0 %v5134
    %7591 = vmatpush1.bf16.msra.mxu0 %v5133
    %7592 = vmatprep.subr.bf16.mxu0 %v5130
    %7593 = vmatpush1.bf16.msra.mxu0 %v5129
    %7594 = vmatprep.subr.bf16.mxu0 %v5190
    %7595 = vmatpush2.bf16.msra.mxu0 %v5189
    %7596 = vmatprep.subr.bf16.mxu0 %v5186
    %7597 = vmatpush2.bf16.msra.mxu0 %v5185
    %7598 = vmatprep.subr.bf16.mxu0 %v5182
    %7599 = vmatpush2.bf16.msra.mxu0 %v5181
    %7600 = vmatprep.subr.bf16.mxu0 %v5178
    %7601 = vmatpush2.bf16.msra.mxu0 %v5177
    %7602 = vmatprep.subr.bf16.mxu0 %v5174
    %7603 = vmatpush2.bf16.msra.mxu0 %v5173
    %7604 = vmatprep.subr.bf16.mxu0 %v5170
    %7605 = vmatpush2.bf16.msra.mxu0 %v5169
    %7606 = vmatprep.subr.bf16.mxu0 %v5166
    %7607 = vmatpush2.bf16.msra.mxu0 %v5165
    %7608 = vmatprep.subr.bf16.mxu0 %v5162
    %7609 = vmatpush2.bf16.msra.mxu0 %v5161
    %7610 = vmatprep.mubr.bf16.mxu0 %v1310
    %7611 = vmatmul.mubr.bf16.gmra.mxu0 %v1309
    %v7612 = vpop.f32.mrf.mxu0
    %v7613 = vadd.f32 %v7572, %v7612
    %v7614 = vpop.f32.mrf.mxu0
    %v7615 = vadd.f32 %v7574, %v7614
    %v7616 = vpop.f32.mrf.mxu0
    %v7617 = vpop.f32.mrf.mxu0
    %7618 = vdwg.mxu0
    %7619 = vmatprep.subr.bf16.mxu0 %v5222
    %7620 = vmatpush1.bf16.msra.mxu0 %v5221
    %7621 = vmatprep.subr.bf16.mxu0 %v5218
    %7622 = vmatpush1.bf16.msra.mxu0 %v5217
    %7623 = vmatprep.subr.bf16.mxu0 %v5214
    %7624 = vmatpush1.bf16.msra.mxu0 %v5213
    %7625 = vmatprep.subr.bf16.mxu0 %v5210
    %7626 = vmatpush1.bf16.msra.mxu0 %v5209
    %7627 = vmatprep.subr.bf16.mxu0 %v5206
    %7628 = vmatpush1.bf16.msra.mxu0 %v5205
    %7629 = vmatprep.subr.bf16.mxu0 %v5202
    %7630 = vmatpush1.bf16.msra.mxu0 %v5201
    %7631 = vmatprep.subr.bf16.mxu0 %v5198
    %7632 = vmatpush1.bf16.msra.mxu0 %v5197
    %7633 = vmatprep.subr.bf16.mxu0 %v5194
    %7634 = vmatpush1.bf16.msra.mxu0 %v5193
    %7635 = vmatprep.subr.bf16.mxu0 %v5254
    %7636 = vmatpush2.bf16.msra.mxu0 %v5253
    %7637 = vmatprep.subr.bf16.mxu0 %v5250
    %7638 = vmatpush2.bf16.msra.mxu0 %v5249
    %7639 = vmatprep.subr.bf16.mxu0 %v5246
    %7640 = vmatpush2.bf16.msra.mxu0 %v5245
    %7641 = vmatprep.subr.bf16.mxu0 %v5242
    %7642 = vmatpush2.bf16.msra.mxu0 %v5241
    %7643 = vmatprep.subr.bf16.mxu0 %v5238
    %7644 = vmatpush2.bf16.msra.mxu0 %v5237
    %7645 = vmatprep.subr.bf16.mxu0 %v5234
    %7646 = vmatpush2.bf16.msra.mxu0 %v5233
    %7647 = vmatprep.subr.bf16.mxu0 %v5230
    %7648 = vmatpush2.bf16.msra.mxu0 %v5229
    %7649 = vmatprep.subr.bf16.mxu0 %v5226
    %7650 = vmatpush2.bf16.msra.mxu0 %v5225
    %7651 = vmatprep.mubr.bf16.mxu0 %v1312
    %7652 = vmatmul.mubr.bf16.gmra.mxu0 %v1311
    %v7653 = vpop.f32.mrf.mxu0
    %v7654 = vadd.f32 %v7613, %v7653
    %v7655 = vpop.f32.mrf.mxu0
    %v7656 = vadd.f32 %v7615, %v7655
    %v7657 = vpop.f32.mrf.mxu0
    %v7658 = vpop.f32.mrf.mxu0
    %7659 = vdwg.mxu0
    %7660 = vmatprep.subr.bf16.mxu0 %v5286
    %7661 = vmatpush1.bf16.msra.mxu0 %v5285
    %7662 = vmatprep.subr.bf16.mxu0 %v5282
    %7663 = vmatpush1.bf16.msra.mxu0 %v5281
    %7664 = vmatprep.subr.bf16.mxu0 %v5278
    %7665 = vmatpush1.bf16.msra.mxu0 %v5277
    %7666 = vmatprep.subr.bf16.mxu0 %v5274
    %7667 = vmatpush1.bf16.msra.mxu0 %v5273
    %7668 = vmatprep.subr.bf16.mxu0 %v5270
    %7669 = vmatpush1.bf16.msra.mxu0 %v5269
    %7670 = vmatprep.subr.bf16.mxu0 %v5266
    %7671 = vmatpush1.bf16.msra.mxu0 %v5265
    %7672 = vmatprep.subr.bf16.mxu0 %v5262
    %7673 = vmatpush1.bf16.msra.mxu0 %v5261
    %7674 = vmatprep.subr.bf16.mxu0 %v5258
    %7675 = vmatpush1.bf16.msra.mxu0 %v5257
    %7676 = vmatprep.subr.bf16.mxu0 %v5318
    %7677 = vmatpush2.bf16.msra.mxu0 %v5317
    %7678 = vmatprep.subr.bf16.mxu0 %v5314
    %7679 = vmatpush2.bf16.msra.mxu0 %v5313
    %7680 = vmatprep.subr.bf16.mxu0 %v5310
    %7681 = vmatpush2.bf16.msra.mxu0 %v5309
    %7682 = vmatprep.subr.bf16.mxu0 %v5306
    %7683 = vmatpush2.bf16.msra.mxu0 %v5305
    %7684 = vmatprep.subr.bf16.mxu0 %v5302
    %7685 = vmatpush2.bf16.msra.mxu0 %v5301
    %7686 = vmatprep.subr.bf16.mxu0 %v5298
    %7687 = vmatpush2.bf16.msra.mxu0 %v5297
    %7688 = vmatprep.subr.bf16.mxu0 %v5294
    %7689 = vmatpush2.bf16.msra.mxu0 %v5293
    %7690 = vmatprep.subr.bf16.mxu0 %v5290
    %7691 = vmatpush2.bf16.msra.mxu0 %v5289
    %7692 = vmatprep.mubr.bf16.mxu0 %v1314
    %7693 = vmatmul.mubr.bf16.gmra.mxu0 %v1313
    %v7694 = vpop.f32.mrf.mxu0
    %v7695 = vadd.f32 %v7654, %v7694
    %v7696 = vpop.f32.mrf.mxu0
    %v7697 = vadd.f32 %v7656, %v7696
    %v7698 = vpop.f32.mrf.mxu0
    %v7699 = vpop.f32.mrf.mxu0
    %7700 = vdwg.mxu0
    %7701 = vmatprep.subr.bf16.mxu0 %v5350
    %7702 = vmatpush1.bf16.msra.mxu0 %v5349
    %7703 = vmatprep.subr.bf16.mxu0 %v5346
    %7704 = vmatpush1.bf16.msra.mxu0 %v5345
    %7705 = vmatprep.subr.bf16.mxu0 %v5342
    %7706 = vmatpush1.bf16.msra.mxu0 %v5341
    %7707 = vmatprep.subr.bf16.mxu0 %v5338
    %7708 = vmatpush1.bf16.msra.mxu0 %v5337
    %7709 = vmatprep.subr.bf16.mxu0 %v5334
    %7710 = vmatpush1.bf16.msra.mxu0 %v5333
    %7711 = vmatprep.subr.bf16.mxu0 %v5330
    %7712 = vmatpush1.bf16.msra.mxu0 %v5329
    %7713 = vmatprep.subr.bf16.mxu0 %v5326
    %7714 = vmatpush1.bf16.msra.mxu0 %v5325
    %7715 = vmatprep.subr.bf16.mxu0 %v5322
    %7716 = vmatpush1.bf16.msra.mxu0 %v5321
    %7717 = vmatprep.subr.bf16.mxu0 %v5382
    %7718 = vmatpush2.bf16.msra.mxu0 %v5381
    %7719 = vmatprep.subr.bf16.mxu0 %v5378
    %7720 = vmatpush2.bf16.msra.mxu0 %v5377
    %7721 = vmatprep.subr.bf16.mxu0 %v5374
    %7722 = vmatpush2.bf16.msra.mxu0 %v5373
    %7723 = vmatprep.subr.bf16.mxu0 %v5370
    %7724 = vmatpush2.bf16.msra.mxu0 %v5369
    %7725 = vmatprep.subr.bf16.mxu0 %v5366
    %7726 = vmatpush2.bf16.msra.mxu0 %v5365
    %7727 = vmatprep.subr.bf16.mxu0 %v5362
    %7728 = vmatpush2.bf16.msra.mxu0 %v5361
    %7729 = vmatprep.subr.bf16.mxu0 %v5358
    %7730 = vmatpush2.bf16.msra.mxu0 %v5357
    %7731 = vmatprep.subr.bf16.mxu0 %v5354
    %7732 = vmatpush2.bf16.msra.mxu0 %v5353
    %7733 = vmatprep.mubr.bf16.mxu0 %v1316
    %7734 = vmatmul.mubr.bf16.gmra.mxu0 %v1315
    %v7735 = vpop.f32.mrf.mxu0
    %v7736 = vadd.f32 %v7695, %v7735
    %v7737 = vpop.f32.mrf.mxu0
    %v7738 = vadd.f32 %v7697, %v7737
    %v7739 = vpop.f32.mrf.mxu0
    %v7740 = vpop.f32.mrf.mxu0
    %7741 = vdwg.mxu0
    %7742 = vmatprep.subr.bf16.mxu0 %v5414
    %7743 = vmatpush1.bf16.msra.mxu0 %v5413
    %7744 = vmatprep.subr.bf16.mxu0 %v5410
    %7745 = vmatpush1.bf16.msra.mxu0 %v5409
    %7746 = vmatprep.subr.bf16.mxu0 %v5406
    %7747 = vmatpush1.bf16.msra.mxu0 %v5405
    %7748 = vmatprep.subr.bf16.mxu0 %v5402
    %7749 = vmatpush1.bf16.msra.mxu0 %v5401
    %7750 = vmatprep.subr.bf16.mxu0 %v5398
    %7751 = vmatpush1.bf16.msra.mxu0 %v5397
    %7752 = vmatprep.subr.bf16.mxu0 %v5394
    %7753 = vmatpush1.bf16.msra.mxu0 %v5393
    %7754 = vmatprep.subr.bf16.mxu0 %v5390
    %7755 = vmatpush1.bf16.msra.mxu0 %v5389
    %7756 = vmatprep.subr.bf16.mxu0 %v5386
    %7757 = vmatpush1.bf16.msra.mxu0 %v5385
    %7758 = vmatprep.subr.bf16.mxu0 %v5446
    %7759 = vmatpush2.bf16.msra.mxu0 %v5445
    %7760 = vmatprep.subr.bf16.mxu0 %v5442
    %7761 = vmatpush2.bf16.msra.mxu0 %v5441
    %7762 = vmatprep.subr.bf16.mxu0 %v5438
    %7763 = vmatpush2.bf16.msra.mxu0 %v5437
    %7764 = vmatprep.subr.bf16.mxu0 %v5434
    %7765 = vmatpush2.bf16.msra.mxu0 %v5433
    %7766 = vmatprep.subr.bf16.mxu0 %v5430
    %7767 = vmatpush2.bf16.msra.mxu0 %v5429
    %7768 = vmatprep.subr.bf16.mxu0 %v5426
    %7769 = vmatpush2.bf16.msra.mxu0 %v5425
    %7770 = vmatprep.subr.bf16.mxu0 %v5422
    %7771 = vmatpush2.bf16.msra.mxu0 %v5421
    %7772 = vmatprep.subr.bf16.mxu0 %v5418
    %7773 = vmatpush2.bf16.msra.mxu0 %v5417
    %7774 = vmatprep.mubr.bf16.mxu0 %v1318
    %7775 = vmatmul.mubr.bf16.gmra.mxu0 %v1317
    %v7776 = vpop.f32.mrf.mxu0
    %v7777 = vadd.f32 %v7736, %v7776
    %v7778 = vpop.f32.mrf.mxu0
    %v7779 = vadd.f32 %v7738, %v7778
    %v7780 = vpop.f32.mrf.mxu0
    %v7781 = vpop.f32.mrf.mxu0
    %7782 = vdwg.mxu0
    %v7783 = vmax.f32 %v7121, 0.0
    %v7784 = vmax.f32 %v7123, 0.0
    %v7785 = vmax.f32 %v7777, 0.0
    %v7786 = vmax.f32 %v7779, 0.0
    %v7787 = vpack.c.bf16 %v7783, %v7783
    %v7788 = vpack.c.bf16 %v7784, %v7784
    %v7789 = vpack.c.bf16 %v7785, %v7785
    %v7790 = vpack.c.bf16 %v7786, %v7786
    %v7791 = vld [vmem:[#allocation8] sm:$0xff]
    %v7792 = vld [vmem:[#allocation8 + $0x8] sm:$0xff]
    %v7793 = vld [vmem:[#allocation8 + $0x10] sm:$0xff]
    %v7794 = vld [vmem:[#allocation8 + $0x18] sm:$0xff]
    %v7795 = vld [vmem:[#allocation8 + $0x20] sm:$0xff]
    %v7796 = vld [vmem:[#allocation8 + $0x28] sm:$0xff]
    %v7797 = vld [vmem:[#allocation8 + $0x30] sm:$0xff]
    %v7798 = vld [vmem:[#allocation8 + $0x38] sm:$0xff]
    %v7799 = vld [vmem:[#allocation8 + $0x40] sm:$0xff]
    %v7800 = vld [vmem:[#allocation8 + $0x48] sm:$0xff]
    %v7801 = vld [vmem:[#allocation8 + $0x50] sm:$0xff]
    %v7802 = vld [vmem:[#allocation8 + $0x58] sm:$0xff]
    %v7803 = vld [vmem:[#allocation8 + $0x60] sm:$0xff]
    %v7804 = vld [vmem:[#allocation8 + $0x68] sm:$0xff]
    %v7805 = vld [vmem:[#allocation8 + $0x70] sm:$0xff]
    %v7806 = vld [vmem:[#allocation8 + $0x78] sm:$0xff]
    %v7807 = vld [vmem:[#allocation8 + $0x80] sm:$0xff]
    %v7808 = vld [vmem:[#allocation8 + $0x88] sm:$0xff]
    %v7809 = vld [vmem:[#allocation8 + $0x90] sm:$0xff]
    %v7810 = vld [vmem:[#allocation8 + $0x98] sm:$0xff]
    %v7811 = vld [vmem:[#allocation8 + $0xa0] sm:$0xff]
    %v7812 = vld [vmem:[#allocation8 + $0xa8] sm:$0xff]
    %v7813 = vld [vmem:[#allocation8 + $0xb0] sm:$0xff]
    %v7814 = vld [vmem:[#allocation8 + $0xb8] sm:$0xff]
    %v7815 = vld [vmem:[#allocation8 + $0xc0] sm:$0xff]
    %v7816 = vld [vmem:[#allocation8 + $0xc8] sm:$0xff]
    %v7817 = vld [vmem:[#allocation8 + $0xd0] sm:$0xff]
    %v7818 = vld [vmem:[#allocation8 + $0xd8] sm:$0xff]
    %v7819 = vld [vmem:[#allocation8 + $0xe0] sm:$0xff]
    %v7820 = vld [vmem:[#allocation8 + $0xe8] sm:$0xff]
    %v7821 = vld [vmem:[#allocation8 + $0xf0] sm:$0xff]
    %v7822 = vld [vmem:[#allocation8 + $0xf8] sm:$0xff]
    %v7823 = vld [vmem:[#allocation8 + $0x100] sm:$0xff]
    %v7824 = vld [vmem:[#allocation8 + $0x108] sm:$0xff]
    %v7825 = vld [vmem:[#allocation8 + $0x110] sm:$0xff]
    %v7826 = vld [vmem:[#allocation8 + $0x118] sm:$0xff]
    %v7827 = vld [vmem:[#allocation8 + $0x120] sm:$0xff]
    %v7828 = vld [vmem:[#allocation8 + $0x128] sm:$0xff]
    %v7829 = vld [vmem:[#allocation8 + $0x130] sm:$0xff]
    %v7830 = vld [vmem:[#allocation8 + $0x138] sm:$0xff]
    %v7831 = vld [vmem:[#allocation8 + $0x140] sm:$0xff]
    %v7832 = vld [vmem:[#allocation8 + $0x148] sm:$0xff]
    %v7833 = vld [vmem:[#allocation8 + $0x150] sm:$0xff]
    %v7834 = vld [vmem:[#allocation8 + $0x158] sm:$0xff]
    %v7835 = vld [vmem:[#allocation8 + $0x160] sm:$0xff]
    %v7836 = vld [vmem:[#allocation8 + $0x168] sm:$0xff]
    %v7837 = vld [vmem:[#allocation8 + $0x170] sm:$0xff]
    %v7838 = vld [vmem:[#allocation8 + $0x178] sm:$0xff]
    %v7839 = vld [vmem:[#allocation8 + $0x180] sm:$0xff]
    %v7840 = vld [vmem:[#allocation8 + $0x188] sm:$0xff]
    %v7841 = vld [vmem:[#allocation8 + $0x190] sm:$0xff]
    %v7842 = vld [vmem:[#allocation8 + $0x198] sm:$0xff]
    %v7843 = vld [vmem:[#allocation8 + $0x1a0] sm:$0xff]
    %v7844 = vld [vmem:[#allocation8 + $0x1a8] sm:$0xff]
    %v7845 = vld [vmem:[#allocation8 + $0x1b0] sm:$0xff]
    %v7846 = vld [vmem:[#allocation8 + $0x1b8] sm:$0xff]
    %v7847 = vld [vmem:[#allocation8 + $0x1c0] sm:$0xff]
    %v7848 = vld [vmem:[#allocation8 + $0x1c8] sm:$0xff]
    %v7849 = vld [vmem:[#allocation8 + $0x1d0] sm:$0xff]
    %v7850 = vld [vmem:[#allocation8 + $0x1d8] sm:$0xff]
    %v7851 = vld [vmem:[#allocation8 + $0x1e0] sm:$0xff]
    %v7852 = vld [vmem:[#allocation8 + $0x1e8] sm:$0xff]
    %v7853 = vld [vmem:[#allocation8 + $0x1f0] sm:$0xff]
    %v7854 = vld [vmem:[#allocation8 + $0x1f8] sm:$0xff]
    %v7855 = vld [vmem:[#allocation10] sm:$0x3]
    %v7857 = vlaneseq
    %v7858 = vshrl.u32 %v7857, 7
    %v7859 = vsub.s32 0, %v7858
    %v7860 = vrot.slane %v7855, %v7859
    %v7861 = vlaneseq
    %v7862 = vshrl.u32 %v7861, 7
    %v7863 = vsub.s32 1, %v7862
    %v7864 = vrot.slane %v7855, %v7863
    %v7931 = vunpack.c.l.b16 %v7791
    %v7932 = vunpack.c.h.b16 %v7791
    %v7933 = vunpack.c.l.b16 %v7792
    %v7934 = vunpack.c.h.b16 %v7792
    %v7935 = vunpack.c.l.b16 %v7793
    %v7936 = vunpack.c.h.b16 %v7793
    %v7937 = vunpack.c.l.b16 %v7794
    %v7938 = vunpack.c.h.b16 %v7794
    %v7939 = vunpack.c.l.b16 %v7795
    %v7940 = vunpack.c.h.b16 %v7795
    %v7941 = vunpack.c.l.b16 %v7796
    %v7942 = vunpack.c.h.b16 %v7796
    %v7943 = vunpack.c.l.b16 %v7797
    %v7944 = vunpack.c.h.b16 %v7797
    %v7945 = vunpack.c.l.b16 %v7798
    %v7946 = vunpack.c.h.b16 %v7798
    %v7947 = vunpack.c.l.b16 %v7799
    %v7948 = vunpack.c.h.b16 %v7799
    %v7949 = vunpack.c.l.b16 %v7800
    %v7950 = vunpack.c.h.b16 %v7800
    %v7951 = vunpack.c.l.b16 %v7801
    %v7952 = vunpack.c.h.b16 %v7801
    %v7953 = vunpack.c.l.b16 %v7802
    %v7954 = vunpack.c.h.b16 %v7802
    %v7955 = vunpack.c.l.b16 %v7803
    %v7956 = vunpack.c.h.b16 %v7803
    %v7957 = vunpack.c.l.b16 %v7804
    %v7958 = vunpack.c.h.b16 %v7804
    %v7959 = vunpack.c.l.b16 %v7805
    %v7960 = vunpack.c.h.b16 %v7805
    %v7961 = vunpack.c.l.b16 %v7806
    %v7962 = vunpack.c.h.b16 %v7806
    %v7963 = vunpack.c.l.b16 %v7807
    %v7964 = vunpack.c.h.b16 %v7807
    %v7965 = vunpack.c.l.b16 %v7808
    %v7966 = vunpack.c.h.b16 %v7808
    %v7967 = vunpack.c.l.b16 %v7809
    %v7968 = vunpack.c.h.b16 %v7809
    %v7969 = vunpack.c.l.b16 %v7810
    %v7970 = vunpack.c.h.b16 %v7810
    %v7971 = vunpack.c.l.b16 %v7811
    %v7972 = vunpack.c.h.b16 %v7811
    %v7973 = vunpack.c.l.b16 %v7812
    %v7974 = vunpack.c.h.b16 %v7812
    %v7975 = vunpack.c.l.b16 %v7813
    %v7976 = vunpack.c.h.b16 %v7813
    %v7977 = vunpack.c.l.b16 %v7814
    %v7978 = vunpack.c.h.b16 %v7814
    %v7979 = vunpack.c.l.b16 %v7815
    %v7980 = vunpack.c.h.b16 %v7815
    %v7981 = vunpack.c.l.b16 %v7816
    %v7982 = vunpack.c.h.b16 %v7816
    %v7983 = vunpack.c.l.b16 %v7817
    %v7984 = vunpack.c.h.b16 %v7817
    %v7985 = vunpack.c.l.b16 %v7818
    %v7986 = vunpack.c.h.b16 %v7818
    %v7987 = vunpack.c.l.b16 %v7819
    %v7988 = vunpack.c.h.b16 %v7819
    %v7989 = vunpack.c.l.b16 %v7820
    %v7990 = vunpack.c.h.b16 %v7820
    %v7991 = vunpack.c.l.b16 %v7821
    %v7992 = vunpack.c.h.b16 %v7821
    %v7993 = vunpack.c.l.b16 %v7822
    %v7994 = vunpack.c.h.b16 %v7822
    %v7995 = vunpack.c.l.b16 %v7823
    %v7996 = vunpack.c.h.b16 %v7823
    %v7997 = vunpack.c.l.b16 %v7824
    %v7998 = vunpack.c.h.b16 %v7824
    %v7999 = vunpack.c.l.b16 %v7825
    %v8000 = vunpack.c.h.b16 %v7825
    %v8001 = vunpack.c.l.b16 %v7826
    %v8002 = vunpack.c.h.b16 %v7826
    %v8003 = vunpack.c.l.b16 %v7827
    %v8004 = vunpack.c.h.b16 %v7827
    %v8005 = vunpack.c.l.b16 %v7828
    %v8006 = vunpack.c.h.b16 %v7828
    %v8007 = vunpack.c.l.b16 %v7829
    %v8008 = vunpack.c.h.b16 %v7829
    %v8009 = vunpack.c.l.b16 %v7830
    %v8010 = vunpack.c.h.b16 %v7830
    %v8011 = vunpack.c.l.b16 %v7831
    %v8012 = vunpack.c.h.b16 %v7831
    %v8013 = vunpack.c.l.b16 %v7832
    %v8014 = vunpack.c.h.b16 %v7832
    %v8015 = vunpack.c.l.b16 %v7833
    %v8016 = vunpack.c.h.b16 %v7833
    %v8017 = vunpack.c.l.b16 %v7834
    %v8018 = vunpack.c.h.b16 %v7834
    %v8019 = vunpack.c.l.b16 %v7835
    %v8020 = vunpack.c.h.b16 %v7835
    %v8021 = vunpack.c.l.b16 %v7836
    %v8022 = vunpack.c.h.b16 %v7836
    %v8023 = vunpack.c.l.b16 %v7837
    %v8024 = vunpack.c.h.b16 %v7837
    %v8025 = vunpack.c.l.b16 %v7838
    %v8026 = vunpack.c.h.b16 %v7838
    %v8027 = vunpack.c.l.b16 %v7839
    %v8028 = vunpack.c.h.b16 %v7839
    %v8029 = vunpack.c.l.b16 %v7840
    %v8030 = vunpack.c.h.b16 %v7840
    %v8031 = vunpack.c.l.b16 %v7841
    %v8032 = vunpack.c.h.b16 %v7841
    %v8033 = vunpack.c.l.b16 %v7842
    %v8034 = vunpack.c.h.b16 %v7842
    %v8035 = vunpack.c.l.b16 %v7843
    %v8036 = vunpack.c.h.b16 %v7843
    %v8037 = vunpack.c.l.b16 %v7844
    %v8038 = vunpack.c.h.b16 %v7844
    %v8039 = vunpack.c.l.b16 %v7845
    %v8040 = vunpack.c.h.b16 %v7845
    %v8041 = vunpack.c.l.b16 %v7846
    %v8042 = vunpack.c.h.b16 %v7846
    %v8043 = vunpack.c.l.b16 %v7847
    %v8044 = vunpack.c.h.b16 %v7847
    %v8045 = vunpack.c.l.b16 %v7848
    %v8046 = vunpack.c.h.b16 %v7848
    %v8047 = vunpack.c.l.b16 %v7849
    %v8048 = vunpack.c.h.b16 %v7849
    %v8049 = vunpack.c.l.b16 %v7850
    %v8050 = vunpack.c.h.b16 %v7850
    %v8051 = vunpack.c.l.b16 %v7851
    %v8052 = vunpack.c.h.b16 %v7851
    %v8053 = vunpack.c.l.b16 %v7852
    %v8054 = vunpack.c.h.b16 %v7852
    %v8055 = vunpack.c.l.b16 %v7853
    %v8056 = vunpack.c.h.b16 %v7853
    %v8057 = vunpack.c.l.b16 %v7854
    %v8058 = vunpack.c.h.b16 %v7854
    %v8059 = vpack.c.b16 %v7933, %v7931
    %v8060 = vpack.c.b16 %v7934, %v7932
    %v8061 = vpack.c.b16 %v7937, %v7935
    %v8062 = vpack.c.b16 %v7938, %v7936
    %v8063 = vpack.c.b16 %v7941, %v7939
    %v8064 = vpack.c.b16 %v7942, %v7940
    %v8065 = vpack.c.b16 %v7945, %v7943
    %v8066 = vpack.c.b16 %v7946, %v7944
    %v8067 = vpack.c.b16 %v7949, %v7947
    %v8068 = vpack.c.b16 %v7950, %v7948
    %v8069 = vpack.c.b16 %v7953, %v7951
    %v8070 = vpack.c.b16 %v7954, %v7952
    %v8071 = vpack.c.b16 %v7957, %v7955
    %v8072 = vpack.c.b16 %v7958, %v7956
    %v8073 = vpack.c.b16 %v7961, %v7959
    %v8074 = vpack.c.b16 %v7962, %v7960
    %v8075 = vpack.c.b16 %v7965, %v7963
    %v8076 = vpack.c.b16 %v7966, %v7964
    %v8077 = vpack.c.b16 %v7969, %v7967
    %v8078 = vpack.c.b16 %v7970, %v7968
    %v8079 = vpack.c.b16 %v7973, %v7971
    %v8080 = vpack.c.b16 %v7974, %v7972
    %v8081 = vpack.c.b16 %v7977, %v7975
    %v8082 = vpack.c.b16 %v7978, %v7976
    %v8083 = vpack.c.b16 %v7981, %v7979
    %v8084 = vpack.c.b16 %v7982, %v7980
    %v8085 = vpack.c.b16 %v7985, %v7983
    %v8086 = vpack.c.b16 %v7986, %v7984
    %v8087 = vpack.c.b16 %v7989, %v7987
    %v8088 = vpack.c.b16 %v7990, %v7988
    %v8089 = vpack.c.b16 %v7993, %v7991
    %v8090 = vpack.c.b16 %v7994, %v7992
    %v8091 = vpack.c.b16 %v7997, %v7995
    %v8092 = vpack.c.b16 %v7998, %v7996
    %v8093 = vpack.c.b16 %v8001, %v7999
    %v8094 = vpack.c.b16 %v8002, %v8000
    %v8095 = vpack.c.b16 %v8005, %v8003
    %v8096 = vpack.c.b16 %v8006, %v8004
    %v8097 = vpack.c.b16 %v8009, %v8007
    %v8098 = vpack.c.b16 %v8010, %v8008
    %v8099 = vpack.c.b16 %v8013, %v8011
    %v8100 = vpack.c.b16 %v8014, %v8012
    %v8101 = vpack.c.b16 %v8017, %v8015
    %v8102 = vpack.c.b16 %v8018, %v8016
    %v8103 = vpack.c.b16 %v8021, %v8019
    %v8104 = vpack.c.b16 %v8022, %v8020
    %v8105 = vpack.c.b16 %v8025, %v8023
    %v8106 = vpack.c.b16 %v8026, %v8024
    %v8107 = vpack.c.b16 %v8029, %v8027
    %v8108 = vpack.c.b16 %v8030, %v8028
    %v8109 = vpack.c.b16 %v8033, %v8031
    %v8110 = vpack.c.b16 %v8034, %v8032
    %v8111 = vpack.c.b16 %v8037, %v8035
    %v8112 = vpack.c.b16 %v8038, %v8036
    %v8113 = vpack.c.b16 %v8041, %v8039
    %v8114 = vpack.c.b16 %v8042, %v8040
    %v8115 = vpack.c.b16 %v8045, %v8043
    %v8116 = vpack.c.b16 %v8046, %v8044
    %v8117 = vpack.c.b16 %v8049, %v8047
    %v8118 = vpack.c.b16 %v8050, %v8048
    %v8119 = vpack.c.b16 %v8053, %v8051
    %v8120 = vpack.c.b16 %v8054, %v8052
    %v8121 = vpack.c.b16 %v8057, %v8055
    %v8122 = vpack.c.b16 %v8058, %v8056
    %8187 = vmatprep.subr.bf16.mxu0 %v8074
    %8188 = vmatpush1.bf16.msra.mxu0 %v8073
    %8189 = vmatprep.subr.bf16.mxu0 %v8072
    %8190 = vmatpush1.bf16.msra.mxu0 %v8071
    %8191 = vmatprep.subr.bf16.mxu0 %v8070
    %8192 = vmatpush1.bf16.msra.mxu0 %v8069
    %8193 = vmatprep.subr.bf16.mxu0 %v8068
    %8194 = vmatpush1.bf16.msra.mxu0 %v8067
    %8195 = vmatprep.subr.bf16.mxu0 %v8066
    %8196 = vmatpush1.bf16.msra.mxu0 %v8065
    %8197 = vmatprep.subr.bf16.mxu0 %v8064
    %8198 = vmatpush1.bf16.msra.mxu0 %v8063
    %8199 = vmatprep.subr.bf16.mxu0 %v8062
    %8200 = vmatpush1.bf16.msra.mxu0 %v8061
    %8201 = vmatprep.subr.bf16.mxu0 %v8060
    %8202 = vmatpush1.bf16.msra.mxu0 %v8059
    %8203 = vmatprep.subr.bf16.mxu0 %v8090
    %8204 = vmatpush2.bf16.msra.mxu0 %v8089
    %8205 = vmatprep.subr.bf16.mxu0 %v8088
    %8206 = vmatpush2.bf16.msra.mxu0 %v8087
    %8207 = vmatprep.subr.bf16.mxu0 %v8086
    %8208 = vmatpush2.bf16.msra.mxu0 %v8085
    %8209 = vmatprep.subr.bf16.mxu0 %v8084
    %8210 = vmatpush2.bf16.msra.mxu0 %v8083
    %8211 = vmatprep.subr.bf16.mxu0 %v8082
    %8212 = vmatpush2.bf16.msra.mxu0 %v8081
    %8213 = vmatprep.subr.bf16.mxu0 %v8080
    %8214 = vmatpush2.bf16.msra.mxu0 %v8079
    %8215 = vmatprep.subr.bf16.mxu0 %v8078
    %8216 = vmatpush2.bf16.msra.mxu0 %v8077
    %8217 = vmatprep.subr.bf16.mxu0 %v8076
    %8218 = vmatpush2.bf16.msra.mxu0 %v8075
    %8219 = vmatprep.mubr.bf16.mxu0 %v7788
    %8220 = vmatmul.mubr.bf16.gmra.mxu0 %v7787
    %v8221 = vpop.f32.mrf.mxu0
    %v8222 = vadd.f32 %v7860, %v8221
    %v8223 = vpop.f32.mrf.mxu0
    %v8224 = vadd.f32 %v7864, %v8223
    %v8225 = vpop.f32.mrf.mxu0
    %v8226 = vpop.f32.mrf.mxu0
    %8227 = vdwg.mxu0
    %8228 = vmatprep.subr.bf16.mxu0 %v8106
    %8229 = vmatpush1.bf16.msra.mxu0 %v8105
    %8230 = vmatprep.subr.bf16.mxu0 %v8104
    %8231 = vmatpush1.bf16.msra.mxu0 %v8103
    %8232 = vmatprep.subr.bf16.mxu0 %v8102
    %8233 = vmatpush1.bf16.msra.mxu0 %v8101
    %8234 = vmatprep.subr.bf16.mxu0 %v8100
    %8235 = vmatpush1.bf16.msra.mxu0 %v8099
    %8236 = vmatprep.subr.bf16.mxu0 %v8098
    %8237 = vmatpush1.bf16.msra.mxu0 %v8097
    %8238 = vmatprep.subr.bf16.mxu0 %v8096
    %8239 = vmatpush1.bf16.msra.mxu0 %v8095
    %8240 = vmatprep.subr.bf16.mxu0 %v8094
    %8241 = vmatpush1.bf16.msra.mxu0 %v8093
    %8242 = vmatprep.subr.bf16.mxu0 %v8092
    %8243 = vmatpush1.bf16.msra.mxu0 %v8091
    %8244 = vmatprep.subr.bf16.mxu0 %v8122
    %8245 = vmatpush2.bf16.msra.mxu0 %v8121
    %8246 = vmatprep.subr.bf16.mxu0 %v8120
    %8247 = vmatpush2.bf16.msra.mxu0 %v8119
    %8248 = vmatprep.subr.bf16.mxu0 %v8118
    %8249 = vmatpush2.bf16.msra.mxu0 %v8117
    %8250 = vmatprep.subr.bf16.mxu0 %v8116
    %8251 = vmatpush2.bf16.msra.mxu0 %v8115
    %8252 = vmatprep.subr.bf16.mxu0 %v8114
    %8253 = vmatpush2.bf16.msra.mxu0 %v8113
    %8254 = vmatprep.subr.bf16.mxu0 %v8112
    %8255 = vmatpush2.bf16.msra.mxu0 %v8111
    %8256 = vmatprep.subr.bf16.mxu0 %v8110
    %8257 = vmatpush2.bf16.msra.mxu0 %v8109
    %8258 = vmatprep.subr.bf16.mxu0 %v8108
    %8259 = vmatpush2.bf16.msra.mxu0 %v8107
    %8260 = vmatprep.mubr.bf16.mxu0 %v7790
    %8261 = vmatmul.mubr.bf16.gmra.mxu0 %v7789
    %v8262 = vpop.f32.mrf.mxu0
    %v8263 = vadd.f32 %v8222, %v8262
    %v8264 = vpop.f32.mrf.mxu0
    %v8265 = vadd.f32 %v8224, %v8264
    %v8266 = vpop.f32.mrf.mxu0
    %v8267 = vpop.f32.mrf.mxu0
    %8268 = vdwg.mxu0
    %v8269 = vmax.f32 %v8263, 0.0
    %v8270 = vmax.f32 %v8265, 0.0
    %v8271 = vpack.c.bf16 %v8269, %v8269
    %v8272 = vpack.c.bf16 %v8270, %v8270
    %v8273 = vld [vmem:[#allocation11] sm:$0xff]
    %v8274 = vld [vmem:[#allocation11 + $0x8] sm:$0xff]
    %v8275 = vld [vmem:[#allocation11 + $0x10] sm:$0xff]
    %v8276 = vld [vmem:[#allocation11 + $0x18] sm:$0xff]
    %v8277 = vld [vmem:[#allocation11 + $0x20] sm:$0xff]
    %v8278 = vld [vmem:[#allocation11 + $0x28] sm:$0xff]
    %v8279 = vld [vmem:[#allocation11 + $0x30] sm:$0xff]
    %v8280 = vld [vmem:[#allocation11 + $0x38] sm:$0xff]
    %v8281 = vld [vmem:[#allocation11 + $0x40] sm:$0xff]
    %v8282 = vld [vmem:[#allocation11 + $0x48] sm:$0xff]
    %v8283 = vld [vmem:[#allocation11 + $0x50] sm:$0xff]
    %v8284 = vld [vmem:[#allocation11 + $0x58] sm:$0xff]
    %v8285 = vld [vmem:[#allocation11 + $0x60] sm:$0xff]
    %v8286 = vld [vmem:[#allocation11 + $0x68] sm:$0xff]
    %v8287 = vld [vmem:[#allocation11 + $0x70] sm:$0xff]
    %v8288 = vld [vmem:[#allocation11 + $0x78] sm:$0xff]
    %v8289 = vld [vmem:[#allocation11 + $0x80] sm:$0xff]
    %v8290 = vld [vmem:[#allocation11 + $0x88] sm:$0xff]
    %v8291 = vld [vmem:[#allocation11 + $0x90] sm:$0xff]
    %v8292 = vld [vmem:[#allocation11 + $0x98] sm:$0xff]
    %v8293 = vld [vmem:[#allocation11 + $0xa0] sm:$0xff]
    %v8294 = vld [vmem:[#allocation11 + $0xa8] sm:$0xff]
    %v8295 = vld [vmem:[#allocation11 + $0xb0] sm:$0xff]
    %v8296 = vld [vmem:[#allocation11 + $0xb8] sm:$0xff]
    %v8297 = vld [vmem:[#allocation11 + $0xc0] sm:$0xff]
    %v8298 = vld [vmem:[#allocation11 + $0xc8] sm:$0xff]
    %v8299 = vld [vmem:[#allocation11 + $0xd0] sm:$0xff]
    %v8300 = vld [vmem:[#allocation11 + $0xd8] sm:$0xff]
    %v8301 = vld [vmem:[#allocation11 + $0xe0] sm:$0xff]
    %v8302 = vld [vmem:[#allocation11 + $0xe8] sm:$0xff]
    %v8303 = vld [vmem:[#allocation11 + $0xf0] sm:$0xff]
    %v8304 = vld [vmem:[#allocation11 + $0xf8] sm:$0xff]
    %v8305 = vld [vmem:[#allocation13] sm:$0x3]
    %v8307 = vlaneseq
    %v8308 = vshrl.u32 %v8307, 7
    %v8309 = vsub.s32 0, %v8308
    %v8310 = vrot.slane %v8305, %v8309
    %v8311 = vlaneseq
    %v8312 = vshrl.u32 %v8311, 7
    %v8313 = vsub.s32 1, %v8312
    %v8314 = vrot.slane %v8305, %v8313
    %v8349 = vunpack.c.l.b16 %v8273
    %v8350 = vunpack.c.h.b16 %v8273
    %v8351 = vunpack.c.l.b16 %v8274
    %v8352 = vunpack.c.h.b16 %v8274
    %v8353 = vunpack.c.l.b16 %v8275
    %v8354 = vunpack.c.h.b16 %v8275
    %v8355 = vunpack.c.l.b16 %v8276
    %v8356 = vunpack.c.h.b16 %v8276
    %v8357 = vunpack.c.l.b16 %v8277
    %v8358 = vunpack.c.h.b16 %v8277
    %v8359 = vunpack.c.l.b16 %v8278
    %v8360 = vunpack.c.h.b16 %v8278
    %v8361 = vunpack.c.l.b16 %v8279
    %v8362 = vunpack.c.h.b16 %v8279
    %v8363 = vunpack.c.l.b16 %v8280
    %v8364 = vunpack.c.h.b16 %v8280
    %v8365 = vunpack.c.l.b16 %v8281
    %v8366 = vunpack.c.h.b16 %v8281
    %v8367 = vunpack.c.l.b16 %v8282
    %v8368 = vunpack.c.h.b16 %v8282
    %v8369 = vunpack.c.l.b16 %v8283
    %v8370 = vunpack.c.h.b16 %v8283
    %v8371 = vunpack.c.l.b16 %v8284
    %v8372 = vunpack.c.h.b16 %v8284
    %v8373 = vunpack.c.l.b16 %v8285
    %v8374 = vunpack.c.h.b16 %v8285
    %v8375 = vunpack.c.l.b16 %v8286
    %v8376 = vunpack.c.h.b16 %v8286
    %v8377 = vunpack.c.l.b16 %v8287
    %v8378 = vunpack.c.h.b16 %v8287
    %v8379 = vunpack.c.l.b16 %v8288
    %v8380 = vunpack.c.h.b16 %v8288
    %v8381 = vunpack.c.l.b16 %v8289
    %v8382 = vunpack.c.h.b16 %v8289
    %v8383 = vunpack.c.l.b16 %v8290
    %v8384 = vunpack.c.h.b16 %v8290
    %v8385 = vunpack.c.l.b16 %v8291
    %v8386 = vunpack.c.h.b16 %v8291
    %v8387 = vunpack.c.l.b16 %v8292
    %v8388 = vunpack.c.h.b16 %v8292
    %v8389 = vunpack.c.l.b16 %v8293
    %v8390 = vunpack.c.h.b16 %v8293
    %v8391 = vunpack.c.l.b16 %v8294
    %v8392 = vunpack.c.h.b16 %v8294
    %v8393 = vunpack.c.l.b16 %v8295
    %v8394 = vunpack.c.h.b16 %v8295
    %v8395 = vunpack.c.l.b16 %v8296
    %v8396 = vunpack.c.h.b16 %v8296
    %v8397 = vunpack.c.l.b16 %v8297
    %v8398 = vunpack.c.h.b16 %v8297
    %v8399 = vunpack.c.l.b16 %v8298
    %v8400 = vunpack.c.h.b16 %v8298
    %v8401 = vunpack.c.l.b16 %v8299
    %v8402 = vunpack.c.h.b16 %v8299
    %v8403 = vunpack.c.l.b16 %v8300
    %v8404 = vunpack.c.h.b16 %v8300
    %v8405 = vunpack.c.l.b16 %v8301
    %v8406 = vunpack.c.h.b16 %v8301
    %v8407 = vunpack.c.l.b16 %v8302
    %v8408 = vunpack.c.h.b16 %v8302
    %v8409 = vunpack.c.l.b16 %v8303
    %v8410 = vunpack.c.h.b16 %v8303
    %v8411 = vunpack.c.l.b16 %v8304
    %v8412 = vunpack.c.h.b16 %v8304
    %v8413 = vpack.c.b16 %v8351, %v8349
    %v8414 = vpack.c.b16 %v8352, %v8350
    %v8415 = vpack.c.b16 %v8355, %v8353
    %v8416 = vpack.c.b16 %v8356, %v8354
    %v8417 = vpack.c.b16 %v8359, %v8357
    %v8418 = vpack.c.b16 %v8360, %v8358
    %v8419 = vpack.c.b16 %v8363, %v8361
    %v8420 = vpack.c.b16 %v8364, %v8362
    %v8421 = vpack.c.b16 %v8367, %v8365
    %v8422 = vpack.c.b16 %v8368, %v8366
    %v8423 = vpack.c.b16 %v8371, %v8369
    %v8424 = vpack.c.b16 %v8372, %v8370
    %v8425 = vpack.c.b16 %v8375, %v8373
    %v8426 = vpack.c.b16 %v8376, %v8374
    %v8427 = vpack.c.b16 %v8379, %v8377
    %v8428 = vpack.c.b16 %v8380, %v8378
    %v8429 = vpack.c.b16 %v8383, %v8381
    %v8430 = vpack.c.b16 %v8384, %v8382
    %v8431 = vpack.c.b16 %v8387, %v8385
    %v8432 = vpack.c.b16 %v8388, %v8386
    %v8433 = vpack.c.b16 %v8391, %v8389
    %v8434 = vpack.c.b16 %v8392, %v8390
    %v8435 = vpack.c.b16 %v8395, %v8393
    %v8436 = vpack.c.b16 %v8396, %v8394
    %v8437 = vpack.c.b16 %v8399, %v8397
    %v8438 = vpack.c.b16 %v8400, %v8398
    %v8439 = vpack.c.b16 %v8403, %v8401
    %v8440 = vpack.c.b16 %v8404, %v8402
    %v8441 = vpack.c.b16 %v8407, %v8405
    %v8442 = vpack.c.b16 %v8408, %v8406
    %v8443 = vpack.c.b16 %v8411, %v8409
    %v8444 = vpack.c.b16 %v8412, %v8410
    %8477 = vmatprep.subr.bf16.mxu0 %v8428
    %8478 = vmatpush1.bf16.msra.mxu0 %v8427
    %8479 = vmatprep.subr.bf16.mxu0 %v8426
    %8480 = vmatpush1.bf16.msra.mxu0 %v8425
    %8481 = vmatprep.subr.bf16.mxu0 %v8424
    %8482 = vmatpush1.bf16.msra.mxu0 %v8423
    %8483 = vmatprep.subr.bf16.mxu0 %v8422
    %8484 = vmatpush1.bf16.msra.mxu0 %v8421
    %8485 = vmatprep.subr.bf16.mxu0 %v8420
    %8486 = vmatpush1.bf16.msra.mxu0 %v8419
    %8487 = vmatprep.subr.bf16.mxu0 %v8418
    %8488 = vmatpush1.bf16.msra.mxu0 %v8417
    %8489 = vmatprep.subr.bf16.mxu0 %v8416
    %8490 = vmatpush1.bf16.msra.mxu0 %v8415
    %8491 = vmatprep.subr.bf16.mxu0 %v8414
    %8492 = vmatpush1.bf16.msra.mxu0 %v8413
    %8493 = vmatprep.subr.bf16.mxu0 %v8444
    %8494 = vmatpush2.bf16.msra.mxu0 %v8443
    %8495 = vmatprep.subr.bf16.mxu0 %v8442
    %8496 = vmatpush2.bf16.msra.mxu0 %v8441
    %8497 = vmatprep.subr.bf16.mxu0 %v8440
    %8498 = vmatpush2.bf16.msra.mxu0 %v8439
    %8499 = vmatprep.subr.bf16.mxu0 %v8438
    %8500 = vmatpush2.bf16.msra.mxu0 %v8437
    %8501 = vmatprep.subr.bf16.mxu0 %v8436
    %8502 = vmatpush2.bf16.msra.mxu0 %v8435
    %8503 = vmatprep.subr.bf16.mxu0 %v8434
    %8504 = vmatpush2.bf16.msra.mxu0 %v8433
    %8505 = vmatprep.subr.bf16.mxu0 %v8432
    %8506 = vmatpush2.bf16.msra.mxu0 %v8431
    %8507 = vmatprep.subr.bf16.mxu0 %v8430
    %8508 = vmatpush2.bf16.msra.mxu0 %v8429
    %8509 = vmatprep.mubr.bf16.mxu0 %v8272
    %8510 = vmatmul.mubr.bf16.gmra.mxu0 %v8271
    %v8511 = vpop.f32.mrf.mxu0
    %v8512 = vadd.f32 %v8310, %v8511
    %v8513 = vpop.f32.mrf.mxu0
    %v8514 = vadd.f32 %v8314, %v8513
    %v8515 = vpop.f32.mrf.mxu0
    %v8516 = vpop.f32.mrf.mxu0
    %8517 = vdwg.mxu0
    %v8518 = vmax.f32 %v8512, 0.0
    %v8519 = vmax.f32 %v8514, 0.0
    %v8520 = vpack.c.bf16 %v8518, %v8518
    %v8521 = vpack.c.bf16 %v8519, %v8519
    %v8522 = vld [vmem:[#allocation14] sm:$0xf]
    %v8523 = vld [vmem:[#allocation14 + $0x4] sm:$0xf]
    %v8524 = vld [vmem:[#allocation14 + $0x8] sm:$0xf]
    %v8525 = vld [vmem:[#allocation14 + $0xc] sm:$0xf]
    %v8526 = vld [vmem:[#allocation14 + $0x10] sm:$0xf]
    %v8527 = vld [vmem:[#allocation14 + $0x14] sm:$0xf]
    %v8528 = vld [vmem:[#allocation14 + $0x18] sm:$0xf]
    %v8529 = vld [vmem:[#allocation14 + $0x1c] sm:$0xf]
    %v8530 = vld [vmem:[#allocation14 + $0x20] sm:$0xf]
    %v8531 = vld [vmem:[#allocation14 + $0x24] sm:$0xf]
    %v8532 = vld [vmem:[#allocation14 + $0x28] sm:$0xf]
    %v8533 = vld [vmem:[#allocation14 + $0x2c] sm:$0xf]
    %v8534 = vld [vmem:[#allocation14 + $0x30] sm:$0xf]
    %v8535 = vld [vmem:[#allocation14 + $0x34] sm:$0xf]
    %v8536 = vld [vmem:[#allocation14 + $0x38] sm:$0xf]
    %v8537 = vld [vmem:[#allocation14 + $0x3c] sm:$0xf]
    %v8538 = vld [vmem:[#allocation14 + $0x40] sm:$0xf]
    %v8539 = vld [vmem:[#allocation14 + $0x44] sm:$0xf]
    %v8540 = vld [vmem:[#allocation14 + $0x48] sm:$0xf]
    %v8541 = vld [vmem:[#allocation14 + $0x4c] sm:$0xf]
    %v8542 = vld [vmem:[#allocation14 + $0x50] sm:$0xf]
    %v8543 = vld [vmem:[#allocation14 + $0x54] sm:$0xf]
    %v8544 = vld [vmem:[#allocation14 + $0x58] sm:$0xf]
    %v8545 = vld [vmem:[#allocation14 + $0x5c] sm:$0xf]
    %v8546 = vld [vmem:[#allocation14 + $0x60] sm:$0xf]
    %v8547 = vld [vmem:[#allocation14 + $0x64] sm:$0xf]
    %v8548 = vld [vmem:[#allocation14 + $0x68] sm:$0xf]
    %v8549 = vld [vmem:[#allocation14 + $0x6c] sm:$0xf]
    %v8550 = vld [vmem:[#allocation14 + $0x70] sm:$0xf]
    %v8551 = vld [vmem:[#allocation14 + $0x74] sm:$0xf]
    %v8552 = vld [vmem:[#allocation14 + $0x78] sm:$0xf]
    %v8553 = vld [vmem:[#allocation14 + $0x7c] sm:$0xf]
    %v8554 = vld [vmem:[#allocation16] sm:$0x1]
    %v8556 = vlaneseq
    %v8557 = vshrl.u32 %v8556, 7
    %v8558 = vsub.s32 0, %v8557
    %v8559 = vrot.slane %v8554, %v8558
    %v8593 = vunpack.c.l.b16 %v8522
    %v8594 = vunpack.c.l.b16 %v8523
    %v8595 = vunpack.c.l.b16 %v8524
    %v8596 = vunpack.c.l.b16 %v8525
    %v8597 = vunpack.c.l.b16 %v8526
    %v8598 = vunpack.c.l.b16 %v8527
    %v8599 = vunpack.c.l.b16 %v8528
    %v8600 = vunpack.c.l.b16 %v8529
    %v8601 = vunpack.c.l.b16 %v8530
    %v8602 = vunpack.c.l.b16 %v8531
    %v8603 = vunpack.c.l.b16 %v8532
    %v8604 = vunpack.c.l.b16 %v8533
    %v8605 = vunpack.c.l.b16 %v8534
    %v8606 = vunpack.c.l.b16 %v8535
    %v8607 = vunpack.c.l.b16 %v8536
    %v8608 = vunpack.c.l.b16 %v8537
    %v8609 = vunpack.c.l.b16 %v8538
    %v8610 = vunpack.c.l.b16 %v8539
    %v8611 = vunpack.c.l.b16 %v8540
    %v8612 = vunpack.c.l.b16 %v8541
    %v8613 = vunpack.c.l.b16 %v8542
    %v8614 = vunpack.c.l.b16 %v8543
    %v8615 = vunpack.c.l.b16 %v8544
    %v8616 = vunpack.c.l.b16 %v8545
    %v8617 = vunpack.c.l.b16 %v8546
    %v8618 = vunpack.c.l.b16 %v8547
    %v8619 = vunpack.c.l.b16 %v8548
    %v8620 = vunpack.c.l.b16 %v8549
    %v8621 = vunpack.c.l.b16 %v8550
    %v8622 = vunpack.c.l.b16 %v8551
    %v8623 = vunpack.c.l.b16 %v8552
    %v8624 = vunpack.c.l.b16 %v8553
    %v8625 = vpack.c.b16 %v8594, %v8593
    %v8626 = vpack.c.b16 %v8596, %v8595
    %v8627 = vpack.c.b16 %v8598, %v8597
    %v8628 = vpack.c.b16 %v8600, %v8599
    %v8629 = vpack.c.b16 %v8602, %v8601
    %v8630 = vpack.c.b16 %v8604, %v8603
    %v8631 = vpack.c.b16 %v8606, %v8605
    %v8632 = vpack.c.b16 %v8608, %v8607
    %v8633 = vpack.c.b16 %v8610, %v8609
    %v8634 = vpack.c.b16 %v8612, %v8611
    %v8635 = vpack.c.b16 %v8614, %v8613
    %v8636 = vpack.c.b16 %v8616, %v8615
    %v8637 = vpack.c.b16 %v8618, %v8617
    %v8638 = vpack.c.b16 %v8620, %v8619
    %v8639 = vpack.c.b16 %v8622, %v8621
    %v8640 = vpack.c.b16 %v8624, %v8623
    %8657 = vmatprep.subr.bf16.mxu0 0
    %8658 = vmatpush1.bf16.msra.mxu0 %v8632
    %8659 = vmatprep.subr.bf16.mxu0 0
    %8660 = vmatpush1.bf16.msra.mxu0 %v8631
    %8661 = vmatprep.subr.bf16.mxu0 0
    %8662 = vmatpush1.bf16.msra.mxu0 %v8630
    %8663 = vmatprep.subr.bf16.mxu0 0
    %8664 = vmatpush1.bf16.msra.mxu0 %v8629
    %8665 = vmatprep.subr.bf16.mxu0 0
    %8666 = vmatpush1.bf16.msra.mxu0 %v8628
    %8667 = vmatprep.subr.bf16.mxu0 0
    %8668 = vmatpush1.bf16.msra.mxu0 %v8627
    %8669 = vmatprep.subr.bf16.mxu0 0
    %8670 = vmatpush1.bf16.msra.mxu0 %v8626
    %8671 = vmatprep.subr.bf16.mxu0 0
    %8672 = vmatpush1.bf16.msra.mxu0 %v8625
    %8673 = vmatprep.subr.bf16.mxu0 0
    %8674 = vmatpush2.bf16.msra.mxu0 %v8640
    %8675 = vmatprep.subr.bf16.mxu0 0
    %8676 = vmatpush2.bf16.msra.mxu0 %v8639
    %8677 = vmatprep.subr.bf16.mxu0 0
    %8678 = vmatpush2.bf16.msra.mxu0 %v8638
    %8679 = vmatprep.subr.bf16.mxu0 0
    %8680 = vmatpush2.bf16.msra.mxu0 %v8637
    %8681 = vmatprep.subr.bf16.mxu0 0
    %8682 = vmatpush2.bf16.msra.mxu0 %v8636
    %8683 = vmatprep.subr.bf16.mxu0 0
    %8684 = vmatpush2.bf16.msra.mxu0 %v8635
    %8685 = vmatprep.subr.bf16.mxu0 0
    %8686 = vmatpush2.bf16.msra.mxu0 %v8634
    %8687 = vmatprep.subr.bf16.mxu0 0
    %8688 = vmatpush2.bf16.msra.mxu0 %v8633
    %8689 = vmatprep.mubr.bf16.mxu0 %v8521
    %8690 = vmatmul.mubr.bf16.gmra.mxu0 %v8520
    %v8691 = vpop.f32.mrf.mxu0
    %v8692 = vadd.f32 %v8559, %v8691
    %v8693 = vpop.f32.mrf.mxu0
    %v8694 = vpop.f32.mrf.mxu0
    %v8695 = vpop.f32.mrf.mxu0
    %8696 = vdwg.mxu0
    %v8697 = vmax.f32 %v8692, 0.0
    %v8698 = vpack.c.bf16 %v8697, %v8697
    %v8699 = vld [vmem:[#allocation17] sm:$0xf]
    %v8700 = vld [vmem:[#allocation17 + $0x4] sm:$0xf]
    %v8701 = vld [vmem:[#allocation17 + $0x8] sm:$0xf]
    %v8702 = vld [vmem:[#allocation17 + $0xc] sm:$0xf]
    %v8703 = vld [vmem:[#allocation17 + $0x10] sm:$0xf]
    %v8704 = vld [vmem:[#allocation17 + $0x14] sm:$0xf]
    %v8705 = vld [vmem:[#allocation17 + $0x18] sm:$0xf]
    %v8706 = vld [vmem:[#allocation17 + $0x1c] sm:$0xf]
    %v8707 = vld [vmem:[#allocation17 + $0x20] sm:$0xf]
    %v8708 = vld [vmem:[#allocation17 + $0x24] sm:$0xf]
    %v8709 = vld [vmem:[#allocation17 + $0x28] sm:$0xf]
    %v8710 = vld [vmem:[#allocation17 + $0x2c] sm:$0xf]
    %v8711 = vld [vmem:[#allocation17 + $0x30] sm:$0xf]
    %v8712 = vld [vmem:[#allocation17 + $0x34] sm:$0xf]
    %v8713 = vld [vmem:[#allocation17 + $0x38] sm:$0xf]
    %v8714 = vld [vmem:[#allocation17 + $0x3c] sm:$0xf]
    %v8715 = vld [vmem:[#allocation19] sm:$0x1]
    %v8717 = vlaneseq
    %v8718 = vshrl.u32 %v8717, 7
    %v8719 = vsub.s32 0, %v8718
    %v8720 = vrot.slane %v8715, %v8719
    %v8738 = vunpack.c.l.b16 %v8699
    %v8739 = vunpack.c.l.b16 %v8700
    %v8740 = vunpack.c.l.b16 %v8701
    %v8741 = vunpack.c.l.b16 %v8702
    %v8742 = vunpack.c.l.b16 %v8703
    %v8743 = vunpack.c.l.b16 %v8704
    %v8744 = vunpack.c.l.b16 %v8705
    %v8745 = vunpack.c.l.b16 %v8706
    %v8746 = vunpack.c.l.b16 %v8707
    %v8747 = vunpack.c.l.b16 %v8708
    %v8748 = vunpack.c.l.b16 %v8709
    %v8749 = vunpack.c.l.b16 %v8710
    %v8750 = vunpack.c.l.b16 %v8711
    %v8751 = vunpack.c.l.b16 %v8712
    %v8752 = vunpack.c.l.b16 %v8713
    %v8753 = vunpack.c.l.b16 %v8714
    %v8754 = vpack.c.b16 %v8739, %v8738
    %v8755 = vpack.c.b16 %v8741, %v8740
    %v8756 = vpack.c.b16 %v8743, %v8742
    %v8757 = vpack.c.b16 %v8745, %v8744
    %v8758 = vpack.c.b16 %v8747, %v8746
    %v8759 = vpack.c.b16 %v8749, %v8748
    %v8760 = vpack.c.b16 %v8751, %v8750
    %v8761 = vpack.c.b16 %v8753, %v8752
    %8770 = vmatprep.subr.bf16.mxu0 0
    %8771 = vmatpush1.bf16.msra.mxu0 %v8761
    %8772 = vmatprep.subr.bf16.mxu0 0
    %8773 = vmatpush1.bf16.msra.mxu0 %v8760
    %8774 = vmatprep.subr.bf16.mxu0 0
    %8775 = vmatpush1.bf16.msra.mxu0 %v8759
    %8776 = vmatprep.subr.bf16.mxu0 0
    %8777 = vmatpush1.bf16.msra.mxu0 %v8758
    %8778 = vmatprep.subr.bf16.mxu0 0
    %8779 = vmatpush1.bf16.msra.mxu0 %v8757
    %8780 = vmatprep.subr.bf16.mxu0 0
    %8781 = vmatpush1.bf16.msra.mxu0 %v8756
    %8782 = vmatprep.subr.bf16.mxu0 0
    %8783 = vmatpush1.bf16.msra.mxu0 %v8755
    %8784 = vmatprep.subr.bf16.mxu0 0
    %8785 = vmatpush1.bf16.msra.mxu0 %v8754
    %8786 = vmatprep.subr.bf16.mxu0 0
    %8787 = vmatpush2.bf16.msra.mxu0 0
    %8788 = vmatprep.subr.bf16.mxu0 0
    %8789 = vmatpush2.bf16.msra.mxu0 0
    %8790 = vmatprep.subr.bf16.mxu0 0
    %8791 = vmatpush2.bf16.msra.mxu0 0
    %8792 = vmatprep.subr.bf16.mxu0 0
    %8793 = vmatpush2.bf16.msra.mxu0 0
    %8794 = vmatprep.subr.bf16.mxu0 0
    %8795 = vmatpush2.bf16.msra.mxu0 0
    %8796 = vmatprep.subr.bf16.mxu0 0
    %8797 = vmatpush2.bf16.msra.mxu0 0
    %8798 = vmatprep.subr.bf16.mxu0 0
    %8799 = vmatpush2.bf16.msra.mxu0 0
    %8800 = vmatprep.subr.bf16.mxu0 0
    %8801 = vmatpush2.bf16.msra.mxu0 0
    %8802 = vmatprep.mubr.bf16.mxu0 0
    %8803 = vmatmul.mubr.bf16.gmra.mxu0 %v8698
    %v8804 = vpop.f32.mrf.mxu0
    %v8805 = vadd.f32 %v8720, %v8804
    %v8806 = vpop.f32.mrf.mxu0
    %v8807 = vpop.f32.mrf.mxu0
    %v8808 = vpop.f32.mrf.mxu0
    %8809 = vdwg.mxu0
    %8810 = vst [vmem:[#allocation20] sm:$0xff] %v8805
    // Predicated region
    $region90: #{tpu_custom_call.1} parent=1 // pred_check
      _
    $region91: #{tpu_custom_call.1} parent=1 // pred_check_branch
      %8812 = sbr.rel (0) target = $region93
    $region92: #{tpu_custom_call.1} parent=1 // pred_region
      %s8814 = ssub.s32 128, 128
      %8815 = vsyncadd [#allocation4], %s8814
      %s8817 = sshll.u32 [#allocation20], 4
      %s8818 = int_to_ptr.vmem [resolvable:$true] %s8817
      %8820 = dma.vmem_to_hbm [thread:$0]  %s8818, 128, %s11, [#allocation4]
    $region93: #{tpu_custom_call.1} parent=1 // pred_fallthru
      _
    // Predicated region
    $region94: #{tpu_custom_call.1} parent=1 // pred_check
      _
    $region95: #{tpu_custom_call.1} parent=1 // pred_check_branch
      %8822 = sbr.rel (0) target = $region97
    $region96: #{tpu_custom_call.1} parent=1 // pred_region
      %8823 = dma.done [#allocation4], 128
    $region97: #{tpu_custom_call.1} parent=1 // pred_fallthru
      _
    %8824 = vsyncpa [#allocation3], 1
    %8825 = vsyncpa [#allocation6], 1
    %8826 = vsyncpa [#allocation9], 1
    %8827 = vsyncpa [#allocation12], 1
    %8828 = vsyncpa [#allocation15], 1
    %8829 = vsyncpa [#allocation18], 1
    %8830 = vsyncpa [#allocation4], 1

</llo_original>
